<compile_context>
chip_gen: v7x
topology: tpu7x:2x2x1
jax: 0.10.0
libtpu: 0.0.40
codegen_flags: <defaults>
</compile_context>

<pallas_src>
import functools

import jax
import jax.numpy as jnp
import numpy as np
from jax import lax
from jax.experimental import pallas as pl
from jax.experimental.pallas import tpu as pltpu

NUM_GROUPS = 32
EPS = 1e-6


def _attn_block_kernel(x_ref, gamma_ref, beta_ref,
                       wq_ref, bq_ref, wk_ref, bk_ref, wv_ref, bv_ref,
                       wp_ref, bp_ref, mask_cg_ref, mask_gc_ref,
                       o_ref,
                       q_scr, k_scr, v_scr, *, tq):
    """Grid = (B, NT); one batch element stays resident across its NT tiles."""
    t = pl.program_id(1)
    nt = pl.num_programs(1)
    S, C = o_ref.shape
    G = mask_cg_ref.shape[1]

    @pl.when(t == 0)
    def _prologue():
        x = x_ref[...]                                        # (S, C) f32
        inv_n = 1.0 / float(S * (C // G))

        # GroupNorm(32, eps=1e-6), centered two-pass stats, lane-dense:
        # per-channel column sums -> tiny (1,C)@(C,G) group reductions.
        csum = jnp.sum(x, axis=0, keepdims=True)              # (1, C)
        mean_c = jnp.dot(jnp.dot(csum, mask_cg_ref[...],
                                 preferred_element_type=jnp.float32) * inv_n,
                         mask_gc_ref[...],
                         preferred_element_type=jnp.float32)  # (1, C)
        xc = x - mean_c
        csq = jnp.sum(xc * xc, axis=0, keepdims=True)         # (1, C)
        gvar = jnp.dot(csq, mask_cg_ref[...],
                       preferred_element_type=jnp.float32) * inv_n
        inv_std_c = jnp.dot(lax.rsqrt(gvar + EPS), mask_gc_ref[...],
                            preferred_element_type=jnp.float32)  # (1, C)
        xn = (xc * inv_std_c * gamma_ref[...] + beta_ref[...]
              ).astype(jnp.bfloat16)                          # (S, C) bf16

        # 1x1 convs (1/sqrt(C) folded into wq/bq by the wrapper).  Compute and
        # store each projection immediately: only one (S, C) f32 temporary is
        # live at a time (less spill, smaller transient VMEM).
        q_scr[...] = (jnp.dot(xn, wq_ref[...],
                              preferred_element_type=jnp.float32)
                      + bq_ref[...]).astype(jnp.bfloat16)
        k_scr[...] = (jnp.dot(xn, wk_ref[...],
                              preferred_element_type=jnp.float32)
                      + bk_ref[...]).astype(jnp.bfloat16)
        v_scr[...] = (jnp.dot(xn, wv_ref[...],
                              preferred_element_type=jnp.float32)
                      + bv_ref[...]).astype(jnp.bfloat16)

    # ---- one query tile of attention: rows [t*tq, (t+1)*tq) of q ----------
    row0 = pl.multiple_of(t * tq, tq)
    q_t = q_scr[pl.ds(row0, tq), :]                           # (TQ, C) bf16
    # Keys-major score layout: sT[j, i] = k_j . q_{row0+i}.  Both matmuls use
    # native MXU forms (A @ B^T here, plain A @ B below) -- no dim-0
    # contraction, no materialized transpose of the probability tile.
    sT = lax.dot_general(k_scr[...], q_t, (((1,), (1,)), ((), ())),
                         preferred_element_type=jnp.float32)  # (S, TQ) f32
    m = jnp.max(sT, axis=0, keepdims=True)                    # (1, TQ)
    p = jnp.exp(sT - m)                                       # (S, TQ) f32
    l = jnp.sum(p, axis=0, keepdims=True)                     # (1, TQ)
    inv_l = pl.reciprocal(l, approx=True)                     # EUP slot
    # Normalization fused into the f32->bf16 cast of p; v stays untouched bf16.
    p_bf = (p * inv_l).astype(jnp.bfloat16)                   # (S, TQ)
    contrib = jnp.dot(p_bf, v_scr[pl.ds(row0, tq), :],
                      preferred_element_type=jnp.float32)     # (S, C) f32

    # First tile writes directly (no (S, C) zero-fill + RMW pass); later
    # tiles accumulate into the resident f32 output block.
    @pl.when(t == 0)
    def _write_first():
        o_ref[...] = contrib

    @pl.when(t > 0)
    def _accumulate():
        o_ref[...] += contrib

    @pl.when(t == nt - 1)
    def _epilogue():
        acc = o_ref[...]                                      # (S, C) f32
        h = jnp.dot(acc.astype(jnp.bfloat16), wp_ref[...],
                    preferred_element_type=jnp.float32) + bp_ref[...]
        o_ref[...] = (h + x_ref[...]).astype(o_ref.dtype)     # residual in f32


def _supports_single_buffering():
    """True iff this jax exposes BlockSpec(pipeline_mode=pl.Buffered(n))."""
    if not hasattr(pl, "Buffered"):
        return False
    try:
        pl.BlockSpec((8, 128), lambda i, j: (0, 0), pipeline_mode=pl.Buffered(1))
        return True
    except TypeError:
        return False


def _pick_tq(S, vmem_bytes):
    # 256 matches the v6e/v7x 2x256^2 MXU depth (and is a 128-multiple for
    # v5e's 4x128^2 MXU).  Cap TQ so a few f32 (S, TQ) score temporaries stay
    # well inside VMEM at very large S.
    cap = max(vmem_bytes // 4, 4 << 20)
    for cand in (256, 128, 64, 32, 16):
        if S % cand == 0 and 3 * S * cand * 4 <= cap:
            return cand
    return S


def attn_block_pallas(x_nchw, params, *, tq=None):
    """VQGAN AttnBlock forward.  x_nchw: (B, C, H, W) -> (B, C, H, W)."""
    B, C, H, W = x_nchw.shape
    G = NUM_GROUPS
    assert C % G == 0, "GroupNorm(32) requires channels % 32 == 0"
    S = H * W

    try:
        phys_vmem = pltpu.get_tpu_info().vmem_capacity_bytes
    except Exception:
        phys_vmem = 64 * 1024 * 1024   # conservative v7x floor

    if tq is None:
        tq = _pick_tq(S, phys_vmem)
    assert S % tq == 0, "query tile must divide H*W"
    nt = S // tq

    f32, bf16 = jnp.float32, jnp.bfloat16

    # NCHW -> (B, S, C), s = h*W + w (row-major, matches torch's reshape).
    x = jnp.transpose(x_nchw, (0, 2, 3, 1)).reshape(B, S, C).astype(f32)

    scale = float(C) ** (-0.5)
    gamma = params["gamma"].reshape(1, C).astype(f32)
    beta = params["beta"].reshape(1, C).astype(f32)
    # conv weights are (C_out, C_in); pre-transpose so the kernel does xn @ W^T,
    # fold the 1/sqrt(C) attention scale into wq/bq, cast weights to bf16.
    wq = (params["wq"].T * scale).astype(bf16)
    wk = params["wk"].T.astype(bf16)
    wv = params["wv"].T.astype(bf16)
    wp = params["wp"].T.astype(bf16)
    bq = (params["bq"] * scale).reshape(1, C).astype(f32)
    bk = params["bk"].reshape(1, C).astype(f32)
    bv = params["bv"].reshape(1, C).astype(f32)
    bp = params["bp"].reshape(1, C).astype(f32)

    # one-hot channel<->group membership matrices (GroupNorm reductions on MXU)
    ch = jnp.arange(C)
    mask_cg = (ch[:, None] // (C // G) == jnp.arange(G)[None, :]).astype(f32)
    mask_gc = mask_cg.T

    can_single_buffer = _supports_single_buffering()

    def residency(nb_io, nb_w):
        io = nb_io * 2 * S * C * 4                 # x + out blocks (f32)
        wgt = nb_w * (4 * C * C * 2                # wq/wk/wv/wp (bf16)
                      + 6 * C * 4                  # bq/bk/bv/bp/gamma/beta
                      + 2 * C * G * 4)             # GN masks
        scr = 3 * S * C * 2                        # q/k/v bf16 scratch
        trans = 3 * S * tq * 4 + 4 * S * C * 4     # score tile + prologue temps
        return io + wgt + scr + trans

    # Single-buffer the per-batch x/out blocks only when double buffering would
    # not fit physical VMEM (v7x 64 MiB); the lost overlap is one DMA per batch.
    single_io = can_single_buffer and residency(2, 1) > int(0.8 * phys_vmem)

    def build(use_single_buffering):
        nb_io = 1 if (use_single_buffering and single_io) else 2
        nb_w = 1 if use_single_buffering else 2
        est = residency(nb_io, nb_w)
        vmem_limit = int(min(0.9 * phys_vmem,
                             max(32 * 1024 * 1024, 1.25 * est)))

        def spec(shape, index_map, nbuf):
            if use_single_buffering and nbuf == 1:
                return pl.BlockSpec(shape, index_map,
                                    pipeline_mode=pl.Buffered(1))
            return pl.BlockSpec(shape, index_map)

        def fixed(shape):
            return spec(shape, lambda b, t: (0,) * len(shape), nb_w)

        io_map = lambda b, t: (b, 0, 0)
        grid_spec = pltpu.PrefetchScalarGridSpec(
            num_scalar_prefetch=0,
            grid=(B, nt),
            in_specs=[
                spec((None, S, C), io_map, nb_io),             # x (resident)
                fixed((1, C)), fixed((1, C)),                  # gamma, beta
                fixed((C, C)), fixed((1, C)),                  # wq, bq
                fixed((C, C)), fixed((1, C)),                  # wk, bk
                fixed((C, C)), fixed((1, C)),                  # wv, bv
                fixed((C, C)), fixed((1, C)),                  # wp, bp
                fixed((C, G)), fixed((G, C)),                  # GN masks
            ],
            out_specs=spec((None, S, C), io_map, nb_io),
            scratch_shapes=[pltpu.VMEM((S, C), bf16)] * 3,     # q, k, v
        )
        return pl.pallas_call(
            functools.partial(_attn_block_kernel, tq=tq),
            out_shape=jax.ShapeDtypeStruct((B, S, C), f32),    # f32 accumulator
            grid_spec=grid_spec,
            compiler_params=pltpu.CompilerParams(
                dimension_semantics=("parallel", "arbitrary"),
                vmem_limit_bytes=vmem_limit),
        )

    args = (x, gamma, beta, wq, bq, wk, bk, wv, bv, wp, bp, mask_cg, mask_gc)
    if can_single_buffer:
        try:
            out = build(True)(*args)
        except Exception:
            # Mosaic/jax variant without Buffered(1) support: default buffering.
            out = build(False)(*args)
    else:
        out = build(False)(*args)

    # (B, S, C) -> NCHW, back to the caller's dtype.
    out = jnp.transpose(out.reshape(B, H, W, C), (0, 3, 1, 2))
    return out.astype(x_nchw.dtype)


def attn_block_reference(x, p):
    """Pure-JAX reference mirroring the PyTorch forward (NCHW)."""
    B, C, H, W = x.shape
    G = NUM_GROUPS
    gs = C // G
    xr = x.reshape(B, G, gs, H, W)
    mean = xr.mean(axis=(2, 3, 4), keepdims=True)
    var = xr.var(axis=(2, 3, 4), keepdims=True)
    xn = (xr - mean) / jnp.sqrt(var + EPS)
    xn = xn.reshape(B, C, H, W) * p["gamma"][None, :, None, None] \
        + p["beta"][None, :, None, None]

    def conv1x1(h, w, b):
        return jnp.einsum('bchw,oc->bohw', h, w) + b[None, :, None, None]

    q = conv1x1(xn, p["wq"], p["bq"])
    k = conv1x1(xn, p["wk"], p["bk"])
    v = conv1x1(xn, p["wv"], p["bv"])
    S = H * W
    qf = q.reshape(B, C, S).transpose(0, 2, 1)          # (B, S, C)
    kf = k.reshape(B, C, S)                             # (B, C, S)
    attn = jnp.einsum('bsc,bct->bst', qf, kf) * (int(C) ** (-0.5))
    attn = jax.nn.softmax(attn, axis=2)
    vf = v.reshape(B, C, S)
    h = jnp.einsum('bcs,bst->bct', vf, attn)            # bmm(value, attn)
    h = h.reshape(B, C, H, W)
    h = conv1x1(h, p["wp"], p["bp"])
    return h + x


def make_params(key, C):
    keys = jax.random.split(key, 10)
    s = 0.05
    return {
        "gamma": jnp.ones((C,), jnp.float32)
                 + 0.1 * jax.random.normal(keys[0], (C,), jnp.float32),
        "beta": 0.1 * jax.random.normal(keys[1], (C,), jnp.float32),
        "wq": s * jax.random.normal(keys[2], (C, C), jnp.float32),
        "bq": s * jax.random.normal(keys[3], (C,), jnp.float32),
        "wk": s * jax.random.normal(keys[4], (C, C), jnp.float32),
        "bk": s * jax.random.normal(keys[5], (C,), jnp.float32),
        "wv": s * jax.random.normal(keys[6], (C, C), jnp.float32),
        "bv": s * jax.random.normal(keys[7], (C,), jnp.float32),
        "wp": s * jax.random.normal(keys[8], (C, C), jnp.float32),
        "bp": s * jax.random.normal(keys[9], (C,), jnp.float32),
    }


if __name__ == "__main__":
    key = jax.random.PRNGKey(0)
    kx, kp = jax.random.split(key)

    # C multiple of 32 (GroupNorm) and of 128 (lane-dense channel dim on TPU).
    B, C, H, W = 2, 128, 16, 16
    x = jax.random.normal(kx, (B, C, H, W), jnp.float32)
    params = make_params(kp, C)

    ref = jax.block_until_ready(attn_block_reference(x, params))

    # multi-tile path (tq=64 -> 4 query tiles) exercises the accumulator logic
    out = jax.block_until_ready(attn_block_pallas(x, params, tq=64))
    np.testing.assert_allclose(np.asarray(out), np.asarray(ref),
                               rtol=2e-2, atol=2e-2)

    # auto tile size (tq=256 -> single tile at this S)
    out_auto = jax.block_until_ready(attn_block_pallas(x, params))
    np.testing.assert_allclose(np.asarray(out_auto), np.asarray(ref),
                               rtol=2e-2, atol=2e-2)

    print("KERNEL_OK")
</pallas_src>

<mosaic_0001>
module attributes {stable_mosaic.version = 11 : i64} {
  func.func @_attn_block_kernel(%arg0: i32, %arg1: i32, %arg2: memref<1x256x128xf32, #tpu.memory_space<vmem>>, %arg3: memref<1x128xf32, #tpu.memory_space<vmem>>, %arg4: memref<1x128xf32, #tpu.memory_space<vmem>>, %arg5: memref<128x128xbf16, #tpu.memory_space<vmem>>, %arg6: memref<1x128xf32, #tpu.memory_space<vmem>>, %arg7: memref<128x128xbf16, #tpu.memory_space<vmem>>, %arg8: memref<1x128xf32, #tpu.memory_space<vmem>>, %arg9: memref<128x128xbf16, #tpu.memory_space<vmem>>, %arg10: memref<1x128xf32, #tpu.memory_space<vmem>>, %arg11: memref<128x128xbf16, #tpu.memory_space<vmem>>, %arg12: memref<1x128xf32, #tpu.memory_space<vmem>>, %arg13: memref<128x32xf32, #tpu.memory_space<vmem>>, %arg14: memref<32x128xf32, #tpu.memory_space<vmem>>, %arg15: memref<1x256x128xf32, #tpu.memory_space<vmem>>, %arg16: memref<256x128xbf16, #tpu.memory_space<vmem>>, %arg17: memref<256x128xbf16, #tpu.memory_space<vmem>>, %arg18: memref<256x128xbf16, #tpu.memory_space<vmem>>) attributes {dimension_semantics = [#tpu.dimension_semantics<parallel>, #tpu.dimension_semantics<arbitrary>], iteration_bounds = array<i64: 2, 4>, scalar_prefetch = 0 : i64, scratch_operands = 3 : i64, tpu.core_type = #tpu.core_type<tc>, window_params = [{transform_indices = @transform_0, window_bounds = array<i64: 1, 256, 128>}, {pipeline_mode = #tpu.pipeline_mode<synchronous>, transform_indices = @transform_1, window_bounds = array<i64: 1, 128>}, {pipeline_mode = #tpu.pipeline_mode<synchronous>, transform_indices = @transform_2, window_bounds = array<i64: 1, 128>}, {pipeline_mode = #tpu.pipeline_mode<synchronous>, transform_indices = @transform_3, window_bounds = array<i64: 128, 128>}, {pipeline_mode = #tpu.pipeline_mode<synchronous>, transform_indices = @transform_4, window_bounds = array<i64: 1, 128>}, {pipeline_mode = #tpu.pipeline_mode<synchronous>, transform_indices = @transform_5, window_bounds = array<i64: 128, 128>}, {pipeline_mode = #tpu.pipeline_mode<synchronous>, transform_indices = @transform_6, window_bounds = array<i64: 1, 128>}, {pipeline_mode = #tpu.pipeline_mode<synchronous>, transform_indices = @transform_7, window_bounds = array<i64: 128, 128>}, {pipeline_mode = #tpu.pipeline_mode<synchronous>, transform_indices = @transform_8, window_bounds = array<i64: 1, 128>}, {pipeline_mode = #tpu.pipeline_mode<synchronous>, transform_indices = @transform_9, window_bounds = array<i64: 128, 128>}, {pipeline_mode = #tpu.pipeline_mode<synchronous>, transform_indices = @transform_10, window_bounds = array<i64: 1, 128>}, {pipeline_mode = #tpu.pipeline_mode<synchronous>, transform_indices = @transform_11, window_bounds = array<i64: 128, 32>}, {pipeline_mode = #tpu.pipeline_mode<synchronous>, transform_indices = @transform_12, window_bounds = array<i64: 32, 128>}, {transform_indices = @transform_13, window_bounds = array<i64: 1, 256, 128>}]} {
    %c0_i32 = arith.constant 0 : i32
    %0 = arith.cmpi eq, %arg1, %c0_i32 : i32
    %1 = arith.extui %0 : i1 to i32
    %c0_i32_0 = arith.constant 0 : i32
    %2 = arith.cmpi ne, %1, %c0_i32_0 : i32
    scf.if %2 {
      %c0_12 = arith.constant 0 : index
      %c0_13 = arith.constant 0 : index
      %c0_14 = arith.constant 0 : index
      %32 = vector.load %arg2[%c0_12, %c0_13, %c0_14] : memref<1x256x128xf32, #tpu.memory_space<vmem>>, vector<1x256x128xf32>
      %33 = vector.shape_cast %32 : vector<1x256x128xf32> to vector<256x128xf32>
      %cst_15 = arith.constant dense<0.000000e+00> : vector<128xf32>
      %34 = vector.multi_reduction <add>, %33, %cst_15 [0] : vector<256x128xf32> to vector<128xf32>
      %35 = vector.shape_cast %34 : vector<128xf32> to vector<1x128xf32>
      %c0_16 = arith.constant 0 : index
      %c0_17 = arith.constant 0 : index
      %36 = vector.load %arg13[%c0_16, %c0_17] : memref<128x32xf32, #tpu.memory_space<vmem>>, vector<128x32xf32>
      %cst_18 = arith.constant dense<0.000000e+00> : vector<1x32xf32>
      %37 = tpu.matmul %35, %36, %cst_18 {dimension_numbers = #tpu.dot_dimension_numbers<[1], [0], [0], [1], [0, 0, 1, 1], [], []>} : vector<1x128xf32>, vector<128x32xf32>, vector<1x32xf32> -> vector<1x32xf32>
      %cst_19 = arith.constant 9.765625E-4 : f32
      %38 = vector.broadcast %cst_19 : f32 to vector<1x32xf32>
      %39 = arith.mulf %37, %38 : vector<1x32xf32>
      %c0_20 = arith.constant 0 : index
      %c0_21 = arith.constant 0 : index
      %40 = vector.load %arg14[%c0_20, %c0_21] : memref<32x128xf32, #tpu.memory_space<vmem>>, vector<32x128xf32>
      %cst_22 = arith.constant dense<0.000000e+00> : vector<1x128xf32>
      %41 = tpu.matmul %39, %40, %cst_22 {dimension_numbers = #tpu.dot_dimension_numbers<[1], [0], [0], [1], [0, 0, 1, 1], [], []>} : vector<1x32xf32>, vector<32x128xf32>, vector<1x128xf32> -> vector<1x128xf32>
      %42 = vector.broadcast %41 : vector<1x128xf32> to vector<256x128xf32>
      %43 = arith.subf %33, %42 : vector<256x128xf32>
      %44 = arith.mulf %43, %43 : vector<256x128xf32>
      %cst_23 = arith.constant dense<0.000000e+00> : vector<128xf32>
      %45 = vector.multi_reduction <add>, %44, %cst_23 [0] : vector<256x128xf32> to vector<128xf32>
      %46 = vector.shape_cast %45 : vector<128xf32> to vector<1x128xf32>
      %c0_24 = arith.constant 0 : index
      %c0_25 = arith.constant 0 : index
      %47 = vector.load %arg13[%c0_24, %c0_25] : memref<128x32xf32, #tpu.memory_space<vmem>>, vector<128x32xf32>
      %cst_26 = arith.constant dense<0.000000e+00> : vector<1x32xf32>
      %48 = tpu.matmul %46, %47, %cst_26 {dimension_numbers = #tpu.dot_dimension_numbers<[1], [0], [0], [1], [0, 0, 1, 1], [], []>} : vector<1x128xf32>, vector<128x32xf32>, vector<1x32xf32> -> vector<1x32xf32>
      %cst_27 = arith.constant 9.765625E-4 : f32
      %49 = vector.broadcast %cst_27 : f32 to vector<1x32xf32>
      %50 = arith.mulf %48, %49 : vector<1x32xf32>
      %cst_28 = arith.constant 9.99999997E-7 : f32
      %51 = vector.broadcast %cst_28 : f32 to vector<1x32xf32>
      %52 = arith.addf %50, %51 : vector<1x32xf32>
      %53 = math.rsqrt %52 : vector<1x32xf32>
      %c0_29 = arith.constant 0 : index
      %c0_30 = arith.constant 0 : index
      %54 = vector.load %arg14[%c0_29, %c0_30] : memref<32x128xf32, #tpu.memory_space<vmem>>, vector<32x128xf32>
      %cst_31 = arith.constant dense<0.000000e+00> : vector<1x128xf32>
      %55 = tpu.matmul %53, %54, %cst_31 {dimension_numbers = #tpu.dot_dimension_numbers<[1], [0], [0], [1], [0, 0, 1, 1], [], []>} : vector<1x32xf32>, vector<32x128xf32>, vector<1x128xf32> -> vector<1x128xf32>
      %56 = vector.broadcast %55 : vector<1x128xf32> to vector<256x128xf32>
      %57 = arith.mulf %43, %56 : vector<256x128xf32>
      %c0_32 = arith.constant 0 : index
      %c0_33 = arith.constant 0 : index
      %58 = vector.load %arg3[%c0_32, %c0_33] : memref<1x128xf32, #tpu.memory_space<vmem>>, vector<1x128xf32>
      %59 = vector.broadcast %58 : vector<1x128xf32> to vector<256x128xf32>
      %60 = arith.mulf %57, %59 : vector<256x128xf32>
      %c0_34 = arith.constant 0 : index
      %c0_35 = arith.constant 0 : index
      %61 = vector.load %arg4[%c0_34, %c0_35] : memref<1x128xf32, #tpu.memory_space<vmem>>, vector<1x128xf32>
      %62 = vector.broadcast %61 : vector<1x128xf32> to vector<256x128xf32>
      %63 = arith.addf %60, %62 : vector<256x128xf32>
      %64 = arith.truncf %63 : vector<256x128xf32> to vector<256x128xbf16>
      %c0_36 = arith.constant 0 : index
      %c0_37 = arith.constant 0 : index
      %65 = vector.load %arg5[%c0_36, %c0_37] : memref<128x128xbf16, #tpu.memory_space<vmem>>, vector<128x128xbf16>
      %cst_38 = arith.constant dense<0.000000e+00> : vector<256x128xf32>
      %66 = tpu.matmul %64, %65, %cst_38 {dimension_numbers = #tpu.dot_dimension_numbers<[1], [0], [0], [1], [0, 0, 1, 1], [], []>} : vector<256x128xbf16>, vector<128x128xbf16>, vector<256x128xf32> -> vector<256x128xf32>
      %c0_39 = arith.constant 0 : index
      %c0_40 = arith.constant 0 : index
      %67 = vector.load %arg6[%c0_39, %c0_40] : memref<1x128xf32, #tpu.memory_space<vmem>>, vector<1x128xf32>
      %68 = vector.broadcast %67 : vector<1x128xf32> to vector<256x128xf32>
      %69 = arith.addf %66, %68 : vector<256x128xf32>
      %70 = arith.truncf %69 : vector<256x128xf32> to vector<256x128xbf16>
      %c0_41 = arith.constant 0 : index
      %c0_42 = arith.constant 0 : index
      %71 = vector.load %arg16[%c0_41, %c0_42] : memref<256x128xbf16, #tpu.memory_space<vmem>>, vector<256x128xbf16>
      tpu.vector_store %arg16[%c0_41, %c0_42], %70 {strides = array<i32>} : memref<256x128xbf16, #tpu.memory_space<vmem>>, vector<256x128xbf16>,
      %c0_43 = arith.constant 0 : index
      %c0_44 = arith.constant 0 : index
      %72 = vector.load %arg7[%c0_43, %c0_44] : memref<128x128xbf16, #tpu.memory_space<vmem>>, vector<128x128xbf16>
      %cst_45 = arith.constant dense<0.000000e+00> : vector<256x128xf32>
      %73 = tpu.matmul %64, %72, %cst_45 {dimension_numbers = #tpu.dot_dimension_numbers<[1], [0], [0], [1], [0, 0, 1, 1], [], []>} : vector<256x128xbf16>, vector<128x128xbf16>, vector<256x128xf32> -> vector<256x128xf32>
      %c0_46 = arith.constant 0 : index
      %c0_47 = arith.constant 0 : index
      %74 = vector.load %arg8[%c0_46, %c0_47] : memref<1x128xf32, #tpu.memory_space<vmem>>, vector<1x128xf32>
      %75 = vector.broadcast %74 : vector<1x128xf32> to vector<256x128xf32>
      %76 = arith.addf %73, %75 : vector<256x128xf32>
      %77 = arith.truncf %76 : vector<256x128xf32> to vector<256x128xbf16>
      %c0_48 = arith.constant 0 : index
      %c0_49 = arith.constant 0 : index
      %78 = vector.load %arg17[%c0_48, %c0_49] : memref<256x128xbf16, #tpu.memory_space<vmem>>, vector<256x128xbf16>
      tpu.vector_store %arg17[%c0_48, %c0_49], %77 {strides = array<i32>} : memref<256x128xbf16, #tpu.memory_space<vmem>>, vector<256x128xbf16>,
      %c0_50 = arith.constant 0 : index
      %c0_51 = arith.constant 0 : index
      %79 = vector.load %arg9[%c0_50, %c0_51] : memref<128x128xbf16, #tpu.memory_space<vmem>>, vector<128x128xbf16>
      %cst_52 = arith.constant dense<0.000000e+00> : vector<256x128xf32>
      %80 = tpu.matmul %64, %79, %cst_52 {dimension_numbers = #tpu.dot_dimension_numbers<[1], [0], [0], [1], [0, 0, 1, 1], [], []>} : vector<256x128xbf16>, vector<128x128xbf16>, vector<256x128xf32> -> vector<256x128xf32>
      %c0_53 = arith.constant 0 : index
      %c0_54 = arith.constant 0 : index
      %81 = vector.load %arg10[%c0_53, %c0_54] : memref<1x128xf32, #tpu.memory_space<vmem>>, vector<1x128xf32>
      %82 = vector.broadcast %81 : vector<1x128xf32> to vector<256x128xf32>
      %83 = arith.addf %80, %82 : vector<256x128xf32>
      %84 = arith.truncf %83 : vector<256x128xf32> to vector<256x128xbf16>
      %c0_55 = arith.constant 0 : index
      %c0_56 = arith.constant 0 : index
      %85 = vector.load %arg18[%c0_55, %c0_56] : memref<256x128xbf16, #tpu.memory_space<vmem>>, vector<256x128xbf16>
      tpu.vector_store %arg18[%c0_55, %c0_56], %84 {strides = array<i32>} : memref<256x128xbf16, #tpu.memory_space<vmem>>, vector<256x128xbf16>,
    } else {
    }
    %c64_i32 = arith.constant 64 : i32
    %3 = arith.muli %arg1, %c64_i32 : i32
    %4 = tpu.assume_multiple %3, 64 : i32
    %5 = arith.index_cast %4 : i32 to index
    %c0 = arith.constant 0 : index
    %6 = vector.load %arg16[%5, %c0] : memref<256x128xbf16, #tpu.memory_space<vmem>>, vector<64x128xbf16>
    %c0_1 = arith.constant 0 : index
    %c0_2 = arith.constant 0 : index
    %7 = vector.load %arg17[%c0_1, %c0_2] : memref<256x128xbf16, #tpu.memory_space<vmem>>, vector<256x128xbf16>
    %cst = arith.constant dense<0.000000e+00> : vector<256x64xf32>
    %8 = tpu.matmul %7, %6, %cst {dimension_numbers = #tpu.dot_dimension_numbers<[1], [1], [0], [0], [0, 0, 1, 0], [], []>} : vector<256x128xbf16>, vector<64x128xbf16>, vector<256x64xf32> -> vector<256x64xf32>
    %cst_3 = arith.constant dense<0xFF800000> : vector<64xf32>
    %9 = vector.multi_reduction <maximumf>, %8, %cst_3 [0] : vector<256x64xf32> to vector<64xf32>
    %10 = vector.shape_cast %9 : vector<64xf32> to vector<1x64xf32>
    %11 = vector.broadcast %10 : vector<1x64xf32> to vector<256x64xf32>
    %12 = arith.subf %8, %11 : vector<256x64xf32>
    %13 = math.exp %12 : vector<256x64xf32>
    %cst_4 = arith.constant dense<0.000000e+00> : vector<64xf32>
    %14 = vector.multi_reduction <add>, %13, %cst_4 [0] : vector<256x64xf32> to vector<64xf32>
    %15 = vector.shape_cast %14 : vector<64xf32> to vector<1x64xf32>
    %16 = tpu.reciprocal %15 {approx = true} : vector<1x64xf32> -> vector<1x64xf32>
    %17 = vector.broadcast %16 : vector<1x64xf32> to vector<256x64xf32>
    %18 = arith.mulf %13, %17 : vector<256x64xf32>
    %19 = arith.truncf %18 : vector<256x64xf32> to vector<256x64xbf16>
    %20 = arith.index_cast %4 : i32 to index
    %c0_5 = arith.constant 0 : index
    %21 = vector.load %arg18[%20, %c0_5] : memref<256x128xbf16, #tpu.memory_space<vmem>>, vector<64x128xbf16>
    %cst_6 = arith.constant dense<0.000000e+00> : vector<256x128xf32>
    %22 = tpu.matmul %19, %21, %cst_6 {dimension_numbers = #tpu.dot_dimension_numbers<[1], [0], [0], [1], [0, 0, 1, 1], [], []>} : vector<256x64xbf16>, vector<64x128xbf16>, vector<256x128xf32> -> vector<256x128xf32>
    %c0_i32_7 = arith.constant 0 : i32
    %23 = arith.cmpi eq, %arg1, %c0_i32_7 : i32
    %24 = arith.extui %23 : i1 to i32
    %c0_i32_8 = arith.constant 0 : i32
    %25 = arith.cmpi ne, %24, %c0_i32_8 : i32
    scf.if %25 {
      %c0_12 = arith.constant 0 : index
      %c0_13 = arith.constant 0 : index
      %c0_14 = arith.constant 0 : index
      %32 = vector.load %arg15[%c0_12, %c0_13, %c0_14] : memref<1x256x128xf32, #tpu.memory_space<vmem>>, vector<1x256x128xf32>
      %33 = vector.shape_cast %32 : vector<1x256x128xf32> to vector<256x128xf32>
      %34 = vector.shape_cast %22 : vector<256x128xf32> to vector<1x256x128xf32>
      tpu.vector_store %arg15[%c0_12, %c0_13, %c0_14], %34 {strides = array<i32>} : memref<1x256x128xf32, #tpu.memory_space<vmem>>, vector<1x256x128xf32>,
    } else {
    }
    %c0_i32_9 = arith.constant 0 : i32
    %26 = arith.cmpi sgt, %arg1, %c0_i32_9 : i32
    %27 = arith.extui %26 : i1 to i32
    %c0_i32_10 = arith.constant 0 : i32
    %28 = arith.cmpi ne, %27, %c0_i32_10 : i32
    scf.if %28 {
      %c0_12 = arith.constant 0 : index
      %c0_13 = arith.constant 0 : index
      %c0_14 = arith.constant 0 : index
      %32 = vector.load %arg15[%c0_12, %c0_13, %c0_14] : memref<1x256x128xf32, #tpu.memory_space<vmem>>, vector<1x256x128xf32>
      %33 = vector.shape_cast %32 : vector<1x256x128xf32> to vector<256x128xf32>
      %34 = arith.addf %33, %22 : vector<256x128xf32>
      %c0_15 = arith.constant 0 : index
      %c0_16 = arith.constant 0 : index
      %c0_17 = arith.constant 0 : index
      %35 = vector.load %arg15[%c0_15, %c0_16, %c0_17] : memref<1x256x128xf32, #tpu.memory_space<vmem>>, vector<1x256x128xf32>
      %36 = vector.shape_cast %35 : vector<1x256x128xf32> to vector<256x128xf32>
      %37 = vector.shape_cast %34 : vector<256x128xf32> to vector<1x256x128xf32>
      tpu.vector_store %arg15[%c0_15, %c0_16, %c0_17], %37 {strides = array<i32>} : memref<1x256x128xf32, #tpu.memory_space<vmem>>, vector<1x256x128xf32>,
    } else {
    }
    %c3_i32 = arith.constant 3 : i32
    %29 = arith.cmpi eq, %arg1, %c3_i32 : i32
    %30 = arith.extui %29 : i1 to i32
    %c0_i32_11 = arith.constant 0 : i32
    %31 = arith.cmpi ne, %30, %c0_i32_11 : i32
    scf.if %31 {
      %c0_12 = arith.constant 0 : index
      %c0_13 = arith.constant 0 : index
      %c0_14 = arith.constant 0 : index
      %32 = vector.load %arg15[%c0_12, %c0_13, %c0_14] : memref<1x256x128xf32, #tpu.memory_space<vmem>>, vector<1x256x128xf32>
      %33 = vector.shape_cast %32 : vector<1x256x128xf32> to vector<256x128xf32>
      %34 = arith.truncf %33 : vector<256x128xf32> to vector<256x128xbf16>
      %c0_15 = arith.constant 0 : index
      %c0_16 = arith.constant 0 : index
      %35 = vector.load %arg11[%c0_15, %c0_16] : memref<128x128xbf16, #tpu.memory_space<vmem>>, vector<128x128xbf16>
      %cst_17 = arith.constant dense<0.000000e+00> : vector<256x128xf32>
      %36 = tpu.matmul %34, %35, %cst_17 {dimension_numbers = #tpu.dot_dimension_numbers<[1], [0], [0], [1], [0, 0, 1, 1], [], []>} : vector<256x128xbf16>, vector<128x128xbf16>, vector<256x128xf32> -> vector<256x128xf32>
      %c0_18 = arith.constant 0 : index
      %c0_19 = arith.constant 0 : index
      %37 = vector.load %arg12[%c0_18, %c0_19] : memref<1x128xf32, #tpu.memory_space<vmem>>, vector<1x128xf32>
      %38 = vector.broadcast %37 : vector<1x128xf32> to vector<256x128xf32>
      %39 = arith.addf %36, %38 : vector<256x128xf32>
      %c0_20 = arith.constant 0 : index
      %c0_21 = arith.constant 0 : index
      %c0_22 = arith.constant 0 : index
      %40 = vector.load %arg2[%c0_20, %c0_21, %c0_22] : memref<1x256x128xf32, #tpu.memory_space<vmem>>, vector<1x256x128xf32>
      %41 = vector.shape_cast %40 : vector<1x256x128xf32> to vector<256x128xf32>
      %42 = arith.addf %39, %41 : vector<256x128xf32>
      %c0_23 = arith.constant 0 : index
      %c0_24 = arith.constant 0 : index
      %c0_25 = arith.constant 0 : index
      %43 = vector.load %arg15[%c0_23, %c0_24, %c0_25] : memref<1x256x128xf32, #tpu.memory_space<vmem>>, vector<1x256x128xf32>
      %44 = vector.shape_cast %43 : vector<1x256x128xf32> to vector<256x128xf32>
      %45 = vector.shape_cast %42 : vector<256x128xf32> to vector<1x256x128xf32>
      tpu.vector_store %arg15[%c0_23, %c0_24, %c0_25], %45 {strides = array<i32>} : memref<1x256x128xf32, #tpu.memory_space<vmem>>, vector<1x256x128xf32>,
    } else {
    }
    return
  }
  func.func @transform_0(%arg0: i32, %arg1: i32) -> (i32, i32, i32) {
    %c0_i32 = arith.constant 0 : i32
    %c0_i32_0 = arith.constant 0 : i32
    %c0_i32_1 = arith.constant 0 : i32
    return %arg0, %c0_i32, %c0_i32_0 : i32, i32, i32
  }
  func.func @transform_1(%arg0: i32, %arg1: i32) -> (i32, i32) {
    %c0_i32 = arith.constant 0 : i32
    %c0_i32_0 = arith.constant 0 : i32
    %c0_i32_1 = arith.constant 0 : i32
    return %c0_i32, %c0_i32_0 : i32, i32
  }
  func.func @transform_2(%arg0: i32, %arg1: i32) -> (i32, i32) {
    %c0_i32 = arith.constant 0 : i32
    %c0_i32_0 = arith.constant 0 : i32
    %c0_i32_1 = arith.constant 0 : i32
    return %c0_i32, %c0_i32_0 : i32, i32
  }
  func.func @transform_3(%arg0: i32, %arg1: i32) -> (i32, i32) {
    %c0_i32 = arith.constant 0 : i32
    %c0_i32_0 = arith.constant 0 : i32
    %c0_i32_1 = arith.constant 0 : i32
    return %c0_i32, %c0_i32_0 : i32, i32
  }
  func.func @transform_4(%arg0: i32, %arg1: i32) -> (i32, i32) {
    %c0_i32 = arith.constant 0 : i32
    %c0_i32_0 = arith.constant 0 : i32
    %c0_i32_1 = arith.constant 0 : i32
    return %c0_i32, %c0_i32_0 : i32, i32
  }
  func.func @transform_5(%arg0: i32, %arg1: i32) -> (i32, i32) {
    %c0_i32 = arith.constant 0 : i32
    %c0_i32_0 = arith.constant 0 : i32
    %c0_i32_1 = arith.constant 0 : i32
    return %c0_i32, %c0_i32_0 : i32, i32
  }
  func.func @transform_6(%arg0: i32, %arg1: i32) -> (i32, i32) {
    %c0_i32 = arith.constant 0 : i32
    %c0_i32_0 = arith.constant 0 : i32
    %c0_i32_1 = arith.constant 0 : i32
    return %c0_i32, %c0_i32_0 : i32, i32
  }
  func.func @transform_7(%arg0: i32, %arg1: i32) -> (i32, i32) {
    %c0_i32 = arith.constant 0 : i32
    %c0_i32_0 = arith.constant 0 : i32
    %c0_i32_1 = arith.constant 0 : i32
    return %c0_i32, %c0_i32_0 : i32, i32
  }
  func.func @transform_8(%arg0: i32, %arg1: i32) -> (i32, i32) {
    %c0_i32 = arith.constant 0 : i32
    %c0_i32_0 = arith.constant 0 : i32
    %c0_i32_1 = arith.constant 0 : i32
    return %c0_i32, %c0_i32_0 : i32, i32
  }
  func.func @transform_9(%arg0: i32, %arg1: i32) -> (i32, i32) {
    %c0_i32 = arith.constant 0 : i32
    %c0_i32_0 = arith.constant 0 : i32
    %c0_i32_1 = arith.constant 0 : i32
    return %c0_i32, %c0_i32_0 : i32, i32
  }
  func.func @transform_10(%arg0: i32, %arg1: i32) -> (i32, i32) {
    %c0_i32 = arith.constant 0 : i32
    %c0_i32_0 = arith.constant 0 : i32
    %c0_i32_1 = arith.constant 0 : i32
    return %c0_i32, %c0_i32_0 : i32, i32
  }
  func.func @transform_11(%arg0: i32, %arg1: i32) -> (i32, i32) {
    %c0_i32 = arith.constant 0 : i32
    %c0_i32_0 = arith.constant 0 : i32
    %c0_i32_1 = arith.constant 0 : i32
    return %c0_i32, %c0_i32_0 : i32, i32
  }
  func.func @transform_12(%arg0: i32, %arg1: i32) -> (i32, i32) {
    %c0_i32 = arith.constant 0 : i32
    %c0_i32_0 = arith.constant 0 : i32
    %c0_i32_1 = arith.constant 0 : i32
    return %c0_i32, %c0_i32_0 : i32, i32
  }
  func.func @transform_13(%arg0: i32, %arg1: i32) -> (i32, i32, i32) {
    %c0_i32 = arith.constant 0 : i32
    %c0_i32_0 = arith.constant 0 : i32
    %c0_i32_1 = arith.constant 0 : i32
    return %arg0, %c0_i32, %c0_i32_0 : i32, i32, i32
  }
}

module attributes {stable_mosaic.version = 11 : i64} {
  func.func @_attn_block_kernel(%arg0: i32, %arg1: i32, %arg2: memref<1x256x128xf32, #tpu.memory_space<vmem>>, %arg3: memref<1x128xf32, #tpu.memory_space<vmem>>, %arg4: memref<1x128xf32, #tpu.memory_space<vmem>>, %arg5: memref<128x128xbf16, #tpu.memory_space<vmem>>, %arg6: memref<1x128xf32, #tpu.memory_space<vmem>>, %arg7: memref<128x128xbf16, #tpu.memory_space<vmem>>, %arg8: memref<1x128xf32, #tpu.memory_space<vmem>>, %arg9: memref<128x128xbf16, #tpu.memory_space<vmem>>, %arg10: memref<1x128xf32, #tpu.memory_space<vmem>>, %arg11: memref<128x128xbf16, #tpu.memory_space<vmem>>, %arg12: memref<1x128xf32, #tpu.memory_space<vmem>>, %arg13: memref<128x32xf32, #tpu.memory_space<vmem>>, %arg14: memref<32x128xf32, #tpu.memory_space<vmem>>, %arg15: memref<1x256x128xf32, #tpu.memory_space<vmem>>, %arg16: memref<256x128xbf16, #tpu.memory_space<vmem>>, %arg17: memref<256x128xbf16, #tpu.memory_space<vmem>>, %arg18: memref<256x128xbf16, #tpu.memory_space<vmem>>) attributes {dimension_semantics = [#tpu.dimension_semantics<parallel>, #tpu.dimension_semantics<arbitrary>], iteration_bounds = array<i64: 2, 4>, scalar_prefetch = 0 : i64, scratch_operands = 3 : i64, tpu.core_type = #tpu.core_type<tc>, window_params = [{transform_indices = @transform_0, window_bounds = array<i64: 1, 256, 128>}, {pipeline_mode = #tpu.pipeline_mode<synchronous>, transform_indices = @transform_1, window_bounds = array<i64: 1, 128>}, {pipeline_mode = #tpu.pipeline_mode<synchronous>, transform_indices = @transform_2, window_bounds = array<i64: 1, 128>}, {pipeline_mode = #tpu.pipeline_mode<synchronous>, transform_indices = @transform_3, window_bounds = array<i64: 128, 128>}, {pipeline_mode = #tpu.pipeline_mode<synchronous>, transform_indices = @transform_4, window_bounds = array<i64: 1, 128>}, {pipeline_mode = #tpu.pipeline_mode<synchronous>, transform_indices = @transform_5, window_bounds = array<i64: 128, 128>}, {pipeline_mode = #tpu.pipeline_mode<synchronous>, transform_indices = @transform_6, window_bounds = array<i64: 1, 128>}, {pipeline_mode = #tpu.pipeline_mode<synchronous>, transform_indices = @transform_7, window_bounds = array<i64: 128, 128>}, {pipeline_mode = #tpu.pipeline_mode<synchronous>, transform_indices = @transform_8, window_bounds = array<i64: 1, 128>}, {pipeline_mode = #tpu.pipeline_mode<synchronous>, transform_indices = @transform_9, window_bounds = array<i64: 128, 128>}, {pipeline_mode = #tpu.pipeline_mode<synchronous>, transform_indices = @transform_10, window_bounds = array<i64: 1, 128>}, {pipeline_mode = #tpu.pipeline_mode<synchronous>, transform_indices = @transform_11, window_bounds = array<i64: 128, 32>}, {pipeline_mode = #tpu.pipeline_mode<synchronous>, transform_indices = @transform_12, window_bounds = array<i64: 32, 128>}, {transform_indices = @transform_13, window_bounds = array<i64: 1, 256, 128>}]} {
    %c0_i32 = arith.constant 0 : i32
    %0 = arith.cmpi eq, %arg1, %c0_i32 : i32
    %1 = arith.extui %0 : i1 to i32
    %c0_i32_0 = arith.constant 0 : i32
    %2 = arith.cmpi ne, %1, %c0_i32_0 : i32
    scf.if %2 {
      %c0_12 = arith.constant 0 : index
      %c0_13 = arith.constant 0 : index
      %c0_14 = arith.constant 0 : index
      %32 = vector.load %arg2[%c0_12, %c0_13, %c0_14] : memref<1x256x128xf32, #tpu.memory_space<vmem>>, vector<1x256x128xf32>
      %33 = vector.shape_cast %32 : vector<1x256x128xf32> to vector<256x128xf32>
      %cst_15 = arith.constant dense<0.000000e+00> : vector<128xf32>
      %34 = vector.multi_reduction <add>, %33, %cst_15 [0] : vector<256x128xf32> to vector<128xf32>
      %35 = vector.shape_cast %34 : vector<128xf32> to vector<1x128xf32>
      %c0_16 = arith.constant 0 : index
      %c0_17 = arith.constant 0 : index
      %36 = vector.load %arg13[%c0_16, %c0_17] : memref<128x32xf32, #tpu.memory_space<vmem>>, vector<128x32xf32>
      %cst_18 = arith.constant dense<0.000000e+00> : vector<1x32xf32>
      %37 = tpu.matmul %35, %36, %cst_18 {dimension_numbers = #tpu.dot_dimension_numbers<[1], [0], [0], [1], [0, 0, 1, 1], [], []>} : vector<1x128xf32>, vector<128x32xf32>, vector<1x32xf32> -> vector<1x32xf32>
      %cst_19 = arith.constant 9.765625E-4 : f32
      %38 = vector.broadcast %cst_19 : f32 to vector<1x32xf32>
      %39 = arith.mulf %37, %38 : vector<1x32xf32>
      %c0_20 = arith.constant 0 : index
      %c0_21 = arith.constant 0 : index
      %40 = vector.load %arg14[%c0_20, %c0_21] : memref<32x128xf32, #tpu.memory_space<vmem>>, vector<32x128xf32>
      %cst_22 = arith.constant dense<0.000000e+00> : vector<1x128xf32>
      %41 = tpu.matmul %39, %40, %cst_22 {dimension_numbers = #tpu.dot_dimension_numbers<[1], [0], [0], [1], [0, 0, 1, 1], [], []>} : vector<1x32xf32>, vector<32x128xf32>, vector<1x128xf32> -> vector<1x128xf32>
      %42 = vector.broadcast %41 : vector<1x128xf32> to vector<256x128xf32>
      %43 = arith.subf %33, %42 : vector<256x128xf32>
      %44 = arith.mulf %43, %43 : vector<256x128xf32>
      %cst_23 = arith.constant dense<0.000000e+00> : vector<128xf32>
      %45 = vector.multi_reduction <add>, %44, %cst_23 [0] : vector<256x128xf32> to vector<128xf32>
      %46 = vector.shape_cast %45 : vector<128xf32> to vector<1x128xf32>
      %c0_24 = arith.constant 0 : index
      %c0_25 = arith.constant 0 : index
      %47 = vector.load %arg13[%c0_24, %c0_25] : memref<128x32xf32, #tpu.memory_space<vmem>>, vector<128x32xf32>
      %cst_26 = arith.constant dense<0.000000e+00> : vector<1x32xf32>
      %48 = tpu.matmul %46, %47, %cst_26 {dimension_numbers = #tpu.dot_dimension_numbers<[1], [0], [0], [1], [0, 0, 1, 1], [], []>} : vector<1x128xf32>, vector<128x32xf32>, vector<1x32xf32> -> vector<1x32xf32>
      %cst_27 = arith.constant 9.765625E-4 : f32
      %49 = vector.broadcast %cst_27 : f32 to vector<1x32xf32>
      %50 = arith.mulf %48, %49 : vector<1x32xf32>
      %cst_28 = arith.constant 9.99999997E-7 : f32
      %51 = vector.broadcast %cst_28 : f32 to vector<1x32xf32>
      %52 = arith.addf %50, %51 : vector<1x32xf32>
      %53 = math.rsqrt %52 : vector<1x32xf32>
      %c0_29 = arith.constant 0 : index
      %c0_30 = arith.constant 0 : index
      %54 = vector.load %arg14[%c0_29, %c0_30] : memref<32x128xf32, #tpu.memory_space<vmem>>, vector<32x128xf32>
      %cst_31 = arith.constant dense<0.000000e+00> : vector<1x128xf32>
      %55 = tpu.matmul %53, %54, %cst_31 {dimension_numbers = #tpu.dot_dimension_numbers<[1], [0], [0], [1], [0, 0, 1, 1], [], []>} : vector<1x32xf32>, vector<32x128xf32>, vector<1x128xf32> -> vector<1x128xf32>
      %56 = vector.broadcast %55 : vector<1x128xf32> to vector<256x128xf32>
      %57 = arith.mulf %43, %56 : vector<256x128xf32>
      %c0_32 = arith.constant 0 : index
      %c0_33 = arith.constant 0 : index
      %58 = vector.load %arg3[%c0_32, %c0_33] : memref<1x128xf32, #tpu.memory_space<vmem>>, vector<1x128xf32>
      %59 = vector.broadcast %58 : vector<1x128xf32> to vector<256x128xf32>
      %60 = arith.mulf %57, %59 : vector<256x128xf32>
      %c0_34 = arith.constant 0 : index
      %c0_35 = arith.constant 0 : index
      %61 = vector.load %arg4[%c0_34, %c0_35] : memref<1x128xf32, #tpu.memory_space<vmem>>, vector<1x128xf32>
      %62 = vector.broadcast %61 : vector<1x128xf32> to vector<256x128xf32>
      %63 = arith.addf %60, %62 : vector<256x128xf32>
      %64 = arith.truncf %63 : vector<256x128xf32> to vector<256x128xbf16>
      %c0_36 = arith.constant 0 : index
      %c0_37 = arith.constant 0 : index
      %65 = vector.load %arg5[%c0_36, %c0_37] : memref<128x128xbf16, #tpu.memory_space<vmem>>, vector<128x128xbf16>
      %cst_38 = arith.constant dense<0.000000e+00> : vector<256x128xf32>
      %66 = tpu.matmul %64, %65, %cst_38 {dimension_numbers = #tpu.dot_dimension_numbers<[1], [0], [0], [1], [0, 0, 1, 1], [], []>} : vector<256x128xbf16>, vector<128x128xbf16>, vector<256x128xf32> -> vector<256x128xf32>
      %c0_39 = arith.constant 0 : index
      %c0_40 = arith.constant 0 : index
      %67 = vector.load %arg6[%c0_39, %c0_40] : memref<1x128xf32, #tpu.memory_space<vmem>>, vector<1x128xf32>
      %68 = vector.broadcast %67 : vector<1x128xf32> to vector<256x128xf32>
      %69 = arith.addf %66, %68 : vector<256x128xf32>
      %70 = arith.truncf %69 : vector<256x128xf32> to vector<256x128xbf16>
      %c0_41 = arith.constant 0 : index
      %c0_42 = arith.constant 0 : index
      %71 = vector.load %arg16[%c0_41, %c0_42] : memref<256x128xbf16, #tpu.memory_space<vmem>>, vector<256x128xbf16>
      tpu.vector_store %arg16[%c0_41, %c0_42], %70 {strides = array<i32>} : memref<256x128xbf16, #tpu.memory_space<vmem>>, vector<256x128xbf16>,
      %c0_43 = arith.constant 0 : index
      %c0_44 = arith.constant 0 : index
      %72 = vector.load %arg7[%c0_43, %c0_44] : memref<128x128xbf16, #tpu.memory_space<vmem>>, vector<128x128xbf16>
      %cst_45 = arith.constant dense<0.000000e+00> : vector<256x128xf32>
      %73 = tpu.matmul %64, %72, %cst_45 {dimension_numbers = #tpu.dot_dimension_numbers<[1], [0], [0], [1], [0, 0, 1, 1], [], []>} : vector<256x128xbf16>, vector<128x128xbf16>, vector<256x128xf32> -> vector<256x128xf32>
      %c0_46 = arith.constant 0 : index
      %c0_47 = arith.constant 0 : index
      %74 = vector.load %arg8[%c0_46, %c0_47] : memref<1x128xf32, #tpu.memory_space<vmem>>, vector<1x128xf32>
      %75 = vector.broadcast %74 : vector<1x128xf32> to vector<256x128xf32>
      %76 = arith.addf %73, %75 : vector<256x128xf32>
      %77 = arith.truncf %76 : vector<256x128xf32> to vector<256x128xbf16>
      %c0_48 = arith.constant 0 : index
      %c0_49 = arith.constant 0 : index
      %78 = vector.load %arg17[%c0_48, %c0_49] : memref<256x128xbf16, #tpu.memory_space<vmem>>, vector<256x128xbf16>
      tpu.vector_store %arg17[%c0_48, %c0_49], %77 {strides = array<i32>} : memref<256x128xbf16, #tpu.memory_space<vmem>>, vector<256x128xbf16>,
      %c0_50 = arith.constant 0 : index
      %c0_51 = arith.constant 0 : index
      %79 = vector.load %arg9[%c0_50, %c0_51] : memref<128x128xbf16, #tpu.memory_space<vmem>>, vector<128x128xbf16>
      %cst_52 = arith.constant dense<0.000000e+00> : vector<256x128xf32>
      %80 = tpu.matmul %64, %79, %cst_52 {dimension_numbers = #tpu.dot_dimension_numbers<[1], [0], [0], [1], [0, 0, 1, 1], [], []>} : vector<256x128xbf16>, vector<128x128xbf16>, vector<256x128xf32> -> vector<256x128xf32>
      %c0_53 = arith.constant 0 : index
      %c0_54 = arith.constant 0 : index
      %81 = vector.load %arg10[%c0_53, %c0_54] : memref<1x128xf32, #tpu.memory_space<vmem>>, vector<1x128xf32>
      %82 = vector.broadcast %81 : vector<1x128xf32> to vector<256x128xf32>
      %83 = arith.addf %80, %82 : vector<256x128xf32>
      %84 = arith.truncf %83 : vector<256x128xf32> to vector<256x128xbf16>
      %c0_55 = arith.constant 0 : index
      %c0_56 = arith.constant 0 : index
      %85 = vector.load %arg18[%c0_55, %c0_56] : memref<256x128xbf16, #tpu.memory_space<vmem>>, vector<256x128xbf16>
      tpu.vector_store %arg18[%c0_55, %c0_56], %84 {strides = array<i32>} : memref<256x128xbf16, #tpu.memory_space<vmem>>, vector<256x128xbf16>,
    } else {
    }
    %c64_i32 = arith.constant 64 : i32
    %3 = arith.muli %arg1, %c64_i32 : i32
    %4 = tpu.assume_multiple %3, 64 : i32
    %5 = arith.index_cast %4 : i32 to index
    %c0 = arith.constant 0 : index
    %6 = vector.load %arg16[%5, %c0] : memref<256x128xbf16, #tpu.memory_space<vmem>>, vector<64x128xbf16>
    %c0_1 = arith.constant 0 : index
    %c0_2 = arith.constant 0 : index
    %7 = vector.load %arg17[%c0_1, %c0_2] : memref<256x128xbf16, #tpu.memory_space<vmem>>, vector<256x128xbf16>
    %cst = arith.constant dense<0.000000e+00> : vector<256x64xf32>
    %8 = tpu.matmul %7, %6, %cst {dimension_numbers = #tpu.dot_dimension_numbers<[1], [1], [0], [0], [0, 0, 1, 0], [], []>} : vector<256x128xbf16>, vector<64x128xbf16>, vector<256x64xf32> -> vector<256x64xf32>
    %cst_3 = arith.constant dense<0xFF800000> : vector<64xf32>
    %9 = vector.multi_reduction <maximumf>, %8, %cst_3 [0] : vector<256x64xf32> to vector<64xf32>
    %10 = vector.shape_cast %9 : vector<64xf32> to vector<1x64xf32>
    %11 = vector.broadcast %10 : vector<1x64xf32> to vector<256x64xf32>
    %12 = arith.subf %8, %11 : vector<256x64xf32>
    %13 = math.exp %12 : vector<256x64xf32>
    %cst_4 = arith.constant dense<0.000000e+00> : vector<64xf32>
    %14 = vector.multi_reduction <add>, %13, %cst_4 [0] : vector<256x64xf32> to vector<64xf32>
    %15 = vector.shape_cast %14 : vector<64xf32> to vector<1x64xf32>
    %16 = tpu.reciprocal %15 {approx = true} : vector<1x64xf32> -> vector<1x64xf32>
    %17 = vector.broadcast %16 : vector<1x64xf32> to vector<256x64xf32>
    %18 = arith.mulf %13, %17 : vector<256x64xf32>
    %19 = arith.truncf %18 : vector<256x64xf32> to vector<256x64xbf16>
    %20 = arith.index_cast %4 : i32 to index
    %c0_5 = arith.constant 0 : index
    %21 = vector.load %arg18[%20, %c0_5] : memref<256x128xbf16, #tpu.memory_space<vmem>>, vector<64x128xbf16>
    %cst_6 = arith.constant dense<0.000000e+00> : vector<256x128xf32>
    %22 = tpu.matmul %19, %21, %cst_6 {dimension_numbers = #tpu.dot_dimension_numbers<[1], [0], [0], [1], [0, 0, 1, 1], [], []>} : vector<256x64xbf16>, vector<64x128xbf16>, vector<256x128xf32> -> vector<256x128xf32>
    %c0_i32_7 = arith.constant 0 : i32
    %23 = arith.cmpi eq, %arg1, %c0_i32_7 : i32
    %24 = arith.extui %23 : i1 to i32
    %c0_i32_8 = arith.constant 0 : i32
    %25 = arith.cmpi ne, %24, %c0_i32_8 : i32
    scf.if %25 {
      %c0_12 = arith.constant 0 : index
      %c0_13 = arith.constant 0 : index
      %c0_14 = arith.constant 0 : index
      %32 = vector.load %arg15[%c0_12, %c0_13, %c0_14] : memref<1x256x128xf32, #tpu.memory_space<vmem>>, vector<1x256x128xf32>
      %33 = vector.shape_cast %32 : vector<1x256x128xf32> to vector<256x128xf32>
      %34 = vector.shape_cast %22 : vector<256x128xf32> to vector<1x256x128xf32>
      tpu.vector_store %arg15[%c0_12, %c0_13, %c0_14], %34 {strides = array<i32>} : memref<1x256x128xf32, #tpu.memory_space<vmem>>, vector<1x256x128xf32>,
    } else {
    }
    %c0_i32_9 = arith.constant 0 : i32
    %26 = arith.cmpi sgt, %arg1, %c0_i32_9 : i32
    %27 = arith.extui %26 : i1 to i32
    %c0_i32_10 = arith.constant 0 : i32
    %28 = arith.cmpi ne, %27, %c0_i32_10 : i32
    scf.if %28 {
      %c0_12 = arith.constant 0 : index
      %c0_13 = arith.constant 0 : index
      %c0_14 = arith.constant 0 : index
      %32 = vector.load %arg15[%c0_12, %c0_13, %c0_14] : memref<1x256x128xf32, #tpu.memory_space<vmem>>, vector<1x256x128xf32>
      %33 = vector.shape_cast %32 : vector<1x256x128xf32> to vector<256x128xf32>
      %34 = arith.addf %33, %22 : vector<256x128xf32>
      %c0_15 = arith.constant 0 : index
      %c0_16 = arith.constant 0 : index
      %c0_17 = arith.constant 0 : index
      %35 = vector.load %arg15[%c0_15, %c0_16, %c0_17] : memref<1x256x128xf32, #tpu.memory_space<vmem>>, vector<1x256x128xf32>
      %36 = vector.shape_cast %35 : vector<1x256x128xf32> to vector<256x128xf32>
      %37 = vector.shape_cast %34 : vector<256x128xf32> to vector<1x256x128xf32>
      tpu.vector_store %arg15[%c0_15, %c0_16, %c0_17], %37 {strides = array<i32>} : memref<1x256x128xf32, #tpu.memory_space<vmem>>, vector<1x256x128xf32>,
    } else {
    }
    %c3_i32 = arith.constant 3 : i32
    %29 = arith.cmpi eq, %arg1, %c3_i32 : i32
    %30 = arith.extui %29 : i1 to i32
    %c0_i32_11 = arith.constant 0 : i32
    %31 = arith.cmpi ne, %30, %c0_i32_11 : i32
    scf.if %31 {
      %c0_12 = arith.constant 0 : index
      %c0_13 = arith.constant 0 : index
      %c0_14 = arith.constant 0 : index
      %32 = vector.load %arg15[%c0_12, %c0_13, %c0_14] : memref<1x256x128xf32, #tpu.memory_space<vmem>>, vector<1x256x128xf32>
      %33 = vector.shape_cast %32 : vector<1x256x128xf32> to vector<256x128xf32>
      %34 = arith.truncf %33 : vector<256x128xf32> to vector<256x128xbf16>
      %c0_15 = arith.constant 0 : index
      %c0_16 = arith.constant 0 : index
      %35 = vector.load %arg11[%c0_15, %c0_16] : memref<128x128xbf16, #tpu.memory_space<vmem>>, vector<128x128xbf16>
      %cst_17 = arith.constant dense<0.000000e+00> : vector<256x128xf32>
      %36 = tpu.matmul %34, %35, %cst_17 {dimension_numbers = #tpu.dot_dimension_numbers<[1], [0], [0], [1], [0, 0, 1, 1], [], []>} : vector<256x128xbf16>, vector<128x128xbf16>, vector<256x128xf32> -> vector<256x128xf32>
      %c0_18 = arith.constant 0 : index
      %c0_19 = arith.constant 0 : index
      %37 = vector.load %arg12[%c0_18, %c0_19] : memref<1x128xf32, #tpu.memory_space<vmem>>, vector<1x128xf32>
      %38 = vector.broadcast %37 : vector<1x128xf32> to vector<256x128xf32>
      %39 = arith.addf %36, %38 : vector<256x128xf32>
      %c0_20 = arith.constant 0 : index
      %c0_21 = arith.constant 0 : index
      %c0_22 = arith.constant 0 : index
      %40 = vector.load %arg2[%c0_20, %c0_21, %c0_22] : memref<1x256x128xf32, #tpu.memory_space<vmem>>, vector<1x256x128xf32>
      %41 = vector.shape_cast %40 : vector<1x256x128xf32> to vector<256x128xf32>
      %42 = arith.addf %39, %41 : vector<256x128xf32>
      %c0_23 = arith.constant 0 : index
      %c0_24 = arith.constant 0 : index
      %c0_25 = arith.constant 0 : index
      %43 = vector.load %arg15[%c0_23, %c0_24, %c0_25] : memref<1x256x128xf32, #tpu.memory_space<vmem>>, vector<1x256x128xf32>
      %44 = vector.shape_cast %43 : vector<1x256x128xf32> to vector<256x128xf32>
      %45 = vector.shape_cast %42 : vector<256x128xf32> to vector<1x256x128xf32>
      tpu.vector_store %arg15[%c0_23, %c0_24, %c0_25], %45 {strides = array<i32>} : memref<1x256x128xf32, #tpu.memory_space<vmem>>, vector<1x256x128xf32>,
    } else {
    }
    return
  }
  func.func @transform_0(%arg0: i32, %arg1: i32) -> (i32, i32, i32) {
    %c0_i32 = arith.constant 0 : i32
    %c0_i32_0 = arith.constant 0 : i32
    %c0_i32_1 = arith.constant 0 : i32
    return %arg0, %c0_i32, %c0_i32_0 : i32, i32, i32
  }
  func.func @transform_1(%arg0: i32, %arg1: i32) -> (i32, i32) {
    %c0_i32 = arith.constant 0 : i32
    %c0_i32_0 = arith.constant 0 : i32
    %c0_i32_1 = arith.constant 0 : i32
    return %c0_i32, %c0_i32_0 : i32, i32
  }
  func.func @transform_2(%arg0: i32, %arg1: i32) -> (i32, i32) {
    %c0_i32 = arith.constant 0 : i32
    %c0_i32_0 = arith.constant 0 : i32
    %c0_i32_1 = arith.constant 0 : i32
    return %c0_i32, %c0_i32_0 : i32, i32
  }
  func.func @transform_3(%arg0: i32, %arg1: i32) -> (i32, i32) {
    %c0_i32 = arith.constant 0 : i32
    %c0_i32_0 = arith.constant 0 : i32
    %c0_i32_1 = arith.constant 0 : i32
    return %c0_i32, %c0_i32_0 : i32, i32
  }
  func.func @transform_4(%arg0: i32, %arg1: i32) -> (i32, i32) {
    %c0_i32 = arith.constant 0 : i32
    %c0_i32_0 = arith.constant 0 : i32
    %c0_i32_1 = arith.constant 0 : i32
    return %c0_i32, %c0_i32_0 : i32, i32
  }
  func.func @transform_5(%arg0: i32, %arg1: i32) -> (i32, i32) {
    %c0_i32 = arith.constant 0 : i32
    %c0_i32_0 = arith.constant 0 : i32
    %c0_i32_1 = arith.constant 0 : i32
    return %c0_i32, %c0_i32_0 : i32, i32
  }
  func.func @transform_6(%arg0: i32, %arg1: i32) -> (i32, i32) {
    %c0_i32 = arith.constant 0 : i32
    %c0_i32_0 = arith.constant 0 : i32
    %c0_i32_1 = arith.constant 0 : i32
    return %c0_i32, %c0_i32_0 : i32, i32
  }
  func.func @transform_7(%arg0: i32, %arg1: i32) -> (i32, i32) {
    %c0_i32 = arith.constant 0 : i32
    %c0_i32_0 = arith.constant 0 : i32
    %c0_i32_1 = arith.constant 0 : i32
    return %c0_i32, %c0_i32_0 : i32, i32
  }
  func.func @transform_8(%arg0: i32, %arg1: i32) -> (i32, i32) {
    %c0_i32 = arith.constant 0 : i32
    %c0_i32_0 = arith.constant 0 : i32
    %c0_i32_1 = arith.constant 0 : i32
    return %c0_i32, %c0_i32_0 : i32, i32
  }
  func.func @transform_9(%arg0: i32, %arg1: i32) -> (i32, i32) {
    %c0_i32 = arith.constant 0 : i32
    %c0_i32_0 = arith.constant 0 : i32
    %c0_i32_1 = arith.constant 0 : i32
    return %c0_i32, %c0_i32_0 : i32, i32
  }
  func.func @transform_10(%arg0: i32, %arg1: i32) -> (i32, i32) {
    %c0_i32 = arith.constant 0 : i32
    %c0_i32_0 = arith.constant 0 : i32
    %c0_i32_1 = arith.constant 0 : i32
    return %c0_i32, %c0_i32_0 : i32, i32
  }
  func.func @transform_11(%arg0: i32, %arg1: i32) -> (i32, i32) {
    %c0_i32 = arith.constant 0 : i32
    %c0_i32_0 = arith.constant 0 : i32
    %c0_i32_1 = arith.constant 0 : i32
    return %c0_i32, %c0_i32_0 : i32, i32
  }
  func.func @transform_12(%arg0: i32, %arg1: i32) -> (i32, i32) {
    %c0_i32 = arith.constant 0 : i32
    %c0_i32_0 = arith.constant 0 : i32
    %c0_i32_1 = arith.constant 0 : i32
    return %c0_i32, %c0_i32_0 : i32, i32
  }
  func.func @transform_13(%arg0: i32, %arg1: i32) -> (i32, i32, i32) {
    %c0_i32 = arith.constant 0 : i32
    %c0_i32_0 = arith.constant 0 : i32
    %c0_i32_1 = arith.constant 0 : i32
    return %arg0, %c0_i32, %c0_i32_0 : i32, i32, i32
  }
}

</mosaic_0001>

<llo_original>
// kernel: tpu_custom_call.1
$region0: #{tpu_custom_call.1}
  #allocation0 [shape = 'u32[]', space=smem, size = 0x4, offset = 0x4, fixed_abs, tag = 'smem constant byte address 0x4 - core index']
  #allocation1 [shape = 'u32[144,128]{1,0:T(1,128)}', space=vmem, size = 0x12000, scoped, tag = 'internal scratch']
  #allocation2 [shape = 'bf16[256,128]{1,0:T(16,128)(2,1)}', space=vmem, size = 0x10000, scoped, tag = 'scratch operand']
  #allocation3 [shape = 'bf16[256,128]{1,0:T(16,128)(2,1)}', space=vmem, size = 0x10000, scoped, tag = 'scratch operand']
  #allocation4 [shape = 'bf16[256,128]{1,0:T(16,128)(2,1)}', space=vmem, size = 0x10000, scoped, tag = 'scratch operand']
  %s0 = inlined_call_operand.hbm [shape: f32[2,256,128], index: 0, kind: input, shape index: {}]
  %s1 = inlined_call_operand.vmem [shape: f32[1,128], index: 1, kind: input, shape index: {}]
  %s2 = inlined_call_operand.vmem [shape: f32[1,128], index: 2, kind: input, shape index: {}]
  %s3 = inlined_call_operand.vmem [shape: bf16[128,128], index: 3, kind: input, shape index: {}]
  %s4 = inlined_call_operand.hbm [shape: f32[1,128], index: 4, kind: input, shape index: {}]
  %s5 = inlined_call_operand.vmem [shape: bf16[128,128], index: 5, kind: input, shape index: {}]
  %s6 = inlined_call_operand.hbm [shape: f32[1,128], index: 6, kind: input, shape index: {}]
  %s7 = inlined_call_operand.hbm [shape: bf16[128,128], index: 7, kind: input, shape index: {}]
  %s8 = inlined_call_operand.hbm [shape: f32[1,128], index: 8, kind: input, shape index: {}]
  %s9 = inlined_call_operand.vmem [shape: bf16[128,128], index: 9, kind: input, shape index: {}]
  %s10 = inlined_call_operand.vmem [shape: f32[1,128], index: 10, kind: input, shape index: {}]
  %s11 = inlined_call_operand.vmem [shape: f32[128,32], index: 11, kind: input, shape index: {}]
  %s12 = inlined_call_operand.hbm [shape: f32[32,128], index: 12, kind: input, shape index: {}]
  %s13 = inlined_call_operand.hbm [shape: f32[2,256,128], index: 13, kind: output, shape index: {}]
  %s14 = sld [smem:[#allocation0]]
  $region125: #{tpu_custom_call.1} parent=0
    _
  %s16 = ssub.s32 1, %s14
  %s17 = scalar_select 0, %s16, %s14
  $region1: #{tpu_custom_call.1} parent=0
    #allocation5 [shape = 'u8[262144]{0}', space=vmem, size = 0x40000, scoped, tag = 'input window, operand 0']
    #allocation6 [shape = 's32[2]{0}', space=sflag, size = 0x8, scoped, tag = 'scoped memory for tpu_custom_call.1']
    #allocation7 [shape = 's32[2]{0}', space=sflag, size = 0x8, scoped, tag = 'scoped memory for tpu_custom_call.1']
    #allocation8 [shape = 'u8[512]{0}', space=vmem, size = 0x400, scoped, tag = 'input window, operand 4, single buffered']
    #allocation9 [shape = 's32[1]{0}', space=sflag, size = 0x4, scoped, tag = 'scoped memory for tpu_custom_call.1']
    #allocation10 [shape = 'u8[512]{0}', space=vmem, size = 0x400, scoped, tag = 'input window, operand 6, single buffered']
    #allocation11 [shape = 'u8[32768]{0}', space=vmem, size = 0x8000, scoped, tag = 'input window, operand 7, single buffered']
    #allocation12 [shape = 's32[1]{0}', space=sflag, size = 0x4, scoped, tag = 'scoped memory for tpu_custom_call.1']
    #allocation13 [shape = 'u8[512]{0}', space=vmem, size = 0x400, scoped, tag = 'input window, operand 8, single buffered']
    #allocation14 [shape = 'u8[16384]{0}', space=vmem, size = 0x4000, scoped, tag = 'input window, operand 12, single buffered']
    #allocation15 [shape = 's32[1]{0}', space=sflag, size = 0x4, scoped, tag = 'scoped memory for tpu_custom_call.1']
    #allocation16 [shape = 'u8[262144]{0}', space=vmem, size = 0x40000, scoped, tag = 'output window, operand 0']
    %18 = vsyncpa [#allocation6], 0
    %s19 = scalar_lea.sflag [#allocation6], 1
    %20 = vsyncpa %s19, 0
    %21 = vsyncpa [#allocation9], 0
    %22 = vsyncpa [#allocation12], 0
    %23 = vsyncpa [#allocation15], 0
    %24 = vsyncpa [#allocation7], 0
    %s25 = scalar_lea.sflag [#allocation7], 1
    %26 = vsyncpa %s25, 0
    loop: start=0, step=1, limit=10
    $region2: #{tpu_custom_call.1} parent=1 // loop_pre_header
      _
    $region3: #{tpu_custom_call.1} parent=1 // loop_header
      %s28 = sphi 0, %s32
      %p29 = scmp.ge.s32.totalorder %s28, 10
      %s35 = sphi 0, %s47
      %s36 = sphi 0, %s43
      %s37 = sphi 0, %s35
      %s38 = sphi 0, %s36
      %s39 = sphi 0, %s37
      %s40 = sphi 0, %s38
      %s50 = sphi 0, %s52
      %s53 = sphi 0, %s50
      %s54 = sphi 0, %s53
      %s70 = sphi 0, %s54
      %s74 = sphi 0, %s74
      %s76 = sphi 0, %s74
      %s77 = sphi 0, %s76
      %s91 = sphi 0, %s77
      %s95 = sphi 0, %s95
      %s97 = sphi 0, %s95
      %s98 = sphi 0, %s97
      %s112 = sphi 0, %s98
      %s116 = sphi 0, %s116
      %s118 = sphi 0, %s116
      %s119 = sphi 0, %s118
      %s133 = sphi 0, %s119
      %s137 = sphi 0, %s137
      %s139 = sphi 0, %s137
      %s140 = sphi 0, %s139
      %s154 = sphi 0, %s140
      %s158 = sphi 0, %s158
      %s160 = sphi 0, %s158
      %s161 = sphi 0, %s160
      %s175 = sphi 0, %s161
      %s179 = sphi 0, %s179
      %s181 = sphi 0, %s179
      %s182 = sphi 0, %s181
      %s196 = sphi 0, %s182
      %s200 = sphi 0, %s200
      %s202 = sphi 0, %s200
      %s203 = sphi 0, %s202
      %s217 = sphi 0, %s203
      %s221 = sphi 0, %s221
      %s223 = sphi 0, %s221
      %s224 = sphi 0, %s223
      %s238 = sphi 0, %s224
      %s242 = sphi 0, %s242
      %s244 = sphi 0, %s242
      %s245 = sphi 0, %s244
      %s259 = sphi 0, %s245
      %s263 = sphi 0, %s263
      %s265 = sphi 0, %s263
      %s266 = sphi 0, %s265
      %s280 = sphi 0, %s266
      %s284 = sphi 0, %s284
      %s286 = sphi 0, %s284
      %s287 = sphi 0, %s286
      %s301 = sphi 0, %s287
      %s305 = sphi 0, %s305
      %s307 = sphi 0, %s305
      %s308 = sphi 0, %s307
      %s322 = sphi 0, %s308
      %s328 = sphi 0, %s330
      %s331 = sphi 0, %s328
      %s332 = sphi 0, %s331
      %s348 = sphi 0, %s332
    $region4: #{tpu_custom_call.1} parent=1 // loop_header_branch
      %31 = sbr.rel (%p29) target = $region8
    $region5: #{tpu_custom_call.1} parent=1 // loop_body
      %s33 = ssub.s32 %s28, 1
      %s34 = ssub.s32 %s28, 2
      %s41 = sadd.s32 1, %s36
      %p42 = scmp.ge.s32.totalorder %s41, 4
      %s43 = scalar_select %p42, 0, %s41
      %s44 = sadd.s32 1, %s35
      %s45 = scalar_select %p42, %s44, %s35
      %p46 = scmp.ge.s32.totalorder %s45, 2
      %s47 = scalar_select %p46, 0, %s45
      %s48 = ssub.s32 %s35, %s47
      %p49 = scmp.eq.s32.totalorder %s48, 0
      %s51 = sadd.s32 %s50, 1
      %s52 = scalar_select %p49, %s50, %s51
      %p55 = pneg %p49
      %p56 = scmp.eq.s32.totalorder %s28, 7
      %p57 = por %p55, %p56
      %p58 = scmp.ne.s32.totalorder %s50, %s53
      %p59 = scmp.eq.s32.totalorder %s28, 0
      %p60 = por %p58, %p59
      %p61 = scmp.ne.s32.totalorder %s50, %s53
      %p62 = scmp.eq.s32.totalorder %s33, 7
      %p63 = por %p61, %p62
      %p64 = scmp.ne.s32.totalorder %s53, %s54
      %p65 = scmp.eq.s32.totalorder %s33, 0
      %p66 = por %p64, %p65
      %p67 = scmp.ne.s32.totalorder %s53, %s54
      %p68 = scmp.eq.s32.totalorder %s34, 7
      %p69 = por %p67, %p68
      %p71 = scmp.ne.s32.totalorder %s54, %s70
      %p72 = scmp.eq.s32.totalorder %s34, 0
      %p73 = por %p71, %p72
      %s75 = sadd.s32 %s74, 1
      %p78 = scmp.eq.s32.totalorder %s28, 7
      %p79 = scmp.ne.s32.totalorder %s74, %s76
      %p80 = scmp.eq.s32.totalorder %s28, 0
      %p81 = por %p79, %p80
      %p82 = scmp.ne.s32.totalorder %s74, %s76
      %p83 = scmp.eq.s32.totalorder %s33, 7
      %p84 = por %p82, %p83
      %p85 = scmp.ne.s32.totalorder %s76, %s77
      %p86 = scmp.eq.s32.totalorder %s33, 0
      %p87 = por %p85, %p86
      %p88 = scmp.ne.s32.totalorder %s76, %s77
      %p89 = scmp.eq.s32.totalorder %s34, 7
      %p90 = por %p88, %p89
      %p92 = scmp.ne.s32.totalorder %s77, %s91
      %p93 = scmp.eq.s32.totalorder %s34, 0
      %p94 = por %p92, %p93
      %s96 = sadd.s32 %s95, 1
      %p99 = scmp.eq.s32.totalorder %s28, 7
      %p100 = scmp.ne.s32.totalorder %s95, %s97
      %p101 = scmp.eq.s32.totalorder %s28, 0
      %p102 = por %p100, %p101
      %p103 = scmp.ne.s32.totalorder %s95, %s97
      %p104 = scmp.eq.s32.totalorder %s33, 7
      %p105 = por %p103, %p104
      %p106 = scmp.ne.s32.totalorder %s97, %s98
      %p107 = scmp.eq.s32.totalorder %s33, 0
      %p108 = por %p106, %p107
      %p109 = scmp.ne.s32.totalorder %s97, %s98
      %p110 = scmp.eq.s32.totalorder %s34, 7
      %p111 = por %p109, %p110
      %p113 = scmp.ne.s32.totalorder %s98, %s112
      %p114 = scmp.eq.s32.totalorder %s34, 0
      %p115 = por %p113, %p114
      %s117 = sadd.s32 %s116, 1
      %p120 = scmp.eq.s32.totalorder %s28, 7
      %p121 = scmp.ne.s32.totalorder %s116, %s118
      %p122 = scmp.eq.s32.totalorder %s28, 0
      %p123 = por %p121, %p122
      %p124 = scmp.ne.s32.totalorder %s116, %s118
      %p125 = scmp.eq.s32.totalorder %s33, 7
      %p126 = por %p124, %p125
      %p127 = scmp.ne.s32.totalorder %s118, %s119
      %p128 = scmp.eq.s32.totalorder %s33, 0
      %p129 = por %p127, %p128
      %p130 = scmp.ne.s32.totalorder %s118, %s119
      %p131 = scmp.eq.s32.totalorder %s34, 7
      %p132 = por %p130, %p131
      %p134 = scmp.ne.s32.totalorder %s119, %s133
      %p135 = scmp.eq.s32.totalorder %s34, 0
      %p136 = por %p134, %p135
      %s138 = sadd.s32 %s137, 1
      %p141 = scmp.eq.s32.totalorder %s28, 7
      %p142 = scmp.ne.s32.totalorder %s137, %s139
      %p143 = scmp.eq.s32.totalorder %s28, 0
      %p144 = por %p142, %p143
      %p145 = scmp.ne.s32.totalorder %s137, %s139
      %p146 = scmp.eq.s32.totalorder %s33, 7
      %p147 = por %p145, %p146
      %p148 = scmp.ne.s32.totalorder %s139, %s140
      %p149 = scmp.eq.s32.totalorder %s33, 0
      %p150 = por %p148, %p149
      %p151 = scmp.ne.s32.totalorder %s139, %s140
      %p152 = scmp.eq.s32.totalorder %s34, 7
      %p153 = por %p151, %p152
      %p155 = scmp.ne.s32.totalorder %s140, %s154
      %p156 = scmp.eq.s32.totalorder %s34, 0
      %p157 = por %p155, %p156
      %s159 = sadd.s32 %s158, 1
      %p162 = scmp.eq.s32.totalorder %s28, 7
      %p163 = scmp.ne.s32.totalorder %s158, %s160
      %p164 = scmp.eq.s32.totalorder %s28, 0
      %p165 = por %p163, %p164
      %p166 = scmp.ne.s32.totalorder %s158, %s160
      %p167 = scmp.eq.s32.totalorder %s33, 7
      %p168 = por %p166, %p167
      %p169 = scmp.ne.s32.totalorder %s160, %s161
      %p170 = scmp.eq.s32.totalorder %s33, 0
      %p171 = por %p169, %p170
      %p172 = scmp.ne.s32.totalorder %s160, %s161
      %p173 = scmp.eq.s32.totalorder %s34, 7
      %p174 = por %p172, %p173
      %p176 = scmp.ne.s32.totalorder %s161, %s175
      %p177 = scmp.eq.s32.totalorder %s34, 0
      %p178 = por %p176, %p177
      %s180 = sadd.s32 %s179, 1
      %p183 = scmp.eq.s32.totalorder %s28, 7
      %p184 = scmp.ne.s32.totalorder %s179, %s181
      %p185 = scmp.eq.s32.totalorder %s28, 0
      %p186 = por %p184, %p185
      %p187 = scmp.ne.s32.totalorder %s179, %s181
      %p188 = scmp.eq.s32.totalorder %s33, 7
      %p189 = por %p187, %p188
      %p190 = scmp.ne.s32.totalorder %s181, %s182
      %p191 = scmp.eq.s32.totalorder %s33, 0
      %p192 = por %p190, %p191
      %p193 = scmp.ne.s32.totalorder %s181, %s182
      %p194 = scmp.eq.s32.totalorder %s34, 7
      %p195 = por %p193, %p194
      %p197 = scmp.ne.s32.totalorder %s182, %s196
      %p198 = scmp.eq.s32.totalorder %s34, 0
      %p199 = por %p197, %p198
      %s201 = sadd.s32 %s200, 1
      %p204 = scmp.eq.s32.totalorder %s28, 7
      %p205 = scmp.ne.s32.totalorder %s200, %s202
      %p206 = scmp.eq.s32.totalorder %s28, 0
      %p207 = por %p205, %p206
      %p208 = scmp.ne.s32.totalorder %s200, %s202
      %p209 = scmp.eq.s32.totalorder %s33, 7
      %p210 = por %p208, %p209
      %p211 = scmp.ne.s32.totalorder %s202, %s203
      %p212 = scmp.eq.s32.totalorder %s33, 0
      %p213 = por %p211, %p212
      %p214 = scmp.ne.s32.totalorder %s202, %s203
      %p215 = scmp.eq.s32.totalorder %s34, 7
      %p216 = por %p214, %p215
      %p218 = scmp.ne.s32.totalorder %s203, %s217
      %p219 = scmp.eq.s32.totalorder %s34, 0
      %p220 = por %p218, %p219
      %s222 = sadd.s32 %s221, 1
      %p225 = scmp.eq.s32.totalorder %s28, 7
      %p226 = scmp.ne.s32.totalorder %s221, %s223
      %p227 = scmp.eq.s32.totalorder %s28, 0
      %p228 = por %p226, %p227
      %p229 = scmp.ne.s32.totalorder %s221, %s223
      %p230 = scmp.eq.s32.totalorder %s33, 7
      %p231 = por %p229, %p230
      %p232 = scmp.ne.s32.totalorder %s223, %s224
      %p233 = scmp.eq.s32.totalorder %s33, 0
      %p234 = por %p232, %p233
      %p235 = scmp.ne.s32.totalorder %s223, %s224
      %p236 = scmp.eq.s32.totalorder %s34, 7
      %p237 = por %p235, %p236
      %p239 = scmp.ne.s32.totalorder %s224, %s238
      %p240 = scmp.eq.s32.totalorder %s34, 0
      %p241 = por %p239, %p240
      %s243 = sadd.s32 %s242, 1
      %p246 = scmp.eq.s32.totalorder %s28, 7
      %p247 = scmp.ne.s32.totalorder %s242, %s244
      %p248 = scmp.eq.s32.totalorder %s28, 0
      %p249 = por %p247, %p248
      %p250 = scmp.ne.s32.totalorder %s242, %s244
      %p251 = scmp.eq.s32.totalorder %s33, 7
      %p252 = por %p250, %p251
      %p253 = scmp.ne.s32.totalorder %s244, %s245
      %p254 = scmp.eq.s32.totalorder %s33, 0
      %p255 = por %p253, %p254
      %p256 = scmp.ne.s32.totalorder %s244, %s245
      %p257 = scmp.eq.s32.totalorder %s34, 7
      %p258 = por %p256, %p257
      %p260 = scmp.ne.s32.totalorder %s245, %s259
      %p261 = scmp.eq.s32.totalorder %s34, 0
      %p262 = por %p260, %p261
      %s264 = sadd.s32 %s263, 1
      %p267 = scmp.eq.s32.totalorder %s28, 7
      %p268 = scmp.ne.s32.totalorder %s263, %s265
      %p269 = scmp.eq.s32.totalorder %s28, 0
      %p270 = por %p268, %p269
      %p271 = scmp.ne.s32.totalorder %s263, %s265
      %p272 = scmp.eq.s32.totalorder %s33, 7
      %p273 = por %p271, %p272
      %p274 = scmp.ne.s32.totalorder %s265, %s266
      %p275 = scmp.eq.s32.totalorder %s33, 0
      %p276 = por %p274, %p275
      %p277 = scmp.ne.s32.totalorder %s265, %s266
      %p278 = scmp.eq.s32.totalorder %s34, 7
      %p279 = por %p277, %p278
      %p281 = scmp.ne.s32.totalorder %s266, %s280
      %p282 = scmp.eq.s32.totalorder %s34, 0
      %p283 = por %p281, %p282
      %s285 = sadd.s32 %s284, 1
      %p288 = scmp.eq.s32.totalorder %s28, 7
      %p289 = scmp.ne.s32.totalorder %s284, %s286
      %p290 = scmp.eq.s32.totalorder %s28, 0
      %p291 = por %p289, %p290
      %p292 = scmp.ne.s32.totalorder %s284, %s286
      %p293 = scmp.eq.s32.totalorder %s33, 7
      %p294 = por %p292, %p293
      %p295 = scmp.ne.s32.totalorder %s286, %s287
      %p296 = scmp.eq.s32.totalorder %s33, 0
      %p297 = por %p295, %p296
      %p298 = scmp.ne.s32.totalorder %s286, %s287
      %p299 = scmp.eq.s32.totalorder %s34, 7
      %p300 = por %p298, %p299
      %p302 = scmp.ne.s32.totalorder %s287, %s301
      %p303 = scmp.eq.s32.totalorder %s34, 0
      %p304 = por %p302, %p303
      %s306 = sadd.s32 %s305, 1
      %p309 = scmp.eq.s32.totalorder %s28, 7
      %p310 = scmp.ne.s32.totalorder %s305, %s307
      %p311 = scmp.eq.s32.totalorder %s28, 0
      %p312 = por %p310, %p311
      %p313 = scmp.ne.s32.totalorder %s305, %s307
      %p314 = scmp.eq.s32.totalorder %s33, 7
      %p315 = por %p313, %p314
      %p316 = scmp.ne.s32.totalorder %s307, %s308
      %p317 = scmp.eq.s32.totalorder %s33, 0
      %p318 = por %p316, %p317
      %p319 = scmp.ne.s32.totalorder %s307, %s308
      %p320 = scmp.eq.s32.totalorder %s34, 7
      %p321 = por %p319, %p320
      %p323 = scmp.ne.s32.totalorder %s308, %s322
      %p324 = scmp.eq.s32.totalorder %s34, 0
      %p325 = por %p323, %p324
      %s326 = ssub.s32 %s35, %s47
      %p327 = scmp.eq.s32.totalorder %s326, 0
      %s329 = sadd.s32 %s328, 1
      %s330 = scalar_select %p327, %s328, %s329
      %p333 = pneg %p327
      %p334 = scmp.eq.s32.totalorder %s28, 7
      %p335 = por %p333, %p334
      %p336 = scmp.ne.s32.totalorder %s328, %s331
      %p337 = scmp.eq.s32.totalorder %s28, 0
      %p338 = por %p336, %p337
      %p339 = scmp.ne.s32.totalorder %s328, %s331
      %p340 = scmp.eq.s32.totalorder %s33, 7
      %p341 = por %p339, %p340
      %p342 = scmp.ne.s32.totalorder %s331, %s332
      %p343 = scmp.eq.s32.totalorder %s33, 0
      %p344 = por %p342, %p343
      %p345 = scmp.ne.s32.totalorder %s331, %s332
      %p346 = scmp.eq.s32.totalorder %s34, 7
      %p347 = por %p345, %p346
      %p349 = scmp.ne.s32.totalorder %s332, %s348
      %p350 = scmp.eq.s32.totalorder %s34, 0
      %p351 = por %p349, %p350
      %p352 = scmp.le.s32.totalorder 1, %s28
      %p353 = scmp.lt.s32.totalorder %s28, 9
      %p354 = pnand %p352, %p353
      %p355 = pneg %p354
      // Predicated region
      $region9: #{tpu_custom_call.1} parent=5 // pred_check
        _
      $region10: #{tpu_custom_call.1} parent=5 // pred_check_branch
        %357 = sbr.rel (%p354) target = $region12
      $region11: #{tpu_custom_call.1} parent=5 // pred_region
        %s358 = ssub.s32 %s28, 1
        // Predicated region
        $region13: #{tpu_custom_call.1} parent=11 // pred_check
          %p359 = pneg %p87
        $region14: #{tpu_custom_call.1} parent=11 // pred_check_branch
          %361 = sbr.rel (%p359) target = $region16
        $region15: #{tpu_custom_call.1} parent=11 // pred_region
          _
        $region16: #{tpu_custom_call.1} parent=11 // pred_fallthru
          _
        // Predicated region
        $region17: #{tpu_custom_call.1} parent=11 // pred_check
          %p362 = pneg %p108
        $region18: #{tpu_custom_call.1} parent=11 // pred_check_branch
          %364 = sbr.rel (%p362) target = $region20
        $region19: #{tpu_custom_call.1} parent=11 // pred_region
          _
        $region20: #{tpu_custom_call.1} parent=11 // pred_fallthru
          _
        // Predicated region
        $region21: #{tpu_custom_call.1} parent=11 // pred_check
          %p365 = pneg %p129
        $region22: #{tpu_custom_call.1} parent=11 // pred_check_branch
          %367 = sbr.rel (%p365) target = $region24
        $region23: #{tpu_custom_call.1} parent=11 // pred_region
          _
        $region24: #{tpu_custom_call.1} parent=11 // pred_fallthru
          _
        // Predicated region
        $region25: #{tpu_custom_call.1} parent=11 // pred_check
          %p368 = pneg %p150
        $region26: #{tpu_custom_call.1} parent=11 // pred_check_branch
          %370 = sbr.rel (%p368) target = $region28
        $region27: #{tpu_custom_call.1} parent=11 // pred_region
          %s372 = ssub.s32 16, 16
          %373 = vsyncadd [#allocation9], %s372
          %s375 = sshll.u32 [#allocation8], 4
          %s376 = int_to_ptr.vmem [resolvable:$true] %s375
          %378 = dma.hbm_to_vmem [thread:$0]  %s4, 16, %s376, [#allocation9]
        $region28: #{tpu_custom_call.1} parent=11 // pred_fallthru
          _
        // Predicated region
        $region29: #{tpu_custom_call.1} parent=11 // pred_check
          %p379 = pneg %p171
        $region30: #{tpu_custom_call.1} parent=11 // pred_check_branch
          %381 = sbr.rel (%p379) target = $region32
        $region31: #{tpu_custom_call.1} parent=11 // pred_region
          _
        $region32: #{tpu_custom_call.1} parent=11 // pred_fallthru
          _
        // Predicated region
        $region33: #{tpu_custom_call.1} parent=11 // pred_check
          %p382 = pneg %p192
        $region34: #{tpu_custom_call.1} parent=11 // pred_check_branch
          %384 = sbr.rel (%p382) target = $region36
        $region35: #{tpu_custom_call.1} parent=11 // pred_region
          %s386 = ssub.s32 16, 16
          %387 = vsyncadd [#allocation9], %s386
          %s389 = sshll.u32 [#allocation10], 4
          %s390 = int_to_ptr.vmem [resolvable:$true] %s389
          %392 = dma.hbm_to_vmem [thread:$0]  %s6, 16, %s390, [#allocation9]
        $region36: #{tpu_custom_call.1} parent=11 // pred_fallthru
          _
        // Predicated region
        $region37: #{tpu_custom_call.1} parent=11 // pred_check
          %p393 = pneg %p213
        $region38: #{tpu_custom_call.1} parent=11 // pred_check_branch
          %395 = sbr.rel (%p393) target = $region40
        $region39: #{tpu_custom_call.1} parent=11 // pred_region
          %s397 = ssub.s32 1024, 1024
          %398 = vsyncadd [#allocation12], %s397
          %s399 = sshll.u32 [#allocation11], 4
          %s400 = int_to_ptr.vmem [resolvable:$true] %s399
          %405 = dma.hbm_to_vmem [thread:$0]  %s7, 1024, %s400, [#allocation12], 64, 64, 4
        $region40: #{tpu_custom_call.1} parent=11 // pred_fallthru
          _
        // Predicated region
        $region41: #{tpu_custom_call.1} parent=11 // pred_check
          %p406 = pneg %p234
        $region42: #{tpu_custom_call.1} parent=11 // pred_check_branch
          %408 = sbr.rel (%p406) target = $region44
        $region43: #{tpu_custom_call.1} parent=11 // pred_region
          %s410 = ssub.s32 16, 16
          %411 = vsyncadd [#allocation12], %s410
          %s413 = sshll.u32 [#allocation13], 4
          %s414 = int_to_ptr.vmem [resolvable:$true] %s413
          %416 = dma.hbm_to_vmem [thread:$0]  %s8, 16, %s414, [#allocation12]
        $region44: #{tpu_custom_call.1} parent=11 // pred_fallthru
          _
        // Predicated region
        $region45: #{tpu_custom_call.1} parent=11 // pred_check
          %p417 = pneg %p255
        $region46: #{tpu_custom_call.1} parent=11 // pred_check_branch
          %419 = sbr.rel (%p417) target = $region48
        $region47: #{tpu_custom_call.1} parent=11 // pred_region
          _
        $region48: #{tpu_custom_call.1} parent=11 // pred_fallthru
          _
        // Predicated region
        $region49: #{tpu_custom_call.1} parent=11 // pred_check
          %p420 = pneg %p276
        $region50: #{tpu_custom_call.1} parent=11 // pred_check_branch
          %422 = sbr.rel (%p420) target = $region52
        $region51: #{tpu_custom_call.1} parent=11 // pred_region
          _
        $region52: #{tpu_custom_call.1} parent=11 // pred_fallthru
          _
        // Predicated region
        $region53: #{tpu_custom_call.1} parent=11 // pred_check
          %p423 = pneg %p297
        $region54: #{tpu_custom_call.1} parent=11 // pred_check_branch
          %425 = sbr.rel (%p423) target = $region56
        $region55: #{tpu_custom_call.1} parent=11 // pred_region
          _
        $region56: #{tpu_custom_call.1} parent=11 // pred_fallthru
          _
        // Predicated region
        $region57: #{tpu_custom_call.1} parent=11 // pred_check
          %p426 = pneg %p318
        $region58: #{tpu_custom_call.1} parent=11 // pred_check_branch
          %428 = sbr.rel (%p426) target = $region60
        $region59: #{tpu_custom_call.1} parent=11 // pred_region
          %s430 = ssub.s32 512, 512
          %431 = vsyncadd [#allocation15], %s430
          %s432 = sshll.u32 [#allocation14], 4
          %s433 = int_to_ptr.vmem [resolvable:$true] %s432
          %438 = dma.hbm_to_vmem [thread:$0]  %s12, 512, %s433, [#allocation15], 128, 128, 8
        $region60: #{tpu_custom_call.1} parent=11 // pred_fallthru
          _
      $region12: #{tpu_custom_call.1} parent=5 // pred_fallthru
        _
      %p439 = scmp.lt.s32.totalorder %s28, 8
      // Predicated region
      $region61: #{tpu_custom_call.1} parent=5 // pred_check
        %p440 = pneg %p439
      $region62: #{tpu_custom_call.1} parent=5 // pred_check_branch
        %442 = sbr.rel (%p440) target = $region64
      $region63: #{tpu_custom_call.1} parent=5 // pred_region
        // Predicated region
        $region65: #{tpu_custom_call.1} parent=63 // pred_check
          %p443 = pneg %p60
        $region66: #{tpu_custom_call.1} parent=63 // pred_check_branch
          %445 = sbr.rel (%p443) target = $region68
        $region67: #{tpu_custom_call.1} parent=63 // pred_region
          %s446 = sand.u32 %s50, 1
          %s447 = scalar_lea.sflag [#allocation6], %s446
          %s448 = sand.u32 %s50, 1
          %s449 = smul.addr %s448, 256
          %s450 = scalar_lea.vmem [#allocation5], %s449
          %s452 = ssub.s32 4096, 4096
          %453 = vsyncadd %s447, %s452
          %s454 = smul.addr %s35, 32
          %s455 = smul.addr %s454, 128
          %s456 = scalar_lea.hbm %s0, %s455
          %s457 = sshll.u32 %s450, 4
          %s458 = int_to_ptr.vmem [resolvable:$true] %s457
          %463 = dma.hbm_to_vmem [thread:$0]  %s456, 4096, %s458, %s447, 128, 128, 8
        $region68: #{tpu_custom_call.1} parent=63 // pred_fallthru
          _
      $region64: #{tpu_custom_call.1} parent=5 // pred_fallthru
        _
      %p464 = scmp.le.s32.totalorder 1, %s28
      %p465 = scmp.lt.s32.totalorder %s28, 9
      %p466 = pnand %p464, %p465
      %p467 = pneg %p466
      // Predicated region
      $region69: #{tpu_custom_call.1} parent=5 // pred_check
        _
      $region70: #{tpu_custom_call.1} parent=5 // pred_check_branch
        %469 = sbr.rel (%p466) target = $region72
      $region71: #{tpu_custom_call.1} parent=5 // pred_region
        %s470 = ssub.s32 %s28, 1
        %s471 = sand.u32 %s53, 1
        %s472 = scalar_lea.sflag [#allocation6], %s471
        %s473 = sand.u32 %s53, 1
        %s474 = smul.addr %s473, 256
        %s475 = scalar_lea.vmem [#allocation5], %s474
        // Predicated region
        $region73: #{tpu_custom_call.1} parent=71 // pred_check
          %p476 = pneg %p66
        $region74: #{tpu_custom_call.1} parent=71 // pred_check_branch
          %478 = sbr.rel (%p476) target = $region76
        $region75: #{tpu_custom_call.1} parent=71 // pred_region
          %479 = dma.done %s472, 4096
        $region76: #{tpu_custom_call.1} parent=71 // pred_fallthru
          _
        // Predicated region
        $region77: #{tpu_custom_call.1} parent=71 // pred_check
          %p480 = pneg %p150
        $region78: #{tpu_custom_call.1} parent=71 // pred_check_branch
          %482 = sbr.rel (%p480) target = $region80
        $region79: #{tpu_custom_call.1} parent=71 // pred_region
          %483 = dma.done [#allocation9], 16
        $region80: #{tpu_custom_call.1} parent=71 // pred_fallthru
          _
        // Predicated region
        $region81: #{tpu_custom_call.1} parent=71 // pred_check
          %p484 = pneg %p192
        $region82: #{tpu_custom_call.1} parent=71 // pred_check_branch
          %486 = sbr.rel (%p484) target = $region84
        $region83: #{tpu_custom_call.1} parent=71 // pred_region
          %487 = dma.done [#allocation9], 16
        $region84: #{tpu_custom_call.1} parent=71 // pred_fallthru
          _
        // Predicated region
        $region85: #{tpu_custom_call.1} parent=71 // pred_check
          %p488 = pneg %p213
        $region86: #{tpu_custom_call.1} parent=71 // pred_check_branch
          %490 = sbr.rel (%p488) target = $region88
        $region87: #{tpu_custom_call.1} parent=71 // pred_region
          %491 = dma.done [#allocation12], 1024
        $region88: #{tpu_custom_call.1} parent=71 // pred_fallthru
          _
        // Predicated region
        $region89: #{tpu_custom_call.1} parent=71 // pred_check
          %p492 = pneg %p234
        $region90: #{tpu_custom_call.1} parent=71 // pred_check_branch
          %494 = sbr.rel (%p492) target = $region92
        $region91: #{tpu_custom_call.1} parent=71 // pred_region
          %495 = dma.done [#allocation12], 16
        $region92: #{tpu_custom_call.1} parent=71 // pred_fallthru
          _
        // Predicated region
        $region93: #{tpu_custom_call.1} parent=71 // pred_check
          %p496 = pneg %p318
        $region94: #{tpu_custom_call.1} parent=71 // pred_check_branch
          %498 = sbr.rel (%p496) target = $region96
        $region95: #{tpu_custom_call.1} parent=71 // pred_region
          %499 = dma.done [#allocation15], 512
        $region96: #{tpu_custom_call.1} parent=71 // pred_fallthru
          _
        %s500 = sand.u32 %s53, 1
        %s501 = scalar_lea.sflag [#allocation6], %s500
        %s502 = sand.u32 %s53, 1
        %s503 = smul.addr %s502, 256
        %s504 = scalar_lea.vmem [#allocation5], %s503
        %p505 = pneg %p66
        %p506 = pneg %p63
        %p507 = pneg %p87
        %p508 = pneg %p84
        %p509 = pneg %p108
        %p510 = pneg %p105
        %p511 = pneg %p129
        %p512 = pneg %p126
        %p513 = pneg %p150
        %p514 = pneg %p147
        %p515 = pneg %p171
        %p516 = pneg %p168
        %p517 = pneg %p192
        %p518 = pneg %p189
        %p519 = pneg %p213
        %p520 = pneg %p210
        %p521 = pneg %p234
        %p522 = pneg %p231
        %p523 = pneg %p255
        %p524 = pneg %p252
        %p525 = pneg %p276
        %p526 = pneg %p273
        %p527 = pneg %p297
        %p528 = pneg %p294
        %p529 = pneg %p318
        %p530 = pneg %p315
        %p531 = pneg %p344
        %p532 = pneg %p341
        %s533 = sand.u32 %s331, 1
        %s534 = scalar_lea.sflag [#allocation7], %s533
        %s535 = sand.u32 %s331, 1
        %s536 = smul.addr %s535, 256
        %s537 = scalar_lea.vmem [#allocation16], %s536
        %p539 = scmp.eq.s32.totalorder %s38, 0
        // Predicated region
        $region97: #{tpu_custom_call.1} parent=71 // pred_check
          %p540 = pneg %p539
        $region98: #{tpu_custom_call.1} parent=71 // pred_check_branch
          %542 = sbr.rel (%p540) target = $region100
        $region99: #{tpu_custom_call.1} parent=71 // pred_region
          %v543 = vld [vmem:[%s475] sm:$0xff]
          %v544 = vld [vmem:[%s475 + $0x8] sm:$0xff]
          %v545 = vld [vmem:[%s475 + $0x10] sm:$0xff]
          %v546 = vld [vmem:[%s475 + $0x18] sm:$0xff]
          %v547 = vld [vmem:[%s475 + $0x20] sm:$0xff]
          %v548 = vld [vmem:[%s475 + $0x28] sm:$0xff]
          %v549 = vld [vmem:[%s475 + $0x30] sm:$0xff]
          %v550 = vld [vmem:[%s475 + $0x38] sm:$0xff]
          %v551 = vld [vmem:[%s475 + $0x40] sm:$0xff]
          %v552 = vld [vmem:[%s475 + $0x48] sm:$0xff]
          %v553 = vld [vmem:[%s475 + $0x50] sm:$0xff]
          %v554 = vld [vmem:[%s475 + $0x58] sm:$0xff]
          %v555 = vld [vmem:[%s475 + $0x60] sm:$0xff]
          %v556 = vld [vmem:[%s475 + $0x68] sm:$0xff]
          %v557 = vld [vmem:[%s475 + $0x70] sm:$0xff]
          %v558 = vld [vmem:[%s475 + $0x78] sm:$0xff]
          %v559 = vld [vmem:[%s475 + $0x80] sm:$0xff]
          %v560 = vld [vmem:[%s475 + $0x88] sm:$0xff]
          %v561 = vld [vmem:[%s475 + $0x90] sm:$0xff]
          %v562 = vld [vmem:[%s475 + $0x98] sm:$0xff]
          %v563 = vld [vmem:[%s475 + $0xa0] sm:$0xff]
          %v564 = vld [vmem:[%s475 + $0xa8] sm:$0xff]
          %v565 = vld [vmem:[%s475 + $0xb0] sm:$0xff]
          %v566 = vld [vmem:[%s475 + $0xb8] sm:$0xff]
          %v567 = vld [vmem:[%s475 + $0xc0] sm:$0xff]
          %v568 = vld [vmem:[%s475 + $0xc8] sm:$0xff]
          %v569 = vld [vmem:[%s475 + $0xd0] sm:$0xff]
          %v570 = vld [vmem:[%s475 + $0xd8] sm:$0xff]
          %v571 = vld [vmem:[%s475 + $0xe0] sm:$0xff]
          %v572 = vld [vmem:[%s475 + $0xe8] sm:$0xff]
          %v573 = vld [vmem:[%s475 + $0xf0] sm:$0xff]
          %v574 = vld [vmem:[%s475 + $0xf8] sm:$0xff]
          %v575 = vadd.f32 %v543, %v544
          %v576 = vadd.f32 %v575, %v545
          %v577 = vadd.f32 %v576, %v546
          %v578 = vadd.f32 %v577, %v547
          %v579 = vadd.f32 %v578, %v548
          %v580 = vadd.f32 %v579, %v549
          %v581 = vadd.f32 %v580, %v550
          %v582 = vadd.f32 %v581, %v551
          %v583 = vadd.f32 %v582, %v552
          %v584 = vadd.f32 %v583, %v553
          %v585 = vadd.f32 %v584, %v554
          %v586 = vadd.f32 %v585, %v555
          %v587 = vadd.f32 %v586, %v556
          %v588 = vadd.f32 %v587, %v557
          %v589 = vadd.f32 %v588, %v558
          %v590 = vadd.f32 %v589, %v559
          %v591 = vadd.f32 %v590, %v560
          %v592 = vadd.f32 %v591, %v561
          %v593 = vadd.f32 %v592, %v562
          %v594 = vadd.f32 %v593, %v563
          %v595 = vadd.f32 %v594, %v564
          %v596 = vadd.f32 %v595, %v565
          %v597 = vadd.f32 %v596, %v566
          %v598 = vadd.f32 %v597, %v567
          %v599 = vadd.f32 %v598, %v568
          %v600 = vadd.f32 %v599, %v569
          %v601 = vadd.f32 %v600, %v570
          %v602 = vadd.f32 %v601, %v571
          %v603 = vadd.f32 %v602, %v572
          %v604 = vadd.f32 %v603, %v573
          %v605 = vadd.f32 %v604, %v574
          %v606 = vrot.slane %v605, 4
          %v607 = vadd.f32 %v605, %v606
          %v608 = vrot.slane %v607, 2
          %v609 = vadd.f32 %v607, %v608
          %v610 = vrot.slane %v609, 1
          %v611 = vadd.f32 %v609, %v610
          %v612 = vld [vmem:[%s11] sm:$0xff]
          %v613 = vld [vmem:[%s11 + $0x8] sm:$0xff]
          %v614 = vld [vmem:[%s11 + $0x10] sm:$0xff]
          %v615 = vld [vmem:[%s11 + $0x18] sm:$0xff]
          %v616 = vld [vmem:[%s11 + $0x20] sm:$0xff]
          %v617 = vld [vmem:[%s11 + $0x28] sm:$0xff]
          %v618 = vld [vmem:[%s11 + $0x30] sm:$0xff]
          %v619 = vld [vmem:[%s11 + $0x38] sm:$0xff]
          %v620 = vld [vmem:[%s11 + $0x40] sm:$0xff]
          %v621 = vld [vmem:[%s11 + $0x48] sm:$0xff]
          %v622 = vld [vmem:[%s11 + $0x50] sm:$0xff]
          %v623 = vld [vmem:[%s11 + $0x58] sm:$0xff]
          %v624 = vld [vmem:[%s11 + $0x60] sm:$0xff]
          %v625 = vld [vmem:[%s11 + $0x68] sm:$0xff]
          %v626 = vld [vmem:[%s11 + $0x70] sm:$0xff]
          %v627 = vld [vmem:[%s11 + $0x78] sm:$0xff]
          %628 = vmatprep.subr.mxu0 0.0
          %629 = vmatpush1.msra.mxu0 %v612
          %630 = vmatprep.subr.mxu0 0.0
          %631 = vmatpush1.msra.mxu0 %v613
          %632 = vmatprep.subr.mxu0 0.0
          %633 = vmatpush1.msra.mxu0 %v614
          %634 = vmatprep.subr.mxu0 0.0
          %635 = vmatpush1.msra.mxu0 %v615
          %636 = vmatprep.subr.mxu0 0.0
          %637 = vmatpush1.msra.mxu0 %v616
          %638 = vmatprep.subr.mxu0 0.0
          %639 = vmatpush1.msra.mxu0 %v617
          %640 = vmatprep.subr.mxu0 0.0
          %641 = vmatpush1.msra.mxu0 %v618
          %642 = vmatprep.subr.mxu0 0.0
          %643 = vmatpush1.msra.mxu0 %v619
          %644 = vmatprep.subr.mxu0 0.0
          %645 = vmatpush1.msra.mxu0 %v620
          %646 = vmatprep.subr.mxu0 0.0
          %647 = vmatpush1.msra.mxu0 %v621
          %648 = vmatprep.subr.mxu0 0.0
          %649 = vmatpush1.msra.mxu0 %v622
          %650 = vmatprep.subr.mxu0 0.0
          %651 = vmatpush1.msra.mxu0 %v623
          %652 = vmatprep.subr.mxu0 0.0
          %653 = vmatpush1.msra.mxu0 %v624
          %654 = vmatprep.subr.mxu0 0.0
          %655 = vmatpush1.msra.mxu0 %v625
          %656 = vmatprep.subr.mxu0 0.0
          %657 = vmatpush1.msra.mxu0 %v626
          %658 = vmatprep.subr.mxu0 0.0
          %659 = vmatpush1.msra.mxu0 %v627
          %660 = vmatprep.subr.mxu0 0.0
          %661 = vmatpush1.msra.mxu0 0.0
          %662 = vmatprep.subr.mxu0 0.0
          %663 = vmatpush1.msra.mxu0 0.0
          %664 = vmatprep.subr.mxu0 0.0
          %665 = vmatpush1.msra.mxu0 0.0
          %666 = vmatprep.subr.mxu0 0.0
          %667 = vmatpush1.msra.mxu0 0.0
          %668 = vmatprep.subr.mxu0 0.0
          %669 = vmatpush1.msra.mxu0 0.0
          %670 = vmatprep.subr.mxu0 0.0
          %671 = vmatpush1.msra.mxu0 0.0
          %672 = vmatprep.subr.mxu0 0.0
          %673 = vmatpush1.msra.mxu0 0.0
          %674 = vmatprep.subr.mxu0 0.0
          %675 = vmatpush1.msra.mxu0 0.0
          %676 = vmatprep.subr.mxu0 0.0
          %677 = vmatpush1.msra.mxu0 0.0
          %678 = vmatprep.subr.mxu0 0.0
          %679 = vmatpush1.msra.mxu0 0.0
          %680 = vmatprep.subr.mxu0 0.0
          %681 = vmatpush1.msra.mxu0 0.0
          %682 = vmatprep.subr.mxu0 0.0
          %683 = vmatpush1.msra.mxu0 0.0
          %684 = vmatprep.subr.mxu0 0.0
          %685 = vmatpush1.msra.mxu0 0.0
          %686 = vmatprep.subr.mxu0 0.0
          %687 = vmatpush1.msra.mxu0 0.0
          %688 = vmatprep.subr.mxu0 0.0
          %689 = vmatpush1.msra.mxu0 0.0
          %690 = vmatprep.subr.mxu0 0.0
          %691 = vmatpush1.msra.mxu0 0.0
          %692 = vmatprep.mubr.f32.mxu0 0.0
          %693 = vmatmul.mubr.f32.gmra.mrb[0].mxu0 %v611
          %v694 = vpop.f32.mrb[0].mxu0
          %v695 = vadd.f32 0.0, %v694
          %v696 = vpop.f32.mrb[0].mxu0
          %697 = vdwg.mxu0
          %v698 = vmul.f32 %v695, 0.0009765625
          %v699 = vld [vmem:[#allocation14] sm:$0xff]
          %v700 = vld [vmem:[#allocation14 + $0x8] sm:$0xff]
          %v701 = vld [vmem:[#allocation14 + $0x10] sm:$0xff]
          %v702 = vld [vmem:[#allocation14 + $0x18] sm:$0xff]
          %vm703 = vcmask 261120
          %v705 = vsel %vm703, %v698, 0
          %707 = vmatprep.subr.mxu0 0.0
          %708 = vmatpush1.msra.mxu0 %v699
          %709 = vmatprep.subr.mxu0 0.0
          %710 = vmatpush1.msra.mxu0 %v700
          %711 = vmatprep.subr.mxu0 0.0
          %712 = vmatpush1.msra.mxu0 %v701
          %713 = vmatprep.subr.mxu0 0.0
          %714 = vmatpush1.msra.mxu0 %v702
          %715 = vmatprep.subr.mxu0 0.0
          %716 = vmatpush1.msra.mxu0 0.0
          %717 = vmatprep.subr.mxu0 0.0
          %718 = vmatpush1.msra.mxu0 0.0
          %719 = vmatprep.subr.mxu0 0.0
          %720 = vmatpush1.msra.mxu0 0.0
          %721 = vmatprep.subr.mxu0 0.0
          %722 = vmatpush1.msra.mxu0 0.0
          %723 = vmatprep.subr.mxu0 0.0
          %724 = vmatpush1.msra.mxu0 0.0
          %725 = vmatprep.subr.mxu0 0.0
          %726 = vmatpush1.msra.mxu0 0.0
          %727 = vmatprep.subr.mxu0 0.0
          %728 = vmatpush1.msra.mxu0 0.0
          %729 = vmatprep.subr.mxu0 0.0
          %730 = vmatpush1.msra.mxu0 0.0
          %731 = vmatprep.subr.mxu0 0.0
          %732 = vmatpush1.msra.mxu0 0.0
          %733 = vmatprep.subr.mxu0 0.0
          %734 = vmatpush1.msra.mxu0 0.0
          %735 = vmatprep.subr.mxu0 0.0
          %736 = vmatpush1.msra.mxu0 0.0
          %737 = vmatprep.subr.mxu0 0.0
          %738 = vmatpush1.msra.mxu0 0.0
          %739 = vmatprep.subr.mxu0 0.0
          %740 = vmatpush1.msra.mxu0 0.0
          %741 = vmatprep.subr.mxu0 0.0
          %742 = vmatpush1.msra.mxu0 0.0
          %743 = vmatprep.subr.mxu0 0.0
          %744 = vmatpush1.msra.mxu0 0.0
          %745 = vmatprep.subr.mxu0 0.0
          %746 = vmatpush1.msra.mxu0 0.0
          %747 = vmatprep.subr.mxu0 0.0
          %748 = vmatpush1.msra.mxu0 0.0
          %749 = vmatprep.subr.mxu0 0.0
          %750 = vmatpush1.msra.mxu0 0.0
          %751 = vmatprep.subr.mxu0 0.0
          %752 = vmatpush1.msra.mxu0 0.0
          %753 = vmatprep.subr.mxu0 0.0
          %754 = vmatpush1.msra.mxu0 0.0
          %755 = vmatprep.subr.mxu0 0.0
          %756 = vmatpush1.msra.mxu0 0.0
          %757 = vmatprep.subr.mxu0 0.0
          %758 = vmatpush1.msra.mxu0 0.0
          %759 = vmatprep.subr.mxu0 0.0
          %760 = vmatpush1.msra.mxu0 0.0
          %761 = vmatprep.subr.mxu0 0.0
          %762 = vmatpush1.msra.mxu0 0.0
          %763 = vmatprep.subr.mxu0 0.0
          %764 = vmatpush1.msra.mxu0 0.0
          %765 = vmatprep.subr.mxu0 0.0
          %766 = vmatpush1.msra.mxu0 0.0
          %767 = vmatprep.subr.mxu0 0.0
          %768 = vmatpush1.msra.mxu0 0.0
          %769 = vmatprep.subr.mxu0 0.0
          %770 = vmatpush1.msra.mxu0 0.0
          %771 = vmatprep.mubr.f32.mxu0 0.0
          %772 = vmatmul.mubr.f32.gmra.mrb[0].mxu0 %v705
          %v773 = vpop.f32.mrb[0].mxu0
          %v774 = vadd.f32 0.0, %v773
          %v775 = vpop.f32.mrb[0].mxu0
          %776 = vdwg.mxu0
          %v777 = vlaneseq
          %v778 = vshrl.u32 %v777, 7
          %v779 = vsub.s32 0, %v778
          %v780 = vrot.slane %v774, %v779
          %v781 = vsub.f32 %v543, %v780
          %v782 = vsub.f32 %v544, %v780
          %v783 = vsub.f32 %v545, %v780
          %v784 = vsub.f32 %v546, %v780
          %v785 = vsub.f32 %v547, %v780
          %v786 = vsub.f32 %v548, %v780
          %v787 = vsub.f32 %v549, %v780
          %v788 = vsub.f32 %v550, %v780
          %v789 = vsub.f32 %v551, %v780
          %v790 = vsub.f32 %v552, %v780
          %v791 = vsub.f32 %v553, %v780
          %v792 = vsub.f32 %v554, %v780
          %v793 = vsub.f32 %v555, %v780
          %v794 = vsub.f32 %v556, %v780
          %v795 = vsub.f32 %v557, %v780
          %v796 = vsub.f32 %v558, %v780
          %v797 = vsub.f32 %v559, %v780
          %v798 = vsub.f32 %v560, %v780
          %v799 = vsub.f32 %v561, %v780
          %v800 = vsub.f32 %v562, %v780
          %v801 = vsub.f32 %v563, %v780
          %v802 = vsub.f32 %v564, %v780
          %v803 = vsub.f32 %v565, %v780
          %v804 = vsub.f32 %v566, %v780
          %v805 = vsub.f32 %v567, %v780
          %v806 = vsub.f32 %v568, %v780
          %v807 = vsub.f32 %v569, %v780
          %v808 = vsub.f32 %v570, %v780
          %v809 = vsub.f32 %v571, %v780
          %v810 = vsub.f32 %v572, %v780
          %v811 = vsub.f32 %v573, %v780
          %v812 = vsub.f32 %v574, %v780
          %v813 = vmul.f32 %v781, %v781
          %v814 = vmul.f32 %v782, %v782
          %v815 = vmul.f32 %v783, %v783
          %v816 = vmul.f32 %v784, %v784
          %v817 = vmul.f32 %v785, %v785
          %v818 = vmul.f32 %v786, %v786
          %v819 = vmul.f32 %v787, %v787
          %v820 = vmul.f32 %v788, %v788
          %v821 = vmul.f32 %v789, %v789
          %v822 = vmul.f32 %v790, %v790
          %v823 = vmul.f32 %v791, %v791
          %v824 = vmul.f32 %v792, %v792
          %v825 = vmul.f32 %v793, %v793
          %v826 = vmul.f32 %v794, %v794
          %v827 = vmul.f32 %v795, %v795
          %v828 = vmul.f32 %v796, %v796
          %v829 = vmul.f32 %v797, %v797
          %v830 = vmul.f32 %v798, %v798
          %v831 = vmul.f32 %v799, %v799
          %v832 = vmul.f32 %v800, %v800
          %v833 = vmul.f32 %v801, %v801
          %v834 = vmul.f32 %v802, %v802
          %v835 = vmul.f32 %v803, %v803
          %v836 = vmul.f32 %v804, %v804
          %v837 = vmul.f32 %v805, %v805
          %v838 = vmul.f32 %v806, %v806
          %v839 = vmul.f32 %v807, %v807
          %v840 = vmul.f32 %v808, %v808
          %v841 = vmul.f32 %v809, %v809
          %v842 = vmul.f32 %v810, %v810
          %v843 = vmul.f32 %v811, %v811
          %v844 = vmul.f32 %v812, %v812
          %v845 = vadd.f32 %v813, %v814
          %v846 = vadd.f32 %v845, %v815
          %v847 = vadd.f32 %v846, %v816
          %v848 = vadd.f32 %v847, %v817
          %v849 = vadd.f32 %v848, %v818
          %v850 = vadd.f32 %v849, %v819
          %v851 = vadd.f32 %v850, %v820
          %v852 = vadd.f32 %v851, %v821
          %v853 = vadd.f32 %v852, %v822
          %v854 = vadd.f32 %v853, %v823
          %v855 = vadd.f32 %v854, %v824
          %v856 = vadd.f32 %v855, %v825
          %v857 = vadd.f32 %v856, %v826
          %v858 = vadd.f32 %v857, %v827
          %v859 = vadd.f32 %v858, %v828
          %v860 = vadd.f32 %v859, %v829
          %v861 = vadd.f32 %v860, %v830
          %v862 = vadd.f32 %v861, %v831
          %v863 = vadd.f32 %v862, %v832
          %v864 = vadd.f32 %v863, %v833
          %v865 = vadd.f32 %v864, %v834
          %v866 = vadd.f32 %v865, %v835
          %v867 = vadd.f32 %v866, %v836
          %v868 = vadd.f32 %v867, %v837
          %v869 = vadd.f32 %v868, %v838
          %v870 = vadd.f32 %v869, %v839
          %v871 = vadd.f32 %v870, %v840
          %v872 = vadd.f32 %v871, %v841
          %v873 = vadd.f32 %v872, %v842
          %v874 = vadd.f32 %v873, %v843
          %v875 = vadd.f32 %v874, %v844
          %v876 = vrot.slane %v875, 4
          %v877 = vadd.f32 %v875, %v876
          %v878 = vrot.slane %v877, 2
          %v879 = vadd.f32 %v877, %v878
          %v880 = vrot.slane %v879, 1
          %v881 = vadd.f32 %v879, %v880
          %882 = vmatprep.subr.mxu0 0.0
          %883 = vmatpush1.msra.mxu0 %v612
          %884 = vmatprep.subr.mxu0 0.0
          %885 = vmatpush1.msra.mxu0 %v613
          %886 = vmatprep.subr.mxu0 0.0
          %887 = vmatpush1.msra.mxu0 %v614
          %888 = vmatprep.subr.mxu0 0.0
          %889 = vmatpush1.msra.mxu0 %v615
          %890 = vmatprep.subr.mxu0 0.0
          %891 = vmatpush1.msra.mxu0 %v616
          %892 = vmatprep.subr.mxu0 0.0
          %893 = vmatpush1.msra.mxu0 %v617
          %894 = vmatprep.subr.mxu0 0.0
          %895 = vmatpush1.msra.mxu0 %v618
          %896 = vmatprep.subr.mxu0 0.0
          %897 = vmatpush1.msra.mxu0 %v619
          %898 = vmatprep.subr.mxu0 0.0
          %899 = vmatpush1.msra.mxu0 %v620
          %900 = vmatprep.subr.mxu0 0.0
          %901 = vmatpush1.msra.mxu0 %v621
          %902 = vmatprep.subr.mxu0 0.0
          %903 = vmatpush1.msra.mxu0 %v622
          %904 = vmatprep.subr.mxu0 0.0
          %905 = vmatpush1.msra.mxu0 %v623
          %906 = vmatprep.subr.mxu0 0.0
          %907 = vmatpush1.msra.mxu0 %v624
          %908 = vmatprep.subr.mxu0 0.0
          %909 = vmatpush1.msra.mxu0 %v625
          %910 = vmatprep.subr.mxu0 0.0
          %911 = vmatpush1.msra.mxu0 %v626
          %912 = vmatprep.subr.mxu0 0.0
          %913 = vmatpush1.msra.mxu0 %v627
          %914 = vmatprep.subr.mxu0 0.0
          %915 = vmatpush1.msra.mxu0 0.0
          %916 = vmatprep.subr.mxu0 0.0
          %917 = vmatpush1.msra.mxu0 0.0
          %918 = vmatprep.subr.mxu0 0.0
          %919 = vmatpush1.msra.mxu0 0.0
          %920 = vmatprep.subr.mxu0 0.0
          %921 = vmatpush1.msra.mxu0 0.0
          %922 = vmatprep.subr.mxu0 0.0
          %923 = vmatpush1.msra.mxu0 0.0
          %924 = vmatprep.subr.mxu0 0.0
          %925 = vmatpush1.msra.mxu0 0.0
          %926 = vmatprep.subr.mxu0 0.0
          %927 = vmatpush1.msra.mxu0 0.0
          %928 = vmatprep.subr.mxu0 0.0
          %929 = vmatpush1.msra.mxu0 0.0
          %930 = vmatprep.subr.mxu0 0.0
          %931 = vmatpush1.msra.mxu0 0.0
          %932 = vmatprep.subr.mxu0 0.0
          %933 = vmatpush1.msra.mxu0 0.0
          %934 = vmatprep.subr.mxu0 0.0
          %935 = vmatpush1.msra.mxu0 0.0
          %936 = vmatprep.subr.mxu0 0.0
          %937 = vmatpush1.msra.mxu0 0.0
          %938 = vmatprep.subr.mxu0 0.0
          %939 = vmatpush1.msra.mxu0 0.0
          %940 = vmatprep.subr.mxu0 0.0
          %941 = vmatpush1.msra.mxu0 0.0
          %942 = vmatprep.subr.mxu0 0.0
          %943 = vmatpush1.msra.mxu0 0.0
          %944 = vmatprep.subr.mxu0 0.0
          %945 = vmatpush1.msra.mxu0 0.0
          %946 = vmatprep.mubr.f32.mxu0 0.0
          %947 = vmatmul.mubr.f32.gmra.mrb[0].mxu0 %v881
          %v948 = vpop.f32.mrb[0].mxu0
          %v949 = vadd.f32 0.0, %v948
          %v950 = vpop.f32.mrb[0].mxu0
          %951 = vdwg.mxu0
          %v952 = vmul.f32 %v949, 0.0009765625
          %v953 = vadd.f32 %v952, 1e-06
          %v954 = vrsqrt.pop %v953
          %v956 = vsel %vm703, %v954, 0
          %958 = vmatprep.subr.mxu0 0.0
          %959 = vmatpush1.msra.mxu0 %v699
          %960 = vmatprep.subr.mxu0 0.0
          %961 = vmatpush1.msra.mxu0 %v700
          %962 = vmatprep.subr.mxu0 0.0
          %963 = vmatpush1.msra.mxu0 %v701
          %964 = vmatprep.subr.mxu0 0.0
          %965 = vmatpush1.msra.mxu0 %v702
          %966 = vmatprep.subr.mxu0 0.0
          %967 = vmatpush1.msra.mxu0 0.0
          %968 = vmatprep.subr.mxu0 0.0
          %969 = vmatpush1.msra.mxu0 0.0
          %970 = vmatprep.subr.mxu0 0.0
          %971 = vmatpush1.msra.mxu0 0.0
          %972 = vmatprep.subr.mxu0 0.0
          %973 = vmatpush1.msra.mxu0 0.0
          %974 = vmatprep.subr.mxu0 0.0
          %975 = vmatpush1.msra.mxu0 0.0
          %976 = vmatprep.subr.mxu0 0.0
          %977 = vmatpush1.msra.mxu0 0.0
          %978 = vmatprep.subr.mxu0 0.0
          %979 = vmatpush1.msra.mxu0 0.0
          %980 = vmatprep.subr.mxu0 0.0
          %981 = vmatpush1.msra.mxu0 0.0
          %982 = vmatprep.subr.mxu0 0.0
          %983 = vmatpush1.msra.mxu0 0.0
          %984 = vmatprep.subr.mxu0 0.0
          %985 = vmatpush1.msra.mxu0 0.0
          %986 = vmatprep.subr.mxu0 0.0
          %987 = vmatpush1.msra.mxu0 0.0
          %988 = vmatprep.subr.mxu0 0.0
          %989 = vmatpush1.msra.mxu0 0.0
          %990 = vmatprep.subr.mxu0 0.0
          %991 = vmatpush1.msra.mxu0 0.0
          %992 = vmatprep.subr.mxu0 0.0
          %993 = vmatpush1.msra.mxu0 0.0
          %994 = vmatprep.subr.mxu0 0.0
          %995 = vmatpush1.msra.mxu0 0.0
          %996 = vmatprep.subr.mxu0 0.0
          %997 = vmatpush1.msra.mxu0 0.0
          %998 = vmatprep.subr.mxu0 0.0
          %999 = vmatpush1.msra.mxu0 0.0
          %1000 = vmatprep.subr.mxu0 0.0
          %1001 = vmatpush1.msra.mxu0 0.0
          %1002 = vmatprep.subr.mxu0 0.0
          %1003 = vmatpush1.msra.mxu0 0.0
          %1004 = vmatprep.subr.mxu0 0.0
          %1005 = vmatpush1.msra.mxu0 0.0
          %1006 = vmatprep.subr.mxu0 0.0
          %1007 = vmatpush1.msra.mxu0 0.0
          %1008 = vmatprep.subr.mxu0 0.0
          %1009 = vmatpush1.msra.mxu0 0.0
          %1010 = vmatprep.subr.mxu0 0.0
          %1011 = vmatpush1.msra.mxu0 0.0
          %1012 = vmatprep.subr.mxu0 0.0
          %1013 = vmatpush1.msra.mxu0 0.0
          %1014 = vmatprep.subr.mxu0 0.0
          %1015 = vmatpush1.msra.mxu0 0.0
          %1016 = vmatprep.subr.mxu0 0.0
          %1017 = vmatpush1.msra.mxu0 0.0
          %1018 = vmatprep.subr.mxu0 0.0
          %1019 = vmatpush1.msra.mxu0 0.0
          %1020 = vmatprep.subr.mxu0 0.0
          %1021 = vmatpush1.msra.mxu0 0.0
          %1022 = vmatprep.mubr.f32.mxu0 0.0
          %1023 = vmatmul.mubr.f32.gmra.mrb[0].mxu0 %v956
          %v1024 = vpop.f32.mrb[0].mxu0
          %v1025 = vadd.f32 0.0, %v1024
          %v1026 = vpop.f32.mrb[0].mxu0
          %1027 = vdwg.mxu0
          %v1028 = vlaneseq
          %v1029 = vshrl.u32 %v1028, 7
          %v1030 = vsub.s32 0, %v1029
          %v1031 = vrot.slane %v1025, %v1030
          %v1032 = vmul.f32 %v781, %v1031
          %v1033 = vmul.f32 %v782, %v1031
          %v1034 = vmul.f32 %v783, %v1031
          %v1035 = vmul.f32 %v784, %v1031
          %v1036 = vmul.f32 %v785, %v1031
          %v1037 = vmul.f32 %v786, %v1031
          %v1038 = vmul.f32 %v787, %v1031
          %v1039 = vmul.f32 %v788, %v1031
          %v1040 = vmul.f32 %v789, %v1031
          %v1041 = vmul.f32 %v790, %v1031
          %v1042 = vmul.f32 %v791, %v1031
          %v1043 = vmul.f32 %v792, %v1031
          %v1044 = vmul.f32 %v793, %v1031
          %v1045 = vmul.f32 %v794, %v1031
          %v1046 = vmul.f32 %v795, %v1031
          %v1047 = vmul.f32 %v796, %v1031
          %v1048 = vmul.f32 %v797, %v1031
          %v1049 = vmul.f32 %v798, %v1031
          %v1050 = vmul.f32 %v799, %v1031
          %v1051 = vmul.f32 %v800, %v1031
          %v1052 = vmul.f32 %v801, %v1031
          %v1053 = vmul.f32 %v802, %v1031
          %v1054 = vmul.f32 %v803, %v1031
          %v1055 = vmul.f32 %v804, %v1031
          %v1056 = vmul.f32 %v805, %v1031
          %v1057 = vmul.f32 %v806, %v1031
          %v1058 = vmul.f32 %v807, %v1031
          %v1059 = vmul.f32 %v808, %v1031
          %v1060 = vmul.f32 %v809, %v1031
          %v1061 = vmul.f32 %v810, %v1031
          %v1062 = vmul.f32 %v811, %v1031
          %v1063 = vmul.f32 %v812, %v1031
          %v1064 = vld [vmem:[%s1] sm:$0x1]
          %v1066 = vlaneseq
          %v1067 = vshrl.u32 %v1066, 7
          %v1068 = vsub.s32 0, %v1067
          %v1069 = vrot.slane %v1064, %v1068
          %v1071 = vmul.f32 %v1032, %v1069
          %v1072 = vmul.f32 %v1033, %v1069
          %v1073 = vmul.f32 %v1034, %v1069
          %v1074 = vmul.f32 %v1035, %v1069
          %v1075 = vmul.f32 %v1036, %v1069
          %v1076 = vmul.f32 %v1037, %v1069
          %v1077 = vmul.f32 %v1038, %v1069
          %v1078 = vmul.f32 %v1039, %v1069
          %v1079 = vmul.f32 %v1040, %v1069
          %v1080 = vmul.f32 %v1041, %v1069
          %v1081 = vmul.f32 %v1042, %v1069
          %v1082 = vmul.f32 %v1043, %v1069
          %v1083 = vmul.f32 %v1044, %v1069
          %v1084 = vmul.f32 %v1045, %v1069
          %v1085 = vmul.f32 %v1046, %v1069
          %v1086 = vmul.f32 %v1047, %v1069
          %v1087 = vmul.f32 %v1048, %v1069
          %v1088 = vmul.f32 %v1049, %v1069
          %v1089 = vmul.f32 %v1050, %v1069
          %v1090 = vmul.f32 %v1051, %v1069
          %v1091 = vmul.f32 %v1052, %v1069
          %v1092 = vmul.f32 %v1053, %v1069
          %v1093 = vmul.f32 %v1054, %v1069
          %v1094 = vmul.f32 %v1055, %v1069
          %v1095 = vmul.f32 %v1056, %v1069
          %v1096 = vmul.f32 %v1057, %v1069
          %v1097 = vmul.f32 %v1058, %v1069
          %v1098 = vmul.f32 %v1059, %v1069
          %v1099 = vmul.f32 %v1060, %v1069
          %v1100 = vmul.f32 %v1061, %v1069
          %v1101 = vmul.f32 %v1062, %v1069
          %v1102 = vmul.f32 %v1063, %v1069
          %v1103 = vld [vmem:[%s2] sm:$0x1]
          %v1105 = vlaneseq
          %v1106 = vshrl.u32 %v1105, 7
          %v1107 = vsub.s32 0, %v1106
          %v1108 = vrot.slane %v1103, %v1107
          %v1110 = vadd.f32 %v1071, %v1108
          %v1111 = vadd.f32 %v1072, %v1108
          %v1112 = vadd.f32 %v1073, %v1108
          %v1113 = vadd.f32 %v1074, %v1108
          %v1114 = vadd.f32 %v1075, %v1108
          %v1115 = vadd.f32 %v1076, %v1108
          %v1116 = vadd.f32 %v1077, %v1108
          %v1117 = vadd.f32 %v1078, %v1108
          %v1118 = vadd.f32 %v1079, %v1108
          %v1119 = vadd.f32 %v1080, %v1108
          %v1120 = vadd.f32 %v1081, %v1108
          %v1121 = vadd.f32 %v1082, %v1108
          %v1122 = vadd.f32 %v1083, %v1108
          %v1123 = vadd.f32 %v1084, %v1108
          %v1124 = vadd.f32 %v1085, %v1108
          %v1125 = vadd.f32 %v1086, %v1108
          %v1126 = vadd.f32 %v1087, %v1108
          %v1127 = vadd.f32 %v1088, %v1108
          %v1128 = vadd.f32 %v1089, %v1108
          %v1129 = vadd.f32 %v1090, %v1108
          %v1130 = vadd.f32 %v1091, %v1108
          %v1131 = vadd.f32 %v1092, %v1108
          %v1132 = vadd.f32 %v1093, %v1108
          %v1133 = vadd.f32 %v1094, %v1108
          %v1134 = vadd.f32 %v1095, %v1108
          %v1135 = vadd.f32 %v1096, %v1108
          %v1136 = vadd.f32 %v1097, %v1108
          %v1137 = vadd.f32 %v1098, %v1108
          %v1138 = vadd.f32 %v1099, %v1108
          %v1139 = vadd.f32 %v1100, %v1108
          %v1140 = vadd.f32 %v1101, %v1108
          %v1141 = vadd.f32 %v1102, %v1108
          %v1142 = vpack.c.bf16 %v1111, %v1110
          %v1143 = vpack.c.bf16 %v1113, %v1112
          %v1144 = vpack.c.bf16 %v1115, %v1114
          %v1145 = vpack.c.bf16 %v1117, %v1116
          %v1146 = vpack.c.bf16 %v1119, %v1118
          %v1147 = vpack.c.bf16 %v1121, %v1120
          %v1148 = vpack.c.bf16 %v1123, %v1122
          %v1149 = vpack.c.bf16 %v1125, %v1124
          %v1150 = vpack.c.bf16 %v1127, %v1126
          %v1151 = vpack.c.bf16 %v1129, %v1128
          %v1152 = vpack.c.bf16 %v1131, %v1130
          %v1153 = vpack.c.bf16 %v1133, %v1132
          %v1154 = vpack.c.bf16 %v1135, %v1134
          %v1155 = vpack.c.bf16 %v1137, %v1136
          %v1156 = vpack.c.bf16 %v1139, %v1138
          %v1157 = vpack.c.bf16 %v1141, %v1140
          %v1158 = vld [vmem:[%s3] sm:$0xf]
          %v1159 = vld [vmem:[%s3 + $0x4] sm:$0xf]
          %v1160 = vld [vmem:[%s3 + $0x8] sm:$0xf]
          %v1161 = vld [vmem:[%s3 + $0xc] sm:$0xf]
          %v1162 = vld [vmem:[%s3 + $0x10] sm:$0xf]
          %v1163 = vld [vmem:[%s3 + $0x14] sm:$0xf]
          %v1164 = vld [vmem:[%s3 + $0x18] sm:$0xf]
          %v1165 = vld [vmem:[%s3 + $0x1c] sm:$0xf]
          %v1166 = vld [vmem:[%s3 + $0x20] sm:$0xf]
          %v1167 = vld [vmem:[%s3 + $0x24] sm:$0xf]
          %v1168 = vld [vmem:[%s3 + $0x28] sm:$0xf]
          %v1169 = vld [vmem:[%s3 + $0x2c] sm:$0xf]
          %v1170 = vld [vmem:[%s3 + $0x30] sm:$0xf]
          %v1171 = vld [vmem:[%s3 + $0x34] sm:$0xf]
          %v1172 = vld [vmem:[%s3 + $0x38] sm:$0xf]
          %v1173 = vld [vmem:[%s3 + $0x3c] sm:$0xf]
          %v1174 = vld [vmem:[#allocation8] sm:$0x1]
          %v1176 = vlaneseq
          %v1177 = vshrl.u32 %v1176, 7
          %v1178 = vsub.s32 0, %v1177
          %v1179 = vrot.slane %v1174, %v1178
          %v1197 = vunpack.c.l.b16 %v1158
          %v1198 = vunpack.c.l.b16 %v1159
          %v1199 = vunpack.c.l.b16 %v1160
          %v1200 = vunpack.c.l.b16 %v1161
          %v1201 = vunpack.c.l.b16 %v1162
          %v1202 = vunpack.c.l.b16 %v1163
          %v1203 = vunpack.c.l.b16 %v1164
          %v1204 = vunpack.c.l.b16 %v1165
          %v1205 = vunpack.c.l.b16 %v1166
          %v1206 = vunpack.c.l.b16 %v1167
          %v1207 = vunpack.c.l.b16 %v1168
          %v1208 = vunpack.c.l.b16 %v1169
          %v1209 = vunpack.c.l.b16 %v1170
          %v1210 = vunpack.c.l.b16 %v1171
          %v1211 = vunpack.c.l.b16 %v1172
          %v1212 = vunpack.c.l.b16 %v1173
          %v1213 = vpack.c.b16 %v1198, %v1197
          %v1214 = vpack.c.b16 %v1200, %v1199
          %v1215 = vpack.c.b16 %v1202, %v1201
          %v1216 = vpack.c.b16 %v1204, %v1203
          %v1217 = vpack.c.b16 %v1206, %v1205
          %v1218 = vpack.c.b16 %v1208, %v1207
          %v1219 = vpack.c.b16 %v1210, %v1209
          %v1220 = vpack.c.b16 %v1212, %v1211
          %1229 = vmatprep.subr.bf16.mxu0 0
          %1230 = vmatpush1.bf16.msra.mxu0 %v1213
          %1231 = vmatprep.subr.bf16.mxu0 0
          %1232 = vmatpush1.bf16.msra.mxu0 %v1214
          %1233 = vmatprep.subr.bf16.mxu0 0
          %1234 = vmatpush1.bf16.msra.mxu0 %v1215
          %1235 = vmatprep.subr.bf16.mxu0 0
          %1236 = vmatpush1.bf16.msra.mxu0 %v1216
          %1237 = vmatprep.subr.bf16.mxu0 0
          %1238 = vmatpush1.bf16.msra.mxu0 %v1217
          %1239 = vmatprep.subr.bf16.mxu0 0
          %1240 = vmatpush1.bf16.msra.mxu0 %v1218
          %1241 = vmatprep.subr.bf16.mxu0 0
          %1242 = vmatpush1.bf16.msra.mxu0 %v1219
          %1243 = vmatprep.subr.bf16.mxu0 0
          %1244 = vmatpush1.bf16.msra.mxu0 %v1220
          %1245 = vmatprep.subr.bf16.mxu0 0
          %1246 = vmatpush1.bf16.msra.mxu0 0
          %1247 = vmatprep.subr.bf16.mxu0 0
          %1248 = vmatpush1.bf16.msra.mxu0 0
          %1249 = vmatprep.subr.bf16.mxu0 0
          %1250 = vmatpush1.bf16.msra.mxu0 0
          %1251 = vmatprep.subr.bf16.mxu0 0
          %1252 = vmatpush1.bf16.msra.mxu0 0
          %1253 = vmatprep.subr.bf16.mxu0 0
          %1254 = vmatpush1.bf16.msra.mxu0 0
          %1255 = vmatprep.subr.bf16.mxu0 0
          %1256 = vmatpush1.bf16.msra.mxu0 0
          %1257 = vmatprep.subr.bf16.mxu0 0
          %1258 = vmatpush1.bf16.msra.mxu0 0
          %1259 = vmatprep.subr.bf16.mxu0 0
          %1260 = vmatpush1.bf16.msra.mxu0 0
          %1261 = vmatprep.mubr.bf16.mxu0 0
          %1262 = vmatmul.mubr.bf16.gmra.mrb[0].mxu0 %v1142
          %v1263 = vpop.f32.mrb[0].mxu0
          %v1264 = vadd.f32 %v1179, %v1263
          %v1265 = vpop.f32.mrb[0].mxu0
          %v1266 = vpop.f32.mrb[0].mxu0
          %v1267 = vadd.f32 %v1179, %v1266
          %v1268 = vpop.f32.mrb[0].mxu0
          %1269 = vmatprep.mubr.bf16.mxu0 0
          %1270 = vmatmul.mubr.bf16.gmra.mrb[0].mxu0 %v1143
          %v1271 = vpop.f32.mrb[0].mxu0
          %v1272 = vadd.f32 %v1179, %v1271
          %v1273 = vpop.f32.mrb[0].mxu0
          %v1274 = vpop.f32.mrb[0].mxu0
          %v1275 = vadd.f32 %v1179, %v1274
          %v1276 = vpop.f32.mrb[0].mxu0
          %1277 = vmatprep.mubr.bf16.mxu0 0
          %1278 = vmatmul.mubr.bf16.gmra.mrb[0].mxu0 %v1144
          %v1279 = vpop.f32.mrb[0].mxu0
          %v1280 = vadd.f32 %v1179, %v1279
          %v1281 = vpop.f32.mrb[0].mxu0
          %v1282 = vpop.f32.mrb[0].mxu0
          %v1283 = vadd.f32 %v1179, %v1282
          %v1284 = vpop.f32.mrb[0].mxu0
          %1285 = vmatprep.mubr.bf16.mxu0 0
          %1286 = vmatmul.mubr.bf16.gmra.mrb[0].mxu0 %v1145
          %v1287 = vpop.f32.mrb[0].mxu0
          %v1288 = vadd.f32 %v1179, %v1287
          %v1289 = vpop.f32.mrb[0].mxu0
          %v1290 = vpop.f32.mrb[0].mxu0
          %v1291 = vadd.f32 %v1179, %v1290
          %v1292 = vpop.f32.mrb[0].mxu0
          %1293 = vmatprep.mubr.bf16.mxu0 0
          %1294 = vmatmul.mubr.bf16.gmra.mrb[0].mxu0 %v1146
          %v1295 = vpop.f32.mrb[0].mxu0
          %v1296 = vadd.f32 %v1179, %v1295
          %v1297 = vpop.f32.mrb[0].mxu0
          %v1298 = vpop.f32.mrb[0].mxu0
          %v1299 = vadd.f32 %v1179, %v1298
          %v1300 = vpop.f32.mrb[0].mxu0
          %1301 = vmatprep.mubr.bf16.mxu0 0
          %1302 = vmatmul.mubr.bf16.gmra.mrb[0].mxu0 %v1147
          %v1303 = vpop.f32.mrb[0].mxu0
          %v1304 = vadd.f32 %v1179, %v1303
          %v1305 = vpop.f32.mrb[0].mxu0
          %v1306 = vpop.f32.mrb[0].mxu0
          %v1307 = vadd.f32 %v1179, %v1306
          %v1308 = vpop.f32.mrb[0].mxu0
          %1309 = vmatprep.mubr.bf16.mxu0 0
          %1310 = vmatmul.mubr.bf16.gmra.mrb[0].mxu0 %v1148
          %v1311 = vpop.f32.mrb[0].mxu0
          %v1312 = vadd.f32 %v1179, %v1311
          %v1313 = vpop.f32.mrb[0].mxu0
          %v1314 = vpop.f32.mrb[0].mxu0
          %v1315 = vadd.f32 %v1179, %v1314
          %v1316 = vpop.f32.mrb[0].mxu0
          %1317 = vmatprep.mubr.bf16.mxu0 0
          %1318 = vmatmul.mubr.bf16.gmra.mrb[0].mxu0 %v1149
          %v1319 = vpop.f32.mrb[0].mxu0
          %v1320 = vadd.f32 %v1179, %v1319
          %v1321 = vpop.f32.mrb[0].mxu0
          %v1322 = vpop.f32.mrb[0].mxu0
          %v1323 = vadd.f32 %v1179, %v1322
          %v1324 = vpop.f32.mrb[0].mxu0
          %1325 = vmatprep.mubr.bf16.mxu0 0
          %1326 = vmatmul.mubr.bf16.gmra.mrb[0].mxu0 %v1150
          %v1327 = vpop.f32.mrb[0].mxu0
          %v1328 = vadd.f32 %v1179, %v1327
          %v1329 = vpop.f32.mrb[0].mxu0
          %v1330 = vpop.f32.mrb[0].mxu0
          %v1331 = vadd.f32 %v1179, %v1330
          %v1332 = vpop.f32.mrb[0].mxu0
          %1333 = vmatprep.mubr.bf16.mxu0 0
          %1334 = vmatmul.mubr.bf16.gmra.mrb[0].mxu0 %v1151
          %v1335 = vpop.f32.mrb[0].mxu0
          %v1336 = vadd.f32 %v1179, %v1335
          %v1337 = vpop.f32.mrb[0].mxu0
          %v1338 = vpop.f32.mrb[0].mxu0
          %v1339 = vadd.f32 %v1179, %v1338
          %v1340 = vpop.f32.mrb[0].mxu0
          %1341 = vmatprep.mubr.bf16.mxu0 0
          %1342 = vmatmul.mubr.bf16.gmra.mrb[0].mxu0 %v1152
          %v1343 = vpop.f32.mrb[0].mxu0
          %v1344 = vadd.f32 %v1179, %v1343
          %v1345 = vpop.f32.mrb[0].mxu0
          %v1346 = vpop.f32.mrb[0].mxu0
          %v1347 = vadd.f32 %v1179, %v1346
          %v1348 = vpop.f32.mrb[0].mxu0
          %1349 = vmatprep.mubr.bf16.mxu0 0
          %1350 = vmatmul.mubr.bf16.gmra.mrb[0].mxu0 %v1153
          %v1351 = vpop.f32.mrb[0].mxu0
          %v1352 = vadd.f32 %v1179, %v1351
          %v1353 = vpop.f32.mrb[0].mxu0
          %v1354 = vpop.f32.mrb[0].mxu0
          %v1355 = vadd.f32 %v1179, %v1354
          %v1356 = vpop.f32.mrb[0].mxu0
          %1357 = vmatprep.mubr.bf16.mxu0 0
          %1358 = vmatmul.mubr.bf16.gmra.mrb[0].mxu0 %v1154
          %v1359 = vpop.f32.mrb[0].mxu0
          %v1360 = vadd.f32 %v1179, %v1359
          %v1361 = vpop.f32.mrb[0].mxu0
          %v1362 = vpop.f32.mrb[0].mxu0
          %v1363 = vadd.f32 %v1179, %v1362
          %v1364 = vpop.f32.mrb[0].mxu0
          %1365 = vmatprep.mubr.bf16.mxu0 0
          %1366 = vmatmul.mubr.bf16.gmra.mrb[0].mxu0 %v1155
          %v1367 = vpop.f32.mrb[0].mxu0
          %v1368 = vadd.f32 %v1179, %v1367
          %v1369 = vpop.f32.mrb[0].mxu0
          %v1370 = vpop.f32.mrb[0].mxu0
          %v1371 = vadd.f32 %v1179, %v1370
          %v1372 = vpop.f32.mrb[0].mxu0
          %1373 = vmatprep.mubr.bf16.mxu0 0
          %1374 = vmatmul.mubr.bf16.gmra.mrb[0].mxu0 %v1156
          %v1375 = vpop.f32.mrb[0].mxu0
          %v1376 = vadd.f32 %v1179, %v1375
          %v1377 = vpop.f32.mrb[0].mxu0
          %v1378 = vpop.f32.mrb[0].mxu0
          %v1379 = vadd.f32 %v1179, %v1378
          %v1380 = vpop.f32.mrb[0].mxu0
          %1381 = vmatprep.mubr.bf16.mxu0 0
          %1382 = vmatmul.mubr.bf16.gmra.mrb[0].mxu0 %v1157
          %v1383 = vpop.f32.mrb[0].mxu0
          %v1384 = vadd.f32 %v1179, %v1383
          %v1385 = vpop.f32.mrb[0].mxu0
          %v1386 = vpop.f32.mrb[0].mxu0
          %v1387 = vadd.f32 %v1179, %v1386
          %v1388 = vpop.f32.mrb[0].mxu0
          %1389 = vdwg.mxu0
          %v1390 = vpack.c.bf16 %v1267, %v1264
          %v1391 = vpack.c.bf16 %v1275, %v1272
          %v1392 = vpack.c.bf16 %v1283, %v1280
          %v1393 = vpack.c.bf16 %v1291, %v1288
          %v1394 = vpack.c.bf16 %v1299, %v1296
          %v1395 = vpack.c.bf16 %v1307, %v1304
          %v1396 = vpack.c.bf16 %v1315, %v1312
          %v1397 = vpack.c.bf16 %v1323, %v1320
          %v1398 = vpack.c.bf16 %v1331, %v1328
          %v1399 = vpack.c.bf16 %v1339, %v1336
          %v1400 = vpack.c.bf16 %v1347, %v1344
          %v1401 = vpack.c.bf16 %v1355, %v1352
          %v1402 = vpack.c.bf16 %v1363, %v1360
          %v1403 = vpack.c.bf16 %v1371, %v1368
          %v1404 = vpack.c.bf16 %v1379, %v1376
          %v1405 = vpack.c.bf16 %v1387, %v1384
          %1406 = vst [vmem:[#allocation2] sm:$0xff] %v1390
          %1407 = vst [vmem:[#allocation2 + $0x8] sm:$0xff] %v1391
          %1408 = vst [vmem:[#allocation2 + $0x10] sm:$0xff] %v1392
          %1409 = vst [vmem:[#allocation2 + $0x18] sm:$0xff] %v1393
          %1410 = vst [vmem:[#allocation2 + $0x20] sm:$0xff] %v1394
          %1411 = vst [vmem:[#allocation2 + $0x28] sm:$0xff] %v1395
          %1412 = vst [vmem:[#allocation2 + $0x30] sm:$0xff] %v1396
          %1413 = vst [vmem:[#allocation2 + $0x38] sm:$0xff] %v1397
          %1414 = vst [vmem:[#allocation2 + $0x40] sm:$0xff] %v1398
          %1415 = vst [vmem:[#allocation2 + $0x48] sm:$0xff] %v1399
          %1416 = vst [vmem:[#allocation2 + $0x50] sm:$0xff] %v1400
          %1417 = vst [vmem:[#allocation2 + $0x58] sm:$0xff] %v1401
          %1418 = vst [vmem:[#allocation2 + $0x60] sm:$0xff] %v1402
          %1419 = vst [vmem:[#allocation2 + $0x68] sm:$0xff] %v1403
          %1420 = vst [vmem:[#allocation2 + $0x70] sm:$0xff] %v1404
          %1421 = vst [vmem:[#allocation2 + $0x78] sm:$0xff] %v1405
          %v1422 = vld [vmem:[%s5] sm:$0xf]
          %v1423 = vld [vmem:[%s5 + $0x4] sm:$0xf]
          %v1424 = vld [vmem:[%s5 + $0x8] sm:$0xf]
          %v1425 = vld [vmem:[%s5 + $0xc] sm:$0xf]
          %v1426 = vld [vmem:[%s5 + $0x10] sm:$0xf]
          %v1427 = vld [vmem:[%s5 + $0x14] sm:$0xf]
          %v1428 = vld [vmem:[%s5 + $0x18] sm:$0xf]
          %v1429 = vld [vmem:[%s5 + $0x1c] sm:$0xf]
          %v1430 = vld [vmem:[%s5 + $0x20] sm:$0xf]
          %v1431 = vld [vmem:[%s5 + $0x24] sm:$0xf]
          %v1432 = vld [vmem:[%s5 + $0x28] sm:$0xf]
          %v1433 = vld [vmem:[%s5 + $0x2c] sm:$0xf]
          %v1434 = vld [vmem:[%s5 + $0x30] sm:$0xf]
          %v1435 = vld [vmem:[%s5 + $0x34] sm:$0xf]
          %v1436 = vld [vmem:[%s5 + $0x38] sm:$0xf]
          %v1437 = vld [vmem:[%s5 + $0x3c] sm:$0xf]
          %v1438 = vld [vmem:[#allocation10] sm:$0x1]
          %v1440 = vlaneseq
          %v1441 = vshrl.u32 %v1440, 7
          %v1442 = vsub.s32 0, %v1441
          %v1443 = vrot.slane %v1438, %v1442
          %v1461 = vunpack.c.l.b16 %v1422
          %v1462 = vunpack.c.l.b16 %v1423
          %v1463 = vunpack.c.l.b16 %v1424
          %v1464 = vunpack.c.l.b16 %v1425
          %v1465 = vunpack.c.l.b16 %v1426
          %v1466 = vunpack.c.l.b16 %v1427
          %v1467 = vunpack.c.l.b16 %v1428
          %v1468 = vunpack.c.l.b16 %v1429
          %v1469 = vunpack.c.l.b16 %v1430
          %v1470 = vunpack.c.l.b16 %v1431
          %v1471 = vunpack.c.l.b16 %v1432
          %v1472 = vunpack.c.l.b16 %v1433
          %v1473 = vunpack.c.l.b16 %v1434
          %v1474 = vunpack.c.l.b16 %v1435
          %v1475 = vunpack.c.l.b16 %v1436
          %v1476 = vunpack.c.l.b16 %v1437
          %v1477 = vpack.c.b16 %v1462, %v1461
          %v1478 = vpack.c.b16 %v1464, %v1463
          %v1479 = vpack.c.b16 %v1466, %v1465
          %v1480 = vpack.c.b16 %v1468, %v1467
          %v1481 = vpack.c.b16 %v1470, %v1469
          %v1482 = vpack.c.b16 %v1472, %v1471
          %v1483 = vpack.c.b16 %v1474, %v1473
          %v1484 = vpack.c.b16 %v1476, %v1475
          %1493 = vmatprep.subr.bf16.mxu0 0
          %1494 = vmatpush1.bf16.msra.mxu0 %v1477
          %1495 = vmatprep.subr.bf16.mxu0 0
          %1496 = vmatpush1.bf16.msra.mxu0 %v1478
          %1497 = vmatprep.subr.bf16.mxu0 0
          %1498 = vmatpush1.bf16.msra.mxu0 %v1479
          %1499 = vmatprep.subr.bf16.mxu0 0
          %1500 = vmatpush1.bf16.msra.mxu0 %v1480
          %1501 = vmatprep.subr.bf16.mxu0 0
          %1502 = vmatpush1.bf16.msra.mxu0 %v1481
          %1503 = vmatprep.subr.bf16.mxu0 0
          %1504 = vmatpush1.bf16.msra.mxu0 %v1482
          %1505 = vmatprep.subr.bf16.mxu0 0
          %1506 = vmatpush1.bf16.msra.mxu0 %v1483
          %1507 = vmatprep.subr.bf16.mxu0 0
          %1508 = vmatpush1.bf16.msra.mxu0 %v1484
          %1509 = vmatprep.subr.bf16.mxu0 0
          %1510 = vmatpush1.bf16.msra.mxu0 0
          %1511 = vmatprep.subr.bf16.mxu0 0
          %1512 = vmatpush1.bf16.msra.mxu0 0
          %1513 = vmatprep.subr.bf16.mxu0 0
          %1514 = vmatpush1.bf16.msra.mxu0 0
          %1515 = vmatprep.subr.bf16.mxu0 0
          %1516 = vmatpush1.bf16.msra.mxu0 0
          %1517 = vmatprep.subr.bf16.mxu0 0
          %1518 = vmatpush1.bf16.msra.mxu0 0
          %1519 = vmatprep.subr.bf16.mxu0 0
          %1520 = vmatpush1.bf16.msra.mxu0 0
          %1521 = vmatprep.subr.bf16.mxu0 0
          %1522 = vmatpush1.bf16.msra.mxu0 0
          %1523 = vmatprep.subr.bf16.mxu0 0
          %1524 = vmatpush1.bf16.msra.mxu0 0
          %1525 = vmatprep.mubr.bf16.mxu0 0
          %1526 = vmatmul.mubr.bf16.gmra.mrb[0].mxu0 %v1142
          %v1527 = vpop.f32.mrb[0].mxu0
          %v1528 = vadd.f32 %v1443, %v1527
          %v1529 = vpop.f32.mrb[0].mxu0
          %v1530 = vpop.f32.mrb[0].mxu0
          %v1531 = vadd.f32 %v1443, %v1530
          %v1532 = vpop.f32.mrb[0].mxu0
          %1533 = vmatprep.mubr.bf16.mxu0 0
          %1534 = vmatmul.mubr.bf16.gmra.mrb[0].mxu0 %v1143
          %v1535 = vpop.f32.mrb[0].mxu0
          %v1536 = vadd.f32 %v1443, %v1535
          %v1537 = vpop.f32.mrb[0].mxu0
          %v1538 = vpop.f32.mrb[0].mxu0
          %v1539 = vadd.f32 %v1443, %v1538
          %v1540 = vpop.f32.mrb[0].mxu0
          %1541 = vmatprep.mubr.bf16.mxu0 0
          %1542 = vmatmul.mubr.bf16.gmra.mrb[0].mxu0 %v1144
          %v1543 = vpop.f32.mrb[0].mxu0
          %v1544 = vadd.f32 %v1443, %v1543
          %v1545 = vpop.f32.mrb[0].mxu0
          %v1546 = vpop.f32.mrb[0].mxu0
          %v1547 = vadd.f32 %v1443, %v1546
          %v1548 = vpop.f32.mrb[0].mxu0
          %1549 = vmatprep.mubr.bf16.mxu0 0
          %1550 = vmatmul.mubr.bf16.gmra.mrb[0].mxu0 %v1145
          %v1551 = vpop.f32.mrb[0].mxu0
          %v1552 = vadd.f32 %v1443, %v1551
          %v1553 = vpop.f32.mrb[0].mxu0
          %v1554 = vpop.f32.mrb[0].mxu0
          %v1555 = vadd.f32 %v1443, %v1554
          %v1556 = vpop.f32.mrb[0].mxu0
          %1557 = vmatprep.mubr.bf16.mxu0 0
          %1558 = vmatmul.mubr.bf16.gmra.mrb[0].mxu0 %v1146
          %v1559 = vpop.f32.mrb[0].mxu0
          %v1560 = vadd.f32 %v1443, %v1559
          %v1561 = vpop.f32.mrb[0].mxu0
          %v1562 = vpop.f32.mrb[0].mxu0
          %v1563 = vadd.f32 %v1443, %v1562
          %v1564 = vpop.f32.mrb[0].mxu0
          %1565 = vmatprep.mubr.bf16.mxu0 0
          %1566 = vmatmul.mubr.bf16.gmra.mrb[0].mxu0 %v1147
          %v1567 = vpop.f32.mrb[0].mxu0
          %v1568 = vadd.f32 %v1443, %v1567
          %v1569 = vpop.f32.mrb[0].mxu0
          %v1570 = vpop.f32.mrb[0].mxu0
          %v1571 = vadd.f32 %v1443, %v1570
          %v1572 = vpop.f32.mrb[0].mxu0
          %1573 = vmatprep.mubr.bf16.mxu0 0
          %1574 = vmatmul.mubr.bf16.gmra.mrb[0].mxu0 %v1148
          %v1575 = vpop.f32.mrb[0].mxu0
          %v1576 = vadd.f32 %v1443, %v1575
          %v1577 = vpop.f32.mrb[0].mxu0
          %v1578 = vpop.f32.mrb[0].mxu0
          %v1579 = vadd.f32 %v1443, %v1578
          %v1580 = vpop.f32.mrb[0].mxu0
          %1581 = vmatprep.mubr.bf16.mxu0 0
          %1582 = vmatmul.mubr.bf16.gmra.mrb[0].mxu0 %v1149
          %v1583 = vpop.f32.mrb[0].mxu0
          %v1584 = vadd.f32 %v1443, %v1583
          %v1585 = vpop.f32.mrb[0].mxu0
          %v1586 = vpop.f32.mrb[0].mxu0
          %v1587 = vadd.f32 %v1443, %v1586
          %v1588 = vpop.f32.mrb[0].mxu0
          %1589 = vmatprep.mubr.bf16.mxu0 0
          %1590 = vmatmul.mubr.bf16.gmra.mrb[0].mxu0 %v1150
          %v1591 = vpop.f32.mrb[0].mxu0
          %v1592 = vadd.f32 %v1443, %v1591
          %v1593 = vpop.f32.mrb[0].mxu0
          %v1594 = vpop.f32.mrb[0].mxu0
          %v1595 = vadd.f32 %v1443, %v1594
          %v1596 = vpop.f32.mrb[0].mxu0
          %1597 = vmatprep.mubr.bf16.mxu0 0
          %1598 = vmatmul.mubr.bf16.gmra.mrb[0].mxu0 %v1151
          %v1599 = vpop.f32.mrb[0].mxu0
          %v1600 = vadd.f32 %v1443, %v1599
          %v1601 = vpop.f32.mrb[0].mxu0
          %v1602 = vpop.f32.mrb[0].mxu0
          %v1603 = vadd.f32 %v1443, %v1602
          %v1604 = vpop.f32.mrb[0].mxu0
          %1605 = vmatprep.mubr.bf16.mxu0 0
          %1606 = vmatmul.mubr.bf16.gmra.mrb[0].mxu0 %v1152
          %v1607 = vpop.f32.mrb[0].mxu0
          %v1608 = vadd.f32 %v1443, %v1607
          %v1609 = vpop.f32.mrb[0].mxu0
          %v1610 = vpop.f32.mrb[0].mxu0
          %v1611 = vadd.f32 %v1443, %v1610
          %v1612 = vpop.f32.mrb[0].mxu0
          %1613 = vmatprep.mubr.bf16.mxu0 0
          %1614 = vmatmul.mubr.bf16.gmra.mrb[0].mxu0 %v1153
          %v1615 = vpop.f32.mrb[0].mxu0
          %v1616 = vadd.f32 %v1443, %v1615
          %v1617 = vpop.f32.mrb[0].mxu0
          %v1618 = vpop.f32.mrb[0].mxu0
          %v1619 = vadd.f32 %v1443, %v1618
          %v1620 = vpop.f32.mrb[0].mxu0
          %1621 = vmatprep.mubr.bf16.mxu0 0
          %1622 = vmatmul.mubr.bf16.gmra.mrb[0].mxu0 %v1154
          %v1623 = vpop.f32.mrb[0].mxu0
          %v1624 = vadd.f32 %v1443, %v1623
          %v1625 = vpop.f32.mrb[0].mxu0
          %v1626 = vpop.f32.mrb[0].mxu0
          %v1627 = vadd.f32 %v1443, %v1626
          %v1628 = vpop.f32.mrb[0].mxu0
          %1629 = vmatprep.mubr.bf16.mxu0 0
          %1630 = vmatmul.mubr.bf16.gmra.mrb[0].mxu0 %v1155
          %v1631 = vpop.f32.mrb[0].mxu0
          %v1632 = vadd.f32 %v1443, %v1631
          %v1633 = vpop.f32.mrb[0].mxu0
          %v1634 = vpop.f32.mrb[0].mxu0
          %v1635 = vadd.f32 %v1443, %v1634
          %v1636 = vpop.f32.mrb[0].mxu0
          %1637 = vmatprep.mubr.bf16.mxu0 0
          %1638 = vmatmul.mubr.bf16.gmra.mrb[0].mxu0 %v1156
          %v1639 = vpop.f32.mrb[0].mxu0
          %v1640 = vadd.f32 %v1443, %v1639
          %v1641 = vpop.f32.mrb[0].mxu0
          %v1642 = vpop.f32.mrb[0].mxu0
          %v1643 = vadd.f32 %v1443, %v1642
          %v1644 = vpop.f32.mrb[0].mxu0
          %1645 = vmatprep.mubr.bf16.mxu0 0
          %1646 = vmatmul.mubr.bf16.gmra.mrb[0].mxu0 %v1157
          %v1647 = vpop.f32.mrb[0].mxu0
          %v1648 = vadd.f32 %v1443, %v1647
          %v1649 = vpop.f32.mrb[0].mxu0
          %v1650 = vpop.f32.mrb[0].mxu0
          %v1651 = vadd.f32 %v1443, %v1650
          %v1652 = vpop.f32.mrb[0].mxu0
          %1653 = vdwg.mxu0
          %v1654 = vpack.c.bf16 %v1531, %v1528
          %v1655 = vpack.c.bf16 %v1539, %v1536
          %v1656 = vpack.c.bf16 %v1547, %v1544
          %v1657 = vpack.c.bf16 %v1555, %v1552
          %v1658 = vpack.c.bf16 %v1563, %v1560
          %v1659 = vpack.c.bf16 %v1571, %v1568
          %v1660 = vpack.c.bf16 %v1579, %v1576
          %v1661 = vpack.c.bf16 %v1587, %v1584
          %v1662 = vpack.c.bf16 %v1595, %v1592
          %v1663 = vpack.c.bf16 %v1603, %v1600
          %v1664 = vpack.c.bf16 %v1611, %v1608
          %v1665 = vpack.c.bf16 %v1619, %v1616
          %v1666 = vpack.c.bf16 %v1627, %v1624
          %v1667 = vpack.c.bf16 %v1635, %v1632
          %v1668 = vpack.c.bf16 %v1643, %v1640
          %v1669 = vpack.c.bf16 %v1651, %v1648
          %1670 = vst [vmem:[#allocation3] sm:$0xff] %v1654
          %1671 = vst [vmem:[#allocation3 + $0x8] sm:$0xff] %v1655
          %1672 = vst [vmem:[#allocation3 + $0x10] sm:$0xff] %v1656
          %1673 = vst [vmem:[#allocation3 + $0x18] sm:$0xff] %v1657
          %1674 = vst [vmem:[#allocation3 + $0x20] sm:$0xff] %v1658
          %1675 = vst [vmem:[#allocation3 + $0x28] sm:$0xff] %v1659
          %1676 = vst [vmem:[#allocation3 + $0x30] sm:$0xff] %v1660
          %1677 = vst [vmem:[#allocation3 + $0x38] sm:$0xff] %v1661
          %1678 = vst [vmem:[#allocation3 + $0x40] sm:$0xff] %v1662
          %1679 = vst [vmem:[#allocation3 + $0x48] sm:$0xff] %v1663
          %1680 = vst [vmem:[#allocation3 + $0x50] sm:$0xff] %v1664
          %1681 = vst [vmem:[#allocation3 + $0x58] sm:$0xff] %v1665
          %1682 = vst [vmem:[#allocation3 + $0x60] sm:$0xff] %v1666
          %1683 = vst [vmem:[#allocation3 + $0x68] sm:$0xff] %v1667
          %1684 = vst [vmem:[#allocation3 + $0x70] sm:$0xff] %v1668
          %1685 = vst [vmem:[#allocation3 + $0x78] sm:$0xff] %v1669
          %v1686 = vld [vmem:[#allocation11] sm:$0xf]
          %v1687 = vld [vmem:[#allocation11 + $0x4] sm:$0xf]
          %v1688 = vld [vmem:[#allocation11 + $0x8] sm:$0xf]
          %v1689 = vld [vmem:[#allocation11 + $0xc] sm:$0xf]
          %v1690 = vld [vmem:[#allocation11 + $0x10] sm:$0xf]
          %v1691 = vld [vmem:[#allocation11 + $0x14] sm:$0xf]
          %v1692 = vld [vmem:[#allocation11 + $0x18] sm:$0xf]
          %v1693 = vld [vmem:[#allocation11 + $0x1c] sm:$0xf]
          %v1694 = vld [vmem:[#allocation11 + $0x20] sm:$0xf]
          %v1695 = vld [vmem:[#allocation11 + $0x24] sm:$0xf]
          %v1696 = vld [vmem:[#allocation11 + $0x28] sm:$0xf]
          %v1697 = vld [vmem:[#allocation11 + $0x2c] sm:$0xf]
          %v1698 = vld [vmem:[#allocation11 + $0x30] sm:$0xf]
          %v1699 = vld [vmem:[#allocation11 + $0x34] sm:$0xf]
          %v1700 = vld [vmem:[#allocation11 + $0x38] sm:$0xf]
          %v1701 = vld [vmem:[#allocation11 + $0x3c] sm:$0xf]
          %v1702 = vld [vmem:[#allocation13] sm:$0x1]
          %v1704 = vlaneseq
          %v1705 = vshrl.u32 %v1704, 7
          %v1706 = vsub.s32 0, %v1705
          %v1707 = vrot.slane %v1702, %v1706
          %v1725 = vunpack.c.l.b16 %v1686
          %v1726 = vunpack.c.l.b16 %v1687
          %v1727 = vunpack.c.l.b16 %v1688
          %v1728 = vunpack.c.l.b16 %v1689
          %v1729 = vunpack.c.l.b16 %v1690
          %v1730 = vunpack.c.l.b16 %v1691
          %v1731 = vunpack.c.l.b16 %v1692
          %v1732 = vunpack.c.l.b16 %v1693
          %v1733 = vunpack.c.l.b16 %v1694
          %v1734 = vunpack.c.l.b16 %v1695
          %v1735 = vunpack.c.l.b16 %v1696
          %v1736 = vunpack.c.l.b16 %v1697
          %v1737 = vunpack.c.l.b16 %v1698
          %v1738 = vunpack.c.l.b16 %v1699
          %v1739 = vunpack.c.l.b16 %v1700
          %v1740 = vunpack.c.l.b16 %v1701
          %v1741 = vpack.c.b16 %v1726, %v1725
          %v1742 = vpack.c.b16 %v1728, %v1727
          %v1743 = vpack.c.b16 %v1730, %v1729
          %v1744 = vpack.c.b16 %v1732, %v1731
          %v1745 = vpack.c.b16 %v1734, %v1733
          %v1746 = vpack.c.b16 %v1736, %v1735
          %v1747 = vpack.c.b16 %v1738, %v1737
          %v1748 = vpack.c.b16 %v1740, %v1739
          %1757 = vmatprep.subr.bf16.mxu0 0
          %1758 = vmatpush1.bf16.msra.mxu0 %v1741
          %1759 = vmatprep.subr.bf16.mxu0 0
          %1760 = vmatpush1.bf16.msra.mxu0 %v1742
          %1761 = vmatprep.subr.bf16.mxu0 0
          %1762 = vmatpush1.bf16.msra.mxu0 %v1743
          %1763 = vmatprep.subr.bf16.mxu0 0
          %1764 = vmatpush1.bf16.msra.mxu0 %v1744
          %1765 = vmatprep.subr.bf16.mxu0 0
          %1766 = vmatpush1.bf16.msra.mxu0 %v1745
          %1767 = vmatprep.subr.bf16.mxu0 0
          %1768 = vmatpush1.bf16.msra.mxu0 %v1746
          %1769 = vmatprep.subr.bf16.mxu0 0
          %1770 = vmatpush1.bf16.msra.mxu0 %v1747
          %1771 = vmatprep.subr.bf16.mxu0 0
          %1772 = vmatpush1.bf16.msra.mxu0 %v1748
          %1773 = vmatprep.subr.bf16.mxu0 0
          %1774 = vmatpush1.bf16.msra.mxu0 0
          %1775 = vmatprep.subr.bf16.mxu0 0
          %1776 = vmatpush1.bf16.msra.mxu0 0
          %1777 = vmatprep.subr.bf16.mxu0 0
          %1778 = vmatpush1.bf16.msra.mxu0 0
          %1779 = vmatprep.subr.bf16.mxu0 0
          %1780 = vmatpush1.bf16.msra.mxu0 0
          %1781 = vmatprep.subr.bf16.mxu0 0
          %1782 = vmatpush1.bf16.msra.mxu0 0
          %1783 = vmatprep.subr.bf16.mxu0 0
          %1784 = vmatpush1.bf16.msra.mxu0 0
          %1785 = vmatprep.subr.bf16.mxu0 0
          %1786 = vmatpush1.bf16.msra.mxu0 0
          %1787 = vmatprep.subr.bf16.mxu0 0
          %1788 = vmatpush1.bf16.msra.mxu0 0
          %1789 = vmatprep.mubr.bf16.mxu0 0
          %1790 = vmatmul.mubr.bf16.gmra.mrb[0].mxu0 %v1142
          %v1791 = vpop.f32.mrb[0].mxu0
          %v1792 = vadd.f32 %v1707, %v1791
          %v1793 = vpop.f32.mrb[0].mxu0
          %v1794 = vpop.f32.mrb[0].mxu0
          %v1795 = vadd.f32 %v1707, %v1794
          %v1796 = vpop.f32.mrb[0].mxu0
          %1797 = vmatprep.mubr.bf16.mxu0 0
          %1798 = vmatmul.mubr.bf16.gmra.mrb[0].mxu0 %v1143
          %v1799 = vpop.f32.mrb[0].mxu0
          %v1800 = vadd.f32 %v1707, %v1799
          %v1801 = vpop.f32.mrb[0].mxu0
          %v1802 = vpop.f32.mrb[0].mxu0
          %v1803 = vadd.f32 %v1707, %v1802
          %v1804 = vpop.f32.mrb[0].mxu0
          %1805 = vmatprep.mubr.bf16.mxu0 0
          %1806 = vmatmul.mubr.bf16.gmra.mrb[0].mxu0 %v1144
          %v1807 = vpop.f32.mrb[0].mxu0
          %v1808 = vadd.f32 %v1707, %v1807
          %v1809 = vpop.f32.mrb[0].mxu0
          %v1810 = vpop.f32.mrb[0].mxu0
          %v1811 = vadd.f32 %v1707, %v1810
          %v1812 = vpop.f32.mrb[0].mxu0
          %1813 = vmatprep.mubr.bf16.mxu0 0
          %1814 = vmatmul.mubr.bf16.gmra.mrb[0].mxu0 %v1145
          %v1815 = vpop.f32.mrb[0].mxu0
          %v1816 = vadd.f32 %v1707, %v1815
          %v1817 = vpop.f32.mrb[0].mxu0
          %v1818 = vpop.f32.mrb[0].mxu0
          %v1819 = vadd.f32 %v1707, %v1818
          %v1820 = vpop.f32.mrb[0].mxu0
          %1821 = vmatprep.mubr.bf16.mxu0 0
          %1822 = vmatmul.mubr.bf16.gmra.mrb[0].mxu0 %v1146
          %v1823 = vpop.f32.mrb[0].mxu0
          %v1824 = vadd.f32 %v1707, %v1823
          %v1825 = vpop.f32.mrb[0].mxu0
          %v1826 = vpop.f32.mrb[0].mxu0
          %v1827 = vadd.f32 %v1707, %v1826
          %v1828 = vpop.f32.mrb[0].mxu0
          %1829 = vmatprep.mubr.bf16.mxu0 0
          %1830 = vmatmul.mubr.bf16.gmra.mrb[0].mxu0 %v1147
          %v1831 = vpop.f32.mrb[0].mxu0
          %v1832 = vadd.f32 %v1707, %v1831
          %v1833 = vpop.f32.mrb[0].mxu0
          %v1834 = vpop.f32.mrb[0].mxu0
          %v1835 = vadd.f32 %v1707, %v1834
          %v1836 = vpop.f32.mrb[0].mxu0
          %1837 = vmatprep.mubr.bf16.mxu0 0
          %1838 = vmatmul.mubr.bf16.gmra.mrb[0].mxu0 %v1148
          %v1839 = vpop.f32.mrb[0].mxu0
          %v1840 = vadd.f32 %v1707, %v1839
          %v1841 = vpop.f32.mrb[0].mxu0
          %v1842 = vpop.f32.mrb[0].mxu0
          %v1843 = vadd.f32 %v1707, %v1842
          %v1844 = vpop.f32.mrb[0].mxu0
          %1845 = vmatprep.mubr.bf16.mxu0 0
          %1846 = vmatmul.mubr.bf16.gmra.mrb[0].mxu0 %v1149
          %v1847 = vpop.f32.mrb[0].mxu0
          %v1848 = vadd.f32 %v1707, %v1847
          %v1849 = vpop.f32.mrb[0].mxu0
          %v1850 = vpop.f32.mrb[0].mxu0
          %v1851 = vadd.f32 %v1707, %v1850
          %v1852 = vpop.f32.mrb[0].mxu0
          %1853 = vmatprep.mubr.bf16.mxu0 0
          %1854 = vmatmul.mubr.bf16.gmra.mrb[0].mxu0 %v1150
          %v1855 = vpop.f32.mrb[0].mxu0
          %v1856 = vadd.f32 %v1707, %v1855
          %v1857 = vpop.f32.mrb[0].mxu0
          %v1858 = vpop.f32.mrb[0].mxu0
          %v1859 = vadd.f32 %v1707, %v1858
          %v1860 = vpop.f32.mrb[0].mxu0
          %1861 = vmatprep.mubr.bf16.mxu0 0
          %1862 = vmatmul.mubr.bf16.gmra.mrb[0].mxu0 %v1151
          %v1863 = vpop.f32.mrb[0].mxu0
          %v1864 = vadd.f32 %v1707, %v1863
          %v1865 = vpop.f32.mrb[0].mxu0
          %v1866 = vpop.f32.mrb[0].mxu0
          %v1867 = vadd.f32 %v1707, %v1866
          %v1868 = vpop.f32.mrb[0].mxu0
          %1869 = vmatprep.mubr.bf16.mxu0 0
          %1870 = vmatmul.mubr.bf16.gmra.mrb[0].mxu0 %v1152
          %v1871 = vpop.f32.mrb[0].mxu0
          %v1872 = vadd.f32 %v1707, %v1871
          %v1873 = vpop.f32.mrb[0].mxu0
          %v1874 = vpop.f32.mrb[0].mxu0
          %v1875 = vadd.f32 %v1707, %v1874
          %v1876 = vpop.f32.mrb[0].mxu0
          %1877 = vmatprep.mubr.bf16.mxu0 0
          %1878 = vmatmul.mubr.bf16.gmra.mrb[0].mxu0 %v1153
          %v1879 = vpop.f32.mrb[0].mxu0
          %v1880 = vadd.f32 %v1707, %v1879
          %v1881 = vpop.f32.mrb[0].mxu0
          %v1882 = vpop.f32.mrb[0].mxu0
          %v1883 = vadd.f32 %v1707, %v1882
          %v1884 = vpop.f32.mrb[0].mxu0
          %1885 = vmatprep.mubr.bf16.mxu0 0
          %1886 = vmatmul.mubr.bf16.gmra.mrb[0].mxu0 %v1154
          %v1887 = vpop.f32.mrb[0].mxu0
          %v1888 = vadd.f32 %v1707, %v1887
          %v1889 = vpop.f32.mrb[0].mxu0
          %v1890 = vpop.f32.mrb[0].mxu0
          %v1891 = vadd.f32 %v1707, %v1890
          %v1892 = vpop.f32.mrb[0].mxu0
          %1893 = vmatprep.mubr.bf16.mxu0 0
          %1894 = vmatmul.mubr.bf16.gmra.mrb[0].mxu0 %v1155
          %v1895 = vpop.f32.mrb[0].mxu0
          %v1896 = vadd.f32 %v1707, %v1895
          %v1897 = vpop.f32.mrb[0].mxu0
          %v1898 = vpop.f32.mrb[0].mxu0
          %v1899 = vadd.f32 %v1707, %v1898
          %v1900 = vpop.f32.mrb[0].mxu0
          %1901 = vmatprep.mubr.bf16.mxu0 0
          %1902 = vmatmul.mubr.bf16.gmra.mrb[0].mxu0 %v1156
          %v1903 = vpop.f32.mrb[0].mxu0
          %v1904 = vadd.f32 %v1707, %v1903
          %v1905 = vpop.f32.mrb[0].mxu0
          %v1906 = vpop.f32.mrb[0].mxu0
          %v1907 = vadd.f32 %v1707, %v1906
          %v1908 = vpop.f32.mrb[0].mxu0
          %1909 = vmatprep.mubr.bf16.mxu0 0
          %1910 = vmatmul.mubr.bf16.gmra.mrb[0].mxu0 %v1157
          %v1911 = vpop.f32.mrb[0].mxu0
          %v1912 = vadd.f32 %v1707, %v1911
          %v1913 = vpop.f32.mrb[0].mxu0
          %v1914 = vpop.f32.mrb[0].mxu0
          %v1915 = vadd.f32 %v1707, %v1914
          %v1916 = vpop.f32.mrb[0].mxu0
          %1917 = vdwg.mxu0
          %v1918 = vpack.c.bf16 %v1795, %v1792
          %v1919 = vpack.c.bf16 %v1803, %v1800
          %v1920 = vpack.c.bf16 %v1811, %v1808
          %v1921 = vpack.c.bf16 %v1819, %v1816
          %v1922 = vpack.c.bf16 %v1827, %v1824
          %v1923 = vpack.c.bf16 %v1835, %v1832
          %v1924 = vpack.c.bf16 %v1843, %v1840
          %v1925 = vpack.c.bf16 %v1851, %v1848
          %v1926 = vpack.c.bf16 %v1859, %v1856
          %v1927 = vpack.c.bf16 %v1867, %v1864
          %v1928 = vpack.c.bf16 %v1875, %v1872
          %v1929 = vpack.c.bf16 %v1883, %v1880
          %v1930 = vpack.c.bf16 %v1891, %v1888
          %v1931 = vpack.c.bf16 %v1899, %v1896
          %v1932 = vpack.c.bf16 %v1907, %v1904
          %v1933 = vpack.c.bf16 %v1915, %v1912
          %1934 = vst [vmem:[#allocation4] sm:$0xff] %v1918
          %1935 = vst [vmem:[#allocation4 + $0x8] sm:$0xff] %v1919
          %1936 = vst [vmem:[#allocation4 + $0x10] sm:$0xff] %v1920
          %1937 = vst [vmem:[#allocation4 + $0x18] sm:$0xff] %v1921
          %1938 = vst [vmem:[#allocation4 + $0x20] sm:$0xff] %v1922
          %1939 = vst [vmem:[#allocation4 + $0x28] sm:$0xff] %v1923
          %1940 = vst [vmem:[#allocation4 + $0x30] sm:$0xff] %v1924
          %1941 = vst [vmem:[#allocation4 + $0x38] sm:$0xff] %v1925
          %1942 = vst [vmem:[#allocation4 + $0x40] sm:$0xff] %v1926
          %1943 = vst [vmem:[#allocation4 + $0x48] sm:$0xff] %v1927
          %1944 = vst [vmem:[#allocation4 + $0x50] sm:$0xff] %v1928
          %1945 = vst [vmem:[#allocation4 + $0x58] sm:$0xff] %v1929
          %1946 = vst [vmem:[#allocation4 + $0x60] sm:$0xff] %v1930
          %1947 = vst [vmem:[#allocation4 + $0x68] sm:$0xff] %v1931
          %1948 = vst [vmem:[#allocation4 + $0x70] sm:$0xff] %v1932
          %1949 = vst [vmem:[#allocation4 + $0x78] sm:$0xff] %v1933
        $region100: #{tpu_custom_call.1} parent=71 // pred_fallthru
          _
        %s1950 = smul.u32 %s38, 64
        %s1951 = sshra.s32 %s1950, 4
        %s1952 = sand.u32 %s1950, 15
        %s1953 = smul.addr %s1951, 8
        %s1954 = scalar_lea.vmem [#allocation2], %s1953
        %v1955 = vld [vmem:[%s1954] sm:$0xff]
        %v1956 = vld [vmem:[%s1954 + $0x8] sm:$0xff]
        %v1957 = vld [vmem:[%s1954 + $0x10] sm:$0xff]
        %v1958 = vld [vmem:[%s1954 + $0x18] sm:$0xff]
        %v1959 = vld [vmem:[#allocation3] sm:$0xff]
        %v1960 = vld [vmem:[#allocation3 + $0x8] sm:$0xff]
        %v1961 = vld [vmem:[#allocation3 + $0x10] sm:$0xff]
        %v1962 = vld [vmem:[#allocation3 + $0x18] sm:$0xff]
        %v1963 = vld [vmem:[#allocation3 + $0x20] sm:$0xff]
        %v1964 = vld [vmem:[#allocation3 + $0x28] sm:$0xff]
        %v1965 = vld [vmem:[#allocation3 + $0x30] sm:$0xff]
        %v1966 = vld [vmem:[#allocation3 + $0x38] sm:$0xff]
        %v1967 = vld [vmem:[#allocation3 + $0x40] sm:$0xff]
        %v1968 = vld [vmem:[#allocation3 + $0x48] sm:$0xff]
        %v1969 = vld [vmem:[#allocation3 + $0x50] sm:$0xff]
        %v1970 = vld [vmem:[#allocation3 + $0x58] sm:$0xff]
        %v1971 = vld [vmem:[#allocation3 + $0x60] sm:$0xff]
        %v1972 = vld [vmem:[#allocation3 + $0x68] sm:$0xff]
        %v1973 = vld [vmem:[#allocation3 + $0x70] sm:$0xff]
        %v1974 = vld [vmem:[#allocation3 + $0x78] sm:$0xff]
        %1975 = vmatprep.subr.bf16.mxu0 0
        %1976 = vmatpush1.bf16.xpose.msra.mxu0 %v1955
        %1977 = vmatprep.subr.bf16.mxu0 0
        %1978 = vmatpush1.bf16.xpose.msra.mxu0 %v1956
        %1979 = vmatprep.subr.bf16.mxu0 0
        %1980 = vmatpush1.bf16.xpose.msra.mxu0 %v1957
        %1981 = vmatprep.subr.bf16.mxu0 0
        %1982 = vmatpush1.bf16.xpose.msra.mxu0 %v1958
        %1983 = vmatprep.subr.bf16.mxu0 0
        %1984 = vmatpush1.bf16.xpose.msra.mxu0 0
        %1985 = vmatprep.subr.bf16.mxu0 0
        %1986 = vmatpush1.bf16.xpose.msra.mxu0 0
        %1987 = vmatprep.subr.bf16.mxu0 0
        %1988 = vmatpush1.bf16.xpose.msra.mxu0 0
        %1989 = vmatprep.subr.bf16.mxu0 0
        %1990 = vmatpush1.bf16.xpose.msra.mxu0 0
        %1991 = vmatprep.subr.bf16.mxu0 0
        %1992 = vmatpush1.bf16.xpose.msra.mxu0 0
        %1993 = vmatprep.subr.bf16.mxu0 0
        %1994 = vmatpush1.bf16.xpose.msra.mxu0 0
        %1995 = vmatprep.subr.bf16.mxu0 0
        %1996 = vmatpush1.bf16.xpose.msra.mxu0 0
        %1997 = vmatprep.subr.bf16.mxu0 0
        %1998 = vmatpush1.bf16.xpose.msra.mxu0 0
        %1999 = vmatprep.subr.bf16.mxu0 0
        %2000 = vmatpush1.bf16.xpose.msra.mxu0 0
        %2001 = vmatprep.subr.bf16.mxu0 0
        %2002 = vmatpush1.bf16.xpose.msra.mxu0 0
        %2003 = vmatprep.subr.bf16.mxu0 0
        %2004 = vmatpush1.bf16.xpose.msra.mxu0 0
        %2005 = vmatprep.subr.bf16.mxu0 0
        %2006 = vmatpush1.bf16.xpose.msra.mxu0 0
        %2007 = vmatprep.mubr.bf16.mxu0 0
        %2008 = vmatmul.mubr.bf16.gmra.mrb[0].mxu0 %v1959
        %v2009 = vpop.f32.mrb[0].mxu0
        %v2010 = vadd.f32 0.0, %v2009
        %v2011 = vpop.f32.mrb[0].mxu0
        %v2012 = vpop.f32.mrb[0].mxu0
        %v2013 = vadd.f32 0.0, %v2012
        %v2014 = vpop.f32.mrb[0].mxu0
        %2015 = vmatprep.mubr.bf16.mxu0 0
        %2016 = vmatmul.mubr.bf16.gmra.mrb[0].mxu0 %v1960
        %v2017 = vpop.f32.mrb[0].mxu0
        %v2018 = vadd.f32 0.0, %v2017
        %v2019 = vpop.f32.mrb[0].mxu0
        %v2020 = vpop.f32.mrb[0].mxu0
        %v2021 = vadd.f32 0.0, %v2020
        %v2022 = vpop.f32.mrb[0].mxu0
        %2023 = vmatprep.mubr.bf16.mxu0 0
        %2024 = vmatmul.mubr.bf16.gmra.mrb[0].mxu0 %v1961
        %v2025 = vpop.f32.mrb[0].mxu0
        %v2026 = vadd.f32 0.0, %v2025
        %v2027 = vpop.f32.mrb[0].mxu0
        %v2028 = vpop.f32.mrb[0].mxu0
        %v2029 = vadd.f32 0.0, %v2028
        %v2030 = vpop.f32.mrb[0].mxu0
        %2031 = vmatprep.mubr.bf16.mxu0 0
        %2032 = vmatmul.mubr.bf16.gmra.mrb[0].mxu0 %v1962
        %v2033 = vpop.f32.mrb[0].mxu0
        %v2034 = vadd.f32 0.0, %v2033
        %v2035 = vpop.f32.mrb[0].mxu0
        %v2036 = vpop.f32.mrb[0].mxu0
        %v2037 = vadd.f32 0.0, %v2036
        %v2038 = vpop.f32.mrb[0].mxu0
        %2039 = vmatprep.mubr.bf16.mxu0 0
        %2040 = vmatmul.mubr.bf16.gmra.mrb[0].mxu0 %v1963
        %v2041 = vpop.f32.mrb[0].mxu0
        %v2042 = vadd.f32 0.0, %v2041
        %v2043 = vpop.f32.mrb[0].mxu0
        %v2044 = vpop.f32.mrb[0].mxu0
        %v2045 = vadd.f32 0.0, %v2044
        %v2046 = vpop.f32.mrb[0].mxu0
        %2047 = vmatprep.mubr.bf16.mxu0 0
        %2048 = vmatmul.mubr.bf16.gmra.mrb[0].mxu0 %v1964
        %v2049 = vpop.f32.mrb[0].mxu0
        %v2050 = vadd.f32 0.0, %v2049
        %v2051 = vpop.f32.mrb[0].mxu0
        %v2052 = vpop.f32.mrb[0].mxu0
        %v2053 = vadd.f32 0.0, %v2052
        %v2054 = vpop.f32.mrb[0].mxu0
        %2055 = vmatprep.mubr.bf16.mxu0 0
        %2056 = vmatmul.mubr.bf16.gmra.mrb[0].mxu0 %v1965
        %v2057 = vpop.f32.mrb[0].mxu0
        %v2058 = vadd.f32 0.0, %v2057
        %v2059 = vpop.f32.mrb[0].mxu0
        %v2060 = vpop.f32.mrb[0].mxu0
        %v2061 = vadd.f32 0.0, %v2060
        %v2062 = vpop.f32.mrb[0].mxu0
        %2063 = vmatprep.mubr.bf16.mxu0 0
        %2064 = vmatmul.mubr.bf16.gmra.mrb[0].mxu0 %v1966
        %v2065 = vpop.f32.mrb[0].mxu0
        %v2066 = vadd.f32 0.0, %v2065
        %v2067 = vpop.f32.mrb[0].mxu0
        %v2068 = vpop.f32.mrb[0].mxu0
        %v2069 = vadd.f32 0.0, %v2068
        %v2070 = vpop.f32.mrb[0].mxu0
        %2071 = vmatprep.mubr.bf16.mxu0 0
        %2072 = vmatmul.mubr.bf16.gmra.mrb[0].mxu0 %v1967
        %v2073 = vpop.f32.mrb[0].mxu0
        %v2074 = vadd.f32 0.0, %v2073
        %v2075 = vpop.f32.mrb[0].mxu0
        %v2076 = vpop.f32.mrb[0].mxu0
        %v2077 = vadd.f32 0.0, %v2076
        %v2078 = vpop.f32.mrb[0].mxu0
        %2079 = vmatprep.mubr.bf16.mxu0 0
        %2080 = vmatmul.mubr.bf16.gmra.mrb[0].mxu0 %v1968
        %v2081 = vpop.f32.mrb[0].mxu0
        %v2082 = vadd.f32 0.0, %v2081
        %v2083 = vpop.f32.mrb[0].mxu0
        %v2084 = vpop.f32.mrb[0].mxu0
        %v2085 = vadd.f32 0.0, %v2084
        %v2086 = vpop.f32.mrb[0].mxu0
        %2087 = vmatprep.mubr.bf16.mxu0 0
        %2088 = vmatmul.mubr.bf16.gmra.mrb[0].mxu0 %v1969
        %v2089 = vpop.f32.mrb[0].mxu0
        %v2090 = vadd.f32 0.0, %v2089
        %v2091 = vpop.f32.mrb[0].mxu0
        %v2092 = vpop.f32.mrb[0].mxu0
        %v2093 = vadd.f32 0.0, %v2092
        %v2094 = vpop.f32.mrb[0].mxu0
        %2095 = vmatprep.mubr.bf16.mxu0 0
        %2096 = vmatmul.mubr.bf16.gmra.mrb[0].mxu0 %v1970
        %v2097 = vpop.f32.mrb[0].mxu0
        %v2098 = vadd.f32 0.0, %v2097
        %v2099 = vpop.f32.mrb[0].mxu0
        %v2100 = vpop.f32.mrb[0].mxu0
        %v2101 = vadd.f32 0.0, %v2100
        %v2102 = vpop.f32.mrb[0].mxu0
        %2103 = vmatprep.mubr.bf16.mxu0 0
        %2104 = vmatmul.mubr.bf16.gmra.mrb[0].mxu0 %v1971
        %v2105 = vpop.f32.mrb[0].mxu0
        %v2106 = vadd.f32 0.0, %v2105
        %v2107 = vpop.f32.mrb[0].mxu0
        %v2108 = vpop.f32.mrb[0].mxu0
        %v2109 = vadd.f32 0.0, %v2108
        %v2110 = vpop.f32.mrb[0].mxu0
        %2111 = vmatprep.mubr.bf16.mxu0 0
        %2112 = vmatmul.mubr.bf16.gmra.mrb[0].mxu0 %v1972
        %v2113 = vpop.f32.mrb[0].mxu0
        %v2114 = vadd.f32 0.0, %v2113
        %v2115 = vpop.f32.mrb[0].mxu0
        %v2116 = vpop.f32.mrb[0].mxu0
        %v2117 = vadd.f32 0.0, %v2116
        %v2118 = vpop.f32.mrb[0].mxu0
        %2119 = vmatprep.mubr.bf16.mxu0 0
        %2120 = vmatmul.mubr.bf16.gmra.mrb[0].mxu0 %v1973
        %v2121 = vpop.f32.mrb[0].mxu0
        %v2122 = vadd.f32 0.0, %v2121
        %v2123 = vpop.f32.mrb[0].mxu0
        %v2124 = vpop.f32.mrb[0].mxu0
        %v2125 = vadd.f32 0.0, %v2124
        %v2126 = vpop.f32.mrb[0].mxu0
        %2127 = vmatprep.mubr.bf16.mxu0 0
        %2128 = vmatmul.mubr.bf16.gmra.mrb[0].mxu0 %v1974
        %v2129 = vpop.f32.mrb[0].mxu0
        %v2130 = vadd.f32 0.0, %v2129
        %v2131 = vpop.f32.mrb[0].mxu0
        %v2132 = vpop.f32.mrb[0].mxu0
        %v2133 = vadd.f32 0.0, %v2132
        %v2134 = vpop.f32.mrb[0].mxu0
        %2135 = vdwg.mxu0
        %vm2136 = vcmask 523264
        %v2137 = vsel %vm2136, %v2010, -inf
        %v2138 = vsel %vm2136, %v2013, -inf
        %v2139 = vsel %vm2136, %v2018, -inf
        %v2140 = vsel %vm2136, %v2021, -inf
        %v2141 = vsel %vm2136, %v2026, -inf
        %v2142 = vmax.f32 %v2137, %v2141
        %v2143 = vsel %vm2136, %v2029, -inf
        %v2144 = vmax.f32 %v2138, %v2143
        %v2145 = vsel %vm2136, %v2034, -inf
        %v2146 = vmax.f32 %v2139, %v2145
        %v2147 = vsel %vm2136, %v2037, -inf
        %v2148 = vmax.f32 %v2140, %v2147
        %v2149 = vsel %vm2136, %v2042, -inf
        %v2150 = vmax.f32 %v2142, %v2149
        %v2151 = vsel %vm2136, %v2045, -inf
        %v2152 = vmax.f32 %v2144, %v2151
        %v2153 = vsel %vm2136, %v2050, -inf
        %v2154 = vmax.f32 %v2146, %v2153
        %v2155 = vsel %vm2136, %v2053, -inf
        %v2156 = vmax.f32 %v2148, %v2155
        %v2157 = vsel %vm2136, %v2058, -inf
        %v2158 = vmax.f32 %v2150, %v2157
        %v2159 = vsel %vm2136, %v2061, -inf
        %v2160 = vmax.f32 %v2152, %v2159
        %v2161 = vsel %vm2136, %v2066, -inf
        %v2162 = vmax.f32 %v2154, %v2161
        %v2163 = vsel %vm2136, %v2069, -inf
        %v2164 = vmax.f32 %v2156, %v2163
        %v2165 = vsel %vm2136, %v2074, -inf
        %v2166 = vmax.f32 %v2158, %v2165
        %v2167 = vsel %vm2136, %v2077, -inf
        %v2168 = vmax.f32 %v2160, %v2167
        %v2169 = vsel %vm2136, %v2082, -inf
        %v2170 = vmax.f32 %v2162, %v2169
        %v2171 = vsel %vm2136, %v2085, -inf
        %v2172 = vmax.f32 %v2164, %v2171
        %v2173 = vsel %vm2136, %v2090, -inf
        %v2174 = vmax.f32 %v2166, %v2173
        %v2175 = vsel %vm2136, %v2093, -inf
        %v2176 = vmax.f32 %v2168, %v2175
        %v2177 = vsel %vm2136, %v2098, -inf
        %v2178 = vmax.f32 %v2170, %v2177
        %v2179 = vsel %vm2136, %v2101, -inf
        %v2180 = vmax.f32 %v2172, %v2179
        %v2181 = vsel %vm2136, %v2106, -inf
        %v2182 = vmax.f32 %v2174, %v2181
        %v2183 = vsel %vm2136, %v2109, -inf
        %v2184 = vmax.f32 %v2176, %v2183
        %v2185 = vsel %vm2136, %v2114, -inf
        %v2186 = vmax.f32 %v2178, %v2185
        %v2187 = vsel %vm2136, %v2117, -inf
        %v2188 = vmax.f32 %v2180, %v2187
        %v2189 = vsel %vm2136, %v2122, -inf
        %v2190 = vmax.f32 %v2182, %v2189
        %v2191 = vsel %vm2136, %v2125, -inf
        %v2192 = vmax.f32 %v2184, %v2191
        %v2193 = vsel %vm2136, %v2130, -inf
        %v2194 = vmax.f32 %v2186, %v2193
        %v2195 = vsel %vm2136, %v2133, -inf
        %v2196 = vmax.f32 %v2188, %v2195
        %v2197 = vmax.f32 %v2190, %v2192
        %v2198 = vmax.f32 %v2194, %v2196
        %v2199 = vmax.f32 %v2197, %v2198
        %v2200 = vrot.slane %v2199, 4
        %v2201 = vmax.f32 %v2199, %v2200
        %v2202 = vrot.slane %v2201, 2
        %v2203 = vmax.f32 %v2201, %v2202
        %v2204 = vrot.slane %v2203, 1
        %v2205 = vmax.f32 %v2203, %v2204
        %v2206 = vsub.f32 %v2010, %v2205
        %v2207 = vsub.f32 %v2013, %v2205
        %v2208 = vsub.f32 %v2018, %v2205
        %v2209 = vsub.f32 %v2021, %v2205
        %v2210 = vsub.f32 %v2026, %v2205
        %v2211 = vsub.f32 %v2029, %v2205
        %v2212 = vsub.f32 %v2034, %v2205
        %v2213 = vsub.f32 %v2037, %v2205
        %v2214 = vsub.f32 %v2042, %v2205
        %v2215 = vsub.f32 %v2045, %v2205
        %v2216 = vsub.f32 %v2050, %v2205
        %v2217 = vsub.f32 %v2053, %v2205
        %v2218 = vsub.f32 %v2058, %v2205
        %v2219 = vsub.f32 %v2061, %v2205
        %v2220 = vsub.f32 %v2066, %v2205
        %v2221 = vsub.f32 %v2069, %v2205
        %v2222 = vsub.f32 %v2074, %v2205
        %v2223 = vsub.f32 %v2077, %v2205
        %v2224 = vsub.f32 %v2082, %v2205
        %v2225 = vsub.f32 %v2085, %v2205
        %v2226 = vsub.f32 %v2090, %v2205
        %v2227 = vsub.f32 %v2093, %v2205
        %v2228 = vsub.f32 %v2098, %v2205
        %v2229 = vsub.f32 %v2101, %v2205
        %v2230 = vsub.f32 %v2106, %v2205
        %v2231 = vsub.f32 %v2109, %v2205
        %v2232 = vsub.f32 %v2114, %v2205
        %v2233 = vsub.f32 %v2117, %v2205
        %v2234 = vsub.f32 %v2122, %v2205
        %v2235 = vsub.f32 %v2125, %v2205
        %v2236 = vsub.f32 %v2130, %v2205
        %v2237 = vsub.f32 %v2133, %v2205
        %v2238 = vmul.f32 %v2206, 1.442695
        %v2239 = vpow.pop %v2238
        %v2240 = vmul.f32 %v2207, 1.442695
        %v2241 = vpow.pop %v2240
        %v2242 = vmul.f32 %v2208, 1.442695
        %v2243 = vpow.pop %v2242
        %v2244 = vmul.f32 %v2209, 1.442695
        %v2245 = vpow.pop %v2244
        %v2246 = vmul.f32 %v2210, 1.442695
        %v2247 = vpow.pop %v2246
        %v2248 = vmul.f32 %v2211, 1.442695
        %v2249 = vpow.pop %v2248
        %v2250 = vmul.f32 %v2212, 1.442695
        %v2251 = vpow.pop %v2250
        %v2252 = vmul.f32 %v2213, 1.442695
        %v2253 = vpow.pop %v2252
        %v2254 = vmul.f32 %v2214, 1.442695
        %v2255 = vpow.pop %v2254
        %v2256 = vmul.f32 %v2215, 1.442695
        %v2257 = vpow.pop %v2256
        %v2258 = vmul.f32 %v2216, 1.442695
        %v2259 = vpow.pop %v2258
        %v2260 = vmul.f32 %v2217, 1.442695
        %v2261 = vpow.pop %v2260
        %v2262 = vmul.f32 %v2218, 1.442695
        %v2263 = vpow.pop %v2262
        %v2264 = vmul.f32 %v2219, 1.442695
        %v2265 = vpow.pop %v2264
        %v2266 = vmul.f32 %v2220, 1.442695
        %v2267 = vpow.pop %v2266
        %v2268 = vmul.f32 %v2221, 1.442695
        %v2269 = vpow.pop %v2268
        %v2270 = vmul.f32 %v2222, 1.442695
        %v2271 = vpow.pop %v2270
        %v2272 = vmul.f32 %v2223, 1.442695
        %v2273 = vpow.pop %v2272
        %v2274 = vmul.f32 %v2224, 1.442695
        %v2275 = vpow.pop %v2274
        %v2276 = vmul.f32 %v2225, 1.442695
        %v2277 = vpow.pop %v2276
        %v2278 = vmul.f32 %v2226, 1.442695
        %v2279 = vpow.pop %v2278
        %v2280 = vmul.f32 %v2227, 1.442695
        %v2281 = vpow.pop %v2280
        %v2282 = vmul.f32 %v2228, 1.442695
        %v2283 = vpow.pop %v2282
        %v2284 = vmul.f32 %v2229, 1.442695
        %v2285 = vpow.pop %v2284
        %v2286 = vmul.f32 %v2230, 1.442695
        %v2287 = vpow.pop %v2286
        %v2288 = vmul.f32 %v2231, 1.442695
        %v2289 = vpow.pop %v2288
        %v2290 = vmul.f32 %v2232, 1.442695
        %v2291 = vpow.pop %v2290
        %v2292 = vmul.f32 %v2233, 1.442695
        %v2293 = vpow.pop %v2292
        %v2294 = vmul.f32 %v2234, 1.442695
        %v2295 = vpow.pop %v2294
        %v2296 = vmul.f32 %v2235, 1.442695
        %v2297 = vpow.pop %v2296
        %v2298 = vmul.f32 %v2236, 1.442695
        %v2299 = vpow.pop %v2298
        %v2300 = vmul.f32 %v2237, 1.442695
        %v2301 = vpow.pop %v2300
        %v2302 = vsel %vm2136, %v2239, 0.0
        %v2303 = vsel %vm2136, %v2241, 0.0
        %v2304 = vadd.f32 %v2302, %v2303
        %v2305 = vsel %vm2136, %v2243, 0.0
        %v2306 = vadd.f32 %v2304, %v2305
        %v2307 = vsel %vm2136, %v2245, 0.0
        %v2308 = vadd.f32 %v2306, %v2307
        %v2309 = vsel %vm2136, %v2247, 0.0
        %v2310 = vadd.f32 %v2308, %v2309
        %v2311 = vsel %vm2136, %v2249, 0.0
        %v2312 = vadd.f32 %v2310, %v2311
        %v2313 = vsel %vm2136, %v2251, 0.0
        %v2314 = vadd.f32 %v2312, %v2313
        %v2315 = vsel %vm2136, %v2253, 0.0
        %v2316 = vadd.f32 %v2314, %v2315
        %v2317 = vsel %vm2136, %v2255, 0.0
        %v2318 = vadd.f32 %v2316, %v2317
        %v2319 = vsel %vm2136, %v2257, 0.0
        %v2320 = vadd.f32 %v2318, %v2319
        %v2321 = vsel %vm2136, %v2259, 0.0
        %v2322 = vadd.f32 %v2320, %v2321
        %v2323 = vsel %vm2136, %v2261, 0.0
        %v2324 = vadd.f32 %v2322, %v2323
        %v2325 = vsel %vm2136, %v2263, 0.0
        %v2326 = vadd.f32 %v2324, %v2325
        %v2327 = vsel %vm2136, %v2265, 0.0
        %v2328 = vadd.f32 %v2326, %v2327
        %v2329 = vsel %vm2136, %v2267, 0.0
        %v2330 = vadd.f32 %v2328, %v2329
        %v2331 = vsel %vm2136, %v2269, 0.0
        %v2332 = vadd.f32 %v2330, %v2331
        %v2333 = vsel %vm2136, %v2271, 0.0
        %v2334 = vadd.f32 %v2332, %v2333
        %v2335 = vsel %vm2136, %v2273, 0.0
        %v2336 = vadd.f32 %v2334, %v2335
        %v2337 = vsel %vm2136, %v2275, 0.0
        %v2338 = vadd.f32 %v2336, %v2337
        %v2339 = vsel %vm2136, %v2277, 0.0
        %v2340 = vadd.f32 %v2338, %v2339
        %v2341 = vsel %vm2136, %v2279, 0.0
        %v2342 = vadd.f32 %v2340, %v2341
        %v2343 = vsel %vm2136, %v2281, 0.0
        %v2344 = vadd.f32 %v2342, %v2343
        %v2345 = vsel %vm2136, %v2283, 0.0
        %v2346 = vadd.f32 %v2344, %v2345
        %v2347 = vsel %vm2136, %v2285, 0.0
        %v2348 = vadd.f32 %v2346, %v2347
        %v2349 = vsel %vm2136, %v2287, 0.0
        %v2350 = vadd.f32 %v2348, %v2349
        %v2351 = vsel %vm2136, %v2289, 0.0
        %v2352 = vadd.f32 %v2350, %v2351
        %v2353 = vsel %vm2136, %v2291, 0.0
        %v2354 = vadd.f32 %v2352, %v2353
        %v2355 = vsel %vm2136, %v2293, 0.0
        %v2356 = vadd.f32 %v2354, %v2355
        %v2357 = vsel %vm2136, %v2295, 0.0
        %v2358 = vadd.f32 %v2356, %v2357
        %v2359 = vsel %vm2136, %v2297, 0.0
        %v2360 = vadd.f32 %v2358, %v2359
        %v2361 = vsel %vm2136, %v2299, 0.0
        %v2362 = vadd.f32 %v2360, %v2361
        %v2363 = vsel %vm2136, %v2301, 0.0
        %v2364 = vadd.f32 %v2362, %v2363
        %v2365 = vrot.slane %v2364, 4
        %v2366 = vadd.f32 %v2364, %v2365
        %v2367 = vrot.slane %v2366, 2
        %v2368 = vadd.f32 %v2366, %v2367
        %v2369 = vrot.slane %v2368, 1
        %v2370 = vadd.f32 %v2368, %v2369
        %v2371 = vrcp.pop %v2370
        %v2372 = vmul.f32 %v2239, %v2371
        %v2373 = vmul.f32 %v2241, %v2371
        %v2374 = vmul.f32 %v2243, %v2371
        %v2375 = vmul.f32 %v2245, %v2371
        %v2376 = vmul.f32 %v2247, %v2371
        %v2377 = vmul.f32 %v2249, %v2371
        %v2378 = vmul.f32 %v2251, %v2371
        %v2379 = vmul.f32 %v2253, %v2371
        %v2380 = vmul.f32 %v2255, %v2371
        %v2381 = vmul.f32 %v2257, %v2371
        %v2382 = vmul.f32 %v2259, %v2371
        %v2383 = vmul.f32 %v2261, %v2371
        %v2384 = vmul.f32 %v2263, %v2371
        %v2385 = vmul.f32 %v2265, %v2371
        %v2386 = vmul.f32 %v2267, %v2371
        %v2387 = vmul.f32 %v2269, %v2371
        %v2388 = vmul.f32 %v2271, %v2371
        %v2389 = vmul.f32 %v2273, %v2371
        %v2390 = vmul.f32 %v2275, %v2371
        %v2391 = vmul.f32 %v2277, %v2371
        %v2392 = vmul.f32 %v2279, %v2371
        %v2393 = vmul.f32 %v2281, %v2371
        %v2394 = vmul.f32 %v2283, %v2371
        %v2395 = vmul.f32 %v2285, %v2371
        %v2396 = vmul.f32 %v2287, %v2371
        %v2397 = vmul.f32 %v2289, %v2371
        %v2398 = vmul.f32 %v2291, %v2371
        %v2399 = vmul.f32 %v2293, %v2371
        %v2400 = vmul.f32 %v2295, %v2371
        %v2401 = vmul.f32 %v2297, %v2371
        %v2402 = vmul.f32 %v2299, %v2371
        %v2403 = vmul.f32 %v2301, %v2371
        %v2404 = vpack.c.bf16 %v2373, %v2372
        %v2405 = vpack.c.bf16 %v2375, %v2374
        %v2406 = vpack.c.bf16 %v2377, %v2376
        %v2407 = vpack.c.bf16 %v2379, %v2378
        %v2408 = vpack.c.bf16 %v2381, %v2380
        %v2409 = vpack.c.bf16 %v2383, %v2382
        %v2410 = vpack.c.bf16 %v2385, %v2384
        %v2411 = vpack.c.bf16 %v2387, %v2386
        %v2412 = vpack.c.bf16 %v2389, %v2388
        %v2413 = vpack.c.bf16 %v2391, %v2390
        %v2414 = vpack.c.bf16 %v2393, %v2392
        %v2415 = vpack.c.bf16 %v2395, %v2394
        %v2416 = vpack.c.bf16 %v2397, %v2396
        %v2417 = vpack.c.bf16 %v2399, %v2398
        %v2418 = vpack.c.bf16 %v2401, %v2400
        %v2419 = vpack.c.bf16 %v2403, %v2402
        %s2420 = smul.addr %s1951, 8
        %s2421 = scalar_lea.vmem [#allocation4], %s2420
        %v2422 = vld [vmem:[%s2421] sm:$0xff]
        %v2423 = vld [vmem:[%s2421 + $0x8] sm:$0xff]
        %v2424 = vld [vmem:[%s2421 + $0x10] sm:$0xff]
        %v2425 = vld [vmem:[%s2421 + $0x18] sm:$0xff]
        %v2427 = vsel %vm2136, %v2404, 0
        %v2430 = vsel %vm2136, %v2405, 0
        %v2433 = vsel %vm2136, %v2406, 0
        %v2436 = vsel %vm2136, %v2407, 0
        %v2439 = vsel %vm2136, %v2408, 0
        %v2442 = vsel %vm2136, %v2409, 0
        %v2445 = vsel %vm2136, %v2410, 0
        %v2448 = vsel %vm2136, %v2411, 0
        %v2451 = vsel %vm2136, %v2412, 0
        %v2454 = vsel %vm2136, %v2413, 0
        %v2457 = vsel %vm2136, %v2414, 0
        %v2460 = vsel %vm2136, %v2415, 0
        %v2463 = vsel %vm2136, %v2416, 0
        %v2466 = vsel %vm2136, %v2417, 0
        %v2469 = vsel %vm2136, %v2418, 0
        %v2472 = vsel %vm2136, %v2419, 0
        %2474 = vmatprep.subr.bf16.mxu0 0
        %2475 = vmatpush1.bf16.msra.mxu0 %v2422
        %2476 = vmatprep.subr.bf16.mxu0 0
        %2477 = vmatpush1.bf16.msra.mxu0 %v2423
        %2478 = vmatprep.subr.bf16.mxu0 0
        %2479 = vmatpush1.bf16.msra.mxu0 %v2424
        %2480 = vmatprep.subr.bf16.mxu0 0
        %2481 = vmatpush1.bf16.msra.mxu0 %v2425
        %2482 = vmatprep.subr.bf16.mxu0 0
        %2483 = vmatpush1.bf16.msra.mxu0 0
        %2484 = vmatprep.subr.bf16.mxu0 0
        %2485 = vmatpush1.bf16.msra.mxu0 0
        %2486 = vmatprep.subr.bf16.mxu0 0
        %2487 = vmatpush1.bf16.msra.mxu0 0
        %2488 = vmatprep.subr.bf16.mxu0 0
        %2489 = vmatpush1.bf16.msra.mxu0 0
        %2490 = vmatprep.subr.bf16.mxu0 0
        %2491 = vmatpush1.bf16.msra.mxu0 0
        %2492 = vmatprep.subr.bf16.mxu0 0
        %2493 = vmatpush1.bf16.msra.mxu0 0
        %2494 = vmatprep.subr.bf16.mxu0 0
        %2495 = vmatpush1.bf16.msra.mxu0 0
        %2496 = vmatprep.subr.bf16.mxu0 0
        %2497 = vmatpush1.bf16.msra.mxu0 0
        %2498 = vmatprep.subr.bf16.mxu0 0
        %2499 = vmatpush1.bf16.msra.mxu0 0
        %2500 = vmatprep.subr.bf16.mxu0 0
        %2501 = vmatpush1.bf16.msra.mxu0 0
        %2502 = vmatprep.subr.bf16.mxu0 0
        %2503 = vmatpush1.bf16.msra.mxu0 0
        %2504 = vmatprep.subr.bf16.mxu0 0
        %2505 = vmatpush1.bf16.msra.mxu0 0
        %2506 = vmatprep.mubr.bf16.mxu0 0
        %2507 = vmatmul.mubr.bf16.gmra.mrb[0].mxu0 %v2427
        %v2508 = vpop.f32.mrb[0].mxu0
        %v2509 = vadd.f32 0.0, %v2508
        %v2510 = vpop.f32.mrb[0].mxu0
        %v2511 = vpop.f32.mrb[0].mxu0
        %v2512 = vadd.f32 0.0, %v2511
        %v2513 = vpop.f32.mrb[0].mxu0
        %2514 = vmatprep.mubr.bf16.mxu0 0
        %2515 = vmatmul.mubr.bf16.gmra.mrb[0].mxu0 %v2430
        %v2516 = vpop.f32.mrb[0].mxu0
        %v2517 = vadd.f32 0.0, %v2516
        %v2518 = vpop.f32.mrb[0].mxu0
        %v2519 = vpop.f32.mrb[0].mxu0
        %v2520 = vadd.f32 0.0, %v2519
        %v2521 = vpop.f32.mrb[0].mxu0
        %2522 = vmatprep.mubr.bf16.mxu0 0
        %2523 = vmatmul.mubr.bf16.gmra.mrb[0].mxu0 %v2433
        %v2524 = vpop.f32.mrb[0].mxu0
        %v2525 = vadd.f32 0.0, %v2524
        %v2526 = vpop.f32.mrb[0].mxu0
        %v2527 = vpop.f32.mrb[0].mxu0
        %v2528 = vadd.f32 0.0, %v2527
        %v2529 = vpop.f32.mrb[0].mxu0
        %2530 = vmatprep.mubr.bf16.mxu0 0
        %2531 = vmatmul.mubr.bf16.gmra.mrb[0].mxu0 %v2436
        %v2532 = vpop.f32.mrb[0].mxu0
        %v2533 = vadd.f32 0.0, %v2532
        %v2534 = vpop.f32.mrb[0].mxu0
        %v2535 = vpop.f32.mrb[0].mxu0
        %v2536 = vadd.f32 0.0, %v2535
        %v2537 = vpop.f32.mrb[0].mxu0
        %2538 = vmatprep.mubr.bf16.mxu0 0
        %2539 = vmatmul.mubr.bf16.gmra.mrb[0].mxu0 %v2439
        %v2540 = vpop.f32.mrb[0].mxu0
        %v2541 = vadd.f32 0.0, %v2540
        %v2542 = vpop.f32.mrb[0].mxu0
        %v2543 = vpop.f32.mrb[0].mxu0
        %v2544 = vadd.f32 0.0, %v2543
        %v2545 = vpop.f32.mrb[0].mxu0
        %2546 = vmatprep.mubr.bf16.mxu0 0
        %2547 = vmatmul.mubr.bf16.gmra.mrb[0].mxu0 %v2442
        %v2548 = vpop.f32.mrb[0].mxu0
        %v2549 = vadd.f32 0.0, %v2548
        %v2550 = vpop.f32.mrb[0].mxu0
        %v2551 = vpop.f32.mrb[0].mxu0
        %v2552 = vadd.f32 0.0, %v2551
        %v2553 = vpop.f32.mrb[0].mxu0
        %2554 = vmatprep.mubr.bf16.mxu0 0
        %2555 = vmatmul.mubr.bf16.gmra.mrb[0].mxu0 %v2445
        %v2556 = vpop.f32.mrb[0].mxu0
        %v2557 = vadd.f32 0.0, %v2556
        %v2558 = vpop.f32.mrb[0].mxu0
        %v2559 = vpop.f32.mrb[0].mxu0
        %v2560 = vadd.f32 0.0, %v2559
        %v2561 = vpop.f32.mrb[0].mxu0
        %2562 = vmatprep.mubr.bf16.mxu0 0
        %2563 = vmatmul.mubr.bf16.gmra.mrb[0].mxu0 %v2448
        %v2564 = vpop.f32.mrb[0].mxu0
        %v2565 = vadd.f32 0.0, %v2564
        %v2566 = vpop.f32.mrb[0].mxu0
        %v2567 = vpop.f32.mrb[0].mxu0
        %v2568 = vadd.f32 0.0, %v2567
        %v2569 = vpop.f32.mrb[0].mxu0
        %2570 = vmatprep.mubr.bf16.mxu0 0
        %2571 = vmatmul.mubr.bf16.gmra.mrb[0].mxu0 %v2451
        %v2572 = vpop.f32.mrb[0].mxu0
        %v2573 = vadd.f32 0.0, %v2572
        %v2574 = vpop.f32.mrb[0].mxu0
        %v2575 = vpop.f32.mrb[0].mxu0
        %v2576 = vadd.f32 0.0, %v2575
        %v2577 = vpop.f32.mrb[0].mxu0
        %2578 = vmatprep.mubr.bf16.mxu0 0
        %2579 = vmatmul.mubr.bf16.gmra.mrb[0].mxu0 %v2454
        %v2580 = vpop.f32.mrb[0].mxu0
        %v2581 = vadd.f32 0.0, %v2580
        %v2582 = vpop.f32.mrb[0].mxu0
        %v2583 = vpop.f32.mrb[0].mxu0
        %v2584 = vadd.f32 0.0, %v2583
        %v2585 = vpop.f32.mrb[0].mxu0
        %2586 = vmatprep.mubr.bf16.mxu0 0
        %2587 = vmatmul.mubr.bf16.gmra.mrb[0].mxu0 %v2457
        %v2588 = vpop.f32.mrb[0].mxu0
        %v2589 = vadd.f32 0.0, %v2588
        %v2590 = vpop.f32.mrb[0].mxu0
        %v2591 = vpop.f32.mrb[0].mxu0
        %v2592 = vadd.f32 0.0, %v2591
        %v2593 = vpop.f32.mrb[0].mxu0
        %2594 = vmatprep.mubr.bf16.mxu0 0
        %2595 = vmatmul.mubr.bf16.gmra.mrb[0].mxu0 %v2460
        %v2596 = vpop.f32.mrb[0].mxu0
        %v2597 = vadd.f32 0.0, %v2596
        %v2598 = vpop.f32.mrb[0].mxu0
        %v2599 = vpop.f32.mrb[0].mxu0
        %v2600 = vadd.f32 0.0, %v2599
        %v2601 = vpop.f32.mrb[0].mxu0
        %2602 = vmatprep.mubr.bf16.mxu0 0
        %2603 = vmatmul.mubr.bf16.gmra.mrb[0].mxu0 %v2463
        %v2604 = vpop.f32.mrb[0].mxu0
        %v2605 = vadd.f32 0.0, %v2604
        %v2606 = vpop.f32.mrb[0].mxu0
        %v2607 = vpop.f32.mrb[0].mxu0
        %v2608 = vadd.f32 0.0, %v2607
        %v2609 = vpop.f32.mrb[0].mxu0
        %2610 = vmatprep.mubr.bf16.mxu0 0
        %2611 = vmatmul.mubr.bf16.gmra.mrb[0].mxu0 %v2466
        %v2612 = vpop.f32.mrb[0].mxu0
        %v2613 = vadd.f32 0.0, %v2612
        %v2614 = vpop.f32.mrb[0].mxu0
        %v2615 = vpop.f32.mrb[0].mxu0
        %v2616 = vadd.f32 0.0, %v2615
        %v2617 = vpop.f32.mrb[0].mxu0
        %2618 = vmatprep.mubr.bf16.mxu0 0
        %2619 = vmatmul.mubr.bf16.gmra.mrb[0].mxu0 %v2469
        %v2620 = vpop.f32.mrb[0].mxu0
        %v2621 = vadd.f32 0.0, %v2620
        %v2622 = vpop.f32.mrb[0].mxu0
        %v2623 = vpop.f32.mrb[0].mxu0
        %v2624 = vadd.f32 0.0, %v2623
        %v2625 = vpop.f32.mrb[0].mxu0
        %2626 = vmatprep.mubr.bf16.mxu0 0
        %2627 = vmatmul.mubr.bf16.gmra.mrb[0].mxu0 %v2472
        %v2628 = vpop.f32.mrb[0].mxu0
        %v2629 = vadd.f32 0.0, %v2628
        %v2630 = vpop.f32.mrb[0].mxu0
        %v2631 = vpop.f32.mrb[0].mxu0
        %v2632 = vadd.f32 0.0, %v2631
        %v2633 = vpop.f32.mrb[0].mxu0
        %2634 = vdwg.mxu0
        // Predicated region
        $region101: #{tpu_custom_call.1} parent=71 // pred_check
          %p2635 = pneg %p539
        $region102: #{tpu_custom_call.1} parent=71 // pred_check_branch
          %2637 = sbr.rel (%p2635) target = $region104
        $region103: #{tpu_custom_call.1} parent=71 // pred_region
          %2638 = vst [vmem:[%s537] sm:$0xff] %v2509
          %2639 = vst [vmem:[%s537 + $0x8] sm:$0xff] %v2512
          %2640 = vst [vmem:[%s537 + $0x10] sm:$0xff] %v2517
          %2641 = vst [vmem:[%s537 + $0x18] sm:$0xff] %v2520
          %2642 = vst [vmem:[%s537 + $0x20] sm:$0xff] %v2525
          %2643 = vst [vmem:[%s537 + $0x28] sm:$0xff] %v2528
          %2644 = vst [vmem:[%s537 + $0x30] sm:$0xff] %v2533
          %2645 = vst [vmem:[%s537 + $0x38] sm:$0xff] %v2536
          %2646 = vst [vmem:[%s537 + $0x40] sm:$0xff] %v2541
          %2647 = vst [vmem:[%s537 + $0x48] sm:$0xff] %v2544
          %2648 = vst [vmem:[%s537 + $0x50] sm:$0xff] %v2549
          %2649 = vst [vmem:[%s537 + $0x58] sm:$0xff] %v2552
          %2650 = vst [vmem:[%s537 + $0x60] sm:$0xff] %v2557
          %2651 = vst [vmem:[%s537 + $0x68] sm:$0xff] %v2560
          %2652 = vst [vmem:[%s537 + $0x70] sm:$0xff] %v2565
          %2653 = vst [vmem:[%s537 + $0x78] sm:$0xff] %v2568
          %2654 = vst [vmem:[%s537 + $0x80] sm:$0xff] %v2573
          %2655 = vst [vmem:[%s537 + $0x88] sm:$0xff] %v2576
          %2656 = vst [vmem:[%s537 + $0x90] sm:$0xff] %v2581
          %2657 = vst [vmem:[%s537 + $0x98] sm:$0xff] %v2584
          %2658 = vst [vmem:[%s537 + $0xa0] sm:$0xff] %v2589
          %2659 = vst [vmem:[%s537 + $0xa8] sm:$0xff] %v2592
          %2660 = vst [vmem:[%s537 + $0xb0] sm:$0xff] %v2597
          %2661 = vst [vmem:[%s537 + $0xb8] sm:$0xff] %v2600
          %2662 = vst [vmem:[%s537 + $0xc0] sm:$0xff] %v2605
          %2663 = vst [vmem:[%s537 + $0xc8] sm:$0xff] %v2608
          %2664 = vst [vmem:[%s537 + $0xd0] sm:$0xff] %v2613
          %2665 = vst [vmem:[%s537 + $0xd8] sm:$0xff] %v2616
          %2666 = vst [vmem:[%s537 + $0xe0] sm:$0xff] %v2621
          %2667 = vst [vmem:[%s537 + $0xe8] sm:$0xff] %v2624
          %2668 = vst [vmem:[%s537 + $0xf0] sm:$0xff] %v2629
          %2669 = vst [vmem:[%s537 + $0xf8] sm:$0xff] %v2632
        $region104: #{tpu_custom_call.1} parent=71 // pred_fallthru
          _
        %p2670 = scmp.gt.s32.totalorder %s38, 0
        // Predicated region
        $region105: #{tpu_custom_call.1} parent=71 // pred_check
          %p2671 = pneg %p2670
        $region106: #{tpu_custom_call.1} parent=71 // pred_check_branch
          %2673 = sbr.rel (%p2671) target = $region108
        $region107: #{tpu_custom_call.1} parent=71 // pred_region
          %v2674 = vld [vmem:[%s537] sm:$0xff]
          %v2675 = vld [vmem:[%s537 + $0x8] sm:$0xff]
          %v2676 = vld [vmem:[%s537 + $0x10] sm:$0xff]
          %v2677 = vld [vmem:[%s537 + $0x18] sm:$0xff]
          %v2678 = vld [vmem:[%s537 + $0x20] sm:$0xff]
          %v2679 = vld [vmem:[%s537 + $0x28] sm:$0xff]
          %v2680 = vld [vmem:[%s537 + $0x30] sm:$0xff]
          %v2681 = vld [vmem:[%s537 + $0x38] sm:$0xff]
          %v2682 = vld [vmem:[%s537 + $0x40] sm:$0xff]
          %v2683 = vld [vmem:[%s537 + $0x48] sm:$0xff]
          %v2684 = vld [vmem:[%s537 + $0x50] sm:$0xff]
          %v2685 = vld [vmem:[%s537 + $0x58] sm:$0xff]
          %v2686 = vld [vmem:[%s537 + $0x60] sm:$0xff]
          %v2687 = vld [vmem:[%s537 + $0x68] sm:$0xff]
          %v2688 = vld [vmem:[%s537 + $0x70] sm:$0xff]
          %v2689 = vld [vmem:[%s537 + $0x78] sm:$0xff]
          %v2690 = vld [vmem:[%s537 + $0x80] sm:$0xff]
          %v2691 = vld [vmem:[%s537 + $0x88] sm:$0xff]
          %v2692 = vld [vmem:[%s537 + $0x90] sm:$0xff]
          %v2693 = vld [vmem:[%s537 + $0x98] sm:$0xff]
          %v2694 = vld [vmem:[%s537 + $0xa0] sm:$0xff]
          %v2695 = vld [vmem:[%s537 + $0xa8] sm:$0xff]
          %v2696 = vld [vmem:[%s537 + $0xb0] sm:$0xff]
          %v2697 = vld [vmem:[%s537 + $0xb8] sm:$0xff]
          %v2698 = vld [vmem:[%s537 + $0xc0] sm:$0xff]
          %v2699 = vld [vmem:[%s537 + $0xc8] sm:$0xff]
          %v2700 = vld [vmem:[%s537 + $0xd0] sm:$0xff]
          %v2701 = vld [vmem:[%s537 + $0xd8] sm:$0xff]
          %v2702 = vld [vmem:[%s537 + $0xe0] sm:$0xff]
          %v2703 = vld [vmem:[%s537 + $0xe8] sm:$0xff]
          %v2704 = vld [vmem:[%s537 + $0xf0] sm:$0xff]
          %v2705 = vld [vmem:[%s537 + $0xf8] sm:$0xff]
          %v2706 = vadd.f32 %v2674, %v2509
          %v2707 = vadd.f32 %v2675, %v2512
          %v2708 = vadd.f32 %v2676, %v2517
          %v2709 = vadd.f32 %v2677, %v2520
          %v2710 = vadd.f32 %v2678, %v2525
          %v2711 = vadd.f32 %v2679, %v2528
          %v2712 = vadd.f32 %v2680, %v2533
          %v2713 = vadd.f32 %v2681, %v2536
          %v2714 = vadd.f32 %v2682, %v2541
          %v2715 = vadd.f32 %v2683, %v2544
          %v2716 = vadd.f32 %v2684, %v2549
          %v2717 = vadd.f32 %v2685, %v2552
          %v2718 = vadd.f32 %v2686, %v2557
          %v2719 = vadd.f32 %v2687, %v2560
          %v2720 = vadd.f32 %v2688, %v2565
          %v2721 = vadd.f32 %v2689, %v2568
          %v2722 = vadd.f32 %v2690, %v2573
          %v2723 = vadd.f32 %v2691, %v2576
          %v2724 = vadd.f32 %v2692, %v2581
          %v2725 = vadd.f32 %v2693, %v2584
          %v2726 = vadd.f32 %v2694, %v2589
          %v2727 = vadd.f32 %v2695, %v2592
          %v2728 = vadd.f32 %v2696, %v2597
          %v2729 = vadd.f32 %v2697, %v2600
          %v2730 = vadd.f32 %v2698, %v2605
          %v2731 = vadd.f32 %v2699, %v2608
          %v2732 = vadd.f32 %v2700, %v2613
          %v2733 = vadd.f32 %v2701, %v2616
          %v2734 = vadd.f32 %v2702, %v2621
          %v2735 = vadd.f32 %v2703, %v2624
          %v2736 = vadd.f32 %v2704, %v2629
          %v2737 = vadd.f32 %v2705, %v2632
          %2738 = vst [vmem:[%s537] sm:$0xff] %v2706
          %2739 = vst [vmem:[%s537 + $0x8] sm:$0xff] %v2707
          %2740 = vst [vmem:[%s537 + $0x10] sm:$0xff] %v2708
          %2741 = vst [vmem:[%s537 + $0x18] sm:$0xff] %v2709
          %2742 = vst [vmem:[%s537 + $0x20] sm:$0xff] %v2710
          %2743 = vst [vmem:[%s537 + $0x28] sm:$0xff] %v2711
          %2744 = vst [vmem:[%s537 + $0x30] sm:$0xff] %v2712
          %2745 = vst [vmem:[%s537 + $0x38] sm:$0xff] %v2713
          %2746 = vst [vmem:[%s537 + $0x40] sm:$0xff] %v2714
          %2747 = vst [vmem:[%s537 + $0x48] sm:$0xff] %v2715
          %2748 = vst [vmem:[%s537 + $0x50] sm:$0xff] %v2716
          %2749 = vst [vmem:[%s537 + $0x58] sm:$0xff] %v2717
          %2750 = vst [vmem:[%s537 + $0x60] sm:$0xff] %v2718
          %2751 = vst [vmem:[%s537 + $0x68] sm:$0xff] %v2719
          %2752 = vst [vmem:[%s537 + $0x70] sm:$0xff] %v2720
          %2753 = vst [vmem:[%s537 + $0x78] sm:$0xff] %v2721
          %2754 = vst [vmem:[%s537 + $0x80] sm:$0xff] %v2722
          %2755 = vst [vmem:[%s537 + $0x88] sm:$0xff] %v2723
          %2756 = vst [vmem:[%s537 + $0x90] sm:$0xff] %v2724
          %2757 = vst [vmem:[%s537 + $0x98] sm:$0xff] %v2725
          %2758 = vst [vmem:[%s537 + $0xa0] sm:$0xff] %v2726
          %2759 = vst [vmem:[%s537 + $0xa8] sm:$0xff] %v2727
          %2760 = vst [vmem:[%s537 + $0xb0] sm:$0xff] %v2728
          %2761 = vst [vmem:[%s537 + $0xb8] sm:$0xff] %v2729
          %2762 = vst [vmem:[%s537 + $0xc0] sm:$0xff] %v2730
          %2763 = vst [vmem:[%s537 + $0xc8] sm:$0xff] %v2731
          %2764 = vst [vmem:[%s537 + $0xd0] sm:$0xff] %v2732
          %2765 = vst [vmem:[%s537 + $0xd8] sm:$0xff] %v2733
          %2766 = vst [vmem:[%s537 + $0xe0] sm:$0xff] %v2734
          %2767 = vst [vmem:[%s537 + $0xe8] sm:$0xff] %v2735
          %2768 = vst [vmem:[%s537 + $0xf0] sm:$0xff] %v2736
          %2769 = vst [vmem:[%s537 + $0xf8] sm:$0xff] %v2737
        $region108: #{tpu_custom_call.1} parent=71 // pred_fallthru
          _
        %p2770 = scmp.eq.s32.totalorder %s38, 3
        // Predicated region
        $region109: #{tpu_custom_call.1} parent=71 // pred_check
          %p2771 = pneg %p2770
        $region110: #{tpu_custom_call.1} parent=71 // pred_check_branch
          %2773 = sbr.rel (%p2771) target = $region112
        $region111: #{tpu_custom_call.1} parent=71 // pred_region
          %v2774 = vld [vmem:[%s537] sm:$0xff]
          %v2775 = vld [vmem:[%s537 + $0x8] sm:$0xff]
          %v2776 = vld [vmem:[%s537 + $0x10] sm:$0xff]
          %v2777 = vld [vmem:[%s537 + $0x18] sm:$0xff]
          %v2778 = vld [vmem:[%s537 + $0x20] sm:$0xff]
          %v2779 = vld [vmem:[%s537 + $0x28] sm:$0xff]
          %v2780 = vld [vmem:[%s537 + $0x30] sm:$0xff]
          %v2781 = vld [vmem:[%s537 + $0x38] sm:$0xff]
          %v2782 = vld [vmem:[%s537 + $0x40] sm:$0xff]
          %v2783 = vld [vmem:[%s537 + $0x48] sm:$0xff]
          %v2784 = vld [vmem:[%s537 + $0x50] sm:$0xff]
          %v2785 = vld [vmem:[%s537 + $0x58] sm:$0xff]
          %v2786 = vld [vmem:[%s537 + $0x60] sm:$0xff]
          %v2787 = vld [vmem:[%s537 + $0x68] sm:$0xff]
          %v2788 = vld [vmem:[%s537 + $0x70] sm:$0xff]
          %v2789 = vld [vmem:[%s537 + $0x78] sm:$0xff]
          %v2790 = vld [vmem:[%s537 + $0x80] sm:$0xff]
          %v2791 = vld [vmem:[%s537 + $0x88] sm:$0xff]
          %v2792 = vld [vmem:[%s537 + $0x90] sm:$0xff]
          %v2793 = vld [vmem:[%s537 + $0x98] sm:$0xff]
          %v2794 = vld [vmem:[%s537 + $0xa0] sm:$0xff]
          %v2795 = vld [vmem:[%s537 + $0xa8] sm:$0xff]
          %v2796 = vld [vmem:[%s537 + $0xb0] sm:$0xff]
          %v2797 = vld [vmem:[%s537 + $0xb8] sm:$0xff]
          %v2798 = vld [vmem:[%s537 + $0xc0] sm:$0xff]
          %v2799 = vld [vmem:[%s537 + $0xc8] sm:$0xff]
          %v2800 = vld [vmem:[%s537 + $0xd0] sm:$0xff]
          %v2801 = vld [vmem:[%s537 + $0xd8] sm:$0xff]
          %v2802 = vld [vmem:[%s537 + $0xe0] sm:$0xff]
          %v2803 = vld [vmem:[%s537 + $0xe8] sm:$0xff]
          %v2804 = vld [vmem:[%s537 + $0xf0] sm:$0xff]
          %v2805 = vld [vmem:[%s537 + $0xf8] sm:$0xff]
          %v2806 = vpack.c.bf16 %v2775, %v2774
          %v2807 = vpack.c.bf16 %v2777, %v2776
          %v2808 = vpack.c.bf16 %v2779, %v2778
          %v2809 = vpack.c.bf16 %v2781, %v2780
          %v2810 = vpack.c.bf16 %v2783, %v2782
          %v2811 = vpack.c.bf16 %v2785, %v2784
          %v2812 = vpack.c.bf16 %v2787, %v2786
          %v2813 = vpack.c.bf16 %v2789, %v2788
          %v2814 = vpack.c.bf16 %v2791, %v2790
          %v2815 = vpack.c.bf16 %v2793, %v2792
          %v2816 = vpack.c.bf16 %v2795, %v2794
          %v2817 = vpack.c.bf16 %v2797, %v2796
          %v2818 = vpack.c.bf16 %v2799, %v2798
          %v2819 = vpack.c.bf16 %v2801, %v2800
          %v2820 = vpack.c.bf16 %v2803, %v2802
          %v2821 = vpack.c.bf16 %v2805, %v2804
          %v2822 = vld [vmem:[%s9] sm:$0xf]
          %v2823 = vld [vmem:[%s9 + $0x4] sm:$0xf]
          %v2824 = vld [vmem:[%s9 + $0x8] sm:$0xf]
          %v2825 = vld [vmem:[%s9 + $0xc] sm:$0xf]
          %v2826 = vld [vmem:[%s9 + $0x10] sm:$0xf]
          %v2827 = vld [vmem:[%s9 + $0x14] sm:$0xf]
          %v2828 = vld [vmem:[%s9 + $0x18] sm:$0xf]
          %v2829 = vld [vmem:[%s9 + $0x1c] sm:$0xf]
          %v2830 = vld [vmem:[%s9 + $0x20] sm:$0xf]
          %v2831 = vld [vmem:[%s9 + $0x24] sm:$0xf]
          %v2832 = vld [vmem:[%s9 + $0x28] sm:$0xf]
          %v2833 = vld [vmem:[%s9 + $0x2c] sm:$0xf]
          %v2834 = vld [vmem:[%s9 + $0x30] sm:$0xf]
          %v2835 = vld [vmem:[%s9 + $0x34] sm:$0xf]
          %v2836 = vld [vmem:[%s9 + $0x38] sm:$0xf]
          %v2837 = vld [vmem:[%s9 + $0x3c] sm:$0xf]
          %v2838 = vld [vmem:[%s10] sm:$0x1]
          %v2840 = vlaneseq
          %v2841 = vshrl.u32 %v2840, 7
          %v2842 = vsub.s32 0, %v2841
          %v2843 = vrot.slane %v2838, %v2842
          %v2861 = vunpack.c.l.b16 %v2822
          %v2862 = vunpack.c.l.b16 %v2823
          %v2863 = vunpack.c.l.b16 %v2824
          %v2864 = vunpack.c.l.b16 %v2825
          %v2865 = vunpack.c.l.b16 %v2826
          %v2866 = vunpack.c.l.b16 %v2827
          %v2867 = vunpack.c.l.b16 %v2828
          %v2868 = vunpack.c.l.b16 %v2829
          %v2869 = vunpack.c.l.b16 %v2830
          %v2870 = vunpack.c.l.b16 %v2831
          %v2871 = vunpack.c.l.b16 %v2832
          %v2872 = vunpack.c.l.b16 %v2833
          %v2873 = vunpack.c.l.b16 %v2834
          %v2874 = vunpack.c.l.b16 %v2835
          %v2875 = vunpack.c.l.b16 %v2836
          %v2876 = vunpack.c.l.b16 %v2837
          %v2877 = vpack.c.b16 %v2862, %v2861
          %v2878 = vpack.c.b16 %v2864, %v2863
          %v2879 = vpack.c.b16 %v2866, %v2865
          %v2880 = vpack.c.b16 %v2868, %v2867
          %v2881 = vpack.c.b16 %v2870, %v2869
          %v2882 = vpack.c.b16 %v2872, %v2871
          %v2883 = vpack.c.b16 %v2874, %v2873
          %v2884 = vpack.c.b16 %v2876, %v2875
          %2893 = vmatprep.subr.bf16.mxu0 0
          %2894 = vmatpush1.bf16.msra.mxu0 %v2877
          %2895 = vmatprep.subr.bf16.mxu0 0
          %2896 = vmatpush1.bf16.msra.mxu0 %v2878
          %2897 = vmatprep.subr.bf16.mxu0 0
          %2898 = vmatpush1.bf16.msra.mxu0 %v2879
          %2899 = vmatprep.subr.bf16.mxu0 0
          %2900 = vmatpush1.bf16.msra.mxu0 %v2880
          %2901 = vmatprep.subr.bf16.mxu0 0
          %2902 = vmatpush1.bf16.msra.mxu0 %v2881
          %2903 = vmatprep.subr.bf16.mxu0 0
          %2904 = vmatpush1.bf16.msra.mxu0 %v2882
          %2905 = vmatprep.subr.bf16.mxu0 0
          %2906 = vmatpush1.bf16.msra.mxu0 %v2883
          %2907 = vmatprep.subr.bf16.mxu0 0
          %2908 = vmatpush1.bf16.msra.mxu0 %v2884
          %2909 = vmatprep.subr.bf16.mxu0 0
          %2910 = vmatpush1.bf16.msra.mxu0 0
          %2911 = vmatprep.subr.bf16.mxu0 0
          %2912 = vmatpush1.bf16.msra.mxu0 0
          %2913 = vmatprep.subr.bf16.mxu0 0
          %2914 = vmatpush1.bf16.msra.mxu0 0
          %2915 = vmatprep.subr.bf16.mxu0 0
          %2916 = vmatpush1.bf16.msra.mxu0 0
          %2917 = vmatprep.subr.bf16.mxu0 0
          %2918 = vmatpush1.bf16.msra.mxu0 0
          %2919 = vmatprep.subr.bf16.mxu0 0
          %2920 = vmatpush1.bf16.msra.mxu0 0
          %2921 = vmatprep.subr.bf16.mxu0 0
          %2922 = vmatpush1.bf16.msra.mxu0 0
          %2923 = vmatprep.subr.bf16.mxu0 0
          %2924 = vmatpush1.bf16.msra.mxu0 0
          %2925 = vmatprep.mubr.bf16.mxu0 0
          %2926 = vmatmul.mubr.bf16.gmra.mrb[0].mxu0 %v2806
          %v2927 = vpop.f32.mrb[0].mxu0
          %v2928 = vadd.f32 %v2843, %v2927
          %v2929 = vpop.f32.mrb[0].mxu0
          %v2930 = vpop.f32.mrb[0].mxu0
          %v2931 = vadd.f32 %v2843, %v2930
          %v2932 = vpop.f32.mrb[0].mxu0
          %2933 = vmatprep.mubr.bf16.mxu0 0
          %2934 = vmatmul.mubr.bf16.gmra.mrb[0].mxu0 %v2807
          %v2935 = vpop.f32.mrb[0].mxu0
          %v2936 = vadd.f32 %v2843, %v2935
          %v2937 = vpop.f32.mrb[0].mxu0
          %v2938 = vpop.f32.mrb[0].mxu0
          %v2939 = vadd.f32 %v2843, %v2938
          %v2940 = vpop.f32.mrb[0].mxu0
          %2941 = vmatprep.mubr.bf16.mxu0 0
          %2942 = vmatmul.mubr.bf16.gmra.mrb[0].mxu0 %v2808
          %v2943 = vpop.f32.mrb[0].mxu0
          %v2944 = vadd.f32 %v2843, %v2943
          %v2945 = vpop.f32.mrb[0].mxu0
          %v2946 = vpop.f32.mrb[0].mxu0
          %v2947 = vadd.f32 %v2843, %v2946
          %v2948 = vpop.f32.mrb[0].mxu0
          %2949 = vmatprep.mubr.bf16.mxu0 0
          %2950 = vmatmul.mubr.bf16.gmra.mrb[0].mxu0 %v2809
          %v2951 = vpop.f32.mrb[0].mxu0
          %v2952 = vadd.f32 %v2843, %v2951
          %v2953 = vpop.f32.mrb[0].mxu0
          %v2954 = vpop.f32.mrb[0].mxu0
          %v2955 = vadd.f32 %v2843, %v2954
          %v2956 = vpop.f32.mrb[0].mxu0
          %2957 = vmatprep.mubr.bf16.mxu0 0
          %2958 = vmatmul.mubr.bf16.gmra.mrb[0].mxu0 %v2810
          %v2959 = vpop.f32.mrb[0].mxu0
          %v2960 = vadd.f32 %v2843, %v2959
          %v2961 = vpop.f32.mrb[0].mxu0
          %v2962 = vpop.f32.mrb[0].mxu0
          %v2963 = vadd.f32 %v2843, %v2962
          %v2964 = vpop.f32.mrb[0].mxu0
          %2965 = vmatprep.mubr.bf16.mxu0 0
          %2966 = vmatmul.mubr.bf16.gmra.mrb[0].mxu0 %v2811
          %v2967 = vpop.f32.mrb[0].mxu0
          %v2968 = vadd.f32 %v2843, %v2967
          %v2969 = vpop.f32.mrb[0].mxu0
          %v2970 = vpop.f32.mrb[0].mxu0
          %v2971 = vadd.f32 %v2843, %v2970
          %v2972 = vpop.f32.mrb[0].mxu0
          %2973 = vmatprep.mubr.bf16.mxu0 0
          %2974 = vmatmul.mubr.bf16.gmra.mrb[0].mxu0 %v2812
          %v2975 = vpop.f32.mrb[0].mxu0
          %v2976 = vadd.f32 %v2843, %v2975
          %v2977 = vpop.f32.mrb[0].mxu0
          %v2978 = vpop.f32.mrb[0].mxu0
          %v2979 = vadd.f32 %v2843, %v2978
          %v2980 = vpop.f32.mrb[0].mxu0
          %2981 = vmatprep.mubr.bf16.mxu0 0
          %2982 = vmatmul.mubr.bf16.gmra.mrb[0].mxu0 %v2813
          %v2983 = vpop.f32.mrb[0].mxu0
          %v2984 = vadd.f32 %v2843, %v2983
          %v2985 = vpop.f32.mrb[0].mxu0
          %v2986 = vpop.f32.mrb[0].mxu0
          %v2987 = vadd.f32 %v2843, %v2986
          %v2988 = vpop.f32.mrb[0].mxu0
          %2989 = vmatprep.mubr.bf16.mxu0 0
          %2990 = vmatmul.mubr.bf16.gmra.mrb[0].mxu0 %v2814
          %v2991 = vpop.f32.mrb[0].mxu0
          %v2992 = vadd.f32 %v2843, %v2991
          %v2993 = vpop.f32.mrb[0].mxu0
          %v2994 = vpop.f32.mrb[0].mxu0
          %v2995 = vadd.f32 %v2843, %v2994
          %v2996 = vpop.f32.mrb[0].mxu0
          %2997 = vmatprep.mubr.bf16.mxu0 0
          %2998 = vmatmul.mubr.bf16.gmra.mrb[0].mxu0 %v2815
          %v2999 = vpop.f32.mrb[0].mxu0
          %v3000 = vadd.f32 %v2843, %v2999
          %v3001 = vpop.f32.mrb[0].mxu0
          %v3002 = vpop.f32.mrb[0].mxu0
          %v3003 = vadd.f32 %v2843, %v3002
          %v3004 = vpop.f32.mrb[0].mxu0
          %3005 = vmatprep.mubr.bf16.mxu0 0
          %3006 = vmatmul.mubr.bf16.gmra.mrb[0].mxu0 %v2816
          %v3007 = vpop.f32.mrb[0].mxu0
          %v3008 = vadd.f32 %v2843, %v3007
          %v3009 = vpop.f32.mrb[0].mxu0
          %v3010 = vpop.f32.mrb[0].mxu0
          %v3011 = vadd.f32 %v2843, %v3010
          %v3012 = vpop.f32.mrb[0].mxu0
          %3013 = vmatprep.mubr.bf16.mxu0 0
          %3014 = vmatmul.mubr.bf16.gmra.mrb[0].mxu0 %v2817
          %v3015 = vpop.f32.mrb[0].mxu0
          %v3016 = vadd.f32 %v2843, %v3015
          %v3017 = vpop.f32.mrb[0].mxu0
          %v3018 = vpop.f32.mrb[0].mxu0
          %v3019 = vadd.f32 %v2843, %v3018
          %v3020 = vpop.f32.mrb[0].mxu0
          %3021 = vmatprep.mubr.bf16.mxu0 0
          %3022 = vmatmul.mubr.bf16.gmra.mrb[0].mxu0 %v2818
          %v3023 = vpop.f32.mrb[0].mxu0
          %v3024 = vadd.f32 %v2843, %v3023
          %v3025 = vpop.f32.mrb[0].mxu0
          %v3026 = vpop.f32.mrb[0].mxu0
          %v3027 = vadd.f32 %v2843, %v3026
          %v3028 = vpop.f32.mrb[0].mxu0
          %3029 = vmatprep.mubr.bf16.mxu0 0
          %3030 = vmatmul.mubr.bf16.gmra.mrb[0].mxu0 %v2819
          %v3031 = vpop.f32.mrb[0].mxu0
          %v3032 = vadd.f32 %v2843, %v3031
          %v3033 = vpop.f32.mrb[0].mxu0
          %v3034 = vpop.f32.mrb[0].mxu0
          %v3035 = vadd.f32 %v2843, %v3034
          %v3036 = vpop.f32.mrb[0].mxu0
          %3037 = vmatprep.mubr.bf16.mxu0 0
          %3038 = vmatmul.mubr.bf16.gmra.mrb[0].mxu0 %v2820
          %v3039 = vpop.f32.mrb[0].mxu0
          %v3040 = vadd.f32 %v2843, %v3039
          %v3041 = vpop.f32.mrb[0].mxu0
          %v3042 = vpop.f32.mrb[0].mxu0
          %v3043 = vadd.f32 %v2843, %v3042
          %v3044 = vpop.f32.mrb[0].mxu0
          %3045 = vmatprep.mubr.bf16.mxu0 0
          %3046 = vmatmul.mubr.bf16.gmra.mrb[0].mxu0 %v2821
          %v3047 = vpop.f32.mrb[0].mxu0
          %v3048 = vadd.f32 %v2843, %v3047
          %v3049 = vpop.f32.mrb[0].mxu0
          %v3050 = vpop.f32.mrb[0].mxu0
          %v3051 = vadd.f32 %v2843, %v3050
          %v3052 = vpop.f32.mrb[0].mxu0
          %3053 = vdwg.mxu0
          %v3054 = vld [vmem:[%s475] sm:$0xff]
          %v3055 = vld [vmem:[%s475 + $0x8] sm:$0xff]
          %v3056 = vld [vmem:[%s475 + $0x10] sm:$0xff]
          %v3057 = vld [vmem:[%s475 + $0x18] sm:$0xff]
          %v3058 = vld [vmem:[%s475 + $0x20] sm:$0xff]
          %v3059 = vld [vmem:[%s475 + $0x28] sm:$0xff]
          %v3060 = vld [vmem:[%s475 + $0x30] sm:$0xff]
          %v3061 = vld [vmem:[%s475 + $0x38] sm:$0xff]
          %v3062 = vld [vmem:[%s475 + $0x40] sm:$0xff]
          %v3063 = vld [vmem:[%s475 + $0x48] sm:$0xff]
          %v3064 = vld [vmem:[%s475 + $0x50] sm:$0xff]
          %v3065 = vld [vmem:[%s475 + $0x58] sm:$0xff]
          %v3066 = vld [vmem:[%s475 + $0x60] sm:$0xff]
          %v3067 = vld [vmem:[%s475 + $0x68] sm:$0xff]
          %v3068 = vld [vmem:[%s475 + $0x70] sm:$0xff]
          %v3069 = vld [vmem:[%s475 + $0x78] sm:$0xff]
          %v3070 = vld [vmem:[%s475 + $0x80] sm:$0xff]
          %v3071 = vld [vmem:[%s475 + $0x88] sm:$0xff]
          %v3072 = vld [vmem:[%s475 + $0x90] sm:$0xff]
          %v3073 = vld [vmem:[%s475 + $0x98] sm:$0xff]
          %v3074 = vld [vmem:[%s475 + $0xa0] sm:$0xff]
          %v3075 = vld [vmem:[%s475 + $0xa8] sm:$0xff]
          %v3076 = vld [vmem:[%s475 + $0xb0] sm:$0xff]
          %v3077 = vld [vmem:[%s475 + $0xb8] sm:$0xff]
          %v3078 = vld [vmem:[%s475 + $0xc0] sm:$0xff]
          %v3079 = vld [vmem:[%s475 + $0xc8] sm:$0xff]
          %v3080 = vld [vmem:[%s475 + $0xd0] sm:$0xff]
          %v3081 = vld [vmem:[%s475 + $0xd8] sm:$0xff]
          %v3082 = vld [vmem:[%s475 + $0xe0] sm:$0xff]
          %v3083 = vld [vmem:[%s475 + $0xe8] sm:$0xff]
          %v3084 = vld [vmem:[%s475 + $0xf0] sm:$0xff]
          %v3085 = vld [vmem:[%s475 + $0xf8] sm:$0xff]
          %v3086 = vadd.f32 %v2928, %v3054
          %v3087 = vadd.f32 %v2931, %v3055
          %v3088 = vadd.f32 %v2936, %v3056
          %v3089 = vadd.f32 %v2939, %v3057
          %v3090 = vadd.f32 %v2944, %v3058
          %v3091 = vadd.f32 %v2947, %v3059
          %v3092 = vadd.f32 %v2952, %v3060
          %v3093 = vadd.f32 %v2955, %v3061
          %v3094 = vadd.f32 %v2960, %v3062
          %v3095 = vadd.f32 %v2963, %v3063
          %v3096 = vadd.f32 %v2968, %v3064
          %v3097 = vadd.f32 %v2971, %v3065
          %v3098 = vadd.f32 %v2976, %v3066
          %v3099 = vadd.f32 %v2979, %v3067
          %v3100 = vadd.f32 %v2984, %v3068
          %v3101 = vadd.f32 %v2987, %v3069
          %v3102 = vadd.f32 %v2992, %v3070
          %v3103 = vadd.f32 %v2995, %v3071
          %v3104 = vadd.f32 %v3000, %v3072
          %v3105 = vadd.f32 %v3003, %v3073
          %v3106 = vadd.f32 %v3008, %v3074
          %v3107 = vadd.f32 %v3011, %v3075
          %v3108 = vadd.f32 %v3016, %v3076
          %v3109 = vadd.f32 %v3019, %v3077
          %v3110 = vadd.f32 %v3024, %v3078
          %v3111 = vadd.f32 %v3027, %v3079
          %v3112 = vadd.f32 %v3032, %v3080
          %v3113 = vadd.f32 %v3035, %v3081
          %v3114 = vadd.f32 %v3040, %v3082
          %v3115 = vadd.f32 %v3043, %v3083
          %v3116 = vadd.f32 %v3048, %v3084
          %v3117 = vadd.f32 %v3051, %v3085
          %3118 = vst [vmem:[%s537] sm:$0xff] %v3086
          %3119 = vst [vmem:[%s537 + $0x8] sm:$0xff] %v3087
          %3120 = vst [vmem:[%s537 + $0x10] sm:$0xff] %v3088
          %3121 = vst [vmem:[%s537 + $0x18] sm:$0xff] %v3089
          %3122 = vst [vmem:[%s537 + $0x20] sm:$0xff] %v3090
          %3123 = vst [vmem:[%s537 + $0x28] sm:$0xff] %v3091
          %3124 = vst [vmem:[%s537 + $0x30] sm:$0xff] %v3092
          %3125 = vst [vmem:[%s537 + $0x38] sm:$0xff] %v3093
          %3126 = vst [vmem:[%s537 + $0x40] sm:$0xff] %v3094
          %3127 = vst [vmem:[%s537 + $0x48] sm:$0xff] %v3095
          %3128 = vst [vmem:[%s537 + $0x50] sm:$0xff] %v3096
          %3129 = vst [vmem:[%s537 + $0x58] sm:$0xff] %v3097
          %3130 = vst [vmem:[%s537 + $0x60] sm:$0xff] %v3098
          %3131 = vst [vmem:[%s537 + $0x68] sm:$0xff] %v3099
          %3132 = vst [vmem:[%s537 + $0x70] sm:$0xff] %v3100
          %3133 = vst [vmem:[%s537 + $0x78] sm:$0xff] %v3101
          %3134 = vst [vmem:[%s537 + $0x80] sm:$0xff] %v3102
          %3135 = vst [vmem:[%s537 + $0x88] sm:$0xff] %v3103
          %3136 = vst [vmem:[%s537 + $0x90] sm:$0xff] %v3104
          %3137 = vst [vmem:[%s537 + $0x98] sm:$0xff] %v3105
          %3138 = vst [vmem:[%s537 + $0xa0] sm:$0xff] %v3106
          %3139 = vst [vmem:[%s537 + $0xa8] sm:$0xff] %v3107
          %3140 = vst [vmem:[%s537 + $0xb0] sm:$0xff] %v3108
          %3141 = vst [vmem:[%s537 + $0xb8] sm:$0xff] %v3109
          %3142 = vst [vmem:[%s537 + $0xc0] sm:$0xff] %v3110
          %3143 = vst [vmem:[%s537 + $0xc8] sm:$0xff] %v3111
          %3144 = vst [vmem:[%s537 + $0xd0] sm:$0xff] %v3112
          %3145 = vst [vmem:[%s537 + $0xd8] sm:$0xff] %v3113
          %3146 = vst [vmem:[%s537 + $0xe0] sm:$0xff] %v3114
          %3147 = vst [vmem:[%s537 + $0xe8] sm:$0xff] %v3115
          %3148 = vst [vmem:[%s537 + $0xf0] sm:$0xff] %v3116
          %3149 = vst [vmem:[%s537 + $0xf8] sm:$0xff] %v3117
        $region112: #{tpu_custom_call.1} parent=71 // pred_fallthru
          _
        %s3150 = sand.u32 %s331, 1
        %s3151 = scalar_lea.sflag [#allocation7], %s3150
        %s3152 = sand.u32 %s331, 1
        %s3153 = smul.addr %s3152, 256
        %s3154 = scalar_lea.vmem [#allocation16], %s3153
        // Predicated region
        $region113: #{tpu_custom_call.1} parent=71 // pred_check
          %p3155 = pneg %p341
        $region114: #{tpu_custom_call.1} parent=71 // pred_check_branch
          %3157 = sbr.rel (%p3155) target = $region116
        $region115: #{tpu_custom_call.1} parent=71 // pred_region
          %s3159 = ssub.s32 4096, 4096
          %3160 = vsyncadd %s3151, %s3159
          %s3161 = smul.addr %s37, 32
          %s3162 = smul.addr %s3161, 128
          %s3163 = scalar_lea.hbm %s13, %s3162
          %s3164 = sshll.u32 %s3154, 4
          %s3165 = int_to_ptr.vmem [resolvable:$true] %s3164
          %3170 = dma.vmem_to_hbm [thread:$0]  %s3165, 4096, %s3163, %s3151, 128, 128, 8
        $region116: #{tpu_custom_call.1} parent=71 // pred_fallthru
          _
      $region72: #{tpu_custom_call.1} parent=5 // pred_fallthru
        _
      %p3171 = scmp.le.s32.totalorder 2, %s28
      // Predicated region
      $region117: #{tpu_custom_call.1} parent=5 // pred_check
        %p3172 = pneg %p3171
      $region118: #{tpu_custom_call.1} parent=5 // pred_check_branch
        %3174 = sbr.rel (%p3172) target = $region120
      $region119: #{tpu_custom_call.1} parent=5 // pred_region
        %s3175 = ssub.s32 %s28, 2
        // Predicated region
        $region121: #{tpu_custom_call.1} parent=119 // pred_check
          %p3176 = pneg %p347
        $region122: #{tpu_custom_call.1} parent=119 // pred_check_branch
          %3178 = sbr.rel (%p3176) target = $region124
        $region123: #{tpu_custom_call.1} parent=119 // pred_region
          %s3179 = sand.u32 %s332, 1
          %s3180 = scalar_lea.sflag [#allocation7], %s3179
          %s3181 = sand.u32 %s332, 1
          %s3182 = smul.addr %s3181, 256
          %s3183 = scalar_lea.vmem [#allocation16], %s3182
          %3184 = dma.done %s3180, 4096
        $region124: #{tpu_custom_call.1} parent=119 // pred_fallthru
          _
      $region120: #{tpu_custom_call.1} parent=5 // pred_fallthru
        _
    $region6: #{tpu_custom_call.1} parent=1 // loop_footer
      %s32 = sadd.s32 1, %s28
    $region7: #{tpu_custom_call.1} parent=1 // loop_footer_branch
      %27 = sbr.rel target = $region3
    $region8: #{tpu_custom_call.1} parent=1 // loop_exit
      _
    %3185 = vsyncpa [#allocation6], 1
    %s3186 = scalar_lea.sflag [#allocation6], 1
    %3187 = vsyncpa %s3186, 1
    %3188 = vsyncpa [#allocation9], 1
    %3189 = vsyncpa [#allocation12], 1
    %3190 = vsyncpa [#allocation15], 1
    %3191 = vsyncpa [#allocation7], 1
    %s3192 = scalar_lea.sflag [#allocation7], 1
    %3193 = vsyncpa %s3192, 1

// kernel: tpu_custom_call.1
$region0: #{tpu_custom_call.1}
  #allocation0 [shape = 'u32[]', space=smem, size = 0x4, offset = 0x4, fixed_abs, tag = 'smem constant byte address 0x4 - core index']
  #allocation1 [shape = 'u32[144,128]{1,0:T(1,128)}', space=vmem, size = 0x12000, scoped, tag = 'internal scratch']
  #allocation2 [shape = 'bf16[256,128]{1,0:T(16,128)(2,1)}', space=vmem, size = 0x10000, scoped, tag = 'scratch operand']
  #allocation3 [shape = 'bf16[256,128]{1,0:T(16,128)(2,1)}', space=vmem, size = 0x10000, scoped, tag = 'scratch operand']
  #allocation4 [shape = 'bf16[256,128]{1,0:T(16,128)(2,1)}', space=vmem, size = 0x10000, scoped, tag = 'scratch operand']
  %s0 = inlined_call_operand.hbm [shape: f32[2,256,128], index: 0, kind: input, shape index: {}]
  %s1 = inlined_call_operand.vmem [shape: f32[1,128], index: 1, kind: input, shape index: {}]
  %s2 = inlined_call_operand.vmem [shape: f32[1,128], index: 2, kind: input, shape index: {}]
  %s3 = inlined_call_operand.vmem [shape: bf16[128,128], index: 3, kind: input, shape index: {}]
  %s4 = inlined_call_operand.hbm [shape: f32[1,128], index: 4, kind: input, shape index: {}]
  %s5 = inlined_call_operand.vmem [shape: bf16[128,128], index: 5, kind: input, shape index: {}]
  %s6 = inlined_call_operand.hbm [shape: f32[1,128], index: 6, kind: input, shape index: {}]
  %s7 = inlined_call_operand.hbm [shape: bf16[128,128], index: 7, kind: input, shape index: {}]
  %s8 = inlined_call_operand.hbm [shape: f32[1,128], index: 8, kind: input, shape index: {}]
  %s9 = inlined_call_operand.vmem [shape: bf16[128,128], index: 9, kind: input, shape index: {}]
  %s10 = inlined_call_operand.vmem [shape: f32[1,128], index: 10, kind: input, shape index: {}]
  %s11 = inlined_call_operand.vmem [shape: f32[128,32], index: 11, kind: input, shape index: {}]
  %s12 = inlined_call_operand.hbm [shape: f32[32,128], index: 12, kind: input, shape index: {}]
  %s13 = inlined_call_operand.hbm [shape: f32[2,256,128], index: 13, kind: output, shape index: {}]
  %s14 = sld [smem:[#allocation0]]
  $region125: #{tpu_custom_call.1} parent=0
    _
  %s16 = ssub.s32 1, %s14
  %s17 = scalar_select 0, %s16, %s14
  $region1: #{tpu_custom_call.1} parent=0
    #allocation5 [shape = 'u8[262144]{0}', space=vmem, size = 0x40000, scoped, tag = 'input window, operand 0']
    #allocation6 [shape = 's32[2]{0}', space=sflag, size = 0x8, scoped, tag = 'scoped memory for tpu_custom_call.1']
    #allocation7 [shape = 's32[2]{0}', space=sflag, size = 0x8, scoped, tag = 'scoped memory for tpu_custom_call.1']
    #allocation8 [shape = 'u8[512]{0}', space=vmem, size = 0x400, scoped, tag = 'input window, operand 4, single buffered']
    #allocation9 [shape = 's32[1]{0}', space=sflag, size = 0x4, scoped, tag = 'scoped memory for tpu_custom_call.1']
    #allocation10 [shape = 'u8[512]{0}', space=vmem, size = 0x400, scoped, tag = 'input window, operand 6, single buffered']
    #allocation11 [shape = 'u8[32768]{0}', space=vmem, size = 0x8000, scoped, tag = 'input window, operand 7, single buffered']
    #allocation12 [shape = 's32[1]{0}', space=sflag, size = 0x4, scoped, tag = 'scoped memory for tpu_custom_call.1']
    #allocation13 [shape = 'u8[512]{0}', space=vmem, size = 0x400, scoped, tag = 'input window, operand 8, single buffered']
    #allocation14 [shape = 'u8[16384]{0}', space=vmem, size = 0x4000, scoped, tag = 'input window, operand 12, single buffered']
    #allocation15 [shape = 's32[1]{0}', space=sflag, size = 0x4, scoped, tag = 'scoped memory for tpu_custom_call.1']
    #allocation16 [shape = 'u8[262144]{0}', space=vmem, size = 0x40000, scoped, tag = 'output window, operand 0']
    %18 = vsyncpa [#allocation6], 0
    %s19 = scalar_lea.sflag [#allocation6], 1
    %20 = vsyncpa %s19, 0
    %21 = vsyncpa [#allocation9], 0
    %22 = vsyncpa [#allocation12], 0
    %23 = vsyncpa [#allocation15], 0
    %24 = vsyncpa [#allocation7], 0
    %s25 = scalar_lea.sflag [#allocation7], 1
    %26 = vsyncpa %s25, 0
    loop: start=0, step=1, limit=10
    $region2: #{tpu_custom_call.1} parent=1 // loop_pre_header
      _
    $region3: #{tpu_custom_call.1} parent=1 // loop_header
      %s28 = sphi 0, %s32
      %p29 = scmp.ge.s32.totalorder %s28, 10
      %s35 = sphi 0, %s47
      %s36 = sphi 0, %s43
      %s37 = sphi 0, %s35
      %s38 = sphi 0, %s36
      %s39 = sphi 0, %s37
      %s40 = sphi 0, %s38
      %s50 = sphi 0, %s52
      %s53 = sphi 0, %s50
      %s54 = sphi 0, %s53
      %s70 = sphi 0, %s54
      %s74 = sphi 0, %s74
      %s76 = sphi 0, %s74
      %s77 = sphi 0, %s76
      %s91 = sphi 0, %s77
      %s95 = sphi 0, %s95
      %s97 = sphi 0, %s95
      %s98 = sphi 0, %s97
      %s112 = sphi 0, %s98
      %s116 = sphi 0, %s116
      %s118 = sphi 0, %s116
      %s119 = sphi 0, %s118
      %s133 = sphi 0, %s119
      %s137 = sphi 0, %s137
      %s139 = sphi 0, %s137
      %s140 = sphi 0, %s139
      %s154 = sphi 0, %s140
      %s158 = sphi 0, %s158
      %s160 = sphi 0, %s158
      %s161 = sphi 0, %s160
      %s175 = sphi 0, %s161
      %s179 = sphi 0, %s179
      %s181 = sphi 0, %s179
      %s182 = sphi 0, %s181
      %s196 = sphi 0, %s182
      %s200 = sphi 0, %s200
      %s202 = sphi 0, %s200
      %s203 = sphi 0, %s202
      %s217 = sphi 0, %s203
      %s221 = sphi 0, %s221
      %s223 = sphi 0, %s221
      %s224 = sphi 0, %s223
      %s238 = sphi 0, %s224
      %s242 = sphi 0, %s242
      %s244 = sphi 0, %s242
      %s245 = sphi 0, %s244
      %s259 = sphi 0, %s245
      %s263 = sphi 0, %s263
      %s265 = sphi 0, %s263
      %s266 = sphi 0, %s265
      %s280 = sphi 0, %s266
      %s284 = sphi 0, %s284
      %s286 = sphi 0, %s284
      %s287 = sphi 0, %s286
      %s301 = sphi 0, %s287
      %s305 = sphi 0, %s305
      %s307 = sphi 0, %s305
      %s308 = sphi 0, %s307
      %s322 = sphi 0, %s308
      %s328 = sphi 0, %s330
      %s331 = sphi 0, %s328
      %s332 = sphi 0, %s331
      %s348 = sphi 0, %s332
    $region4: #{tpu_custom_call.1} parent=1 // loop_header_branch
      %31 = sbr.rel (%p29) target = $region8
    $region5: #{tpu_custom_call.1} parent=1 // loop_body
      %s33 = ssub.s32 %s28, 1
      %s34 = ssub.s32 %s28, 2
      %s41 = sadd.s32 1, %s36
      %p42 = scmp.ge.s32.totalorder %s41, 4
      %s43 = scalar_select %p42, 0, %s41
      %s44 = sadd.s32 1, %s35
      %s45 = scalar_select %p42, %s44, %s35
      %p46 = scmp.ge.s32.totalorder %s45, 2
      %s47 = scalar_select %p46, 0, %s45
      %s48 = ssub.s32 %s35, %s47
      %p49 = scmp.eq.s32.totalorder %s48, 0
      %s51 = sadd.s32 %s50, 1
      %s52 = scalar_select %p49, %s50, %s51
      %p55 = pneg %p49
      %p56 = scmp.eq.s32.totalorder %s28, 7
      %p57 = por %p55, %p56
      %p58 = scmp.ne.s32.totalorder %s50, %s53
      %p59 = scmp.eq.s32.totalorder %s28, 0
      %p60 = por %p58, %p59
      %p61 = scmp.ne.s32.totalorder %s50, %s53
      %p62 = scmp.eq.s32.totalorder %s33, 7
      %p63 = por %p61, %p62
      %p64 = scmp.ne.s32.totalorder %s53, %s54
      %p65 = scmp.eq.s32.totalorder %s33, 0
      %p66 = por %p64, %p65
      %p67 = scmp.ne.s32.totalorder %s53, %s54
      %p68 = scmp.eq.s32.totalorder %s34, 7
      %p69 = por %p67, %p68
      %p71 = scmp.ne.s32.totalorder %s54, %s70
      %p72 = scmp.eq.s32.totalorder %s34, 0
      %p73 = por %p71, %p72
      %s75 = sadd.s32 %s74, 1
      %p78 = scmp.eq.s32.totalorder %s28, 7
      %p79 = scmp.ne.s32.totalorder %s74, %s76
      %p80 = scmp.eq.s32.totalorder %s28, 0
      %p81 = por %p79, %p80
      %p82 = scmp.ne.s32.totalorder %s74, %s76
      %p83 = scmp.eq.s32.totalorder %s33, 7
      %p84 = por %p82, %p83
      %p85 = scmp.ne.s32.totalorder %s76, %s77
      %p86 = scmp.eq.s32.totalorder %s33, 0
      %p87 = por %p85, %p86
      %p88 = scmp.ne.s32.totalorder %s76, %s77
      %p89 = scmp.eq.s32.totalorder %s34, 7
      %p90 = por %p88, %p89
      %p92 = scmp.ne.s32.totalorder %s77, %s91
      %p93 = scmp.eq.s32.totalorder %s34, 0
      %p94 = por %p92, %p93
      %s96 = sadd.s32 %s95, 1
      %p99 = scmp.eq.s32.totalorder %s28, 7
      %p100 = scmp.ne.s32.totalorder %s95, %s97
      %p101 = scmp.eq.s32.totalorder %s28, 0
      %p102 = por %p100, %p101
      %p103 = scmp.ne.s32.totalorder %s95, %s97
      %p104 = scmp.eq.s32.totalorder %s33, 7
      %p105 = por %p103, %p104
      %p106 = scmp.ne.s32.totalorder %s97, %s98
      %p107 = scmp.eq.s32.totalorder %s33, 0
      %p108 = por %p106, %p107
      %p109 = scmp.ne.s32.totalorder %s97, %s98
      %p110 = scmp.eq.s32.totalorder %s34, 7
      %p111 = por %p109, %p110
      %p113 = scmp.ne.s32.totalorder %s98, %s112
      %p114 = scmp.eq.s32.totalorder %s34, 0
      %p115 = por %p113, %p114
      %s117 = sadd.s32 %s116, 1
      %p120 = scmp.eq.s32.totalorder %s28, 7
      %p121 = scmp.ne.s32.totalorder %s116, %s118
      %p122 = scmp.eq.s32.totalorder %s28, 0
      %p123 = por %p121, %p122
      %p124 = scmp.ne.s32.totalorder %s116, %s118
      %p125 = scmp.eq.s32.totalorder %s33, 7
      %p126 = por %p124, %p125
      %p127 = scmp.ne.s32.totalorder %s118, %s119
      %p128 = scmp.eq.s32.totalorder %s33, 0
      %p129 = por %p127, %p128
      %p130 = scmp.ne.s32.totalorder %s118, %s119
      %p131 = scmp.eq.s32.totalorder %s34, 7
      %p132 = por %p130, %p131
      %p134 = scmp.ne.s32.totalorder %s119, %s133
      %p135 = scmp.eq.s32.totalorder %s34, 0
      %p136 = por %p134, %p135
      %s138 = sadd.s32 %s137, 1
      %p141 = scmp.eq.s32.totalorder %s28, 7
      %p142 = scmp.ne.s32.totalorder %s137, %s139
      %p143 = scmp.eq.s32.totalorder %s28, 0
      %p144 = por %p142, %p143
      %p145 = scmp.ne.s32.totalorder %s137, %s139
      %p146 = scmp.eq.s32.totalorder %s33, 7
      %p147 = por %p145, %p146
      %p148 = scmp.ne.s32.totalorder %s139, %s140
      %p149 = scmp.eq.s32.totalorder %s33, 0
      %p150 = por %p148, %p149
      %p151 = scmp.ne.s32.totalorder %s139, %s140
      %p152 = scmp.eq.s32.totalorder %s34, 7
      %p153 = por %p151, %p152
      %p155 = scmp.ne.s32.totalorder %s140, %s154
      %p156 = scmp.eq.s32.totalorder %s34, 0
      %p157 = por %p155, %p156
      %s159 = sadd.s32 %s158, 1
      %p162 = scmp.eq.s32.totalorder %s28, 7
      %p163 = scmp.ne.s32.totalorder %s158, %s160
      %p164 = scmp.eq.s32.totalorder %s28, 0
      %p165 = por %p163, %p164
      %p166 = scmp.ne.s32.totalorder %s158, %s160
      %p167 = scmp.eq.s32.totalorder %s33, 7
      %p168 = por %p166, %p167
      %p169 = scmp.ne.s32.totalorder %s160, %s161
      %p170 = scmp.eq.s32.totalorder %s33, 0
      %p171 = por %p169, %p170
      %p172 = scmp.ne.s32.totalorder %s160, %s161
      %p173 = scmp.eq.s32.totalorder %s34, 7
      %p174 = por %p172, %p173
      %p176 = scmp.ne.s32.totalorder %s161, %s175
      %p177 = scmp.eq.s32.totalorder %s34, 0
      %p178 = por %p176, %p177
      %s180 = sadd.s32 %s179, 1
      %p183 = scmp.eq.s32.totalorder %s28, 7
      %p184 = scmp.ne.s32.totalorder %s179, %s181
      %p185 = scmp.eq.s32.totalorder %s28, 0
      %p186 = por %p184, %p185
      %p187 = scmp.ne.s32.totalorder %s179, %s181
      %p188 = scmp.eq.s32.totalorder %s33, 7
      %p189 = por %p187, %p188
      %p190 = scmp.ne.s32.totalorder %s181, %s182
      %p191 = scmp.eq.s32.totalorder %s33, 0
      %p192 = por %p190, %p191
      %p193 = scmp.ne.s32.totalorder %s181, %s182
      %p194 = scmp.eq.s32.totalorder %s34, 7
      %p195 = por %p193, %p194
      %p197 = scmp.ne.s32.totalorder %s182, %s196
      %p198 = scmp.eq.s32.totalorder %s34, 0
      %p199 = por %p197, %p198
      %s201 = sadd.s32 %s200, 1
      %p204 = scmp.eq.s32.totalorder %s28, 7
      %p205 = scmp.ne.s32.totalorder %s200, %s202
      %p206 = scmp.eq.s32.totalorder %s28, 0
      %p207 = por %p205, %p206
      %p208 = scmp.ne.s32.totalorder %s200, %s202
      %p209 = scmp.eq.s32.totalorder %s33, 7
      %p210 = por %p208, %p209
      %p211 = scmp.ne.s32.totalorder %s202, %s203
      %p212 = scmp.eq.s32.totalorder %s33, 0
      %p213 = por %p211, %p212
      %p214 = scmp.ne.s32.totalorder %s202, %s203
      %p215 = scmp.eq.s32.totalorder %s34, 7
      %p216 = por %p214, %p215
      %p218 = scmp.ne.s32.totalorder %s203, %s217
      %p219 = scmp.eq.s32.totalorder %s34, 0
      %p220 = por %p218, %p219
      %s222 = sadd.s32 %s221, 1
      %p225 = scmp.eq.s32.totalorder %s28, 7
      %p226 = scmp.ne.s32.totalorder %s221, %s223
      %p227 = scmp.eq.s32.totalorder %s28, 0
      %p228 = por %p226, %p227
      %p229 = scmp.ne.s32.totalorder %s221, %s223
      %p230 = scmp.eq.s32.totalorder %s33, 7
      %p231 = por %p229, %p230
      %p232 = scmp.ne.s32.totalorder %s223, %s224
      %p233 = scmp.eq.s32.totalorder %s33, 0
      %p234 = por %p232, %p233
      %p235 = scmp.ne.s32.totalorder %s223, %s224
      %p236 = scmp.eq.s32.totalorder %s34, 7
      %p237 = por %p235, %p236
      %p239 = scmp.ne.s32.totalorder %s224, %s238
      %p240 = scmp.eq.s32.totalorder %s34, 0
      %p241 = por %p239, %p240
      %s243 = sadd.s32 %s242, 1
      %p246 = scmp.eq.s32.totalorder %s28, 7
      %p247 = scmp.ne.s32.totalorder %s242, %s244
      %p248 = scmp.eq.s32.totalorder %s28, 0
      %p249 = por %p247, %p248
      %p250 = scmp.ne.s32.totalorder %s242, %s244
      %p251 = scmp.eq.s32.totalorder %s33, 7
      %p252 = por %p250, %p251
      %p253 = scmp.ne.s32.totalorder %s244, %s245
      %p254 = scmp.eq.s32.totalorder %s33, 0
      %p255 = por %p253, %p254
      %p256 = scmp.ne.s32.totalorder %s244, %s245
      %p257 = scmp.eq.s32.totalorder %s34, 7
      %p258 = por %p256, %p257
      %p260 = scmp.ne.s32.totalorder %s245, %s259
      %p261 = scmp.eq.s32.totalorder %s34, 0
      %p262 = por %p260, %p261
      %s264 = sadd.s32 %s263, 1
      %p267 = scmp.eq.s32.totalorder %s28, 7
      %p268 = scmp.ne.s32.totalorder %s263, %s265
      %p269 = scmp.eq.s32.totalorder %s28, 0
      %p270 = por %p268, %p269
      %p271 = scmp.ne.s32.totalorder %s263, %s265
      %p272 = scmp.eq.s32.totalorder %s33, 7
      %p273 = por %p271, %p272
      %p274 = scmp.ne.s32.totalorder %s265, %s266
      %p275 = scmp.eq.s32.totalorder %s33, 0
      %p276 = por %p274, %p275
      %p277 = scmp.ne.s32.totalorder %s265, %s266
      %p278 = scmp.eq.s32.totalorder %s34, 7
      %p279 = por %p277, %p278
      %p281 = scmp.ne.s32.totalorder %s266, %s280
      %p282 = scmp.eq.s32.totalorder %s34, 0
      %p283 = por %p281, %p282
      %s285 = sadd.s32 %s284, 1
      %p288 = scmp.eq.s32.totalorder %s28, 7
      %p289 = scmp.ne.s32.totalorder %s284, %s286
      %p290 = scmp.eq.s32.totalorder %s28, 0
      %p291 = por %p289, %p290
      %p292 = scmp.ne.s32.totalorder %s284, %s286
      %p293 = scmp.eq.s32.totalorder %s33, 7
      %p294 = por %p292, %p293
      %p295 = scmp.ne.s32.totalorder %s286, %s287
      %p296 = scmp.eq.s32.totalorder %s33, 0
      %p297 = por %p295, %p296
      %p298 = scmp.ne.s32.totalorder %s286, %s287
      %p299 = scmp.eq.s32.totalorder %s34, 7
      %p300 = por %p298, %p299
      %p302 = scmp.ne.s32.totalorder %s287, %s301
      %p303 = scmp.eq.s32.totalorder %s34, 0
      %p304 = por %p302, %p303
      %s306 = sadd.s32 %s305, 1
      %p309 = scmp.eq.s32.totalorder %s28, 7
      %p310 = scmp.ne.s32.totalorder %s305, %s307
      %p311 = scmp.eq.s32.totalorder %s28, 0
      %p312 = por %p310, %p311
      %p313 = scmp.ne.s32.totalorder %s305, %s307
      %p314 = scmp.eq.s32.totalorder %s33, 7
      %p315 = por %p313, %p314
      %p316 = scmp.ne.s32.totalorder %s307, %s308
      %p317 = scmp.eq.s32.totalorder %s33, 0
      %p318 = por %p316, %p317
      %p319 = scmp.ne.s32.totalorder %s307, %s308
      %p320 = scmp.eq.s32.totalorder %s34, 7
      %p321 = por %p319, %p320
      %p323 = scmp.ne.s32.totalorder %s308, %s322
      %p324 = scmp.eq.s32.totalorder %s34, 0
      %p325 = por %p323, %p324
      %s326 = ssub.s32 %s35, %s47
      %p327 = scmp.eq.s32.totalorder %s326, 0
      %s329 = sadd.s32 %s328, 1
      %s330 = scalar_select %p327, %s328, %s329
      %p333 = pneg %p327
      %p334 = scmp.eq.s32.totalorder %s28, 7
      %p335 = por %p333, %p334
      %p336 = scmp.ne.s32.totalorder %s328, %s331
      %p337 = scmp.eq.s32.totalorder %s28, 0
      %p338 = por %p336, %p337
      %p339 = scmp.ne.s32.totalorder %s328, %s331
      %p340 = scmp.eq.s32.totalorder %s33, 7
      %p341 = por %p339, %p340
      %p342 = scmp.ne.s32.totalorder %s331, %s332
      %p343 = scmp.eq.s32.totalorder %s33, 0
      %p344 = por %p342, %p343
      %p345 = scmp.ne.s32.totalorder %s331, %s332
      %p346 = scmp.eq.s32.totalorder %s34, 7
      %p347 = por %p345, %p346
      %p349 = scmp.ne.s32.totalorder %s332, %s348
      %p350 = scmp.eq.s32.totalorder %s34, 0
      %p351 = por %p349, %p350
      %p352 = scmp.le.s32.totalorder 1, %s28
      %p353 = scmp.lt.s32.totalorder %s28, 9
      %p354 = pnand %p352, %p353
      %p355 = pneg %p354
      // Predicated region
      $region9: #{tpu_custom_call.1} parent=5 // pred_check
        _
      $region10: #{tpu_custom_call.1} parent=5 // pred_check_branch
        %357 = sbr.rel (%p354) target = $region12
      $region11: #{tpu_custom_call.1} parent=5 // pred_region
        %s358 = ssub.s32 %s28, 1
        // Predicated region
        $region13: #{tpu_custom_call.1} parent=11 // pred_check
          %p359 = pneg %p87
        $region14: #{tpu_custom_call.1} parent=11 // pred_check_branch
          %361 = sbr.rel (%p359) target = $region16
        $region15: #{tpu_custom_call.1} parent=11 // pred_region
          _
        $region16: #{tpu_custom_call.1} parent=11 // pred_fallthru
          _
        // Predicated region
        $region17: #{tpu_custom_call.1} parent=11 // pred_check
          %p362 = pneg %p108
        $region18: #{tpu_custom_call.1} parent=11 // pred_check_branch
          %364 = sbr.rel (%p362) target = $region20
        $region19: #{tpu_custom_call.1} parent=11 // pred_region
          _
        $region20: #{tpu_custom_call.1} parent=11 // pred_fallthru
          _
        // Predicated region
        $region21: #{tpu_custom_call.1} parent=11 // pred_check
          %p365 = pneg %p129
        $region22: #{tpu_custom_call.1} parent=11 // pred_check_branch
          %367 = sbr.rel (%p365) target = $region24
        $region23: #{tpu_custom_call.1} parent=11 // pred_region
          _
        $region24: #{tpu_custom_call.1} parent=11 // pred_fallthru
          _
        // Predicated region
        $region25: #{tpu_custom_call.1} parent=11 // pred_check
          %p368 = pneg %p150
        $region26: #{tpu_custom_call.1} parent=11 // pred_check_branch
          %370 = sbr.rel (%p368) target = $region28
        $region27: #{tpu_custom_call.1} parent=11 // pred_region
          %s372 = ssub.s32 16, 16
          %373 = vsyncadd [#allocation9], %s372
          %s375 = sshll.u32 [#allocation8], 4
          %s376 = int_to_ptr.vmem [resolvable:$true] %s375
          %378 = dma.hbm_to_vmem [thread:$0]  %s4, 16, %s376, [#allocation9]
        $region28: #{tpu_custom_call.1} parent=11 // pred_fallthru
          _
        // Predicated region
        $region29: #{tpu_custom_call.1} parent=11 // pred_check
          %p379 = pneg %p171
        $region30: #{tpu_custom_call.1} parent=11 // pred_check_branch
          %381 = sbr.rel (%p379) target = $region32
        $region31: #{tpu_custom_call.1} parent=11 // pred_region
          _
        $region32: #{tpu_custom_call.1} parent=11 // pred_fallthru
          _
        // Predicated region
        $region33: #{tpu_custom_call.1} parent=11 // pred_check
          %p382 = pneg %p192
        $region34: #{tpu_custom_call.1} parent=11 // pred_check_branch
          %384 = sbr.rel (%p382) target = $region36
        $region35: #{tpu_custom_call.1} parent=11 // pred_region
          %s386 = ssub.s32 16, 16
          %387 = vsyncadd [#allocation9], %s386
          %s389 = sshll.u32 [#allocation10], 4
          %s390 = int_to_ptr.vmem [resolvable:$true] %s389
          %392 = dma.hbm_to_vmem [thread:$0]  %s6, 16, %s390, [#allocation9]
        $region36: #{tpu_custom_call.1} parent=11 // pred_fallthru
          _
        // Predicated region
        $region37: #{tpu_custom_call.1} parent=11 // pred_check
          %p393 = pneg %p213
        $region38: #{tpu_custom_call.1} parent=11 // pred_check_branch
          %395 = sbr.rel (%p393) target = $region40
        $region39: #{tpu_custom_call.1} parent=11 // pred_region
          %s397 = ssub.s32 1024, 1024
          %398 = vsyncadd [#allocation12], %s397
          %s399 = sshll.u32 [#allocation11], 4
          %s400 = int_to_ptr.vmem [resolvable:$true] %s399
          %405 = dma.hbm_to_vmem [thread:$0]  %s7, 1024, %s400, [#allocation12], 64, 64, 4
        $region40: #{tpu_custom_call.1} parent=11 // pred_fallthru
          _
        // Predicated region
        $region41: #{tpu_custom_call.1} parent=11 // pred_check
          %p406 = pneg %p234
        $region42: #{tpu_custom_call.1} parent=11 // pred_check_branch
          %408 = sbr.rel (%p406) target = $region44
        $region43: #{tpu_custom_call.1} parent=11 // pred_region
          %s410 = ssub.s32 16, 16
          %411 = vsyncadd [#allocation12], %s410
          %s413 = sshll.u32 [#allocation13], 4
          %s414 = int_to_ptr.vmem [resolvable:$true] %s413
          %416 = dma.hbm_to_vmem [thread:$0]  %s8, 16, %s414, [#allocation12]
        $region44: #{tpu_custom_call.1} parent=11 // pred_fallthru
          _
        // Predicated region
        $region45: #{tpu_custom_call.1} parent=11 // pred_check
          %p417 = pneg %p255
        $region46: #{tpu_custom_call.1} parent=11 // pred_check_branch
          %419 = sbr.rel (%p417) target = $region48
        $region47: #{tpu_custom_call.1} parent=11 // pred_region
          _
        $region48: #{tpu_custom_call.1} parent=11 // pred_fallthru
          _
        // Predicated region
        $region49: #{tpu_custom_call.1} parent=11 // pred_check
          %p420 = pneg %p276
        $region50: #{tpu_custom_call.1} parent=11 // pred_check_branch
          %422 = sbr.rel (%p420) target = $region52
        $region51: #{tpu_custom_call.1} parent=11 // pred_region
          _
        $region52: #{tpu_custom_call.1} parent=11 // pred_fallthru
          _
        // Predicated region
        $region53: #{tpu_custom_call.1} parent=11 // pred_check
          %p423 = pneg %p297
        $region54: #{tpu_custom_call.1} parent=11 // pred_check_branch
          %425 = sbr.rel (%p423) target = $region56
        $region55: #{tpu_custom_call.1} parent=11 // pred_region
          _
        $region56: #{tpu_custom_call.1} parent=11 // pred_fallthru
          _
        // Predicated region
        $region57: #{tpu_custom_call.1} parent=11 // pred_check
          %p426 = pneg %p318
        $region58: #{tpu_custom_call.1} parent=11 // pred_check_branch
          %428 = sbr.rel (%p426) target = $region60
        $region59: #{tpu_custom_call.1} parent=11 // pred_region
          %s430 = ssub.s32 512, 512
          %431 = vsyncadd [#allocation15], %s430
          %s432 = sshll.u32 [#allocation14], 4
          %s433 = int_to_ptr.vmem [resolvable:$true] %s432
          %438 = dma.hbm_to_vmem [thread:$0]  %s12, 512, %s433, [#allocation15], 128, 128, 8
        $region60: #{tpu_custom_call.1} parent=11 // pred_fallthru
          _
      $region12: #{tpu_custom_call.1} parent=5 // pred_fallthru
        _
      %p439 = scmp.lt.s32.totalorder %s28, 8
      // Predicated region
      $region61: #{tpu_custom_call.1} parent=5 // pred_check
        %p440 = pneg %p439
      $region62: #{tpu_custom_call.1} parent=5 // pred_check_branch
        %442 = sbr.rel (%p440) target = $region64
      $region63: #{tpu_custom_call.1} parent=5 // pred_region
        // Predicated region
        $region65: #{tpu_custom_call.1} parent=63 // pred_check
          %p443 = pneg %p60
        $region66: #{tpu_custom_call.1} parent=63 // pred_check_branch
          %445 = sbr.rel (%p443) target = $region68
        $region67: #{tpu_custom_call.1} parent=63 // pred_region
          %s446 = sand.u32 %s50, 1
          %s447 = scalar_lea.sflag [#allocation6], %s446
          %s448 = sand.u32 %s50, 1
          %s449 = smul.addr %s448, 256
          %s450 = scalar_lea.vmem [#allocation5], %s449
          %s452 = ssub.s32 4096, 4096
          %453 = vsyncadd %s447, %s452
          %s454 = smul.addr %s35, 32
          %s455 = smul.addr %s454, 128
          %s456 = scalar_lea.hbm %s0, %s455
          %s457 = sshll.u32 %s450, 4
          %s458 = int_to_ptr.vmem [resolvable:$true] %s457
          %463 = dma.hbm_to_vmem [thread:$0]  %s456, 4096, %s458, %s447, 128, 128, 8
        $region68: #{tpu_custom_call.1} parent=63 // pred_fallthru
          _
      $region64: #{tpu_custom_call.1} parent=5 // pred_fallthru
        _
      %p464 = scmp.le.s32.totalorder 1, %s28
      %p465 = scmp.lt.s32.totalorder %s28, 9
      %p466 = pnand %p464, %p465
      %p467 = pneg %p466
      // Predicated region
      $region69: #{tpu_custom_call.1} parent=5 // pred_check
        _
      $region70: #{tpu_custom_call.1} parent=5 // pred_check_branch
        %469 = sbr.rel (%p466) target = $region72
      $region71: #{tpu_custom_call.1} parent=5 // pred_region
        %s470 = ssub.s32 %s28, 1
        %s471 = sand.u32 %s53, 1
        %s472 = scalar_lea.sflag [#allocation6], %s471
        %s473 = sand.u32 %s53, 1
        %s474 = smul.addr %s473, 256
        %s475 = scalar_lea.vmem [#allocation5], %s474
        // Predicated region
        $region73: #{tpu_custom_call.1} parent=71 // pred_check
          %p476 = pneg %p66
        $region74: #{tpu_custom_call.1} parent=71 // pred_check_branch
          %478 = sbr.rel (%p476) target = $region76
        $region75: #{tpu_custom_call.1} parent=71 // pred_region
          %479 = dma.done %s472, 4096
        $region76: #{tpu_custom_call.1} parent=71 // pred_fallthru
          _
        // Predicated region
        $region77: #{tpu_custom_call.1} parent=71 // pred_check
          %p480 = pneg %p150
        $region78: #{tpu_custom_call.1} parent=71 // pred_check_branch
          %482 = sbr.rel (%p480) target = $region80
        $region79: #{tpu_custom_call.1} parent=71 // pred_region
          %483 = dma.done [#allocation9], 16
        $region80: #{tpu_custom_call.1} parent=71 // pred_fallthru
          _
        // Predicated region
        $region81: #{tpu_custom_call.1} parent=71 // pred_check
          %p484 = pneg %p192
        $region82: #{tpu_custom_call.1} parent=71 // pred_check_branch
          %486 = sbr.rel (%p484) target = $region84
        $region83: #{tpu_custom_call.1} parent=71 // pred_region
          %487 = dma.done [#allocation9], 16
        $region84: #{tpu_custom_call.1} parent=71 // pred_fallthru
          _
        // Predicated region
        $region85: #{tpu_custom_call.1} parent=71 // pred_check
          %p488 = pneg %p213
        $region86: #{tpu_custom_call.1} parent=71 // pred_check_branch
          %490 = sbr.rel (%p488) target = $region88
        $region87: #{tpu_custom_call.1} parent=71 // pred_region
          %491 = dma.done [#allocation12], 1024
        $region88: #{tpu_custom_call.1} parent=71 // pred_fallthru
          _
        // Predicated region
        $region89: #{tpu_custom_call.1} parent=71 // pred_check
          %p492 = pneg %p234
        $region90: #{tpu_custom_call.1} parent=71 // pred_check_branch
          %494 = sbr.rel (%p492) target = $region92
        $region91: #{tpu_custom_call.1} parent=71 // pred_region
          %495 = dma.done [#allocation12], 16
        $region92: #{tpu_custom_call.1} parent=71 // pred_fallthru
          _
        // Predicated region
        $region93: #{tpu_custom_call.1} parent=71 // pred_check
          %p496 = pneg %p318
        $region94: #{tpu_custom_call.1} parent=71 // pred_check_branch
          %498 = sbr.rel (%p496) target = $region96
        $region95: #{tpu_custom_call.1} parent=71 // pred_region
          %499 = dma.done [#allocation15], 512
        $region96: #{tpu_custom_call.1} parent=71 // pred_fallthru
          _
        %s500 = sand.u32 %s53, 1
        %s501 = scalar_lea.sflag [#allocation6], %s500
        %s502 = sand.u32 %s53, 1
        %s503 = smul.addr %s502, 256
        %s504 = scalar_lea.vmem [#allocation5], %s503
        %p505 = pneg %p66
        %p506 = pneg %p63
        %p507 = pneg %p87
        %p508 = pneg %p84
        %p509 = pneg %p108
        %p510 = pneg %p105
        %p511 = pneg %p129
        %p512 = pneg %p126
        %p513 = pneg %p150
        %p514 = pneg %p147
        %p515 = pneg %p171
        %p516 = pneg %p168
        %p517 = pneg %p192
        %p518 = pneg %p189
        %p519 = pneg %p213
        %p520 = pneg %p210
        %p521 = pneg %p234
        %p522 = pneg %p231
        %p523 = pneg %p255
        %p524 = pneg %p252
        %p525 = pneg %p276
        %p526 = pneg %p273
        %p527 = pneg %p297
        %p528 = pneg %p294
        %p529 = pneg %p318
        %p530 = pneg %p315
        %p531 = pneg %p344
        %p532 = pneg %p341
        %s533 = sand.u32 %s331, 1
        %s534 = scalar_lea.sflag [#allocation7], %s533
        %s535 = sand.u32 %s331, 1
        %s536 = smul.addr %s535, 256
        %s537 = scalar_lea.vmem [#allocation16], %s536
        %p539 = scmp.eq.s32.totalorder %s38, 0
        // Predicated region
        $region97: #{tpu_custom_call.1} parent=71 // pred_check
          %p540 = pneg %p539
        $region98: #{tpu_custom_call.1} parent=71 // pred_check_branch
          %542 = sbr.rel (%p540) target = $region100
        $region99: #{tpu_custom_call.1} parent=71 // pred_region
          %v543 = vld [vmem:[%s475] sm:$0xff]
          %v544 = vld [vmem:[%s475 + $0x8] sm:$0xff]
          %v545 = vld [vmem:[%s475 + $0x10] sm:$0xff]
          %v546 = vld [vmem:[%s475 + $0x18] sm:$0xff]
          %v547 = vld [vmem:[%s475 + $0x20] sm:$0xff]
          %v548 = vld [vmem:[%s475 + $0x28] sm:$0xff]
          %v549 = vld [vmem:[%s475 + $0x30] sm:$0xff]
          %v550 = vld [vmem:[%s475 + $0x38] sm:$0xff]
          %v551 = vld [vmem:[%s475 + $0x40] sm:$0xff]
          %v552 = vld [vmem:[%s475 + $0x48] sm:$0xff]
          %v553 = vld [vmem:[%s475 + $0x50] sm:$0xff]
          %v554 = vld [vmem:[%s475 + $0x58] sm:$0xff]
          %v555 = vld [vmem:[%s475 + $0x60] sm:$0xff]
          %v556 = vld [vmem:[%s475 + $0x68] sm:$0xff]
          %v557 = vld [vmem:[%s475 + $0x70] sm:$0xff]
          %v558 = vld [vmem:[%s475 + $0x78] sm:$0xff]
          %v559 = vld [vmem:[%s475 + $0x80] sm:$0xff]
          %v560 = vld [vmem:[%s475 + $0x88] sm:$0xff]
          %v561 = vld [vmem:[%s475 + $0x90] sm:$0xff]
          %v562 = vld [vmem:[%s475 + $0x98] sm:$0xff]
          %v563 = vld [vmem:[%s475 + $0xa0] sm:$0xff]
          %v564 = vld [vmem:[%s475 + $0xa8] sm:$0xff]
          %v565 = vld [vmem:[%s475 + $0xb0] sm:$0xff]
          %v566 = vld [vmem:[%s475 + $0xb8] sm:$0xff]
          %v567 = vld [vmem:[%s475 + $0xc0] sm:$0xff]
          %v568 = vld [vmem:[%s475 + $0xc8] sm:$0xff]
          %v569 = vld [vmem:[%s475 + $0xd0] sm:$0xff]
          %v570 = vld [vmem:[%s475 + $0xd8] sm:$0xff]
          %v571 = vld [vmem:[%s475 + $0xe0] sm:$0xff]
          %v572 = vld [vmem:[%s475 + $0xe8] sm:$0xff]
          %v573 = vld [vmem:[%s475 + $0xf0] sm:$0xff]
          %v574 = vld [vmem:[%s475 + $0xf8] sm:$0xff]
          %v575 = vadd.f32 %v543, %v544
          %v576 = vadd.f32 %v575, %v545
          %v577 = vadd.f32 %v576, %v546
          %v578 = vadd.f32 %v577, %v547
          %v579 = vadd.f32 %v578, %v548
          %v580 = vadd.f32 %v579, %v549
          %v581 = vadd.f32 %v580, %v550
          %v582 = vadd.f32 %v581, %v551
          %v583 = vadd.f32 %v582, %v552
          %v584 = vadd.f32 %v583, %v553
          %v585 = vadd.f32 %v584, %v554
          %v586 = vadd.f32 %v585, %v555
          %v587 = vadd.f32 %v586, %v556
          %v588 = vadd.f32 %v587, %v557
          %v589 = vadd.f32 %v588, %v558
          %v590 = vadd.f32 %v589, %v559
          %v591 = vadd.f32 %v590, %v560
          %v592 = vadd.f32 %v591, %v561
          %v593 = vadd.f32 %v592, %v562
          %v594 = vadd.f32 %v593, %v563
          %v595 = vadd.f32 %v594, %v564
          %v596 = vadd.f32 %v595, %v565
          %v597 = vadd.f32 %v596, %v566
          %v598 = vadd.f32 %v597, %v567
          %v599 = vadd.f32 %v598, %v568
          %v600 = vadd.f32 %v599, %v569
          %v601 = vadd.f32 %v600, %v570
          %v602 = vadd.f32 %v601, %v571
          %v603 = vadd.f32 %v602, %v572
          %v604 = vadd.f32 %v603, %v573
          %v605 = vadd.f32 %v604, %v574
          %v606 = vrot.slane %v605, 4
          %v607 = vadd.f32 %v605, %v606
          %v608 = vrot.slane %v607, 2
          %v609 = vadd.f32 %v607, %v608
          %v610 = vrot.slane %v609, 1
          %v611 = vadd.f32 %v609, %v610
          %v612 = vld [vmem:[%s11] sm:$0xff]
          %v613 = vld [vmem:[%s11 + $0x8] sm:$0xff]
          %v614 = vld [vmem:[%s11 + $0x10] sm:$0xff]
          %v615 = vld [vmem:[%s11 + $0x18] sm:$0xff]
          %v616 = vld [vmem:[%s11 + $0x20] sm:$0xff]
          %v617 = vld [vmem:[%s11 + $0x28] sm:$0xff]
          %v618 = vld [vmem:[%s11 + $0x30] sm:$0xff]
          %v619 = vld [vmem:[%s11 + $0x38] sm:$0xff]
          %v620 = vld [vmem:[%s11 + $0x40] sm:$0xff]
          %v621 = vld [vmem:[%s11 + $0x48] sm:$0xff]
          %v622 = vld [vmem:[%s11 + $0x50] sm:$0xff]
          %v623 = vld [vmem:[%s11 + $0x58] sm:$0xff]
          %v624 = vld [vmem:[%s11 + $0x60] sm:$0xff]
          %v625 = vld [vmem:[%s11 + $0x68] sm:$0xff]
          %v626 = vld [vmem:[%s11 + $0x70] sm:$0xff]
          %v627 = vld [vmem:[%s11 + $0x78] sm:$0xff]
          %628 = vmatprep.subr.mxu0 0.0
          %629 = vmatpush1.msra.mxu0 %v612
          %630 = vmatprep.subr.mxu0 0.0
          %631 = vmatpush1.msra.mxu0 %v613
          %632 = vmatprep.subr.mxu0 0.0
          %633 = vmatpush1.msra.mxu0 %v614
          %634 = vmatprep.subr.mxu0 0.0
          %635 = vmatpush1.msra.mxu0 %v615
          %636 = vmatprep.subr.mxu0 0.0
          %637 = vmatpush1.msra.mxu0 %v616
          %638 = vmatprep.subr.mxu0 0.0
          %639 = vmatpush1.msra.mxu0 %v617
          %640 = vmatprep.subr.mxu0 0.0
          %641 = vmatpush1.msra.mxu0 %v618
          %642 = vmatprep.subr.mxu0 0.0
          %643 = vmatpush1.msra.mxu0 %v619
          %644 = vmatprep.subr.mxu0 0.0
          %645 = vmatpush1.msra.mxu0 %v620
          %646 = vmatprep.subr.mxu0 0.0
          %647 = vmatpush1.msra.mxu0 %v621
          %648 = vmatprep.subr.mxu0 0.0
          %649 = vmatpush1.msra.mxu0 %v622
          %650 = vmatprep.subr.mxu0 0.0
          %651 = vmatpush1.msra.mxu0 %v623
          %652 = vmatprep.subr.mxu0 0.0
          %653 = vmatpush1.msra.mxu0 %v624
          %654 = vmatprep.subr.mxu0 0.0
          %655 = vmatpush1.msra.mxu0 %v625
          %656 = vmatprep.subr.mxu0 0.0
          %657 = vmatpush1.msra.mxu0 %v626
          %658 = vmatprep.subr.mxu0 0.0
          %659 = vmatpush1.msra.mxu0 %v627
          %660 = vmatprep.subr.mxu0 0.0
          %661 = vmatpush1.msra.mxu0 0.0
          %662 = vmatprep.subr.mxu0 0.0
          %663 = vmatpush1.msra.mxu0 0.0
          %664 = vmatprep.subr.mxu0 0.0
          %665 = vmatpush1.msra.mxu0 0.0
          %666 = vmatprep.subr.mxu0 0.0
          %667 = vmatpush1.msra.mxu0 0.0
          %668 = vmatprep.subr.mxu0 0.0
          %669 = vmatpush1.msra.mxu0 0.0
          %670 = vmatprep.subr.mxu0 0.0
          %671 = vmatpush1.msra.mxu0 0.0
          %672 = vmatprep.subr.mxu0 0.0
          %673 = vmatpush1.msra.mxu0 0.0
          %674 = vmatprep.subr.mxu0 0.0
          %675 = vmatpush1.msra.mxu0 0.0
          %676 = vmatprep.subr.mxu0 0.0
          %677 = vmatpush1.msra.mxu0 0.0
          %678 = vmatprep.subr.mxu0 0.0
          %679 = vmatpush1.msra.mxu0 0.0
          %680 = vmatprep.subr.mxu0 0.0
          %681 = vmatpush1.msra.mxu0 0.0
          %682 = vmatprep.subr.mxu0 0.0
          %683 = vmatpush1.msra.mxu0 0.0
          %684 = vmatprep.subr.mxu0 0.0
          %685 = vmatpush1.msra.mxu0 0.0
          %686 = vmatprep.subr.mxu0 0.0
          %687 = vmatpush1.msra.mxu0 0.0
          %688 = vmatprep.subr.mxu0 0.0
          %689 = vmatpush1.msra.mxu0 0.0
          %690 = vmatprep.subr.mxu0 0.0
          %691 = vmatpush1.msra.mxu0 0.0
          %692 = vmatprep.mubr.f32.mxu0 0.0
          %693 = vmatmul.mubr.f32.gmra.mrb[0].mxu0 %v611
          %v694 = vpop.f32.mrb[0].mxu0
          %v695 = vadd.f32 0.0, %v694
          %v696 = vpop.f32.mrb[0].mxu0
          %697 = vdwg.mxu0
          %v698 = vmul.f32 %v695, 0.0009765625
          %v699 = vld [vmem:[#allocation14] sm:$0xff]
          %v700 = vld [vmem:[#allocation14 + $0x8] sm:$0xff]
          %v701 = vld [vmem:[#allocation14 + $0x10] sm:$0xff]
          %v702 = vld [vmem:[#allocation14 + $0x18] sm:$0xff]
          %vm703 = vcmask 261120
          %v705 = vsel %vm703, %v698, 0
          %707 = vmatprep.subr.mxu0 0.0
          %708 = vmatpush1.msra.mxu0 %v699
          %709 = vmatprep.subr.mxu0 0.0
          %710 = vmatpush1.msra.mxu0 %v700
          %711 = vmatprep.subr.mxu0 0.0
          %712 = vmatpush1.msra.mxu0 %v701
          %713 = vmatprep.subr.mxu0 0.0
          %714 = vmatpush1.msra.mxu0 %v702
          %715 = vmatprep.subr.mxu0 0.0
          %716 = vmatpush1.msra.mxu0 0.0
          %717 = vmatprep.subr.mxu0 0.0
          %718 = vmatpush1.msra.mxu0 0.0
          %719 = vmatprep.subr.mxu0 0.0
          %720 = vmatpush1.msra.mxu0 0.0
          %721 = vmatprep.subr.mxu0 0.0
          %722 = vmatpush1.msra.mxu0 0.0
          %723 = vmatprep.subr.mxu0 0.0
          %724 = vmatpush1.msra.mxu0 0.0
          %725 = vmatprep.subr.mxu0 0.0
          %726 = vmatpush1.msra.mxu0 0.0
          %727 = vmatprep.subr.mxu0 0.0
          %728 = vmatpush1.msra.mxu0 0.0
          %729 = vmatprep.subr.mxu0 0.0
          %730 = vmatpush1.msra.mxu0 0.0
          %731 = vmatprep.subr.mxu0 0.0
          %732 = vmatpush1.msra.mxu0 0.0
          %733 = vmatprep.subr.mxu0 0.0
          %734 = vmatpush1.msra.mxu0 0.0
          %735 = vmatprep.subr.mxu0 0.0
          %736 = vmatpush1.msra.mxu0 0.0
          %737 = vmatprep.subr.mxu0 0.0
          %738 = vmatpush1.msra.mxu0 0.0
          %739 = vmatprep.subr.mxu0 0.0
          %740 = vmatpush1.msra.mxu0 0.0
          %741 = vmatprep.subr.mxu0 0.0
          %742 = vmatpush1.msra.mxu0 0.0
          %743 = vmatprep.subr.mxu0 0.0
          %744 = vmatpush1.msra.mxu0 0.0
          %745 = vmatprep.subr.mxu0 0.0
          %746 = vmatpush1.msra.mxu0 0.0
          %747 = vmatprep.subr.mxu0 0.0
          %748 = vmatpush1.msra.mxu0 0.0
          %749 = vmatprep.subr.mxu0 0.0
          %750 = vmatpush1.msra.mxu0 0.0
          %751 = vmatprep.subr.mxu0 0.0
          %752 = vmatpush1.msra.mxu0 0.0
          %753 = vmatprep.subr.mxu0 0.0
          %754 = vmatpush1.msra.mxu0 0.0
          %755 = vmatprep.subr.mxu0 0.0
          %756 = vmatpush1.msra.mxu0 0.0
          %757 = vmatprep.subr.mxu0 0.0
          %758 = vmatpush1.msra.mxu0 0.0
          %759 = vmatprep.subr.mxu0 0.0
          %760 = vmatpush1.msra.mxu0 0.0
          %761 = vmatprep.subr.mxu0 0.0
          %762 = vmatpush1.msra.mxu0 0.0
          %763 = vmatprep.subr.mxu0 0.0
          %764 = vmatpush1.msra.mxu0 0.0
          %765 = vmatprep.subr.mxu0 0.0
          %766 = vmatpush1.msra.mxu0 0.0
          %767 = vmatprep.subr.mxu0 0.0
          %768 = vmatpush1.msra.mxu0 0.0
          %769 = vmatprep.subr.mxu0 0.0
          %770 = vmatpush1.msra.mxu0 0.0
          %771 = vmatprep.mubr.f32.mxu0 0.0
          %772 = vmatmul.mubr.f32.gmra.mrb[0].mxu0 %v705
          %v773 = vpop.f32.mrb[0].mxu0
          %v774 = vadd.f32 0.0, %v773
          %v775 = vpop.f32.mrb[0].mxu0
          %776 = vdwg.mxu0
          %v777 = vlaneseq
          %v778 = vshrl.u32 %v777, 7
          %v779 = vsub.s32 0, %v778
          %v780 = vrot.slane %v774, %v779
          %v781 = vsub.f32 %v543, %v780
          %v782 = vsub.f32 %v544, %v780
          %v783 = vsub.f32 %v545, %v780
          %v784 = vsub.f32 %v546, %v780
          %v785 = vsub.f32 %v547, %v780
          %v786 = vsub.f32 %v548, %v780
          %v787 = vsub.f32 %v549, %v780
          %v788 = vsub.f32 %v550, %v780
          %v789 = vsub.f32 %v551, %v780
          %v790 = vsub.f32 %v552, %v780
          %v791 = vsub.f32 %v553, %v780
          %v792 = vsub.f32 %v554, %v780
          %v793 = vsub.f32 %v555, %v780
          %v794 = vsub.f32 %v556, %v780
          %v795 = vsub.f32 %v557, %v780
          %v796 = vsub.f32 %v558, %v780
          %v797 = vsub.f32 %v559, %v780
          %v798 = vsub.f32 %v560, %v780
          %v799 = vsub.f32 %v561, %v780
          %v800 = vsub.f32 %v562, %v780
          %v801 = vsub.f32 %v563, %v780
          %v802 = vsub.f32 %v564, %v780
          %v803 = vsub.f32 %v565, %v780
          %v804 = vsub.f32 %v566, %v780
          %v805 = vsub.f32 %v567, %v780
          %v806 = vsub.f32 %v568, %v780
          %v807 = vsub.f32 %v569, %v780
          %v808 = vsub.f32 %v570, %v780
          %v809 = vsub.f32 %v571, %v780
          %v810 = vsub.f32 %v572, %v780
          %v811 = vsub.f32 %v573, %v780
          %v812 = vsub.f32 %v574, %v780
          %v813 = vmul.f32 %v781, %v781
          %v814 = vmul.f32 %v782, %v782
          %v815 = vmul.f32 %v783, %v783
          %v816 = vmul.f32 %v784, %v784
          %v817 = vmul.f32 %v785, %v785
          %v818 = vmul.f32 %v786, %v786
          %v819 = vmul.f32 %v787, %v787
          %v820 = vmul.f32 %v788, %v788
          %v821 = vmul.f32 %v789, %v789
          %v822 = vmul.f32 %v790, %v790
          %v823 = vmul.f32 %v791, %v791
          %v824 = vmul.f32 %v792, %v792
          %v825 = vmul.f32 %v793, %v793
          %v826 = vmul.f32 %v794, %v794
          %v827 = vmul.f32 %v795, %v795
          %v828 = vmul.f32 %v796, %v796
          %v829 = vmul.f32 %v797, %v797
          %v830 = vmul.f32 %v798, %v798
          %v831 = vmul.f32 %v799, %v799
          %v832 = vmul.f32 %v800, %v800
          %v833 = vmul.f32 %v801, %v801
          %v834 = vmul.f32 %v802, %v802
          %v835 = vmul.f32 %v803, %v803
          %v836 = vmul.f32 %v804, %v804
          %v837 = vmul.f32 %v805, %v805
          %v838 = vmul.f32 %v806, %v806
          %v839 = vmul.f32 %v807, %v807
          %v840 = vmul.f32 %v808, %v808
          %v841 = vmul.f32 %v809, %v809
          %v842 = vmul.f32 %v810, %v810
          %v843 = vmul.f32 %v811, %v811
          %v844 = vmul.f32 %v812, %v812
          %v845 = vadd.f32 %v813, %v814
          %v846 = vadd.f32 %v845, %v815
          %v847 = vadd.f32 %v846, %v816
          %v848 = vadd.f32 %v847, %v817
          %v849 = vadd.f32 %v848, %v818
          %v850 = vadd.f32 %v849, %v819
          %v851 = vadd.f32 %v850, %v820
          %v852 = vadd.f32 %v851, %v821
          %v853 = vadd.f32 %v852, %v822
          %v854 = vadd.f32 %v853, %v823
          %v855 = vadd.f32 %v854, %v824
          %v856 = vadd.f32 %v855, %v825
          %v857 = vadd.f32 %v856, %v826
          %v858 = vadd.f32 %v857, %v827
          %v859 = vadd.f32 %v858, %v828
          %v860 = vadd.f32 %v859, %v829
          %v861 = vadd.f32 %v860, %v830
          %v862 = vadd.f32 %v861, %v831
          %v863 = vadd.f32 %v862, %v832
          %v864 = vadd.f32 %v863, %v833
          %v865 = vadd.f32 %v864, %v834
          %v866 = vadd.f32 %v865, %v835
          %v867 = vadd.f32 %v866, %v836
          %v868 = vadd.f32 %v867, %v837
          %v869 = vadd.f32 %v868, %v838
          %v870 = vadd.f32 %v869, %v839
          %v871 = vadd.f32 %v870, %v840
          %v872 = vadd.f32 %v871, %v841
          %v873 = vadd.f32 %v872, %v842
          %v874 = vadd.f32 %v873, %v843
          %v875 = vadd.f32 %v874, %v844
          %v876 = vrot.slane %v875, 4
          %v877 = vadd.f32 %v875, %v876
          %v878 = vrot.slane %v877, 2
          %v879 = vadd.f32 %v877, %v878
          %v880 = vrot.slane %v879, 1
          %v881 = vadd.f32 %v879, %v880
          %882 = vmatprep.subr.mxu0 0.0
          %883 = vmatpush1.msra.mxu0 %v612
          %884 = vmatprep.subr.mxu0 0.0
          %885 = vmatpush1.msra.mxu0 %v613
          %886 = vmatprep.subr.mxu0 0.0
          %887 = vmatpush1.msra.mxu0 %v614
          %888 = vmatprep.subr.mxu0 0.0
          %889 = vmatpush1.msra.mxu0 %v615
          %890 = vmatprep.subr.mxu0 0.0
          %891 = vmatpush1.msra.mxu0 %v616
          %892 = vmatprep.subr.mxu0 0.0
          %893 = vmatpush1.msra.mxu0 %v617
          %894 = vmatprep.subr.mxu0 0.0
          %895 = vmatpush1.msra.mxu0 %v618
          %896 = vmatprep.subr.mxu0 0.0
          %897 = vmatpush1.msra.mxu0 %v619
          %898 = vmatprep.subr.mxu0 0.0
          %899 = vmatpush1.msra.mxu0 %v620
          %900 = vmatprep.subr.mxu0 0.0
          %901 = vmatpush1.msra.mxu0 %v621
          %902 = vmatprep.subr.mxu0 0.0
          %903 = vmatpush1.msra.mxu0 %v622
          %904 = vmatprep.subr.mxu0 0.0
          %905 = vmatpush1.msra.mxu0 %v623
          %906 = vmatprep.subr.mxu0 0.0
          %907 = vmatpush1.msra.mxu0 %v624
          %908 = vmatprep.subr.mxu0 0.0
          %909 = vmatpush1.msra.mxu0 %v625
          %910 = vmatprep.subr.mxu0 0.0
          %911 = vmatpush1.msra.mxu0 %v626
          %912 = vmatprep.subr.mxu0 0.0
          %913 = vmatpush1.msra.mxu0 %v627
          %914 = vmatprep.subr.mxu0 0.0
          %915 = vmatpush1.msra.mxu0 0.0
          %916 = vmatprep.subr.mxu0 0.0
          %917 = vmatpush1.msra.mxu0 0.0
          %918 = vmatprep.subr.mxu0 0.0
          %919 = vmatpush1.msra.mxu0 0.0
          %920 = vmatprep.subr.mxu0 0.0
          %921 = vmatpush1.msra.mxu0 0.0
          %922 = vmatprep.subr.mxu0 0.0
          %923 = vmatpush1.msra.mxu0 0.0
          %924 = vmatprep.subr.mxu0 0.0
          %925 = vmatpush1.msra.mxu0 0.0
          %926 = vmatprep.subr.mxu0 0.0
          %927 = vmatpush1.msra.mxu0 0.0
          %928 = vmatprep.subr.mxu0 0.0
          %929 = vmatpush1.msra.mxu0 0.0
          %930 = vmatprep.subr.mxu0 0.0
          %931 = vmatpush1.msra.mxu0 0.0
          %932 = vmatprep.subr.mxu0 0.0
          %933 = vmatpush1.msra.mxu0 0.0
          %934 = vmatprep.subr.mxu0 0.0
          %935 = vmatpush1.msra.mxu0 0.0
          %936 = vmatprep.subr.mxu0 0.0
          %937 = vmatpush1.msra.mxu0 0.0
          %938 = vmatprep.subr.mxu0 0.0
          %939 = vmatpush1.msra.mxu0 0.0
          %940 = vmatprep.subr.mxu0 0.0
          %941 = vmatpush1.msra.mxu0 0.0
          %942 = vmatprep.subr.mxu0 0.0
          %943 = vmatpush1.msra.mxu0 0.0
          %944 = vmatprep.subr.mxu0 0.0
          %945 = vmatpush1.msra.mxu0 0.0
          %946 = vmatprep.mubr.f32.mxu0 0.0
          %947 = vmatmul.mubr.f32.gmra.mrb[0].mxu0 %v881
          %v948 = vpop.f32.mrb[0].mxu0
          %v949 = vadd.f32 0.0, %v948
          %v950 = vpop.f32.mrb[0].mxu0
          %951 = vdwg.mxu0
          %v952 = vmul.f32 %v949, 0.0009765625
          %v953 = vadd.f32 %v952, 1e-06
          %v954 = vrsqrt.pop %v953
          %v956 = vsel %vm703, %v954, 0
          %958 = vmatprep.subr.mxu0 0.0
          %959 = vmatpush1.msra.mxu0 %v699
          %960 = vmatprep.subr.mxu0 0.0
          %961 = vmatpush1.msra.mxu0 %v700
          %962 = vmatprep.subr.mxu0 0.0
          %963 = vmatpush1.msra.mxu0 %v701
          %964 = vmatprep.subr.mxu0 0.0
          %965 = vmatpush1.msra.mxu0 %v702
          %966 = vmatprep.subr.mxu0 0.0
          %967 = vmatpush1.msra.mxu0 0.0
          %968 = vmatprep.subr.mxu0 0.0
          %969 = vmatpush1.msra.mxu0 0.0
          %970 = vmatprep.subr.mxu0 0.0
          %971 = vmatpush1.msra.mxu0 0.0
          %972 = vmatprep.subr.mxu0 0.0
          %973 = vmatpush1.msra.mxu0 0.0
          %974 = vmatprep.subr.mxu0 0.0
          %975 = vmatpush1.msra.mxu0 0.0
          %976 = vmatprep.subr.mxu0 0.0
          %977 = vmatpush1.msra.mxu0 0.0
          %978 = vmatprep.subr.mxu0 0.0
          %979 = vmatpush1.msra.mxu0 0.0
          %980 = vmatprep.subr.mxu0 0.0
          %981 = vmatpush1.msra.mxu0 0.0
          %982 = vmatprep.subr.mxu0 0.0
          %983 = vmatpush1.msra.mxu0 0.0
          %984 = vmatprep.subr.mxu0 0.0
          %985 = vmatpush1.msra.mxu0 0.0
          %986 = vmatprep.subr.mxu0 0.0
          %987 = vmatpush1.msra.mxu0 0.0
          %988 = vmatprep.subr.mxu0 0.0
          %989 = vmatpush1.msra.mxu0 0.0
          %990 = vmatprep.subr.mxu0 0.0
          %991 = vmatpush1.msra.mxu0 0.0
          %992 = vmatprep.subr.mxu0 0.0
          %993 = vmatpush1.msra.mxu0 0.0
          %994 = vmatprep.subr.mxu0 0.0
          %995 = vmatpush1.msra.mxu0 0.0
          %996 = vmatprep.subr.mxu0 0.0
          %997 = vmatpush1.msra.mxu0 0.0
          %998 = vmatprep.subr.mxu0 0.0
          %999 = vmatpush1.msra.mxu0 0.0
          %1000 = vmatprep.subr.mxu0 0.0
          %1001 = vmatpush1.msra.mxu0 0.0
          %1002 = vmatprep.subr.mxu0 0.0
          %1003 = vmatpush1.msra.mxu0 0.0
          %1004 = vmatprep.subr.mxu0 0.0
          %1005 = vmatpush1.msra.mxu0 0.0
          %1006 = vmatprep.subr.mxu0 0.0
          %1007 = vmatpush1.msra.mxu0 0.0
          %1008 = vmatprep.subr.mxu0 0.0
          %1009 = vmatpush1.msra.mxu0 0.0
          %1010 = vmatprep.subr.mxu0 0.0
          %1011 = vmatpush1.msra.mxu0 0.0
          %1012 = vmatprep.subr.mxu0 0.0
          %1013 = vmatpush1.msra.mxu0 0.0
          %1014 = vmatprep.subr.mxu0 0.0
          %1015 = vmatpush1.msra.mxu0 0.0
          %1016 = vmatprep.subr.mxu0 0.0
          %1017 = vmatpush1.msra.mxu0 0.0
          %1018 = vmatprep.subr.mxu0 0.0
          %1019 = vmatpush1.msra.mxu0 0.0
          %1020 = vmatprep.subr.mxu0 0.0
          %1021 = vmatpush1.msra.mxu0 0.0
          %1022 = vmatprep.mubr.f32.mxu0 0.0
          %1023 = vmatmul.mubr.f32.gmra.mrb[0].mxu0 %v956
          %v1024 = vpop.f32.mrb[0].mxu0
          %v1025 = vadd.f32 0.0, %v1024
          %v1026 = vpop.f32.mrb[0].mxu0
          %1027 = vdwg.mxu0
          %v1028 = vlaneseq
          %v1029 = vshrl.u32 %v1028, 7
          %v1030 = vsub.s32 0, %v1029
          %v1031 = vrot.slane %v1025, %v1030
          %v1032 = vmul.f32 %v781, %v1031
          %v1033 = vmul.f32 %v782, %v1031
          %v1034 = vmul.f32 %v783, %v1031
          %v1035 = vmul.f32 %v784, %v1031
          %v1036 = vmul.f32 %v785, %v1031
          %v1037 = vmul.f32 %v786, %v1031
          %v1038 = vmul.f32 %v787, %v1031
          %v1039 = vmul.f32 %v788, %v1031
          %v1040 = vmul.f32 %v789, %v1031
          %v1041 = vmul.f32 %v790, %v1031
          %v1042 = vmul.f32 %v791, %v1031
          %v1043 = vmul.f32 %v792, %v1031
          %v1044 = vmul.f32 %v793, %v1031
          %v1045 = vmul.f32 %v794, %v1031
          %v1046 = vmul.f32 %v795, %v1031
          %v1047 = vmul.f32 %v796, %v1031
          %v1048 = vmul.f32 %v797, %v1031
          %v1049 = vmul.f32 %v798, %v1031
          %v1050 = vmul.f32 %v799, %v1031
          %v1051 = vmul.f32 %v800, %v1031
          %v1052 = vmul.f32 %v801, %v1031
          %v1053 = vmul.f32 %v802, %v1031
          %v1054 = vmul.f32 %v803, %v1031
          %v1055 = vmul.f32 %v804, %v1031
          %v1056 = vmul.f32 %v805, %v1031
          %v1057 = vmul.f32 %v806, %v1031
          %v1058 = vmul.f32 %v807, %v1031
          %v1059 = vmul.f32 %v808, %v1031
          %v1060 = vmul.f32 %v809, %v1031
          %v1061 = vmul.f32 %v810, %v1031
          %v1062 = vmul.f32 %v811, %v1031
          %v1063 = vmul.f32 %v812, %v1031
          %v1064 = vld [vmem:[%s1] sm:$0x1]
          %v1066 = vlaneseq
          %v1067 = vshrl.u32 %v1066, 7
          %v1068 = vsub.s32 0, %v1067
          %v1069 = vrot.slane %v1064, %v1068
          %v1071 = vmul.f32 %v1032, %v1069
          %v1072 = vmul.f32 %v1033, %v1069
          %v1073 = vmul.f32 %v1034, %v1069
          %v1074 = vmul.f32 %v1035, %v1069
          %v1075 = vmul.f32 %v1036, %v1069
          %v1076 = vmul.f32 %v1037, %v1069
          %v1077 = vmul.f32 %v1038, %v1069
          %v1078 = vmul.f32 %v1039, %v1069
          %v1079 = vmul.f32 %v1040, %v1069
          %v1080 = vmul.f32 %v1041, %v1069
          %v1081 = vmul.f32 %v1042, %v1069
          %v1082 = vmul.f32 %v1043, %v1069
          %v1083 = vmul.f32 %v1044, %v1069
          %v1084 = vmul.f32 %v1045, %v1069
          %v1085 = vmul.f32 %v1046, %v1069
          %v1086 = vmul.f32 %v1047, %v1069
          %v1087 = vmul.f32 %v1048, %v1069
          %v1088 = vmul.f32 %v1049, %v1069
          %v1089 = vmul.f32 %v1050, %v1069
          %v1090 = vmul.f32 %v1051, %v1069
          %v1091 = vmul.f32 %v1052, %v1069
          %v1092 = vmul.f32 %v1053, %v1069
          %v1093 = vmul.f32 %v1054, %v1069
          %v1094 = vmul.f32 %v1055, %v1069
          %v1095 = vmul.f32 %v1056, %v1069
          %v1096 = vmul.f32 %v1057, %v1069
          %v1097 = vmul.f32 %v1058, %v1069
          %v1098 = vmul.f32 %v1059, %v1069
          %v1099 = vmul.f32 %v1060, %v1069
          %v1100 = vmul.f32 %v1061, %v1069
          %v1101 = vmul.f32 %v1062, %v1069
          %v1102 = vmul.f32 %v1063, %v1069
          %v1103 = vld [vmem:[%s2] sm:$0x1]
          %v1105 = vlaneseq
          %v1106 = vshrl.u32 %v1105, 7
          %v1107 = vsub.s32 0, %v1106
          %v1108 = vrot.slane %v1103, %v1107
          %v1110 = vadd.f32 %v1071, %v1108
          %v1111 = vadd.f32 %v1072, %v1108
          %v1112 = vadd.f32 %v1073, %v1108
          %v1113 = vadd.f32 %v1074, %v1108
          %v1114 = vadd.f32 %v1075, %v1108
          %v1115 = vadd.f32 %v1076, %v1108
          %v1116 = vadd.f32 %v1077, %v1108
          %v1117 = vadd.f32 %v1078, %v1108
          %v1118 = vadd.f32 %v1079, %v1108
          %v1119 = vadd.f32 %v1080, %v1108
          %v1120 = vadd.f32 %v1081, %v1108
          %v1121 = vadd.f32 %v1082, %v1108
          %v1122 = vadd.f32 %v1083, %v1108
          %v1123 = vadd.f32 %v1084, %v1108
          %v1124 = vadd.f32 %v1085, %v1108
          %v1125 = vadd.f32 %v1086, %v1108
          %v1126 = vadd.f32 %v1087, %v1108
          %v1127 = vadd.f32 %v1088, %v1108
          %v1128 = vadd.f32 %v1089, %v1108
          %v1129 = vadd.f32 %v1090, %v1108
          %v1130 = vadd.f32 %v1091, %v1108
          %v1131 = vadd.f32 %v1092, %v1108
          %v1132 = vadd.f32 %v1093, %v1108
          %v1133 = vadd.f32 %v1094, %v1108
          %v1134 = vadd.f32 %v1095, %v1108
          %v1135 = vadd.f32 %v1096, %v1108
          %v1136 = vadd.f32 %v1097, %v1108
          %v1137 = vadd.f32 %v1098, %v1108
          %v1138 = vadd.f32 %v1099, %v1108
          %v1139 = vadd.f32 %v1100, %v1108
          %v1140 = vadd.f32 %v1101, %v1108
          %v1141 = vadd.f32 %v1102, %v1108
          %v1142 = vpack.c.bf16 %v1111, %v1110
          %v1143 = vpack.c.bf16 %v1113, %v1112
          %v1144 = vpack.c.bf16 %v1115, %v1114
          %v1145 = vpack.c.bf16 %v1117, %v1116
          %v1146 = vpack.c.bf16 %v1119, %v1118
          %v1147 = vpack.c.bf16 %v1121, %v1120
          %v1148 = vpack.c.bf16 %v1123, %v1122
          %v1149 = vpack.c.bf16 %v1125, %v1124
          %v1150 = vpack.c.bf16 %v1127, %v1126
          %v1151 = vpack.c.bf16 %v1129, %v1128
          %v1152 = vpack.c.bf16 %v1131, %v1130
          %v1153 = vpack.c.bf16 %v1133, %v1132
          %v1154 = vpack.c.bf16 %v1135, %v1134
          %v1155 = vpack.c.bf16 %v1137, %v1136
          %v1156 = vpack.c.bf16 %v1139, %v1138
          %v1157 = vpack.c.bf16 %v1141, %v1140
          %v1158 = vld [vmem:[%s3] sm:$0xf]
          %v1159 = vld [vmem:[%s3 + $0x4] sm:$0xf]
          %v1160 = vld [vmem:[%s3 + $0x8] sm:$0xf]
          %v1161 = vld [vmem:[%s3 + $0xc] sm:$0xf]
          %v1162 = vld [vmem:[%s3 + $0x10] sm:$0xf]
          %v1163 = vld [vmem:[%s3 + $0x14] sm:$0xf]
          %v1164 = vld [vmem:[%s3 + $0x18] sm:$0xf]
          %v1165 = vld [vmem:[%s3 + $0x1c] sm:$0xf]
          %v1166 = vld [vmem:[%s3 + $0x20] sm:$0xf]
          %v1167 = vld [vmem:[%s3 + $0x24] sm:$0xf]
          %v1168 = vld [vmem:[%s3 + $0x28] sm:$0xf]
          %v1169 = vld [vmem:[%s3 + $0x2c] sm:$0xf]
          %v1170 = vld [vmem:[%s3 + $0x30] sm:$0xf]
          %v1171 = vld [vmem:[%s3 + $0x34] sm:$0xf]
          %v1172 = vld [vmem:[%s3 + $0x38] sm:$0xf]
          %v1173 = vld [vmem:[%s3 + $0x3c] sm:$0xf]
          %v1174 = vld [vmem:[#allocation8] sm:$0x1]
          %v1176 = vlaneseq
          %v1177 = vshrl.u32 %v1176, 7
          %v1178 = vsub.s32 0, %v1177
          %v1179 = vrot.slane %v1174, %v1178
          %v1197 = vunpack.c.l.b16 %v1158
          %v1198 = vunpack.c.l.b16 %v1159
          %v1199 = vunpack.c.l.b16 %v1160
          %v1200 = vunpack.c.l.b16 %v1161
          %v1201 = vunpack.c.l.b16 %v1162
          %v1202 = vunpack.c.l.b16 %v1163
          %v1203 = vunpack.c.l.b16 %v1164
          %v1204 = vunpack.c.l.b16 %v1165
          %v1205 = vunpack.c.l.b16 %v1166
          %v1206 = vunpack.c.l.b16 %v1167
          %v1207 = vunpack.c.l.b16 %v1168
          %v1208 = vunpack.c.l.b16 %v1169
          %v1209 = vunpack.c.l.b16 %v1170
          %v1210 = vunpack.c.l.b16 %v1171
          %v1211 = vunpack.c.l.b16 %v1172
          %v1212 = vunpack.c.l.b16 %v1173
          %v1213 = vpack.c.b16 %v1198, %v1197
          %v1214 = vpack.c.b16 %v1200, %v1199
          %v1215 = vpack.c.b16 %v1202, %v1201
          %v1216 = vpack.c.b16 %v1204, %v1203
          %v1217 = vpack.c.b16 %v1206, %v1205
          %v1218 = vpack.c.b16 %v1208, %v1207
          %v1219 = vpack.c.b16 %v1210, %v1209
          %v1220 = vpack.c.b16 %v1212, %v1211
          %1229 = vmatprep.subr.bf16.mxu0 0
          %1230 = vmatpush1.bf16.msra.mxu0 %v1213
          %1231 = vmatprep.subr.bf16.mxu0 0
          %1232 = vmatpush1.bf16.msra.mxu0 %v1214
          %1233 = vmatprep.subr.bf16.mxu0 0
          %1234 = vmatpush1.bf16.msra.mxu0 %v1215
          %1235 = vmatprep.subr.bf16.mxu0 0
          %1236 = vmatpush1.bf16.msra.mxu0 %v1216
          %1237 = vmatprep.subr.bf16.mxu0 0
          %1238 = vmatpush1.bf16.msra.mxu0 %v1217
          %1239 = vmatprep.subr.bf16.mxu0 0
          %1240 = vmatpush1.bf16.msra.mxu0 %v1218
          %1241 = vmatprep.subr.bf16.mxu0 0
          %1242 = vmatpush1.bf16.msra.mxu0 %v1219
          %1243 = vmatprep.subr.bf16.mxu0 0
          %1244 = vmatpush1.bf16.msra.mxu0 %v1220
          %1245 = vmatprep.subr.bf16.mxu0 0
          %1246 = vmatpush1.bf16.msra.mxu0 0
          %1247 = vmatprep.subr.bf16.mxu0 0
          %1248 = vmatpush1.bf16.msra.mxu0 0
          %1249 = vmatprep.subr.bf16.mxu0 0
          %1250 = vmatpush1.bf16.msra.mxu0 0
          %1251 = vmatprep.subr.bf16.mxu0 0
          %1252 = vmatpush1.bf16.msra.mxu0 0
          %1253 = vmatprep.subr.bf16.mxu0 0
          %1254 = vmatpush1.bf16.msra.mxu0 0
          %1255 = vmatprep.subr.bf16.mxu0 0
          %1256 = vmatpush1.bf16.msra.mxu0 0
          %1257 = vmatprep.subr.bf16.mxu0 0
          %1258 = vmatpush1.bf16.msra.mxu0 0
          %1259 = vmatprep.subr.bf16.mxu0 0
          %1260 = vmatpush1.bf16.msra.mxu0 0
          %1261 = vmatprep.mubr.bf16.mxu0 0
          %1262 = vmatmul.mubr.bf16.gmra.mrb[0].mxu0 %v1142
          %v1263 = vpop.f32.mrb[0].mxu0
          %v1264 = vadd.f32 %v1179, %v1263
          %v1265 = vpop.f32.mrb[0].mxu0
          %v1266 = vpop.f32.mrb[0].mxu0
          %v1267 = vadd.f32 %v1179, %v1266
          %v1268 = vpop.f32.mrb[0].mxu0
          %1269 = vmatprep.mubr.bf16.mxu0 0
          %1270 = vmatmul.mubr.bf16.gmra.mrb[0].mxu0 %v1143
          %v1271 = vpop.f32.mrb[0].mxu0
          %v1272 = vadd.f32 %v1179, %v1271
          %v1273 = vpop.f32.mrb[0].mxu0
          %v1274 = vpop.f32.mrb[0].mxu0
          %v1275 = vadd.f32 %v1179, %v1274
          %v1276 = vpop.f32.mrb[0].mxu0
          %1277 = vmatprep.mubr.bf16.mxu0 0
          %1278 = vmatmul.mubr.bf16.gmra.mrb[0].mxu0 %v1144
          %v1279 = vpop.f32.mrb[0].mxu0
          %v1280 = vadd.f32 %v1179, %v1279
          %v1281 = vpop.f32.mrb[0].mxu0
          %v1282 = vpop.f32.mrb[0].mxu0
          %v1283 = vadd.f32 %v1179, %v1282
          %v1284 = vpop.f32.mrb[0].mxu0
          %1285 = vmatprep.mubr.bf16.mxu0 0
          %1286 = vmatmul.mubr.bf16.gmra.mrb[0].mxu0 %v1145
          %v1287 = vpop.f32.mrb[0].mxu0
          %v1288 = vadd.f32 %v1179, %v1287
          %v1289 = vpop.f32.mrb[0].mxu0
          %v1290 = vpop.f32.mrb[0].mxu0
          %v1291 = vadd.f32 %v1179, %v1290
          %v1292 = vpop.f32.mrb[0].mxu0
          %1293 = vmatprep.mubr.bf16.mxu0 0
          %1294 = vmatmul.mubr.bf16.gmra.mrb[0].mxu0 %v1146
          %v1295 = vpop.f32.mrb[0].mxu0
          %v1296 = vadd.f32 %v1179, %v1295
          %v1297 = vpop.f32.mrb[0].mxu0
          %v1298 = vpop.f32.mrb[0].mxu0
          %v1299 = vadd.f32 %v1179, %v1298
          %v1300 = vpop.f32.mrb[0].mxu0
          %1301 = vmatprep.mubr.bf16.mxu0 0
          %1302 = vmatmul.mubr.bf16.gmra.mrb[0].mxu0 %v1147
          %v1303 = vpop.f32.mrb[0].mxu0
          %v1304 = vadd.f32 %v1179, %v1303
          %v1305 = vpop.f32.mrb[0].mxu0
          %v1306 = vpop.f32.mrb[0].mxu0
          %v1307 = vadd.f32 %v1179, %v1306
          %v1308 = vpop.f32.mrb[0].mxu0
          %1309 = vmatprep.mubr.bf16.mxu0 0
          %1310 = vmatmul.mubr.bf16.gmra.mrb[0].mxu0 %v1148
          %v1311 = vpop.f32.mrb[0].mxu0
          %v1312 = vadd.f32 %v1179, %v1311
          %v1313 = vpop.f32.mrb[0].mxu0
          %v1314 = vpop.f32.mrb[0].mxu0
          %v1315 = vadd.f32 %v1179, %v1314
          %v1316 = vpop.f32.mrb[0].mxu0
          %1317 = vmatprep.mubr.bf16.mxu0 0
          %1318 = vmatmul.mubr.bf16.gmra.mrb[0].mxu0 %v1149
          %v1319 = vpop.f32.mrb[0].mxu0
          %v1320 = vadd.f32 %v1179, %v1319
          %v1321 = vpop.f32.mrb[0].mxu0
          %v1322 = vpop.f32.mrb[0].mxu0
          %v1323 = vadd.f32 %v1179, %v1322
          %v1324 = vpop.f32.mrb[0].mxu0
          %1325 = vmatprep.mubr.bf16.mxu0 0
          %1326 = vmatmul.mubr.bf16.gmra.mrb[0].mxu0 %v1150
          %v1327 = vpop.f32.mrb[0].mxu0
          %v1328 = vadd.f32 %v1179, %v1327
          %v1329 = vpop.f32.mrb[0].mxu0
          %v1330 = vpop.f32.mrb[0].mxu0
          %v1331 = vadd.f32 %v1179, %v1330
          %v1332 = vpop.f32.mrb[0].mxu0
          %1333 = vmatprep.mubr.bf16.mxu0 0
          %1334 = vmatmul.mubr.bf16.gmra.mrb[0].mxu0 %v1151
          %v1335 = vpop.f32.mrb[0].mxu0
          %v1336 = vadd.f32 %v1179, %v1335
          %v1337 = vpop.f32.mrb[0].mxu0
          %v1338 = vpop.f32.mrb[0].mxu0
          %v1339 = vadd.f32 %v1179, %v1338
          %v1340 = vpop.f32.mrb[0].mxu0
          %1341 = vmatprep.mubr.bf16.mxu0 0
          %1342 = vmatmul.mubr.bf16.gmra.mrb[0].mxu0 %v1152
          %v1343 = vpop.f32.mrb[0].mxu0
          %v1344 = vadd.f32 %v1179, %v1343
          %v1345 = vpop.f32.mrb[0].mxu0
          %v1346 = vpop.f32.mrb[0].mxu0
          %v1347 = vadd.f32 %v1179, %v1346
          %v1348 = vpop.f32.mrb[0].mxu0
          %1349 = vmatprep.mubr.bf16.mxu0 0
          %1350 = vmatmul.mubr.bf16.gmra.mrb[0].mxu0 %v1153
          %v1351 = vpop.f32.mrb[0].mxu0
          %v1352 = vadd.f32 %v1179, %v1351
          %v1353 = vpop.f32.mrb[0].mxu0
          %v1354 = vpop.f32.mrb[0].mxu0
          %v1355 = vadd.f32 %v1179, %v1354
          %v1356 = vpop.f32.mrb[0].mxu0
          %1357 = vmatprep.mubr.bf16.mxu0 0
          %1358 = vmatmul.mubr.bf16.gmra.mrb[0].mxu0 %v1154
          %v1359 = vpop.f32.mrb[0].mxu0
          %v1360 = vadd.f32 %v1179, %v1359
          %v1361 = vpop.f32.mrb[0].mxu0
          %v1362 = vpop.f32.mrb[0].mxu0
          %v1363 = vadd.f32 %v1179, %v1362
          %v1364 = vpop.f32.mrb[0].mxu0
          %1365 = vmatprep.mubr.bf16.mxu0 0
          %1366 = vmatmul.mubr.bf16.gmra.mrb[0].mxu0 %v1155
          %v1367 = vpop.f32.mrb[0].mxu0
          %v1368 = vadd.f32 %v1179, %v1367
          %v1369 = vpop.f32.mrb[0].mxu0
          %v1370 = vpop.f32.mrb[0].mxu0
          %v1371 = vadd.f32 %v1179, %v1370
          %v1372 = vpop.f32.mrb[0].mxu0
          %1373 = vmatprep.mubr.bf16.mxu0 0
          %1374 = vmatmul.mubr.bf16.gmra.mrb[0].mxu0 %v1156
          %v1375 = vpop.f32.mrb[0].mxu0
          %v1376 = vadd.f32 %v1179, %v1375
          %v1377 = vpop.f32.mrb[0].mxu0
          %v1378 = vpop.f32.mrb[0].mxu0
          %v1379 = vadd.f32 %v1179, %v1378
          %v1380 = vpop.f32.mrb[0].mxu0
          %1381 = vmatprep.mubr.bf16.mxu0 0
          %1382 = vmatmul.mubr.bf16.gmra.mrb[0].mxu0 %v1157
          %v1383 = vpop.f32.mrb[0].mxu0
          %v1384 = vadd.f32 %v1179, %v1383
          %v1385 = vpop.f32.mrb[0].mxu0
          %v1386 = vpop.f32.mrb[0].mxu0
          %v1387 = vadd.f32 %v1179, %v1386
          %v1388 = vpop.f32.mrb[0].mxu0
          %1389 = vdwg.mxu0
          %v1390 = vpack.c.bf16 %v1267, %v1264
          %v1391 = vpack.c.bf16 %v1275, %v1272
          %v1392 = vpack.c.bf16 %v1283, %v1280
          %v1393 = vpack.c.bf16 %v1291, %v1288
          %v1394 = vpack.c.bf16 %v1299, %v1296
          %v1395 = vpack.c.bf16 %v1307, %v1304
          %v1396 = vpack.c.bf16 %v1315, %v1312
          %v1397 = vpack.c.bf16 %v1323, %v1320
          %v1398 = vpack.c.bf16 %v1331, %v1328
          %v1399 = vpack.c.bf16 %v1339, %v1336
          %v1400 = vpack.c.bf16 %v1347, %v1344
          %v1401 = vpack.c.bf16 %v1355, %v1352
          %v1402 = vpack.c.bf16 %v1363, %v1360
          %v1403 = vpack.c.bf16 %v1371, %v1368
          %v1404 = vpack.c.bf16 %v1379, %v1376
          %v1405 = vpack.c.bf16 %v1387, %v1384
          %1406 = vst [vmem:[#allocation2] sm:$0xff] %v1390
          %1407 = vst [vmem:[#allocation2 + $0x8] sm:$0xff] %v1391
          %1408 = vst [vmem:[#allocation2 + $0x10] sm:$0xff] %v1392
          %1409 = vst [vmem:[#allocation2 + $0x18] sm:$0xff] %v1393
          %1410 = vst [vmem:[#allocation2 + $0x20] sm:$0xff] %v1394
          %1411 = vst [vmem:[#allocation2 + $0x28] sm:$0xff] %v1395
          %1412 = vst [vmem:[#allocation2 + $0x30] sm:$0xff] %v1396
          %1413 = vst [vmem:[#allocation2 + $0x38] sm:$0xff] %v1397
          %1414 = vst [vmem:[#allocation2 + $0x40] sm:$0xff] %v1398
          %1415 = vst [vmem:[#allocation2 + $0x48] sm:$0xff] %v1399
          %1416 = vst [vmem:[#allocation2 + $0x50] sm:$0xff] %v1400
          %1417 = vst [vmem:[#allocation2 + $0x58] sm:$0xff] %v1401
          %1418 = vst [vmem:[#allocation2 + $0x60] sm:$0xff] %v1402
          %1419 = vst [vmem:[#allocation2 + $0x68] sm:$0xff] %v1403
          %1420 = vst [vmem:[#allocation2 + $0x70] sm:$0xff] %v1404
          %1421 = vst [vmem:[#allocation2 + $0x78] sm:$0xff] %v1405
          %v1422 = vld [vmem:[%s5] sm:$0xf]
          %v1423 = vld [vmem:[%s5 + $0x4] sm:$0xf]
          %v1424 = vld [vmem:[%s5 + $0x8] sm:$0xf]
          %v1425 = vld [vmem:[%s5 + $0xc] sm:$0xf]
          %v1426 = vld [vmem:[%s5 + $0x10] sm:$0xf]
          %v1427 = vld [vmem:[%s5 + $0x14] sm:$0xf]
          %v1428 = vld [vmem:[%s5 + $0x18] sm:$0xf]
          %v1429 = vld [vmem:[%s5 + $0x1c] sm:$0xf]
          %v1430 = vld [vmem:[%s5 + $0x20] sm:$0xf]
          %v1431 = vld [vmem:[%s5 + $0x24] sm:$0xf]
          %v1432 = vld [vmem:[%s5 + $0x28] sm:$0xf]
          %v1433 = vld [vmem:[%s5 + $0x2c] sm:$0xf]
          %v1434 = vld [vmem:[%s5 + $0x30] sm:$0xf]
          %v1435 = vld [vmem:[%s5 + $0x34] sm:$0xf]
          %v1436 = vld [vmem:[%s5 + $0x38] sm:$0xf]
          %v1437 = vld [vmem:[%s5 + $0x3c] sm:$0xf]
          %v1438 = vld [vmem:[#allocation10] sm:$0x1]
          %v1440 = vlaneseq
          %v1441 = vshrl.u32 %v1440, 7
          %v1442 = vsub.s32 0, %v1441
          %v1443 = vrot.slane %v1438, %v1442
          %v1461 = vunpack.c.l.b16 %v1422
          %v1462 = vunpack.c.l.b16 %v1423
          %v1463 = vunpack.c.l.b16 %v1424
          %v1464 = vunpack.c.l.b16 %v1425
          %v1465 = vunpack.c.l.b16 %v1426
          %v1466 = vunpack.c.l.b16 %v1427
          %v1467 = vunpack.c.l.b16 %v1428
          %v1468 = vunpack.c.l.b16 %v1429
          %v1469 = vunpack.c.l.b16 %v1430
          %v1470 = vunpack.c.l.b16 %v1431
          %v1471 = vunpack.c.l.b16 %v1432
          %v1472 = vunpack.c.l.b16 %v1433
          %v1473 = vunpack.c.l.b16 %v1434
          %v1474 = vunpack.c.l.b16 %v1435
          %v1475 = vunpack.c.l.b16 %v1436
          %v1476 = vunpack.c.l.b16 %v1437
          %v1477 = vpack.c.b16 %v1462, %v1461
          %v1478 = vpack.c.b16 %v1464, %v1463
          %v1479 = vpack.c.b16 %v1466, %v1465
          %v1480 = vpack.c.b16 %v1468, %v1467
          %v1481 = vpack.c.b16 %v1470, %v1469
          %v1482 = vpack.c.b16 %v1472, %v1471
          %v1483 = vpack.c.b16 %v1474, %v1473
          %v1484 = vpack.c.b16 %v1476, %v1475
          %1493 = vmatprep.subr.bf16.mxu0 0
          %1494 = vmatpush1.bf16.msra.mxu0 %v1477
          %1495 = vmatprep.subr.bf16.mxu0 0
          %1496 = vmatpush1.bf16.msra.mxu0 %v1478
          %1497 = vmatprep.subr.bf16.mxu0 0
          %1498 = vmatpush1.bf16.msra.mxu0 %v1479
          %1499 = vmatprep.subr.bf16.mxu0 0
          %1500 = vmatpush1.bf16.msra.mxu0 %v1480
          %1501 = vmatprep.subr.bf16.mxu0 0
          %1502 = vmatpush1.bf16.msra.mxu0 %v1481
          %1503 = vmatprep.subr.bf16.mxu0 0
          %1504 = vmatpush1.bf16.msra.mxu0 %v1482
          %1505 = vmatprep.subr.bf16.mxu0 0
          %1506 = vmatpush1.bf16.msra.mxu0 %v1483
          %1507 = vmatprep.subr.bf16.mxu0 0
          %1508 = vmatpush1.bf16.msra.mxu0 %v1484
          %1509 = vmatprep.subr.bf16.mxu0 0
          %1510 = vmatpush1.bf16.msra.mxu0 0
          %1511 = vmatprep.subr.bf16.mxu0 0
          %1512 = vmatpush1.bf16.msra.mxu0 0
          %1513 = vmatprep.subr.bf16.mxu0 0
          %1514 = vmatpush1.bf16.msra.mxu0 0
          %1515 = vmatprep.subr.bf16.mxu0 0
          %1516 = vmatpush1.bf16.msra.mxu0 0
          %1517 = vmatprep.subr.bf16.mxu0 0
          %1518 = vmatpush1.bf16.msra.mxu0 0
          %1519 = vmatprep.subr.bf16.mxu0 0
          %1520 = vmatpush1.bf16.msra.mxu0 0
          %1521 = vmatprep.subr.bf16.mxu0 0
          %1522 = vmatpush1.bf16.msra.mxu0 0
          %1523 = vmatprep.subr.bf16.mxu0 0
          %1524 = vmatpush1.bf16.msra.mxu0 0
          %1525 = vmatprep.mubr.bf16.mxu0 0
          %1526 = vmatmul.mubr.bf16.gmra.mrb[0].mxu0 %v1142
          %v1527 = vpop.f32.mrb[0].mxu0
          %v1528 = vadd.f32 %v1443, %v1527
          %v1529 = vpop.f32.mrb[0].mxu0
          %v1530 = vpop.f32.mrb[0].mxu0
          %v1531 = vadd.f32 %v1443, %v1530
          %v1532 = vpop.f32.mrb[0].mxu0
          %1533 = vmatprep.mubr.bf16.mxu0 0
          %1534 = vmatmul.mubr.bf16.gmra.mrb[0].mxu0 %v1143
          %v1535 = vpop.f32.mrb[0].mxu0
          %v1536 = vadd.f32 %v1443, %v1535
          %v1537 = vpop.f32.mrb[0].mxu0
          %v1538 = vpop.f32.mrb[0].mxu0
          %v1539 = vadd.f32 %v1443, %v1538
          %v1540 = vpop.f32.mrb[0].mxu0
          %1541 = vmatprep.mubr.bf16.mxu0 0
          %1542 = vmatmul.mubr.bf16.gmra.mrb[0].mxu0 %v1144
          %v1543 = vpop.f32.mrb[0].mxu0
          %v1544 = vadd.f32 %v1443, %v1543
          %v1545 = vpop.f32.mrb[0].mxu0
          %v1546 = vpop.f32.mrb[0].mxu0
          %v1547 = vadd.f32 %v1443, %v1546
          %v1548 = vpop.f32.mrb[0].mxu0
          %1549 = vmatprep.mubr.bf16.mxu0 0
          %1550 = vmatmul.mubr.bf16.gmra.mrb[0].mxu0 %v1145
          %v1551 = vpop.f32.mrb[0].mxu0
          %v1552 = vadd.f32 %v1443, %v1551
          %v1553 = vpop.f32.mrb[0].mxu0
          %v1554 = vpop.f32.mrb[0].mxu0
          %v1555 = vadd.f32 %v1443, %v1554
          %v1556 = vpop.f32.mrb[0].mxu0
          %1557 = vmatprep.mubr.bf16.mxu0 0
          %1558 = vmatmul.mubr.bf16.gmra.mrb[0].mxu0 %v1146
          %v1559 = vpop.f32.mrb[0].mxu0
          %v1560 = vadd.f32 %v1443, %v1559
          %v1561 = vpop.f32.mrb[0].mxu0
          %v1562 = vpop.f32.mrb[0].mxu0
          %v1563 = vadd.f32 %v1443, %v1562
          %v1564 = vpop.f32.mrb[0].mxu0
          %1565 = vmatprep.mubr.bf16.mxu0 0
          %1566 = vmatmul.mubr.bf16.gmra.mrb[0].mxu0 %v1147
          %v1567 = vpop.f32.mrb[0].mxu0
          %v1568 = vadd.f32 %v1443, %v1567
          %v1569 = vpop.f32.mrb[0].mxu0
          %v1570 = vpop.f32.mrb[0].mxu0
          %v1571 = vadd.f32 %v1443, %v1570
          %v1572 = vpop.f32.mrb[0].mxu0
          %1573 = vmatprep.mubr.bf16.mxu0 0
          %1574 = vmatmul.mubr.bf16.gmra.mrb[0].mxu0 %v1148
          %v1575 = vpop.f32.mrb[0].mxu0
          %v1576 = vadd.f32 %v1443, %v1575
          %v1577 = vpop.f32.mrb[0].mxu0
          %v1578 = vpop.f32.mrb[0].mxu0
          %v1579 = vadd.f32 %v1443, %v1578
          %v1580 = vpop.f32.mrb[0].mxu0
          %1581 = vmatprep.mubr.bf16.mxu0 0
          %1582 = vmatmul.mubr.bf16.gmra.mrb[0].mxu0 %v1149
          %v1583 = vpop.f32.mrb[0].mxu0
          %v1584 = vadd.f32 %v1443, %v1583
          %v1585 = vpop.f32.mrb[0].mxu0
          %v1586 = vpop.f32.mrb[0].mxu0
          %v1587 = vadd.f32 %v1443, %v1586
          %v1588 = vpop.f32.mrb[0].mxu0
          %1589 = vmatprep.mubr.bf16.mxu0 0
          %1590 = vmatmul.mubr.bf16.gmra.mrb[0].mxu0 %v1150
          %v1591 = vpop.f32.mrb[0].mxu0
          %v1592 = vadd.f32 %v1443, %v1591
          %v1593 = vpop.f32.mrb[0].mxu0
          %v1594 = vpop.f32.mrb[0].mxu0
          %v1595 = vadd.f32 %v1443, %v1594
          %v1596 = vpop.f32.mrb[0].mxu0
          %1597 = vmatprep.mubr.bf16.mxu0 0
          %1598 = vmatmul.mubr.bf16.gmra.mrb[0].mxu0 %v1151
          %v1599 = vpop.f32.mrb[0].mxu0
          %v1600 = vadd.f32 %v1443, %v1599
          %v1601 = vpop.f32.mrb[0].mxu0
          %v1602 = vpop.f32.mrb[0].mxu0
          %v1603 = vadd.f32 %v1443, %v1602
          %v1604 = vpop.f32.mrb[0].mxu0
          %1605 = vmatprep.mubr.bf16.mxu0 0
          %1606 = vmatmul.mubr.bf16.gmra.mrb[0].mxu0 %v1152
          %v1607 = vpop.f32.mrb[0].mxu0
          %v1608 = vadd.f32 %v1443, %v1607
          %v1609 = vpop.f32.mrb[0].mxu0
          %v1610 = vpop.f32.mrb[0].mxu0
          %v1611 = vadd.f32 %v1443, %v1610
          %v1612 = vpop.f32.mrb[0].mxu0
          %1613 = vmatprep.mubr.bf16.mxu0 0
          %1614 = vmatmul.mubr.bf16.gmra.mrb[0].mxu0 %v1153
          %v1615 = vpop.f32.mrb[0].mxu0
          %v1616 = vadd.f32 %v1443, %v1615
          %v1617 = vpop.f32.mrb[0].mxu0
          %v1618 = vpop.f32.mrb[0].mxu0
          %v1619 = vadd.f32 %v1443, %v1618
          %v1620 = vpop.f32.mrb[0].mxu0
          %1621 = vmatprep.mubr.bf16.mxu0 0
          %1622 = vmatmul.mubr.bf16.gmra.mrb[0].mxu0 %v1154
          %v1623 = vpop.f32.mrb[0].mxu0
          %v1624 = vadd.f32 %v1443, %v1623
          %v1625 = vpop.f32.mrb[0].mxu0
          %v1626 = vpop.f32.mrb[0].mxu0
          %v1627 = vadd.f32 %v1443, %v1626
          %v1628 = vpop.f32.mrb[0].mxu0
          %1629 = vmatprep.mubr.bf16.mxu0 0
          %1630 = vmatmul.mubr.bf16.gmra.mrb[0].mxu0 %v1155
          %v1631 = vpop.f32.mrb[0].mxu0
          %v1632 = vadd.f32 %v1443, %v1631
          %v1633 = vpop.f32.mrb[0].mxu0
          %v1634 = vpop.f32.mrb[0].mxu0
          %v1635 = vadd.f32 %v1443, %v1634
          %v1636 = vpop.f32.mrb[0].mxu0
          %1637 = vmatprep.mubr.bf16.mxu0 0
          %1638 = vmatmul.mubr.bf16.gmra.mrb[0].mxu0 %v1156
          %v1639 = vpop.f32.mrb[0].mxu0
          %v1640 = vadd.f32 %v1443, %v1639
          %v1641 = vpop.f32.mrb[0].mxu0
          %v1642 = vpop.f32.mrb[0].mxu0
          %v1643 = vadd.f32 %v1443, %v1642
          %v1644 = vpop.f32.mrb[0].mxu0
          %1645 = vmatprep.mubr.bf16.mxu0 0
          %1646 = vmatmul.mubr.bf16.gmra.mrb[0].mxu0 %v1157
          %v1647 = vpop.f32.mrb[0].mxu0
          %v1648 = vadd.f32 %v1443, %v1647
          %v1649 = vpop.f32.mrb[0].mxu0
          %v1650 = vpop.f32.mrb[0].mxu0
          %v1651 = vadd.f32 %v1443, %v1650
          %v1652 = vpop.f32.mrb[0].mxu0
          %1653 = vdwg.mxu0
          %v1654 = vpack.c.bf16 %v1531, %v1528
          %v1655 = vpack.c.bf16 %v1539, %v1536
          %v1656 = vpack.c.bf16 %v1547, %v1544
          %v1657 = vpack.c.bf16 %v1555, %v1552
          %v1658 = vpack.c.bf16 %v1563, %v1560
          %v1659 = vpack.c.bf16 %v1571, %v1568
          %v1660 = vpack.c.bf16 %v1579, %v1576
          %v1661 = vpack.c.bf16 %v1587, %v1584
          %v1662 = vpack.c.bf16 %v1595, %v1592
          %v1663 = vpack.c.bf16 %v1603, %v1600
          %v1664 = vpack.c.bf16 %v1611, %v1608
          %v1665 = vpack.c.bf16 %v1619, %v1616
          %v1666 = vpack.c.bf16 %v1627, %v1624
          %v1667 = vpack.c.bf16 %v1635, %v1632
          %v1668 = vpack.c.bf16 %v1643, %v1640
          %v1669 = vpack.c.bf16 %v1651, %v1648
          %1670 = vst [vmem:[#allocation3] sm:$0xff] %v1654
          %1671 = vst [vmem:[#allocation3 + $0x8] sm:$0xff] %v1655
          %1672 = vst [vmem:[#allocation3 + $0x10] sm:$0xff] %v1656
          %1673 = vst [vmem:[#allocation3 + $0x18] sm:$0xff] %v1657
          %1674 = vst [vmem:[#allocation3 + $0x20] sm:$0xff] %v1658
          %1675 = vst [vmem:[#allocation3 + $0x28] sm:$0xff] %v1659
          %1676 = vst [vmem:[#allocation3 + $0x30] sm:$0xff] %v1660
          %1677 = vst [vmem:[#allocation3 + $0x38] sm:$0xff] %v1661
          %1678 = vst [vmem:[#allocation3 + $0x40] sm:$0xff] %v1662
          %1679 = vst [vmem:[#allocation3 + $0x48] sm:$0xff] %v1663
          %1680 = vst [vmem:[#allocation3 + $0x50] sm:$0xff] %v1664
          %1681 = vst [vmem:[#allocation3 + $0x58] sm:$0xff] %v1665
          %1682 = vst [vmem:[#allocation3 + $0x60] sm:$0xff] %v1666
          %1683 = vst [vmem:[#allocation3 + $0x68] sm:$0xff] %v1667
          %1684 = vst [vmem:[#allocation3 + $0x70] sm:$0xff] %v1668
          %1685 = vst [vmem:[#allocation3 + $0x78] sm:$0xff] %v1669
          %v1686 = vld [vmem:[#allocation11] sm:$0xf]
          %v1687 = vld [vmem:[#allocation11 + $0x4] sm:$0xf]
          %v1688 = vld [vmem:[#allocation11 + $0x8] sm:$0xf]
          %v1689 = vld [vmem:[#allocation11 + $0xc] sm:$0xf]
          %v1690 = vld [vmem:[#allocation11 + $0x10] sm:$0xf]
          %v1691 = vld [vmem:[#allocation11 + $0x14] sm:$0xf]
          %v1692 = vld [vmem:[#allocation11 + $0x18] sm:$0xf]
          %v1693 = vld [vmem:[#allocation11 + $0x1c] sm:$0xf]
          %v1694 = vld [vmem:[#allocation11 + $0x20] sm:$0xf]
          %v1695 = vld [vmem:[#allocation11 + $0x24] sm:$0xf]
          %v1696 = vld [vmem:[#allocation11 + $0x28] sm:$0xf]
          %v1697 = vld [vmem:[#allocation11 + $0x2c] sm:$0xf]
          %v1698 = vld [vmem:[#allocation11 + $0x30] sm:$0xf]
          %v1699 = vld [vmem:[#allocation11 + $0x34] sm:$0xf]
          %v1700 = vld [vmem:[#allocation11 + $0x38] sm:$0xf]
          %v1701 = vld [vmem:[#allocation11 + $0x3c] sm:$0xf]
          %v1702 = vld [vmem:[#allocation13] sm:$0x1]
          %v1704 = vlaneseq
          %v1705 = vshrl.u32 %v1704, 7
          %v1706 = vsub.s32 0, %v1705
          %v1707 = vrot.slane %v1702, %v1706
          %v1725 = vunpack.c.l.b16 %v1686
          %v1726 = vunpack.c.l.b16 %v1687
          %v1727 = vunpack.c.l.b16 %v1688
          %v1728 = vunpack.c.l.b16 %v1689
          %v1729 = vunpack.c.l.b16 %v1690
          %v1730 = vunpack.c.l.b16 %v1691
          %v1731 = vunpack.c.l.b16 %v1692
          %v1732 = vunpack.c.l.b16 %v1693
          %v1733 = vunpack.c.l.b16 %v1694
          %v1734 = vunpack.c.l.b16 %v1695
          %v1735 = vunpack.c.l.b16 %v1696
          %v1736 = vunpack.c.l.b16 %v1697
          %v1737 = vunpack.c.l.b16 %v1698
          %v1738 = vunpack.c.l.b16 %v1699
          %v1739 = vunpack.c.l.b16 %v1700
          %v1740 = vunpack.c.l.b16 %v1701
          %v1741 = vpack.c.b16 %v1726, %v1725
          %v1742 = vpack.c.b16 %v1728, %v1727
          %v1743 = vpack.c.b16 %v1730, %v1729
          %v1744 = vpack.c.b16 %v1732, %v1731
          %v1745 = vpack.c.b16 %v1734, %v1733
          %v1746 = vpack.c.b16 %v1736, %v1735
          %v1747 = vpack.c.b16 %v1738, %v1737
          %v1748 = vpack.c.b16 %v1740, %v1739
          %1757 = vmatprep.subr.bf16.mxu0 0
          %1758 = vmatpush1.bf16.msra.mxu0 %v1741
          %1759 = vmatprep.subr.bf16.mxu0 0
          %1760 = vmatpush1.bf16.msra.mxu0 %v1742
          %1761 = vmatprep.subr.bf16.mxu0 0
          %1762 = vmatpush1.bf16.msra.mxu0 %v1743
          %1763 = vmatprep.subr.bf16.mxu0 0
          %1764 = vmatpush1.bf16.msra.mxu0 %v1744
          %1765 = vmatprep.subr.bf16.mxu0 0
          %1766 = vmatpush1.bf16.msra.mxu0 %v1745
          %1767 = vmatprep.subr.bf16.mxu0 0
          %1768 = vmatpush1.bf16.msra.mxu0 %v1746
          %1769 = vmatprep.subr.bf16.mxu0 0
          %1770 = vmatpush1.bf16.msra.mxu0 %v1747
          %1771 = vmatprep.subr.bf16.mxu0 0
          %1772 = vmatpush1.bf16.msra.mxu0 %v1748
          %1773 = vmatprep.subr.bf16.mxu0 0
          %1774 = vmatpush1.bf16.msra.mxu0 0
          %1775 = vmatprep.subr.bf16.mxu0 0
          %1776 = vmatpush1.bf16.msra.mxu0 0
          %1777 = vmatprep.subr.bf16.mxu0 0
          %1778 = vmatpush1.bf16.msra.mxu0 0
          %1779 = vmatprep.subr.bf16.mxu0 0
          %1780 = vmatpush1.bf16.msra.mxu0 0
          %1781 = vmatprep.subr.bf16.mxu0 0
          %1782 = vmatpush1.bf16.msra.mxu0 0
          %1783 = vmatprep.subr.bf16.mxu0 0
          %1784 = vmatpush1.bf16.msra.mxu0 0
          %1785 = vmatprep.subr.bf16.mxu0 0
          %1786 = vmatpush1.bf16.msra.mxu0 0
          %1787 = vmatprep.subr.bf16.mxu0 0
          %1788 = vmatpush1.bf16.msra.mxu0 0
          %1789 = vmatprep.mubr.bf16.mxu0 0
          %1790 = vmatmul.mubr.bf16.gmra.mrb[0].mxu0 %v1142
          %v1791 = vpop.f32.mrb[0].mxu0
          %v1792 = vadd.f32 %v1707, %v1791
          %v1793 = vpop.f32.mrb[0].mxu0
          %v1794 = vpop.f32.mrb[0].mxu0
          %v1795 = vadd.f32 %v1707, %v1794
          %v1796 = vpop.f32.mrb[0].mxu0
          %1797 = vmatprep.mubr.bf16.mxu0 0
          %1798 = vmatmul.mubr.bf16.gmra.mrb[0].mxu0 %v1143
          %v1799 = vpop.f32.mrb[0].mxu0
          %v1800 = vadd.f32 %v1707, %v1799
          %v1801 = vpop.f32.mrb[0].mxu0
          %v1802 = vpop.f32.mrb[0].mxu0
          %v1803 = vadd.f32 %v1707, %v1802
          %v1804 = vpop.f32.mrb[0].mxu0
          %1805 = vmatprep.mubr.bf16.mxu0 0
          %1806 = vmatmul.mubr.bf16.gmra.mrb[0].mxu0 %v1144
          %v1807 = vpop.f32.mrb[0].mxu0
          %v1808 = vadd.f32 %v1707, %v1807
          %v1809 = vpop.f32.mrb[0].mxu0
          %v1810 = vpop.f32.mrb[0].mxu0
          %v1811 = vadd.f32 %v1707, %v1810
          %v1812 = vpop.f32.mrb[0].mxu0
          %1813 = vmatprep.mubr.bf16.mxu0 0
          %1814 = vmatmul.mubr.bf16.gmra.mrb[0].mxu0 %v1145
          %v1815 = vpop.f32.mrb[0].mxu0
          %v1816 = vadd.f32 %v1707, %v1815
          %v1817 = vpop.f32.mrb[0].mxu0
          %v1818 = vpop.f32.mrb[0].mxu0
          %v1819 = vadd.f32 %v1707, %v1818
          %v1820 = vpop.f32.mrb[0].mxu0
          %1821 = vmatprep.mubr.bf16.mxu0 0
          %1822 = vmatmul.mubr.bf16.gmra.mrb[0].mxu0 %v1146
          %v1823 = vpop.f32.mrb[0].mxu0
          %v1824 = vadd.f32 %v1707, %v1823
          %v1825 = vpop.f32.mrb[0].mxu0
          %v1826 = vpop.f32.mrb[0].mxu0
          %v1827 = vadd.f32 %v1707, %v1826
          %v1828 = vpop.f32.mrb[0].mxu0
          %1829 = vmatprep.mubr.bf16.mxu0 0
          %1830 = vmatmul.mubr.bf16.gmra.mrb[0].mxu0 %v1147
          %v1831 = vpop.f32.mrb[0].mxu0
          %v1832 = vadd.f32 %v1707, %v1831
          %v1833 = vpop.f32.mrb[0].mxu0
          %v1834 = vpop.f32.mrb[0].mxu0
          %v1835 = vadd.f32 %v1707, %v1834
          %v1836 = vpop.f32.mrb[0].mxu0
          %1837 = vmatprep.mubr.bf16.mxu0 0
          %1838 = vmatmul.mubr.bf16.gmra.mrb[0].mxu0 %v1148
          %v1839 = vpop.f32.mrb[0].mxu0
          %v1840 = vadd.f32 %v1707, %v1839
          %v1841 = vpop.f32.mrb[0].mxu0
          %v1842 = vpop.f32.mrb[0].mxu0
          %v1843 = vadd.f32 %v1707, %v1842
          %v1844 = vpop.f32.mrb[0].mxu0
          %1845 = vmatprep.mubr.bf16.mxu0 0
          %1846 = vmatmul.mubr.bf16.gmra.mrb[0].mxu0 %v1149
          %v1847 = vpop.f32.mrb[0].mxu0
          %v1848 = vadd.f32 %v1707, %v1847
          %v1849 = vpop.f32.mrb[0].mxu0
          %v1850 = vpop.f32.mrb[0].mxu0
          %v1851 = vadd.f32 %v1707, %v1850
          %v1852 = vpop.f32.mrb[0].mxu0
          %1853 = vmatprep.mubr.bf16.mxu0 0
          %1854 = vmatmul.mubr.bf16.gmra.mrb[0].mxu0 %v1150
          %v1855 = vpop.f32.mrb[0].mxu0
          %v1856 = vadd.f32 %v1707, %v1855
          %v1857 = vpop.f32.mrb[0].mxu0
          %v1858 = vpop.f32.mrb[0].mxu0
          %v1859 = vadd.f32 %v1707, %v1858
          %v1860 = vpop.f32.mrb[0].mxu0
          %1861 = vmatprep.mubr.bf16.mxu0 0
          %1862 = vmatmul.mubr.bf16.gmra.mrb[0].mxu0 %v1151
          %v1863 = vpop.f32.mrb[0].mxu0
          %v1864 = vadd.f32 %v1707, %v1863
          %v1865 = vpop.f32.mrb[0].mxu0
          %v1866 = vpop.f32.mrb[0].mxu0
          %v1867 = vadd.f32 %v1707, %v1866
          %v1868 = vpop.f32.mrb[0].mxu0
          %1869 = vmatprep.mubr.bf16.mxu0 0
          %1870 = vmatmul.mubr.bf16.gmra.mrb[0].mxu0 %v1152
          %v1871 = vpop.f32.mrb[0].mxu0
          %v1872 = vadd.f32 %v1707, %v1871
          %v1873 = vpop.f32.mrb[0].mxu0
          %v1874 = vpop.f32.mrb[0].mxu0
          %v1875 = vadd.f32 %v1707, %v1874
          %v1876 = vpop.f32.mrb[0].mxu0
          %1877 = vmatprep.mubr.bf16.mxu0 0
          %1878 = vmatmul.mubr.bf16.gmra.mrb[0].mxu0 %v1153
          %v1879 = vpop.f32.mrb[0].mxu0
          %v1880 = vadd.f32 %v1707, %v1879
          %v1881 = vpop.f32.mrb[0].mxu0
          %v1882 = vpop.f32.mrb[0].mxu0
          %v1883 = vadd.f32 %v1707, %v1882
          %v1884 = vpop.f32.mrb[0].mxu0
          %1885 = vmatprep.mubr.bf16.mxu0 0
          %1886 = vmatmul.mubr.bf16.gmra.mrb[0].mxu0 %v1154
          %v1887 = vpop.f32.mrb[0].mxu0
          %v1888 = vadd.f32 %v1707, %v1887
          %v1889 = vpop.f32.mrb[0].mxu0
          %v1890 = vpop.f32.mrb[0].mxu0
          %v1891 = vadd.f32 %v1707, %v1890
          %v1892 = vpop.f32.mrb[0].mxu0
          %1893 = vmatprep.mubr.bf16.mxu0 0
          %1894 = vmatmul.mubr.bf16.gmra.mrb[0].mxu0 %v1155
          %v1895 = vpop.f32.mrb[0].mxu0
          %v1896 = vadd.f32 %v1707, %v1895
          %v1897 = vpop.f32.mrb[0].mxu0
          %v1898 = vpop.f32.mrb[0].mxu0
          %v1899 = vadd.f32 %v1707, %v1898
          %v1900 = vpop.f32.mrb[0].mxu0
          %1901 = vmatprep.mubr.bf16.mxu0 0
          %1902 = vmatmul.mubr.bf16.gmra.mrb[0].mxu0 %v1156
          %v1903 = vpop.f32.mrb[0].mxu0
          %v1904 = vadd.f32 %v1707, %v1903
          %v1905 = vpop.f32.mrb[0].mxu0
          %v1906 = vpop.f32.mrb[0].mxu0
          %v1907 = vadd.f32 %v1707, %v1906
          %v1908 = vpop.f32.mrb[0].mxu0
          %1909 = vmatprep.mubr.bf16.mxu0 0
          %1910 = vmatmul.mubr.bf16.gmra.mrb[0].mxu0 %v1157
          %v1911 = vpop.f32.mrb[0].mxu0
          %v1912 = vadd.f32 %v1707, %v1911
          %v1913 = vpop.f32.mrb[0].mxu0
          %v1914 = vpop.f32.mrb[0].mxu0
          %v1915 = vadd.f32 %v1707, %v1914
          %v1916 = vpop.f32.mrb[0].mxu0
          %1917 = vdwg.mxu0
          %v1918 = vpack.c.bf16 %v1795, %v1792
          %v1919 = vpack.c.bf16 %v1803, %v1800
          %v1920 = vpack.c.bf16 %v1811, %v1808
          %v1921 = vpack.c.bf16 %v1819, %v1816
          %v1922 = vpack.c.bf16 %v1827, %v1824
          %v1923 = vpack.c.bf16 %v1835, %v1832
          %v1924 = vpack.c.bf16 %v1843, %v1840
          %v1925 = vpack.c.bf16 %v1851, %v1848
          %v1926 = vpack.c.bf16 %v1859, %v1856
          %v1927 = vpack.c.bf16 %v1867, %v1864
          %v1928 = vpack.c.bf16 %v1875, %v1872
          %v1929 = vpack.c.bf16 %v1883, %v1880
          %v1930 = vpack.c.bf16 %v1891, %v1888
          %v1931 = vpack.c.bf16 %v1899, %v1896
          %v1932 = vpack.c.bf16 %v1907, %v1904
          %v1933 = vpack.c.bf16 %v1915, %v1912
          %1934 = vst [vmem:[#allocation4] sm:$0xff] %v1918
          %1935 = vst [vmem:[#allocation4 + $0x8] sm:$0xff] %v1919
          %1936 = vst [vmem:[#allocation4 + $0x10] sm:$0xff] %v1920
          %1937 = vst [vmem:[#allocation4 + $0x18] sm:$0xff] %v1921
          %1938 = vst [vmem:[#allocation4 + $0x20] sm:$0xff] %v1922
          %1939 = vst [vmem:[#allocation4 + $0x28] sm:$0xff] %v1923
          %1940 = vst [vmem:[#allocation4 + $0x30] sm:$0xff] %v1924
          %1941 = vst [vmem:[#allocation4 + $0x38] sm:$0xff] %v1925
          %1942 = vst [vmem:[#allocation4 + $0x40] sm:$0xff] %v1926
          %1943 = vst [vmem:[#allocation4 + $0x48] sm:$0xff] %v1927
          %1944 = vst [vmem:[#allocation4 + $0x50] sm:$0xff] %v1928
          %1945 = vst [vmem:[#allocation4 + $0x58] sm:$0xff] %v1929
          %1946 = vst [vmem:[#allocation4 + $0x60] sm:$0xff] %v1930
          %1947 = vst [vmem:[#allocation4 + $0x68] sm:$0xff] %v1931
          %1948 = vst [vmem:[#allocation4 + $0x70] sm:$0xff] %v1932
          %1949 = vst [vmem:[#allocation4 + $0x78] sm:$0xff] %v1933
        $region100: #{tpu_custom_call.1} parent=71 // pred_fallthru
          _
        %s1950 = smul.u32 %s38, 64
        %s1951 = sshra.s32 %s1950, 4
        %s1952 = sand.u32 %s1950, 15
        %s1953 = smul.addr %s1951, 8
        %s1954 = scalar_lea.vmem [#allocation2], %s1953
        %v1955 = vld [vmem:[%s1954] sm:$0xff]
        %v1956 = vld [vmem:[%s1954 + $0x8] sm:$0xff]
        %v1957 = vld [vmem:[%s1954 + $0x10] sm:$0xff]
        %v1958 = vld [vmem:[%s1954 + $0x18] sm:$0xff]
        %v1959 = vld [vmem:[#allocation3] sm:$0xff]
        %v1960 = vld [vmem:[#allocation3 + $0x8] sm:$0xff]
        %v1961 = vld [vmem:[#allocation3 + $0x10] sm:$0xff]
        %v1962 = vld [vmem:[#allocation3 + $0x18] sm:$0xff]
        %v1963 = vld [vmem:[#allocation3 + $0x20] sm:$0xff]
        %v1964 = vld [vmem:[#allocation3 + $0x28] sm:$0xff]
        %v1965 = vld [vmem:[#allocation3 + $0x30] sm:$0xff]
        %v1966 = vld [vmem:[#allocation3 + $0x38] sm:$0xff]
        %v1967 = vld [vmem:[#allocation3 + $0x40] sm:$0xff]
        %v1968 = vld [vmem:[#allocation3 + $0x48] sm:$0xff]
        %v1969 = vld [vmem:[#allocation3 + $0x50] sm:$0xff]
        %v1970 = vld [vmem:[#allocation3 + $0x58] sm:$0xff]
        %v1971 = vld [vmem:[#allocation3 + $0x60] sm:$0xff]
        %v1972 = vld [vmem:[#allocation3 + $0x68] sm:$0xff]
        %v1973 = vld [vmem:[#allocation3 + $0x70] sm:$0xff]
        %v1974 = vld [vmem:[#allocation3 + $0x78] sm:$0xff]
        %1975 = vmatprep.subr.bf16.mxu0 0
        %1976 = vmatpush1.bf16.xpose.msra.mxu0 %v1955
        %1977 = vmatprep.subr.bf16.mxu0 0
        %1978 = vmatpush1.bf16.xpose.msra.mxu0 %v1956
        %1979 = vmatprep.subr.bf16.mxu0 0
        %1980 = vmatpush1.bf16.xpose.msra.mxu0 %v1957
        %1981 = vmatprep.subr.bf16.mxu0 0
        %1982 = vmatpush1.bf16.xpose.msra.mxu0 %v1958
        %1983 = vmatprep.subr.bf16.mxu0 0
        %1984 = vmatpush1.bf16.xpose.msra.mxu0 0
        %1985 = vmatprep.subr.bf16.mxu0 0
        %1986 = vmatpush1.bf16.xpose.msra.mxu0 0
        %1987 = vmatprep.subr.bf16.mxu0 0
        %1988 = vmatpush1.bf16.xpose.msra.mxu0 0
        %1989 = vmatprep.subr.bf16.mxu0 0
        %1990 = vmatpush1.bf16.xpose.msra.mxu0 0
        %1991 = vmatprep.subr.bf16.mxu0 0
        %1992 = vmatpush1.bf16.xpose.msra.mxu0 0
        %1993 = vmatprep.subr.bf16.mxu0 0
        %1994 = vmatpush1.bf16.xpose.msra.mxu0 0
        %1995 = vmatprep.subr.bf16.mxu0 0
        %1996 = vmatpush1.bf16.xpose.msra.mxu0 0
        %1997 = vmatprep.subr.bf16.mxu0 0
        %1998 = vmatpush1.bf16.xpose.msra.mxu0 0
        %1999 = vmatprep.subr.bf16.mxu0 0
        %2000 = vmatpush1.bf16.xpose.msra.mxu0 0
        %2001 = vmatprep.subr.bf16.mxu0 0
        %2002 = vmatpush1.bf16.xpose.msra.mxu0 0
        %2003 = vmatprep.subr.bf16.mxu0 0
        %2004 = vmatpush1.bf16.xpose.msra.mxu0 0
        %2005 = vmatprep.subr.bf16.mxu0 0
        %2006 = vmatpush1.bf16.xpose.msra.mxu0 0
        %2007 = vmatprep.mubr.bf16.mxu0 0
        %2008 = vmatmul.mubr.bf16.gmra.mrb[0].mxu0 %v1959
        %v2009 = vpop.f32.mrb[0].mxu0
        %v2010 = vadd.f32 0.0, %v2009
        %v2011 = vpop.f32.mrb[0].mxu0
        %v2012 = vpop.f32.mrb[0].mxu0
        %v2013 = vadd.f32 0.0, %v2012
        %v2014 = vpop.f32.mrb[0].mxu0
        %2015 = vmatprep.mubr.bf16.mxu0 0
        %2016 = vmatmul.mubr.bf16.gmra.mrb[0].mxu0 %v1960
        %v2017 = vpop.f32.mrb[0].mxu0
        %v2018 = vadd.f32 0.0, %v2017
        %v2019 = vpop.f32.mrb[0].mxu0
        %v2020 = vpop.f32.mrb[0].mxu0
        %v2021 = vadd.f32 0.0, %v2020
        %v2022 = vpop.f32.mrb[0].mxu0
        %2023 = vmatprep.mubr.bf16.mxu0 0
        %2024 = vmatmul.mubr.bf16.gmra.mrb[0].mxu0 %v1961
        %v2025 = vpop.f32.mrb[0].mxu0
        %v2026 = vadd.f32 0.0, %v2025
        %v2027 = vpop.f32.mrb[0].mxu0
        %v2028 = vpop.f32.mrb[0].mxu0
        %v2029 = vadd.f32 0.0, %v2028
        %v2030 = vpop.f32.mrb[0].mxu0
        %2031 = vmatprep.mubr.bf16.mxu0 0
        %2032 = vmatmul.mubr.bf16.gmra.mrb[0].mxu0 %v1962
        %v2033 = vpop.f32.mrb[0].mxu0
        %v2034 = vadd.f32 0.0, %v2033
        %v2035 = vpop.f32.mrb[0].mxu0
        %v2036 = vpop.f32.mrb[0].mxu0
        %v2037 = vadd.f32 0.0, %v2036
        %v2038 = vpop.f32.mrb[0].mxu0
        %2039 = vmatprep.mubr.bf16.mxu0 0
        %2040 = vmatmul.mubr.bf16.gmra.mrb[0].mxu0 %v1963
        %v2041 = vpop.f32.mrb[0].mxu0
        %v2042 = vadd.f32 0.0, %v2041
        %v2043 = vpop.f32.mrb[0].mxu0
        %v2044 = vpop.f32.mrb[0].mxu0
        %v2045 = vadd.f32 0.0, %v2044
        %v2046 = vpop.f32.mrb[0].mxu0
        %2047 = vmatprep.mubr.bf16.mxu0 0
        %2048 = vmatmul.mubr.bf16.gmra.mrb[0].mxu0 %v1964
        %v2049 = vpop.f32.mrb[0].mxu0
        %v2050 = vadd.f32 0.0, %v2049
        %v2051 = vpop.f32.mrb[0].mxu0
        %v2052 = vpop.f32.mrb[0].mxu0
        %v2053 = vadd.f32 0.0, %v2052
        %v2054 = vpop.f32.mrb[0].mxu0
        %2055 = vmatprep.mubr.bf16.mxu0 0
        %2056 = vmatmul.mubr.bf16.gmra.mrb[0].mxu0 %v1965
        %v2057 = vpop.f32.mrb[0].mxu0
        %v2058 = vadd.f32 0.0, %v2057
        %v2059 = vpop.f32.mrb[0].mxu0
        %v2060 = vpop.f32.mrb[0].mxu0
        %v2061 = vadd.f32 0.0, %v2060
        %v2062 = vpop.f32.mrb[0].mxu0
        %2063 = vmatprep.mubr.bf16.mxu0 0
        %2064 = vmatmul.mubr.bf16.gmra.mrb[0].mxu0 %v1966
        %v2065 = vpop.f32.mrb[0].mxu0
        %v2066 = vadd.f32 0.0, %v2065
        %v2067 = vpop.f32.mrb[0].mxu0
        %v2068 = vpop.f32.mrb[0].mxu0
        %v2069 = vadd.f32 0.0, %v2068
        %v2070 = vpop.f32.mrb[0].mxu0
        %2071 = vmatprep.mubr.bf16.mxu0 0
        %2072 = vmatmul.mubr.bf16.gmra.mrb[0].mxu0 %v1967
        %v2073 = vpop.f32.mrb[0].mxu0
        %v2074 = vadd.f32 0.0, %v2073
        %v2075 = vpop.f32.mrb[0].mxu0
        %v2076 = vpop.f32.mrb[0].mxu0
        %v2077 = vadd.f32 0.0, %v2076
        %v2078 = vpop.f32.mrb[0].mxu0
        %2079 = vmatprep.mubr.bf16.mxu0 0
        %2080 = vmatmul.mubr.bf16.gmra.mrb[0].mxu0 %v1968
        %v2081 = vpop.f32.mrb[0].mxu0
        %v2082 = vadd.f32 0.0, %v2081
        %v2083 = vpop.f32.mrb[0].mxu0
        %v2084 = vpop.f32.mrb[0].mxu0
        %v2085 = vadd.f32 0.0, %v2084
        %v2086 = vpop.f32.mrb[0].mxu0
        %2087 = vmatprep.mubr.bf16.mxu0 0
        %2088 = vmatmul.mubr.bf16.gmra.mrb[0].mxu0 %v1969
        %v2089 = vpop.f32.mrb[0].mxu0
        %v2090 = vadd.f32 0.0, %v2089
        %v2091 = vpop.f32.mrb[0].mxu0
        %v2092 = vpop.f32.mrb[0].mxu0
        %v2093 = vadd.f32 0.0, %v2092
        %v2094 = vpop.f32.mrb[0].mxu0
        %2095 = vmatprep.mubr.bf16.mxu0 0
        %2096 = vmatmul.mubr.bf16.gmra.mrb[0].mxu0 %v1970
        %v2097 = vpop.f32.mrb[0].mxu0
        %v2098 = vadd.f32 0.0, %v2097
        %v2099 = vpop.f32.mrb[0].mxu0
        %v2100 = vpop.f32.mrb[0].mxu0
        %v2101 = vadd.f32 0.0, %v2100
        %v2102 = vpop.f32.mrb[0].mxu0
        %2103 = vmatprep.mubr.bf16.mxu0 0
        %2104 = vmatmul.mubr.bf16.gmra.mrb[0].mxu0 %v1971
        %v2105 = vpop.f32.mrb[0].mxu0
        %v2106 = vadd.f32 0.0, %v2105
        %v2107 = vpop.f32.mrb[0].mxu0
        %v2108 = vpop.f32.mrb[0].mxu0
        %v2109 = vadd.f32 0.0, %v2108
        %v2110 = vpop.f32.mrb[0].mxu0
        %2111 = vmatprep.mubr.bf16.mxu0 0
        %2112 = vmatmul.mubr.bf16.gmra.mrb[0].mxu0 %v1972
        %v2113 = vpop.f32.mrb[0].mxu0
        %v2114 = vadd.f32 0.0, %v2113
        %v2115 = vpop.f32.mrb[0].mxu0
        %v2116 = vpop.f32.mrb[0].mxu0
        %v2117 = vadd.f32 0.0, %v2116
        %v2118 = vpop.f32.mrb[0].mxu0
        %2119 = vmatprep.mubr.bf16.mxu0 0
        %2120 = vmatmul.mubr.bf16.gmra.mrb[0].mxu0 %v1973
        %v2121 = vpop.f32.mrb[0].mxu0
        %v2122 = vadd.f32 0.0, %v2121
        %v2123 = vpop.f32.mrb[0].mxu0
        %v2124 = vpop.f32.mrb[0].mxu0
        %v2125 = vadd.f32 0.0, %v2124
        %v2126 = vpop.f32.mrb[0].mxu0
        %2127 = vmatprep.mubr.bf16.mxu0 0
        %2128 = vmatmul.mubr.bf16.gmra.mrb[0].mxu0 %v1974
        %v2129 = vpop.f32.mrb[0].mxu0
        %v2130 = vadd.f32 0.0, %v2129
        %v2131 = vpop.f32.mrb[0].mxu0
        %v2132 = vpop.f32.mrb[0].mxu0
        %v2133 = vadd.f32 0.0, %v2132
        %v2134 = vpop.f32.mrb[0].mxu0
        %2135 = vdwg.mxu0
        %vm2136 = vcmask 523264
        %v2137 = vsel %vm2136, %v2010, -inf
        %v2138 = vsel %vm2136, %v2013, -inf
        %v2139 = vsel %vm2136, %v2018, -inf
        %v2140 = vsel %vm2136, %v2021, -inf
        %v2141 = vsel %vm2136, %v2026, -inf
        %v2142 = vmax.f32 %v2137, %v2141
        %v2143 = vsel %vm2136, %v2029, -inf
        %v2144 = vmax.f32 %v2138, %v2143
        %v2145 = vsel %vm2136, %v2034, -inf
        %v2146 = vmax.f32 %v2139, %v2145
        %v2147 = vsel %vm2136, %v2037, -inf
        %v2148 = vmax.f32 %v2140, %v2147
        %v2149 = vsel %vm2136, %v2042, -inf
        %v2150 = vmax.f32 %v2142, %v2149
        %v2151 = vsel %vm2136, %v2045, -inf
        %v2152 = vmax.f32 %v2144, %v2151
        %v2153 = vsel %vm2136, %v2050, -inf
        %v2154 = vmax.f32 %v2146, %v2153
        %v2155 = vsel %vm2136, %v2053, -inf
        %v2156 = vmax.f32 %v2148, %v2155
        %v2157 = vsel %vm2136, %v2058, -inf
        %v2158 = vmax.f32 %v2150, %v2157
        %v2159 = vsel %vm2136, %v2061, -inf
        %v2160 = vmax.f32 %v2152, %v2159
        %v2161 = vsel %vm2136, %v2066, -inf
        %v2162 = vmax.f32 %v2154, %v2161
        %v2163 = vsel %vm2136, %v2069, -inf
        %v2164 = vmax.f32 %v2156, %v2163
        %v2165 = vsel %vm2136, %v2074, -inf
        %v2166 = vmax.f32 %v2158, %v2165
        %v2167 = vsel %vm2136, %v2077, -inf
        %v2168 = vmax.f32 %v2160, %v2167
        %v2169 = vsel %vm2136, %v2082, -inf
        %v2170 = vmax.f32 %v2162, %v2169
        %v2171 = vsel %vm2136, %v2085, -inf
        %v2172 = vmax.f32 %v2164, %v2171
        %v2173 = vsel %vm2136, %v2090, -inf
        %v2174 = vmax.f32 %v2166, %v2173
        %v2175 = vsel %vm2136, %v2093, -inf
        %v2176 = vmax.f32 %v2168, %v2175
        %v2177 = vsel %vm2136, %v2098, -inf
        %v2178 = vmax.f32 %v2170, %v2177
        %v2179 = vsel %vm2136, %v2101, -inf
        %v2180 = vmax.f32 %v2172, %v2179
        %v2181 = vsel %vm2136, %v2106, -inf
        %v2182 = vmax.f32 %v2174, %v2181
        %v2183 = vsel %vm2136, %v2109, -inf
        %v2184 = vmax.f32 %v2176, %v2183
        %v2185 = vsel %vm2136, %v2114, -inf
        %v2186 = vmax.f32 %v2178, %v2185
        %v2187 = vsel %vm2136, %v2117, -inf
        %v2188 = vmax.f32 %v2180, %v2187
        %v2189 = vsel %vm2136, %v2122, -inf
        %v2190 = vmax.f32 %v2182, %v2189
        %v2191 = vsel %vm2136, %v2125, -inf
        %v2192 = vmax.f32 %v2184, %v2191
        %v2193 = vsel %vm2136, %v2130, -inf
        %v2194 = vmax.f32 %v2186, %v2193
        %v2195 = vsel %vm2136, %v2133, -inf
        %v2196 = vmax.f32 %v2188, %v2195
        %v2197 = vmax.f32 %v2190, %v2192
        %v2198 = vmax.f32 %v2194, %v2196
        %v2199 = vmax.f32 %v2197, %v2198
        %v2200 = vrot.slane %v2199, 4
        %v2201 = vmax.f32 %v2199, %v2200
        %v2202 = vrot.slane %v2201, 2
        %v2203 = vmax.f32 %v2201, %v2202
        %v2204 = vrot.slane %v2203, 1
        %v2205 = vmax.f32 %v2203, %v2204
        %v2206 = vsub.f32 %v2010, %v2205
        %v2207 = vsub.f32 %v2013, %v2205
        %v2208 = vsub.f32 %v2018, %v2205
        %v2209 = vsub.f32 %v2021, %v2205
        %v2210 = vsub.f32 %v2026, %v2205
        %v2211 = vsub.f32 %v2029, %v2205
        %v2212 = vsub.f32 %v2034, %v2205
        %v2213 = vsub.f32 %v2037, %v2205
        %v2214 = vsub.f32 %v2042, %v2205
        %v2215 = vsub.f32 %v2045, %v2205
        %v2216 = vsub.f32 %v2050, %v2205
        %v2217 = vsub.f32 %v2053, %v2205
        %v2218 = vsub.f32 %v2058, %v2205
        %v2219 = vsub.f32 %v2061, %v2205
        %v2220 = vsub.f32 %v2066, %v2205
        %v2221 = vsub.f32 %v2069, %v2205
        %v2222 = vsub.f32 %v2074, %v2205
        %v2223 = vsub.f32 %v2077, %v2205
        %v2224 = vsub.f32 %v2082, %v2205
        %v2225 = vsub.f32 %v2085, %v2205
        %v2226 = vsub.f32 %v2090, %v2205
        %v2227 = vsub.f32 %v2093, %v2205
        %v2228 = vsub.f32 %v2098, %v2205
        %v2229 = vsub.f32 %v2101, %v2205
        %v2230 = vsub.f32 %v2106, %v2205
        %v2231 = vsub.f32 %v2109, %v2205
        %v2232 = vsub.f32 %v2114, %v2205
        %v2233 = vsub.f32 %v2117, %v2205
        %v2234 = vsub.f32 %v2122, %v2205
        %v2235 = vsub.f32 %v2125, %v2205
        %v2236 = vsub.f32 %v2130, %v2205
        %v2237 = vsub.f32 %v2133, %v2205
        %v2238 = vmul.f32 %v2206, 1.442695
        %v2239 = vpow.pop %v2238
        %v2240 = vmul.f32 %v2207, 1.442695
        %v2241 = vpow.pop %v2240
        %v2242 = vmul.f32 %v2208, 1.442695
        %v2243 = vpow.pop %v2242
        %v2244 = vmul.f32 %v2209, 1.442695
        %v2245 = vpow.pop %v2244
        %v2246 = vmul.f32 %v2210, 1.442695
        %v2247 = vpow.pop %v2246
        %v2248 = vmul.f32 %v2211, 1.442695
        %v2249 = vpow.pop %v2248
        %v2250 = vmul.f32 %v2212, 1.442695
        %v2251 = vpow.pop %v2250
        %v2252 = vmul.f32 %v2213, 1.442695
        %v2253 = vpow.pop %v2252
        %v2254 = vmul.f32 %v2214, 1.442695
        %v2255 = vpow.pop %v2254
        %v2256 = vmul.f32 %v2215, 1.442695
        %v2257 = vpow.pop %v2256
        %v2258 = vmul.f32 %v2216, 1.442695
        %v2259 = vpow.pop %v2258
        %v2260 = vmul.f32 %v2217, 1.442695
        %v2261 = vpow.pop %v2260
        %v2262 = vmul.f32 %v2218, 1.442695
        %v2263 = vpow.pop %v2262
        %v2264 = vmul.f32 %v2219, 1.442695
        %v2265 = vpow.pop %v2264
        %v2266 = vmul.f32 %v2220, 1.442695
        %v2267 = vpow.pop %v2266
        %v2268 = vmul.f32 %v2221, 1.442695
        %v2269 = vpow.pop %v2268
        %v2270 = vmul.f32 %v2222, 1.442695
        %v2271 = vpow.pop %v2270
        %v2272 = vmul.f32 %v2223, 1.442695
        %v2273 = vpow.pop %v2272
        %v2274 = vmul.f32 %v2224, 1.442695
        %v2275 = vpow.pop %v2274
        %v2276 = vmul.f32 %v2225, 1.442695
        %v2277 = vpow.pop %v2276
        %v2278 = vmul.f32 %v2226, 1.442695
        %v2279 = vpow.pop %v2278
        %v2280 = vmul.f32 %v2227, 1.442695
        %v2281 = vpow.pop %v2280
        %v2282 = vmul.f32 %v2228, 1.442695
        %v2283 = vpow.pop %v2282
        %v2284 = vmul.f32 %v2229, 1.442695
        %v2285 = vpow.pop %v2284
        %v2286 = vmul.f32 %v2230, 1.442695
        %v2287 = vpow.pop %v2286
        %v2288 = vmul.f32 %v2231, 1.442695
        %v2289 = vpow.pop %v2288
        %v2290 = vmul.f32 %v2232, 1.442695
        %v2291 = vpow.pop %v2290
        %v2292 = vmul.f32 %v2233, 1.442695
        %v2293 = vpow.pop %v2292
        %v2294 = vmul.f32 %v2234, 1.442695
        %v2295 = vpow.pop %v2294
        %v2296 = vmul.f32 %v2235, 1.442695
        %v2297 = vpow.pop %v2296
        %v2298 = vmul.f32 %v2236, 1.442695
        %v2299 = vpow.pop %v2298
        %v2300 = vmul.f32 %v2237, 1.442695
        %v2301 = vpow.pop %v2300
        %v2302 = vsel %vm2136, %v2239, 0.0
        %v2303 = vsel %vm2136, %v2241, 0.0
        %v2304 = vadd.f32 %v2302, %v2303
        %v2305 = vsel %vm2136, %v2243, 0.0
        %v2306 = vadd.f32 %v2304, %v2305
        %v2307 = vsel %vm2136, %v2245, 0.0
        %v2308 = vadd.f32 %v2306, %v2307
        %v2309 = vsel %vm2136, %v2247, 0.0
        %v2310 = vadd.f32 %v2308, %v2309
        %v2311 = vsel %vm2136, %v2249, 0.0
        %v2312 = vadd.f32 %v2310, %v2311
        %v2313 = vsel %vm2136, %v2251, 0.0
        %v2314 = vadd.f32 %v2312, %v2313
        %v2315 = vsel %vm2136, %v2253, 0.0
        %v2316 = vadd.f32 %v2314, %v2315
        %v2317 = vsel %vm2136, %v2255, 0.0
        %v2318 = vadd.f32 %v2316, %v2317
        %v2319 = vsel %vm2136, %v2257, 0.0
        %v2320 = vadd.f32 %v2318, %v2319
        %v2321 = vsel %vm2136, %v2259, 0.0
        %v2322 = vadd.f32 %v2320, %v2321
        %v2323 = vsel %vm2136, %v2261, 0.0
        %v2324 = vadd.f32 %v2322, %v2323
        %v2325 = vsel %vm2136, %v2263, 0.0
        %v2326 = vadd.f32 %v2324, %v2325
        %v2327 = vsel %vm2136, %v2265, 0.0
        %v2328 = vadd.f32 %v2326, %v2327
        %v2329 = vsel %vm2136, %v2267, 0.0
        %v2330 = vadd.f32 %v2328, %v2329
        %v2331 = vsel %vm2136, %v2269, 0.0
        %v2332 = vadd.f32 %v2330, %v2331
        %v2333 = vsel %vm2136, %v2271, 0.0
        %v2334 = vadd.f32 %v2332, %v2333
        %v2335 = vsel %vm2136, %v2273, 0.0
        %v2336 = vadd.f32 %v2334, %v2335
        %v2337 = vsel %vm2136, %v2275, 0.0
        %v2338 = vadd.f32 %v2336, %v2337
        %v2339 = vsel %vm2136, %v2277, 0.0
        %v2340 = vadd.f32 %v2338, %v2339
        %v2341 = vsel %vm2136, %v2279, 0.0
        %v2342 = vadd.f32 %v2340, %v2341
        %v2343 = vsel %vm2136, %v2281, 0.0
        %v2344 = vadd.f32 %v2342, %v2343
        %v2345 = vsel %vm2136, %v2283, 0.0
        %v2346 = vadd.f32 %v2344, %v2345
        %v2347 = vsel %vm2136, %v2285, 0.0
        %v2348 = vadd.f32 %v2346, %v2347
        %v2349 = vsel %vm2136, %v2287, 0.0
        %v2350 = vadd.f32 %v2348, %v2349
        %v2351 = vsel %vm2136, %v2289, 0.0
        %v2352 = vadd.f32 %v2350, %v2351
        %v2353 = vsel %vm2136, %v2291, 0.0
        %v2354 = vadd.f32 %v2352, %v2353
        %v2355 = vsel %vm2136, %v2293, 0.0
        %v2356 = vadd.f32 %v2354, %v2355
        %v2357 = vsel %vm2136, %v2295, 0.0
        %v2358 = vadd.f32 %v2356, %v2357
        %v2359 = vsel %vm2136, %v2297, 0.0
        %v2360 = vadd.f32 %v2358, %v2359
        %v2361 = vsel %vm2136, %v2299, 0.0
        %v2362 = vadd.f32 %v2360, %v2361
        %v2363 = vsel %vm2136, %v2301, 0.0
        %v2364 = vadd.f32 %v2362, %v2363
        %v2365 = vrot.slane %v2364, 4
        %v2366 = vadd.f32 %v2364, %v2365
        %v2367 = vrot.slane %v2366, 2
        %v2368 = vadd.f32 %v2366, %v2367
        %v2369 = vrot.slane %v2368, 1
        %v2370 = vadd.f32 %v2368, %v2369
        %v2371 = vrcp.pop %v2370
        %v2372 = vmul.f32 %v2239, %v2371
        %v2373 = vmul.f32 %v2241, %v2371
        %v2374 = vmul.f32 %v2243, %v2371
        %v2375 = vmul.f32 %v2245, %v2371
        %v2376 = vmul.f32 %v2247, %v2371
        %v2377 = vmul.f32 %v2249, %v2371
        %v2378 = vmul.f32 %v2251, %v2371
        %v2379 = vmul.f32 %v2253, %v2371
        %v2380 = vmul.f32 %v2255, %v2371
        %v2381 = vmul.f32 %v2257, %v2371
        %v2382 = vmul.f32 %v2259, %v2371
        %v2383 = vmul.f32 %v2261, %v2371
        %v2384 = vmul.f32 %v2263, %v2371
        %v2385 = vmul.f32 %v2265, %v2371
        %v2386 = vmul.f32 %v2267, %v2371
        %v2387 = vmul.f32 %v2269, %v2371
        %v2388 = vmul.f32 %v2271, %v2371
        %v2389 = vmul.f32 %v2273, %v2371
        %v2390 = vmul.f32 %v2275, %v2371
        %v2391 = vmul.f32 %v2277, %v2371
        %v2392 = vmul.f32 %v2279, %v2371
        %v2393 = vmul.f32 %v2281, %v2371
        %v2394 = vmul.f32 %v2283, %v2371
        %v2395 = vmul.f32 %v2285, %v2371
        %v2396 = vmul.f32 %v2287, %v2371
        %v2397 = vmul.f32 %v2289, %v2371
        %v2398 = vmul.f32 %v2291, %v2371
        %v2399 = vmul.f32 %v2293, %v2371
        %v2400 = vmul.f32 %v2295, %v2371
        %v2401 = vmul.f32 %v2297, %v2371
        %v2402 = vmul.f32 %v2299, %v2371
        %v2403 = vmul.f32 %v2301, %v2371
        %v2404 = vpack.c.bf16 %v2373, %v2372
        %v2405 = vpack.c.bf16 %v2375, %v2374
        %v2406 = vpack.c.bf16 %v2377, %v2376
        %v2407 = vpack.c.bf16 %v2379, %v2378
        %v2408 = vpack.c.bf16 %v2381, %v2380
        %v2409 = vpack.c.bf16 %v2383, %v2382
        %v2410 = vpack.c.bf16 %v2385, %v2384
        %v2411 = vpack.c.bf16 %v2387, %v2386
        %v2412 = vpack.c.bf16 %v2389, %v2388
        %v2413 = vpack.c.bf16 %v2391, %v2390
        %v2414 = vpack.c.bf16 %v2393, %v2392
        %v2415 = vpack.c.bf16 %v2395, %v2394
        %v2416 = vpack.c.bf16 %v2397, %v2396
        %v2417 = vpack.c.bf16 %v2399, %v2398
        %v2418 = vpack.c.bf16 %v2401, %v2400
        %v2419 = vpack.c.bf16 %v2403, %v2402
        %s2420 = smul.addr %s1951, 8
        %s2421 = scalar_lea.vmem [#allocation4], %s2420
        %v2422 = vld [vmem:[%s2421] sm:$0xff]
        %v2423 = vld [vmem:[%s2421 + $0x8] sm:$0xff]
        %v2424 = vld [vmem:[%s2421 + $0x10] sm:$0xff]
        %v2425 = vld [vmem:[%s2421 + $0x18] sm:$0xff]
        %v2427 = vsel %vm2136, %v2404, 0
        %v2430 = vsel %vm2136, %v2405, 0
        %v2433 = vsel %vm2136, %v2406, 0
        %v2436 = vsel %vm2136, %v2407, 0
        %v2439 = vsel %vm2136, %v2408, 0
        %v2442 = vsel %vm2136, %v2409, 0
        %v2445 = vsel %vm2136, %v2410, 0
        %v2448 = vsel %vm2136, %v2411, 0
        %v2451 = vsel %vm2136, %v2412, 0
        %v2454 = vsel %vm2136, %v2413, 0
        %v2457 = vsel %vm2136, %v2414, 0
        %v2460 = vsel %vm2136, %v2415, 0
        %v2463 = vsel %vm2136, %v2416, 0
        %v2466 = vsel %vm2136, %v2417, 0
        %v2469 = vsel %vm2136, %v2418, 0
        %v2472 = vsel %vm2136, %v2419, 0
        %2474 = vmatprep.subr.bf16.mxu0 0
        %2475 = vmatpush1.bf16.msra.mxu0 %v2422
        %2476 = vmatprep.subr.bf16.mxu0 0
        %2477 = vmatpush1.bf16.msra.mxu0 %v2423
        %2478 = vmatprep.subr.bf16.mxu0 0
        %2479 = vmatpush1.bf16.msra.mxu0 %v2424
        %2480 = vmatprep.subr.bf16.mxu0 0
        %2481 = vmatpush1.bf16.msra.mxu0 %v2425
        %2482 = vmatprep.subr.bf16.mxu0 0
        %2483 = vmatpush1.bf16.msra.mxu0 0
        %2484 = vmatprep.subr.bf16.mxu0 0
        %2485 = vmatpush1.bf16.msra.mxu0 0
        %2486 = vmatprep.subr.bf16.mxu0 0
        %2487 = vmatpush1.bf16.msra.mxu0 0
        %2488 = vmatprep.subr.bf16.mxu0 0
        %2489 = vmatpush1.bf16.msra.mxu0 0
        %2490 = vmatprep.subr.bf16.mxu0 0
        %2491 = vmatpush1.bf16.msra.mxu0 0
        %2492 = vmatprep.subr.bf16.mxu0 0
        %2493 = vmatpush1.bf16.msra.mxu0 0
        %2494 = vmatprep.subr.bf16.mxu0 0
        %2495 = vmatpush1.bf16.msra.mxu0 0
        %2496 = vmatprep.subr.bf16.mxu0 0
        %2497 = vmatpush1.bf16.msra.mxu0 0
        %2498 = vmatprep.subr.bf16.mxu0 0
        %2499 = vmatpush1.bf16.msra.mxu0 0
        %2500 = vmatprep.subr.bf16.mxu0 0
        %2501 = vmatpush1.bf16.msra.mxu0 0
        %2502 = vmatprep.subr.bf16.mxu0 0
        %2503 = vmatpush1.bf16.msra.mxu0 0
        %2504 = vmatprep.subr.bf16.mxu0 0
        %2505 = vmatpush1.bf16.msra.mxu0 0
        %2506 = vmatprep.mubr.bf16.mxu0 0
        %2507 = vmatmul.mubr.bf16.gmra.mrb[0].mxu0 %v2427
        %v2508 = vpop.f32.mrb[0].mxu0
        %v2509 = vadd.f32 0.0, %v2508
        %v2510 = vpop.f32.mrb[0].mxu0
        %v2511 = vpop.f32.mrb[0].mxu0
        %v2512 = vadd.f32 0.0, %v2511
        %v2513 = vpop.f32.mrb[0].mxu0
        %2514 = vmatprep.mubr.bf16.mxu0 0
        %2515 = vmatmul.mubr.bf16.gmra.mrb[0].mxu0 %v2430
        %v2516 = vpop.f32.mrb[0].mxu0
        %v2517 = vadd.f32 0.0, %v2516
        %v2518 = vpop.f32.mrb[0].mxu0
        %v2519 = vpop.f32.mrb[0].mxu0
        %v2520 = vadd.f32 0.0, %v2519
        %v2521 = vpop.f32.mrb[0].mxu0
        %2522 = vmatprep.mubr.bf16.mxu0 0
        %2523 = vmatmul.mubr.bf16.gmra.mrb[0].mxu0 %v2433
        %v2524 = vpop.f32.mrb[0].mxu0
        %v2525 = vadd.f32 0.0, %v2524
        %v2526 = vpop.f32.mrb[0].mxu0
        %v2527 = vpop.f32.mrb[0].mxu0
        %v2528 = vadd.f32 0.0, %v2527
        %v2529 = vpop.f32.mrb[0].mxu0
        %2530 = vmatprep.mubr.bf16.mxu0 0
        %2531 = vmatmul.mubr.bf16.gmra.mrb[0].mxu0 %v2436
        %v2532 = vpop.f32.mrb[0].mxu0
        %v2533 = vadd.f32 0.0, %v2532
        %v2534 = vpop.f32.mrb[0].mxu0
        %v2535 = vpop.f32.mrb[0].mxu0
        %v2536 = vadd.f32 0.0, %v2535
        %v2537 = vpop.f32.mrb[0].mxu0
        %2538 = vmatprep.mubr.bf16.mxu0 0
        %2539 = vmatmul.mubr.bf16.gmra.mrb[0].mxu0 %v2439
        %v2540 = vpop.f32.mrb[0].mxu0
        %v2541 = vadd.f32 0.0, %v2540
        %v2542 = vpop.f32.mrb[0].mxu0
        %v2543 = vpop.f32.mrb[0].mxu0
        %v2544 = vadd.f32 0.0, %v2543
        %v2545 = vpop.f32.mrb[0].mxu0
        %2546 = vmatprep.mubr.bf16.mxu0 0
        %2547 = vmatmul.mubr.bf16.gmra.mrb[0].mxu0 %v2442
        %v2548 = vpop.f32.mrb[0].mxu0
        %v2549 = vadd.f32 0.0, %v2548
        %v2550 = vpop.f32.mrb[0].mxu0
        %v2551 = vpop.f32.mrb[0].mxu0
        %v2552 = vadd.f32 0.0, %v2551
        %v2553 = vpop.f32.mrb[0].mxu0
        %2554 = vmatprep.mubr.bf16.mxu0 0
        %2555 = vmatmul.mubr.bf16.gmra.mrb[0].mxu0 %v2445
        %v2556 = vpop.f32.mrb[0].mxu0
        %v2557 = vadd.f32 0.0, %v2556
        %v2558 = vpop.f32.mrb[0].mxu0
        %v2559 = vpop.f32.mrb[0].mxu0
        %v2560 = vadd.f32 0.0, %v2559
        %v2561 = vpop.f32.mrb[0].mxu0
        %2562 = vmatprep.mubr.bf16.mxu0 0
        %2563 = vmatmul.mubr.bf16.gmra.mrb[0].mxu0 %v2448
        %v2564 = vpop.f32.mrb[0].mxu0
        %v2565 = vadd.f32 0.0, %v2564
        %v2566 = vpop.f32.mrb[0].mxu0
        %v2567 = vpop.f32.mrb[0].mxu0
        %v2568 = vadd.f32 0.0, %v2567
        %v2569 = vpop.f32.mrb[0].mxu0
        %2570 = vmatprep.mubr.bf16.mxu0 0
        %2571 = vmatmul.mubr.bf16.gmra.mrb[0].mxu0 %v2451
        %v2572 = vpop.f32.mrb[0].mxu0
        %v2573 = vadd.f32 0.0, %v2572
        %v2574 = vpop.f32.mrb[0].mxu0
        %v2575 = vpop.f32.mrb[0].mxu0
        %v2576 = vadd.f32 0.0, %v2575
        %v2577 = vpop.f32.mrb[0].mxu0
        %2578 = vmatprep.mubr.bf16.mxu0 0
        %2579 = vmatmul.mubr.bf16.gmra.mrb[0].mxu0 %v2454
        %v2580 = vpop.f32.mrb[0].mxu0
        %v2581 = vadd.f32 0.0, %v2580
        %v2582 = vpop.f32.mrb[0].mxu0
        %v2583 = vpop.f32.mrb[0].mxu0
        %v2584 = vadd.f32 0.0, %v2583
        %v2585 = vpop.f32.mrb[0].mxu0
        %2586 = vmatprep.mubr.bf16.mxu0 0
        %2587 = vmatmul.mubr.bf16.gmra.mrb[0].mxu0 %v2457
        %v2588 = vpop.f32.mrb[0].mxu0
        %v2589 = vadd.f32 0.0, %v2588
        %v2590 = vpop.f32.mrb[0].mxu0
        %v2591 = vpop.f32.mrb[0].mxu0
        %v2592 = vadd.f32 0.0, %v2591
        %v2593 = vpop.f32.mrb[0].mxu0
        %2594 = vmatprep.mubr.bf16.mxu0 0
        %2595 = vmatmul.mubr.bf16.gmra.mrb[0].mxu0 %v2460
        %v2596 = vpop.f32.mrb[0].mxu0
        %v2597 = vadd.f32 0.0, %v2596
        %v2598 = vpop.f32.mrb[0].mxu0
        %v2599 = vpop.f32.mrb[0].mxu0
        %v2600 = vadd.f32 0.0, %v2599
        %v2601 = vpop.f32.mrb[0].mxu0
        %2602 = vmatprep.mubr.bf16.mxu0 0
        %2603 = vmatmul.mubr.bf16.gmra.mrb[0].mxu0 %v2463
        %v2604 = vpop.f32.mrb[0].mxu0
        %v2605 = vadd.f32 0.0, %v2604
        %v2606 = vpop.f32.mrb[0].mxu0
        %v2607 = vpop.f32.mrb[0].mxu0
        %v2608 = vadd.f32 0.0, %v2607
        %v2609 = vpop.f32.mrb[0].mxu0
        %2610 = vmatprep.mubr.bf16.mxu0 0
        %2611 = vmatmul.mubr.bf16.gmra.mrb[0].mxu0 %v2466
        %v2612 = vpop.f32.mrb[0].mxu0
        %v2613 = vadd.f32 0.0, %v2612
        %v2614 = vpop.f32.mrb[0].mxu0
        %v2615 = vpop.f32.mrb[0].mxu0
        %v2616 = vadd.f32 0.0, %v2615
        %v2617 = vpop.f32.mrb[0].mxu0
        %2618 = vmatprep.mubr.bf16.mxu0 0
        %2619 = vmatmul.mubr.bf16.gmra.mrb[0].mxu0 %v2469
        %v2620 = vpop.f32.mrb[0].mxu0
        %v2621 = vadd.f32 0.0, %v2620
        %v2622 = vpop.f32.mrb[0].mxu0
        %v2623 = vpop.f32.mrb[0].mxu0
        %v2624 = vadd.f32 0.0, %v2623
        %v2625 = vpop.f32.mrb[0].mxu0
        %2626 = vmatprep.mubr.bf16.mxu0 0
        %2627 = vmatmul.mubr.bf16.gmra.mrb[0].mxu0 %v2472
        %v2628 = vpop.f32.mrb[0].mxu0
        %v2629 = vadd.f32 0.0, %v2628
        %v2630 = vpop.f32.mrb[0].mxu0
        %v2631 = vpop.f32.mrb[0].mxu0
        %v2632 = vadd.f32 0.0, %v2631
        %v2633 = vpop.f32.mrb[0].mxu0
        %2634 = vdwg.mxu0
        // Predicated region
        $region101: #{tpu_custom_call.1} parent=71 // pred_check
          %p2635 = pneg %p539
        $region102: #{tpu_custom_call.1} parent=71 // pred_check_branch
          %2637 = sbr.rel (%p2635) target = $region104
        $region103: #{tpu_custom_call.1} parent=71 // pred_region
          %2638 = vst [vmem:[%s537] sm:$0xff] %v2509
          %2639 = vst [vmem:[%s537 + $0x8] sm:$0xff] %v2512
          %2640 = vst [vmem:[%s537 + $0x10] sm:$0xff] %v2517
          %2641 = vst [vmem:[%s537 + $0x18] sm:$0xff] %v2520
          %2642 = vst [vmem:[%s537 + $0x20] sm:$0xff] %v2525
          %2643 = vst [vmem:[%s537 + $0x28] sm:$0xff] %v2528
          %2644 = vst [vmem:[%s537 + $0x30] sm:$0xff] %v2533
          %2645 = vst [vmem:[%s537 + $0x38] sm:$0xff] %v2536
          %2646 = vst [vmem:[%s537 + $0x40] sm:$0xff] %v2541
          %2647 = vst [vmem:[%s537 + $0x48] sm:$0xff] %v2544
          %2648 = vst [vmem:[%s537 + $0x50] sm:$0xff] %v2549
          %2649 = vst [vmem:[%s537 + $0x58] sm:$0xff] %v2552
          %2650 = vst [vmem:[%s537 + $0x60] sm:$0xff] %v2557
          %2651 = vst [vmem:[%s537 + $0x68] sm:$0xff] %v2560
          %2652 = vst [vmem:[%s537 + $0x70] sm:$0xff] %v2565
          %2653 = vst [vmem:[%s537 + $0x78] sm:$0xff] %v2568
          %2654 = vst [vmem:[%s537 + $0x80] sm:$0xff] %v2573
          %2655 = vst [vmem:[%s537 + $0x88] sm:$0xff] %v2576
          %2656 = vst [vmem:[%s537 + $0x90] sm:$0xff] %v2581
          %2657 = vst [vmem:[%s537 + $0x98] sm:$0xff] %v2584
          %2658 = vst [vmem:[%s537 + $0xa0] sm:$0xff] %v2589
          %2659 = vst [vmem:[%s537 + $0xa8] sm:$0xff] %v2592
          %2660 = vst [vmem:[%s537 + $0xb0] sm:$0xff] %v2597
          %2661 = vst [vmem:[%s537 + $0xb8] sm:$0xff] %v2600
          %2662 = vst [vmem:[%s537 + $0xc0] sm:$0xff] %v2605
          %2663 = vst [vmem:[%s537 + $0xc8] sm:$0xff] %v2608
          %2664 = vst [vmem:[%s537 + $0xd0] sm:$0xff] %v2613
          %2665 = vst [vmem:[%s537 + $0xd8] sm:$0xff] %v2616
          %2666 = vst [vmem:[%s537 + $0xe0] sm:$0xff] %v2621
          %2667 = vst [vmem:[%s537 + $0xe8] sm:$0xff] %v2624
          %2668 = vst [vmem:[%s537 + $0xf0] sm:$0xff] %v2629
          %2669 = vst [vmem:[%s537 + $0xf8] sm:$0xff] %v2632
        $region104: #{tpu_custom_call.1} parent=71 // pred_fallthru
          _
        %p2670 = scmp.gt.s32.totalorder %s38, 0
        // Predicated region
        $region105: #{tpu_custom_call.1} parent=71 // pred_check
          %p2671 = pneg %p2670
        $region106: #{tpu_custom_call.1} parent=71 // pred_check_branch
          %2673 = sbr.rel (%p2671) target = $region108
        $region107: #{tpu_custom_call.1} parent=71 // pred_region
          %v2674 = vld [vmem:[%s537] sm:$0xff]
          %v2675 = vld [vmem:[%s537 + $0x8] sm:$0xff]
          %v2676 = vld [vmem:[%s537 + $0x10] sm:$0xff]
          %v2677 = vld [vmem:[%s537 + $0x18] sm:$0xff]
          %v2678 = vld [vmem:[%s537 + $0x20] sm:$0xff]
          %v2679 = vld [vmem:[%s537 + $0x28] sm:$0xff]
          %v2680 = vld [vmem:[%s537 + $0x30] sm:$0xff]
          %v2681 = vld [vmem:[%s537 + $0x38] sm:$0xff]
          %v2682 = vld [vmem:[%s537 + $0x40] sm:$0xff]
          %v2683 = vld [vmem:[%s537 + $0x48] sm:$0xff]
          %v2684 = vld [vmem:[%s537 + $0x50] sm:$0xff]
          %v2685 = vld [vmem:[%s537 + $0x58] sm:$0xff]
          %v2686 = vld [vmem:[%s537 + $0x60] sm:$0xff]
          %v2687 = vld [vmem:[%s537 + $0x68] sm:$0xff]
          %v2688 = vld [vmem:[%s537 + $0x70] sm:$0xff]
          %v2689 = vld [vmem:[%s537 + $0x78] sm:$0xff]
          %v2690 = vld [vmem:[%s537 + $0x80] sm:$0xff]
          %v2691 = vld [vmem:[%s537 + $0x88] sm:$0xff]
          %v2692 = vld [vmem:[%s537 + $0x90] sm:$0xff]
          %v2693 = vld [vmem:[%s537 + $0x98] sm:$0xff]
          %v2694 = vld [vmem:[%s537 + $0xa0] sm:$0xff]
          %v2695 = vld [vmem:[%s537 + $0xa8] sm:$0xff]
          %v2696 = vld [vmem:[%s537 + $0xb0] sm:$0xff]
          %v2697 = vld [vmem:[%s537 + $0xb8] sm:$0xff]
          %v2698 = vld [vmem:[%s537 + $0xc0] sm:$0xff]
          %v2699 = vld [vmem:[%s537 + $0xc8] sm:$0xff]
          %v2700 = vld [vmem:[%s537 + $0xd0] sm:$0xff]
          %v2701 = vld [vmem:[%s537 + $0xd8] sm:$0xff]
          %v2702 = vld [vmem:[%s537 + $0xe0] sm:$0xff]
          %v2703 = vld [vmem:[%s537 + $0xe8] sm:$0xff]
          %v2704 = vld [vmem:[%s537 + $0xf0] sm:$0xff]
          %v2705 = vld [vmem:[%s537 + $0xf8] sm:$0xff]
          %v2706 = vadd.f32 %v2674, %v2509
          %v2707 = vadd.f32 %v2675, %v2512
          %v2708 = vadd.f32 %v2676, %v2517
          %v2709 = vadd.f32 %v2677, %v2520
          %v2710 = vadd.f32 %v2678, %v2525
          %v2711 = vadd.f32 %v2679, %v2528
          %v2712 = vadd.f32 %v2680, %v2533
          %v2713 = vadd.f32 %v2681, %v2536
          %v2714 = vadd.f32 %v2682, %v2541
          %v2715 = vadd.f32 %v2683, %v2544
          %v2716 = vadd.f32 %v2684, %v2549
          %v2717 = vadd.f32 %v2685, %v2552
          %v2718 = vadd.f32 %v2686, %v2557
          %v2719 = vadd.f32 %v2687, %v2560
          %v2720 = vadd.f32 %v2688, %v2565
          %v2721 = vadd.f32 %v2689, %v2568
          %v2722 = vadd.f32 %v2690, %v2573
          %v2723 = vadd.f32 %v2691, %v2576
          %v2724 = vadd.f32 %v2692, %v2581
          %v2725 = vadd.f32 %v2693, %v2584
          %v2726 = vadd.f32 %v2694, %v2589
          %v2727 = vadd.f32 %v2695, %v2592
          %v2728 = vadd.f32 %v2696, %v2597
          %v2729 = vadd.f32 %v2697, %v2600
          %v2730 = vadd.f32 %v2698, %v2605
          %v2731 = vadd.f32 %v2699, %v2608
          %v2732 = vadd.f32 %v2700, %v2613
          %v2733 = vadd.f32 %v2701, %v2616
          %v2734 = vadd.f32 %v2702, %v2621
          %v2735 = vadd.f32 %v2703, %v2624
          %v2736 = vadd.f32 %v2704, %v2629
          %v2737 = vadd.f32 %v2705, %v2632
          %2738 = vst [vmem:[%s537] sm:$0xff] %v2706
          %2739 = vst [vmem:[%s537 + $0x8] sm:$0xff] %v2707
          %2740 = vst [vmem:[%s537 + $0x10] sm:$0xff] %v2708
          %2741 = vst [vmem:[%s537 + $0x18] sm:$0xff] %v2709
          %2742 = vst [vmem:[%s537 + $0x20] sm:$0xff] %v2710
          %2743 = vst [vmem:[%s537 + $0x28] sm:$0xff] %v2711
          %2744 = vst [vmem:[%s537 + $0x30] sm:$0xff] %v2712
          %2745 = vst [vmem:[%s537 + $0x38] sm:$0xff] %v2713
          %2746 = vst [vmem:[%s537 + $0x40] sm:$0xff] %v2714
          %2747 = vst [vmem:[%s537 + $0x48] sm:$0xff] %v2715
          %2748 = vst [vmem:[%s537 + $0x50] sm:$0xff] %v2716
          %2749 = vst [vmem:[%s537 + $0x58] sm:$0xff] %v2717
          %2750 = vst [vmem:[%s537 + $0x60] sm:$0xff] %v2718
          %2751 = vst [vmem:[%s537 + $0x68] sm:$0xff] %v2719
          %2752 = vst [vmem:[%s537 + $0x70] sm:$0xff] %v2720
          %2753 = vst [vmem:[%s537 + $0x78] sm:$0xff] %v2721
          %2754 = vst [vmem:[%s537 + $0x80] sm:$0xff] %v2722
          %2755 = vst [vmem:[%s537 + $0x88] sm:$0xff] %v2723
          %2756 = vst [vmem:[%s537 + $0x90] sm:$0xff] %v2724
          %2757 = vst [vmem:[%s537 + $0x98] sm:$0xff] %v2725
          %2758 = vst [vmem:[%s537 + $0xa0] sm:$0xff] %v2726
          %2759 = vst [vmem:[%s537 + $0xa8] sm:$0xff] %v2727
          %2760 = vst [vmem:[%s537 + $0xb0] sm:$0xff] %v2728
          %2761 = vst [vmem:[%s537 + $0xb8] sm:$0xff] %v2729
          %2762 = vst [vmem:[%s537 + $0xc0] sm:$0xff] %v2730
          %2763 = vst [vmem:[%s537 + $0xc8] sm:$0xff] %v2731
          %2764 = vst [vmem:[%s537 + $0xd0] sm:$0xff] %v2732
          %2765 = vst [vmem:[%s537 + $0xd8] sm:$0xff] %v2733
          %2766 = vst [vmem:[%s537 + $0xe0] sm:$0xff] %v2734
          %2767 = vst [vmem:[%s537 + $0xe8] sm:$0xff] %v2735
          %2768 = vst [vmem:[%s537 + $0xf0] sm:$0xff] %v2736
          %2769 = vst [vmem:[%s537 + $0xf8] sm:$0xff] %v2737
        $region108: #{tpu_custom_call.1} parent=71 // pred_fallthru
          _
        %p2770 = scmp.eq.s32.totalorder %s38, 3
        // Predicated region
        $region109: #{tpu_custom_call.1} parent=71 // pred_check
          %p2771 = pneg %p2770
        $region110: #{tpu_custom_call.1} parent=71 // pred_check_branch
          %2773 = sbr.rel (%p2771) target = $region112
        $region111: #{tpu_custom_call.1} parent=71 // pred_region
          %v2774 = vld [vmem:[%s537] sm:$0xff]
          %v2775 = vld [vmem:[%s537 + $0x8] sm:$0xff]
          %v2776 = vld [vmem:[%s537 + $0x10] sm:$0xff]
          %v2777 = vld [vmem:[%s537 + $0x18] sm:$0xff]
          %v2778 = vld [vmem:[%s537 + $0x20] sm:$0xff]
          %v2779 = vld [vmem:[%s537 + $0x28] sm:$0xff]
          %v2780 = vld [vmem:[%s537 + $0x30] sm:$0xff]
          %v2781 = vld [vmem:[%s537 + $0x38] sm:$0xff]
          %v2782 = vld [vmem:[%s537 + $0x40] sm:$0xff]
          %v2783 = vld [vmem:[%s537 + $0x48] sm:$0xff]
          %v2784 = vld [vmem:[%s537 + $0x50] sm:$0xff]
          %v2785 = vld [vmem:[%s537 + $0x58] sm:$0xff]
          %v2786 = vld [vmem:[%s537 + $0x60] sm:$0xff]
          %v2787 = vld [vmem:[%s537 + $0x68] sm:$0xff]
          %v2788 = vld [vmem:[%s537 + $0x70] sm:$0xff]
          %v2789 = vld [vmem:[%s537 + $0x78] sm:$0xff]
          %v2790 = vld [vmem:[%s537 + $0x80] sm:$0xff]
          %v2791 = vld [vmem:[%s537 + $0x88] sm:$0xff]
          %v2792 = vld [vmem:[%s537 + $0x90] sm:$0xff]
          %v2793 = vld [vmem:[%s537 + $0x98] sm:$0xff]
          %v2794 = vld [vmem:[%s537 + $0xa0] sm:$0xff]
          %v2795 = vld [vmem:[%s537 + $0xa8] sm:$0xff]
          %v2796 = vld [vmem:[%s537 + $0xb0] sm:$0xff]
          %v2797 = vld [vmem:[%s537 + $0xb8] sm:$0xff]
          %v2798 = vld [vmem:[%s537 + $0xc0] sm:$0xff]
          %v2799 = vld [vmem:[%s537 + $0xc8] sm:$0xff]
          %v2800 = vld [vmem:[%s537 + $0xd0] sm:$0xff]
          %v2801 = vld [vmem:[%s537 + $0xd8] sm:$0xff]
          %v2802 = vld [vmem:[%s537 + $0xe0] sm:$0xff]
          %v2803 = vld [vmem:[%s537 + $0xe8] sm:$0xff]
          %v2804 = vld [vmem:[%s537 + $0xf0] sm:$0xff]
          %v2805 = vld [vmem:[%s537 + $0xf8] sm:$0xff]
          %v2806 = vpack.c.bf16 %v2775, %v2774
          %v2807 = vpack.c.bf16 %v2777, %v2776
          %v2808 = vpack.c.bf16 %v2779, %v2778
          %v2809 = vpack.c.bf16 %v2781, %v2780
          %v2810 = vpack.c.bf16 %v2783, %v2782
          %v2811 = vpack.c.bf16 %v2785, %v2784
          %v2812 = vpack.c.bf16 %v2787, %v2786
          %v2813 = vpack.c.bf16 %v2789, %v2788
          %v2814 = vpack.c.bf16 %v2791, %v2790
          %v2815 = vpack.c.bf16 %v2793, %v2792
          %v2816 = vpack.c.bf16 %v2795, %v2794
          %v2817 = vpack.c.bf16 %v2797, %v2796
          %v2818 = vpack.c.bf16 %v2799, %v2798
          %v2819 = vpack.c.bf16 %v2801, %v2800
          %v2820 = vpack.c.bf16 %v2803, %v2802
          %v2821 = vpack.c.bf16 %v2805, %v2804
          %v2822 = vld [vmem:[%s9] sm:$0xf]
          %v2823 = vld [vmem:[%s9 + $0x4] sm:$0xf]
          %v2824 = vld [vmem:[%s9 + $0x8] sm:$0xf]
          %v2825 = vld [vmem:[%s9 + $0xc] sm:$0xf]
          %v2826 = vld [vmem:[%s9 + $0x10] sm:$0xf]
          %v2827 = vld [vmem:[%s9 + $0x14] sm:$0xf]
          %v2828 = vld [vmem:[%s9 + $0x18] sm:$0xf]
          %v2829 = vld [vmem:[%s9 + $0x1c] sm:$0xf]
          %v2830 = vld [vmem:[%s9 + $0x20] sm:$0xf]
          %v2831 = vld [vmem:[%s9 + $0x24] sm:$0xf]
          %v2832 = vld [vmem:[%s9 + $0x28] sm:$0xf]
          %v2833 = vld [vmem:[%s9 + $0x2c] sm:$0xf]
          %v2834 = vld [vmem:[%s9 + $0x30] sm:$0xf]
          %v2835 = vld [vmem:[%s9 + $0x34] sm:$0xf]
          %v2836 = vld [vmem:[%s9 + $0x38] sm:$0xf]
          %v2837 = vld [vmem:[%s9 + $0x3c] sm:$0xf]
          %v2838 = vld [vmem:[%s10] sm:$0x1]
          %v2840 = vlaneseq
          %v2841 = vshrl.u32 %v2840, 7
          %v2842 = vsub.s32 0, %v2841
          %v2843 = vrot.slane %v2838, %v2842
          %v2861 = vunpack.c.l.b16 %v2822
          %v2862 = vunpack.c.l.b16 %v2823
          %v2863 = vunpack.c.l.b16 %v2824
          %v2864 = vunpack.c.l.b16 %v2825
          %v2865 = vunpack.c.l.b16 %v2826
          %v2866 = vunpack.c.l.b16 %v2827
          %v2867 = vunpack.c.l.b16 %v2828
          %v2868 = vunpack.c.l.b16 %v2829
          %v2869 = vunpack.c.l.b16 %v2830
          %v2870 = vunpack.c.l.b16 %v2831
          %v2871 = vunpack.c.l.b16 %v2832
          %v2872 = vunpack.c.l.b16 %v2833
          %v2873 = vunpack.c.l.b16 %v2834
          %v2874 = vunpack.c.l.b16 %v2835
          %v2875 = vunpack.c.l.b16 %v2836
          %v2876 = vunpack.c.l.b16 %v2837
          %v2877 = vpack.c.b16 %v2862, %v2861
          %v2878 = vpack.c.b16 %v2864, %v2863
          %v2879 = vpack.c.b16 %v2866, %v2865
          %v2880 = vpack.c.b16 %v2868, %v2867
          %v2881 = vpack.c.b16 %v2870, %v2869
          %v2882 = vpack.c.b16 %v2872, %v2871
          %v2883 = vpack.c.b16 %v2874, %v2873
          %v2884 = vpack.c.b16 %v2876, %v2875
          %2893 = vmatprep.subr.bf16.mxu0 0
          %2894 = vmatpush1.bf16.msra.mxu0 %v2877
          %2895 = vmatprep.subr.bf16.mxu0 0
          %2896 = vmatpush1.bf16.msra.mxu0 %v2878
          %2897 = vmatprep.subr.bf16.mxu0 0
          %2898 = vmatpush1.bf16.msra.mxu0 %v2879
          %2899 = vmatprep.subr.bf16.mxu0 0
          %2900 = vmatpush1.bf16.msra.mxu0 %v2880
          %2901 = vmatprep.subr.bf16.mxu0 0
          %2902 = vmatpush1.bf16.msra.mxu0 %v2881
          %2903 = vmatprep.subr.bf16.mxu0 0
          %2904 = vmatpush1.bf16.msra.mxu0 %v2882
          %2905 = vmatprep.subr.bf16.mxu0 0
          %2906 = vmatpush1.bf16.msra.mxu0 %v2883
          %2907 = vmatprep.subr.bf16.mxu0 0
          %2908 = vmatpush1.bf16.msra.mxu0 %v2884
          %2909 = vmatprep.subr.bf16.mxu0 0
          %2910 = vmatpush1.bf16.msra.mxu0 0
          %2911 = vmatprep.subr.bf16.mxu0 0
          %2912 = vmatpush1.bf16.msra.mxu0 0
          %2913 = vmatprep.subr.bf16.mxu0 0
          %2914 = vmatpush1.bf16.msra.mxu0 0
          %2915 = vmatprep.subr.bf16.mxu0 0
          %2916 = vmatpush1.bf16.msra.mxu0 0
          %2917 = vmatprep.subr.bf16.mxu0 0
          %2918 = vmatpush1.bf16.msra.mxu0 0
          %2919 = vmatprep.subr.bf16.mxu0 0
          %2920 = vmatpush1.bf16.msra.mxu0 0
          %2921 = vmatprep.subr.bf16.mxu0 0
          %2922 = vmatpush1.bf16.msra.mxu0 0
          %2923 = vmatprep.subr.bf16.mxu0 0
          %2924 = vmatpush1.bf16.msra.mxu0 0
          %2925 = vmatprep.mubr.bf16.mxu0 0
          %2926 = vmatmul.mubr.bf16.gmra.mrb[0].mxu0 %v2806
          %v2927 = vpop.f32.mrb[0].mxu0
          %v2928 = vadd.f32 %v2843, %v2927
          %v2929 = vpop.f32.mrb[0].mxu0
          %v2930 = vpop.f32.mrb[0].mxu0
          %v2931 = vadd.f32 %v2843, %v2930
          %v2932 = vpop.f32.mrb[0].mxu0
          %2933 = vmatprep.mubr.bf16.mxu0 0
          %2934 = vmatmul.mubr.bf16.gmra.mrb[0].mxu0 %v2807
          %v2935 = vpop.f32.mrb[0].mxu0
          %v2936 = vadd.f32 %v2843, %v2935
          %v2937 = vpop.f32.mrb[0].mxu0
          %v2938 = vpop.f32.mrb[0].mxu0
          %v2939 = vadd.f32 %v2843, %v2938
          %v2940 = vpop.f32.mrb[0].mxu0
          %2941 = vmatprep.mubr.bf16.mxu0 0
          %2942 = vmatmul.mubr.bf16.gmra.mrb[0].mxu0 %v2808
          %v2943 = vpop.f32.mrb[0].mxu0
          %v2944 = vadd.f32 %v2843, %v2943
          %v2945 = vpop.f32.mrb[0].mxu0
          %v2946 = vpop.f32.mrb[0].mxu0
          %v2947 = vadd.f32 %v2843, %v2946
          %v2948 = vpop.f32.mrb[0].mxu0
          %2949 = vmatprep.mubr.bf16.mxu0 0
          %2950 = vmatmul.mubr.bf16.gmra.mrb[0].mxu0 %v2809
          %v2951 = vpop.f32.mrb[0].mxu0
          %v2952 = vadd.f32 %v2843, %v2951
          %v2953 = vpop.f32.mrb[0].mxu0
          %v2954 = vpop.f32.mrb[0].mxu0
          %v2955 = vadd.f32 %v2843, %v2954
          %v2956 = vpop.f32.mrb[0].mxu0
          %2957 = vmatprep.mubr.bf16.mxu0 0
          %2958 = vmatmul.mubr.bf16.gmra.mrb[0].mxu0 %v2810
          %v2959 = vpop.f32.mrb[0].mxu0
          %v2960 = vadd.f32 %v2843, %v2959
          %v2961 = vpop.f32.mrb[0].mxu0
          %v2962 = vpop.f32.mrb[0].mxu0
          %v2963 = vadd.f32 %v2843, %v2962
          %v2964 = vpop.f32.mrb[0].mxu0
          %2965 = vmatprep.mubr.bf16.mxu0 0
          %2966 = vmatmul.mubr.bf16.gmra.mrb[0].mxu0 %v2811
          %v2967 = vpop.f32.mrb[0].mxu0
          %v2968 = vadd.f32 %v2843, %v2967
          %v2969 = vpop.f32.mrb[0].mxu0
          %v2970 = vpop.f32.mrb[0].mxu0
          %v2971 = vadd.f32 %v2843, %v2970
          %v2972 = vpop.f32.mrb[0].mxu0
          %2973 = vmatprep.mubr.bf16.mxu0 0
          %2974 = vmatmul.mubr.bf16.gmra.mrb[0].mxu0 %v2812
          %v2975 = vpop.f32.mrb[0].mxu0
          %v2976 = vadd.f32 %v2843, %v2975
          %v2977 = vpop.f32.mrb[0].mxu0
          %v2978 = vpop.f32.mrb[0].mxu0
          %v2979 = vadd.f32 %v2843, %v2978
          %v2980 = vpop.f32.mrb[0].mxu0
          %2981 = vmatprep.mubr.bf16.mxu0 0
          %2982 = vmatmul.mubr.bf16.gmra.mrb[0].mxu0 %v2813
          %v2983 = vpop.f32.mrb[0].mxu0
          %v2984 = vadd.f32 %v2843, %v2983
          %v2985 = vpop.f32.mrb[0].mxu0
          %v2986 = vpop.f32.mrb[0].mxu0
          %v2987 = vadd.f32 %v2843, %v2986
          %v2988 = vpop.f32.mrb[0].mxu0
          %2989 = vmatprep.mubr.bf16.mxu0 0
          %2990 = vmatmul.mubr.bf16.gmra.mrb[0].mxu0 %v2814
          %v2991 = vpop.f32.mrb[0].mxu0
          %v2992 = vadd.f32 %v2843, %v2991
          %v2993 = vpop.f32.mrb[0].mxu0
          %v2994 = vpop.f32.mrb[0].mxu0
          %v2995 = vadd.f32 %v2843, %v2994
          %v2996 = vpop.f32.mrb[0].mxu0
          %2997 = vmatprep.mubr.bf16.mxu0 0
          %2998 = vmatmul.mubr.bf16.gmra.mrb[0].mxu0 %v2815
          %v2999 = vpop.f32.mrb[0].mxu0
          %v3000 = vadd.f32 %v2843, %v2999
          %v3001 = vpop.f32.mrb[0].mxu0
          %v3002 = vpop.f32.mrb[0].mxu0
          %v3003 = vadd.f32 %v2843, %v3002
          %v3004 = vpop.f32.mrb[0].mxu0
          %3005 = vmatprep.mubr.bf16.mxu0 0
          %3006 = vmatmul.mubr.bf16.gmra.mrb[0].mxu0 %v2816
          %v3007 = vpop.f32.mrb[0].mxu0
          %v3008 = vadd.f32 %v2843, %v3007
          %v3009 = vpop.f32.mrb[0].mxu0
          %v3010 = vpop.f32.mrb[0].mxu0
          %v3011 = vadd.f32 %v2843, %v3010
          %v3012 = vpop.f32.mrb[0].mxu0
          %3013 = vmatprep.mubr.bf16.mxu0 0
          %3014 = vmatmul.mubr.bf16.gmra.mrb[0].mxu0 %v2817
          %v3015 = vpop.f32.mrb[0].mxu0
          %v3016 = vadd.f32 %v2843, %v3015
          %v3017 = vpop.f32.mrb[0].mxu0
          %v3018 = vpop.f32.mrb[0].mxu0
          %v3019 = vadd.f32 %v2843, %v3018
          %v3020 = vpop.f32.mrb[0].mxu0
          %3021 = vmatprep.mubr.bf16.mxu0 0
          %3022 = vmatmul.mubr.bf16.gmra.mrb[0].mxu0 %v2818
          %v3023 = vpop.f32.mrb[0].mxu0
          %v3024 = vadd.f32 %v2843, %v3023
          %v3025 = vpop.f32.mrb[0].mxu0
          %v3026 = vpop.f32.mrb[0].mxu0
          %v3027 = vadd.f32 %v2843, %v3026
          %v3028 = vpop.f32.mrb[0].mxu0
          %3029 = vmatprep.mubr.bf16.mxu0 0
          %3030 = vmatmul.mubr.bf16.gmra.mrb[0].mxu0 %v2819
          %v3031 = vpop.f32.mrb[0].mxu0
          %v3032 = vadd.f32 %v2843, %v3031
          %v3033 = vpop.f32.mrb[0].mxu0
          %v3034 = vpop.f32.mrb[0].mxu0
          %v3035 = vadd.f32 %v2843, %v3034
          %v3036 = vpop.f32.mrb[0].mxu0
          %3037 = vmatprep.mubr.bf16.mxu0 0
          %3038 = vmatmul.mubr.bf16.gmra.mrb[0].mxu0 %v2820
          %v3039 = vpop.f32.mrb[0].mxu0
          %v3040 = vadd.f32 %v2843, %v3039
          %v3041 = vpop.f32.mrb[0].mxu0
          %v3042 = vpop.f32.mrb[0].mxu0
          %v3043 = vadd.f32 %v2843, %v3042
          %v3044 = vpop.f32.mrb[0].mxu0
          %3045 = vmatprep.mubr.bf16.mxu0 0
          %3046 = vmatmul.mubr.bf16.gmra.mrb[0].mxu0 %v2821
          %v3047 = vpop.f32.mrb[0].mxu0
          %v3048 = vadd.f32 %v2843, %v3047
          %v3049 = vpop.f32.mrb[0].mxu0
          %v3050 = vpop.f32.mrb[0].mxu0
          %v3051 = vadd.f32 %v2843, %v3050
          %v3052 = vpop.f32.mrb[0].mxu0
          %3053 = vdwg.mxu0
          %v3054 = vld [vmem:[%s475] sm:$0xff]
          %v3055 = vld [vmem:[%s475 + $0x8] sm:$0xff]
          %v3056 = vld [vmem:[%s475 + $0x10] sm:$0xff]
          %v3057 = vld [vmem:[%s475 + $0x18] sm:$0xff]
          %v3058 = vld [vmem:[%s475 + $0x20] sm:$0xff]
          %v3059 = vld [vmem:[%s475 + $0x28] sm:$0xff]
          %v3060 = vld [vmem:[%s475 + $0x30] sm:$0xff]
          %v3061 = vld [vmem:[%s475 + $0x38] sm:$0xff]
          %v3062 = vld [vmem:[%s475 + $0x40] sm:$0xff]
          %v3063 = vld [vmem:[%s475 + $0x48] sm:$0xff]
          %v3064 = vld [vmem:[%s475 + $0x50] sm:$0xff]
          %v3065 = vld [vmem:[%s475 + $0x58] sm:$0xff]
          %v3066 = vld [vmem:[%s475 + $0x60] sm:$0xff]
          %v3067 = vld [vmem:[%s475 + $0x68] sm:$0xff]
          %v3068 = vld [vmem:[%s475 + $0x70] sm:$0xff]
          %v3069 = vld [vmem:[%s475 + $0x78] sm:$0xff]
          %v3070 = vld [vmem:[%s475 + $0x80] sm:$0xff]
          %v3071 = vld [vmem:[%s475 + $0x88] sm:$0xff]
          %v3072 = vld [vmem:[%s475 + $0x90] sm:$0xff]
          %v3073 = vld [vmem:[%s475 + $0x98] sm:$0xff]
          %v3074 = vld [vmem:[%s475 + $0xa0] sm:$0xff]
          %v3075 = vld [vmem:[%s475 + $0xa8] sm:$0xff]
          %v3076 = vld [vmem:[%s475 + $0xb0] sm:$0xff]
          %v3077 = vld [vmem:[%s475 + $0xb8] sm:$0xff]
          %v3078 = vld [vmem:[%s475 + $0xc0] sm:$0xff]
          %v3079 = vld [vmem:[%s475 + $0xc8] sm:$0xff]
          %v3080 = vld [vmem:[%s475 + $0xd0] sm:$0xff]
          %v3081 = vld [vmem:[%s475 + $0xd8] sm:$0xff]
          %v3082 = vld [vmem:[%s475 + $0xe0] sm:$0xff]
          %v3083 = vld [vmem:[%s475 + $0xe8] sm:$0xff]
          %v3084 = vld [vmem:[%s475 + $0xf0] sm:$0xff]
          %v3085 = vld [vmem:[%s475 + $0xf8] sm:$0xff]
          %v3086 = vadd.f32 %v2928, %v3054
          %v3087 = vadd.f32 %v2931, %v3055
          %v3088 = vadd.f32 %v2936, %v3056
          %v3089 = vadd.f32 %v2939, %v3057
          %v3090 = vadd.f32 %v2944, %v3058
          %v3091 = vadd.f32 %v2947, %v3059
          %v3092 = vadd.f32 %v2952, %v3060
          %v3093 = vadd.f32 %v2955, %v3061
          %v3094 = vadd.f32 %v2960, %v3062
          %v3095 = vadd.f32 %v2963, %v3063
          %v3096 = vadd.f32 %v2968, %v3064
          %v3097 = vadd.f32 %v2971, %v3065
          %v3098 = vadd.f32 %v2976, %v3066
          %v3099 = vadd.f32 %v2979, %v3067
          %v3100 = vadd.f32 %v2984, %v3068
          %v3101 = vadd.f32 %v2987, %v3069
          %v3102 = vadd.f32 %v2992, %v3070
          %v3103 = vadd.f32 %v2995, %v3071
          %v3104 = vadd.f32 %v3000, %v3072
          %v3105 = vadd.f32 %v3003, %v3073
          %v3106 = vadd.f32 %v3008, %v3074
          %v3107 = vadd.f32 %v3011, %v3075
          %v3108 = vadd.f32 %v3016, %v3076
          %v3109 = vadd.f32 %v3019, %v3077
          %v3110 = vadd.f32 %v3024, %v3078
          %v3111 = vadd.f32 %v3027, %v3079
          %v3112 = vadd.f32 %v3032, %v3080
          %v3113 = vadd.f32 %v3035, %v3081
          %v3114 = vadd.f32 %v3040, %v3082
          %v3115 = vadd.f32 %v3043, %v3083
          %v3116 = vadd.f32 %v3048, %v3084
          %v3117 = vadd.f32 %v3051, %v3085
          %3118 = vst [vmem:[%s537] sm:$0xff] %v3086
          %3119 = vst [vmem:[%s537 + $0x8] sm:$0xff] %v3087
          %3120 = vst [vmem:[%s537 + $0x10] sm:$0xff] %v3088
          %3121 = vst [vmem:[%s537 + $0x18] sm:$0xff] %v3089
          %3122 = vst [vmem:[%s537 + $0x20] sm:$0xff] %v3090
          %3123 = vst [vmem:[%s537 + $0x28] sm:$0xff] %v3091
          %3124 = vst [vmem:[%s537 + $0x30] sm:$0xff] %v3092
          %3125 = vst [vmem:[%s537 + $0x38] sm:$0xff] %v3093
          %3126 = vst [vmem:[%s537 + $0x40] sm:$0xff] %v3094
          %3127 = vst [vmem:[%s537 + $0x48] sm:$0xff] %v3095
          %3128 = vst [vmem:[%s537 + $0x50] sm:$0xff] %v3096
          %3129 = vst [vmem:[%s537 + $0x58] sm:$0xff] %v3097
          %3130 = vst [vmem:[%s537 + $0x60] sm:$0xff] %v3098
          %3131 = vst [vmem:[%s537 + $0x68] sm:$0xff] %v3099
          %3132 = vst [vmem:[%s537 + $0x70] sm:$0xff] %v3100
          %3133 = vst [vmem:[%s537 + $0x78] sm:$0xff] %v3101
          %3134 = vst [vmem:[%s537 + $0x80] sm:$0xff] %v3102
          %3135 = vst [vmem:[%s537 + $0x88] sm:$0xff] %v3103
          %3136 = vst [vmem:[%s537 + $0x90] sm:$0xff] %v3104
          %3137 = vst [vmem:[%s537 + $0x98] sm:$0xff] %v3105
          %3138 = vst [vmem:[%s537 + $0xa0] sm:$0xff] %v3106
          %3139 = vst [vmem:[%s537 + $0xa8] sm:$0xff] %v3107
          %3140 = vst [vmem:[%s537 + $0xb0] sm:$0xff] %v3108
          %3141 = vst [vmem:[%s537 + $0xb8] sm:$0xff] %v3109
          %3142 = vst [vmem:[%s537 + $0xc0] sm:$0xff] %v3110
          %3143 = vst [vmem:[%s537 + $0xc8] sm:$0xff] %v3111
          %3144 = vst [vmem:[%s537 + $0xd0] sm:$0xff] %v3112
          %3145 = vst [vmem:[%s537 + $0xd8] sm:$0xff] %v3113
          %3146 = vst [vmem:[%s537 + $0xe0] sm:$0xff] %v3114
          %3147 = vst [vmem:[%s537 + $0xe8] sm:$0xff] %v3115
          %3148 = vst [vmem:[%s537 + $0xf0] sm:$0xff] %v3116
          %3149 = vst [vmem:[%s537 + $0xf8] sm:$0xff] %v3117
        $region112: #{tpu_custom_call.1} parent=71 // pred_fallthru
          _
        %s3150 = sand.u32 %s331, 1
        %s3151 = scalar_lea.sflag [#allocation7], %s3150
        %s3152 = sand.u32 %s331, 1
        %s3153 = smul.addr %s3152, 256
        %s3154 = scalar_lea.vmem [#allocation16], %s3153
        // Predicated region
        $region113: #{tpu_custom_call.1} parent=71 // pred_check
          %p3155 = pneg %p341
        $region114: #{tpu_custom_call.1} parent=71 // pred_check_branch
          %3157 = sbr.rel (%p3155) target = $region116
        $region115: #{tpu_custom_call.1} parent=71 // pred_region
          %s3159 = ssub.s32 4096, 4096
          %3160 = vsyncadd %s3151, %s3159
          %s3161 = smul.addr %s37, 32
          %s3162 = smul.addr %s3161, 128
          %s3163 = scalar_lea.hbm %s13, %s3162
          %s3164 = sshll.u32 %s3154, 4
          %s3165 = int_to_ptr.vmem [resolvable:$true] %s3164
          %3170 = dma.vmem_to_hbm [thread:$0]  %s3165, 4096, %s3163, %s3151, 128, 128, 8
        $region116: #{tpu_custom_call.1} parent=71 // pred_fallthru
          _
      $region72: #{tpu_custom_call.1} parent=5 // pred_fallthru
        _
      %p3171 = scmp.le.s32.totalorder 2, %s28
      // Predicated region
      $region117: #{tpu_custom_call.1} parent=5 // pred_check
        %p3172 = pneg %p3171
      $region118: #{tpu_custom_call.1} parent=5 // pred_check_branch
        %3174 = sbr.rel (%p3172) target = $region120
      $region119: #{tpu_custom_call.1} parent=5 // pred_region
        %s3175 = ssub.s32 %s28, 2
        // Predicated region
        $region121: #{tpu_custom_call.1} parent=119 // pred_check
          %p3176 = pneg %p347
        $region122: #{tpu_custom_call.1} parent=119 // pred_check_branch
          %3178 = sbr.rel (%p3176) target = $region124
        $region123: #{tpu_custom_call.1} parent=119 // pred_region
          %s3179 = sand.u32 %s332, 1
          %s3180 = scalar_lea.sflag [#allocation7], %s3179
          %s3181 = sand.u32 %s332, 1
          %s3182 = smul.addr %s3181, 256
          %s3183 = scalar_lea.vmem [#allocation16], %s3182
          %3184 = dma.done %s3180, 4096
        $region124: #{tpu_custom_call.1} parent=119 // pred_fallthru
          _
      $region120: #{tpu_custom_call.1} parent=5 // pred_fallthru
        _
    $region6: #{tpu_custom_call.1} parent=1 // loop_footer
      %s32 = sadd.s32 1, %s28
    $region7: #{tpu_custom_call.1} parent=1 // loop_footer_branch
      %27 = sbr.rel target = $region3
    $region8: #{tpu_custom_call.1} parent=1 // loop_exit
      _
    %3185 = vsyncpa [#allocation6], 1
    %s3186 = scalar_lea.sflag [#allocation6], 1
    %3187 = vsyncpa %s3186, 1
    %3188 = vsyncpa [#allocation9], 1
    %3189 = vsyncpa [#allocation12], 1
    %3190 = vsyncpa [#allocation15], 1
    %3191 = vsyncpa [#allocation7], 1
    %s3192 = scalar_lea.sflag [#allocation7], 1
    %3193 = vsyncpa %s3192, 1

</llo_original>
